<compile_context>
chip_gen: v6e
topology: v6e:2x2x1
jax: 0.10.0
libtpu: 0.0.40
codegen_flags: <defaults>
</compile_context>

<pallas_src>
import functools

import jax
import jax.numpy as jnp
from jax.experimental import pallas as pl
from jax.experimental.pallas import tpu as pltpu

EPS = 1e-5        # nn.BatchNorm2d default eps
LANE = 128        # vreg lane count -> channel padding granule


def _round_up(x, m):
    return (x + m - 1) // m * m


# ------------------------------ fused kernel ----------------------------------

def _bn(y, gamma, beta, *, relu):
    """Training-mode BN over rows (rows = N*Ho*Wo), folded scale/shift.

    Two-pass (centered) variance to avoid the E[x^2]-E[x]^2 cancellation noted
    in review; rsqrt lands on the EUP slot.
    """
    inv_m = 1.0 / y.shape[0]
    mean = jnp.sum(y, axis=0, keepdims=True) * inv_m
    var = jnp.sum(jnp.square(y - mean), axis=0, keepdims=True) * inv_m
    scale = gamma * jax.lax.rsqrt(var + EPS)          # (1, C)
    shift = beta - mean * scale                       # (1, C)
    out = y * scale + shift
    return jnp.maximum(out, 0.0) if relu else out


def bottleneck_kernel(x_ref, tapmask_ref,
                      w1sc_ref, g1sc_ref, b1sc_ref,
                      w2_ref, g2_ref, b2_ref,
                      w3_ref, g3_ref, b3_ref,
                      o_ref, cbuf_ref, col_ref, *, wo, lead):
    m = x_ref.shape[0]
    cred_p = w3_ref.shape[0]
    cdt = w2_ref.dtype                 # compute dtype (weights pre-cast: f32/bf16)

    # --- block[0] 1x1 conv + shortcut 1x1 conv fused into one wide matmul ---
    xd = x_ref[...]                                   # (M, Cin_p), compute dtype
    y = jnp.dot(xd, w1sc_ref[...], preferred_element_type=jnp.float32)
    h = _bn(y, g1sc_ref[...], b1sc_ref[...], relu=True)   # per-channel BN (joint)
    h1 = h[:, :cred_p]                                # block[0] activations
    res = h[:, cred_p:]                               # shortcut activations

    # --- block[1] 3x3 conv (pad=1) as ONE im2col matmul, K = 9*Cred_p ---
    # Each tap is a row shift of h1 by (dy-1)*Wo + (dx-1).  Stage h1 once into
    # a flat row-halo buffer; only the two small halo strips are zeroed.  The
    # per-tap row-validity masks (precomputed in the wrapper) zero rows whose
    # shifted source crosses an image/row boundary, so no full-buffer zeroing
    # or per-tap reshape is needed.
    tail = cbuf_ref.shape[0] - lead - m
    cbuf_ref[0:lead, :] = jnp.zeros((lead, cred_p), jnp.float32)
    cbuf_ref[lead + m:lead + m + tail, :] = jnp.zeros((tail, cred_p), jnp.float32)
    cbuf_ref[lead:lead + m, :] = h1
    for k in range(9):                                # static unroll, 9 taps
        dy, dx = k // 3, k % 3
        start = lead + (dy - 1) * wo + (dx - 1)
        win = cbuf_ref[start:start + m, :]            # (M, Cred_p) shifted view
        col_ref[:, k * cred_p:(k + 1) * cred_p] = (
            win * tapmask_ref[:, k:k + 1]).astype(cdt)
    y2 = jnp.dot(col_ref[...], w2_ref[...], preferred_element_type=jnp.float32)
    h2 = _bn(y2, g2_ref[...], b2_ref[...], relu=True)

    # --- block[2] 1x1 conv + BN (Identity act) ---
    y3 = jnp.dot(h2.astype(cdt), w3_ref[...], preferred_element_type=jnp.float32)
    y3 = _bn(y3, g3_ref[...], b3_ref[...], relu=False)

    # x += res ; final ReLU
    o_ref[...] = jnp.maximum(y3 + res, 0.0)


# ------------------------------ params ----------------------------------------

def init_params(key, in_features, out_features, reduction=4):
    red = out_features // reduction
    k1, k2, k3, k4 = jax.random.split(key, 4)
    # Conv weights stored matmul-ready: (Cin, Cout) for 1x1 convs,
    # (9, Cin, Cout) for the 3x3 conv (tap index = ky*3 + kx).
    params = {
        "w1": jax.random.normal(k1, (in_features, red), jnp.float32)
              / jnp.sqrt(float(in_features)),
        "w2": jax.random.normal(k2, (9, red, red), jnp.float32)
              / jnp.sqrt(9.0 * red),
        "w3": jax.random.normal(k3, (red, out_features), jnp.float32)
              / jnp.sqrt(float(red)),
        "wsc": jax.random.normal(k4, (in_features, out_features), jnp.float32)
               / jnp.sqrt(float(in_features)),
    }

    def affine(c, s):
        g = 1.0 + 0.05 * s * jnp.arange(c, dtype=jnp.float32)
        b = 0.02 * s * jnp.arange(c, dtype=jnp.float32) - 0.01
        return g[None, :], b[None, :]

    params["g1"], params["b1"] = affine(red, 1.0)
    params["g2"], params["b2"] = affine(red, 2.0)
    params["g3"], params["b3"] = affine(out_features, 3.0)
    params["gsc"], params["bsc"] = affine(out_features, 4.0)
    return params


def prepare_params(params, *, use_bf16=True):
    """Pad channel dims to the 128-lane granule, fuse conv1+shortcut weights,
    flatten the 3x3 weights to im2col layout, and pre-cast weights to the MXU
    compute dtype (bf16 by default) -- all once, off the hot path.

    Padded weight rows/cols are zero and padded betas are zero, so padded
    channels stay exactly zero through every conv/BN/ReLU stage.
    """
    cin, cred = params["w1"].shape
    cout = params["w3"].shape[1]
    cin_p, cred_p, cout_p = (_round_up(c, LANE) for c in (cin, cred, cout))
    wdt = jnp.bfloat16 if use_bf16 else jnp.float32

    def pad_w(w, rows, cols):
        out = jnp.zeros(w.shape[:-2] + (rows, cols), jnp.float32)
        return out.at[..., :w.shape[-2], :w.shape[-1]].set(w)

    def pad_affine(v, cols, fill):
        out = jnp.full((1, cols), fill, jnp.float32)
        return out.at[:, :v.shape[-1]].set(v)

    w1 = pad_w(params["w1"], cin_p, cred_p)
    wsc = pad_w(params["wsc"], cin_p, cout_p)
    w2 = pad_w(params["w2"], cred_p, cred_p).reshape(9 * cred_p, cred_p)
    w3 = pad_w(params["w3"], cred_p, cout_p)

    return {
        # conv1 + shortcut fused along the output dim -> one MXU pass over x.
        "w1sc": jnp.concatenate([w1, wsc], axis=1).astype(wdt),
        "g1sc": jnp.concatenate([pad_affine(params["g1"], cred_p, 1.0),
                                 pad_affine(params["gsc"], cout_p, 1.0)], axis=1),
        "b1sc": jnp.concatenate([pad_affine(params["b1"], cred_p, 0.0),
                                 pad_affine(params["bsc"], cout_p, 0.0)], axis=1),
        "w2": w2.astype(wdt),                 # (9*Cred_p, Cred_p) im2col layout
        "g2": pad_affine(params["g2"], cred_p, 1.0),
        "b2": pad_affine(params["b2"], cred_p, 0.0),
        "w3": w3.astype(wdt),
        "g3": pad_affine(params["g3"], cout_p, 1.0),
        "b3": pad_affine(params["b3"], cout_p, 0.0),
    }


# ------------------------------ wrapper ----------------------------------------

@functools.partial(jax.jit, static_argnames=("out_features", "stride"))
def bottleneck_block(x_nchw, padded_params, *, out_features, stride=1):
    p = padded_params
    N, Cin, H, W = x_nchw.shape
    cdt = p["w1sc"].dtype                    # compute dtype follows the params
    cin_p = p["w1sc"].shape[0]
    cred_p = p["w3"].shape[0]
    cout_p = p["w3"].shape[1]

    # NCHW -> (M, Cin_p) rows; the 1x1-conv stride == spatial subsampling
    # (shared by conv1 and the shortcut).  XLA fuses slice/transpose/pad/cast
    # into one copy over x.
    # TODO(synk): accept NHWC input and fold the stride into a BlockSpec
    # index_map once an M-grid exists, to drop this pre-kernel copy entirely.
    xs = jnp.transpose(x_nchw[:, :, ::stride, ::stride], (0, 2, 3, 1))
    Ho, Wo = xs.shape[1], xs.shape[2]
    M = N * Ho * Wo
    x2d = jnp.pad(xs.reshape(M, Cin).astype(jnp.float32),
                  ((0, 0), (0, cin_p - Cin))).astype(cdt)

    # Per-tap row-validity masks for the 3x3 conv (shape-only -> constant
    # folded under jit): 1.0 where the shifted source pixel is in-bounds.
    ii = jnp.arange(Ho, dtype=jnp.int32).reshape(1, Ho, 1)
    jj = jnp.arange(Wo, dtype=jnp.int32).reshape(1, 1, Wo)
    masks = []
    for k in range(9):
        dy, dx = k // 3, k % 3
        ok = ((ii + dy - 1 >= 0) & (ii + dy - 1 < Ho)
              & (jj + dx - 1 >= 0) & (jj + dx - 1 < Wo))
        masks.append(jnp.broadcast_to(ok, (N, Ho, Wo)).reshape(M))
    tapmask = jnp.stack(masks, axis=1).astype(jnp.float32)      # (M, 9)

    lead = _round_up(Wo + 1, 8)              # sublane-aligned interior offset
    tail = _round_up(Wo + 1, 8)
    cbuf_rows = lead + M + tail

    # Per-generation VMEM budget: 3/4 of physical VMEM (128 MiB v5e/v6e,
    # 64 MiB v7x), floored at 32 MiB; whole problem fits at these sizes.
    itemsize = jnp.dtype(cdt).itemsize
    est = 2 * (M * cin_p * itemsize + M * cout_p * 4
               + M * 9 * cred_p * itemsize + cbuf_rows * cred_p * 4
               + sum(v.size * v.dtype.itemsize for v in p.values())) + (8 << 20)
    try:
        cap = pltpu.get_tpu_info().vmem_capacity_bytes
    except Exception:
        cap = 64 << 20
    vmem_limit = int(min(max(est, 32 << 20), (cap * 3) // 4))

    vmem = functools.partial(pl.BlockSpec, memory_space=pltpu.MemorySpace.VMEM)
    args = (x2d, tapmask, p["w1sc"], p["g1sc"], p["b1sc"],
            p["w2"], p["g2"], p["b2"], p["w3"], p["g3"], p["b3"])

    out2d = pl.pallas_call(
        functools.partial(bottleneck_kernel, wo=Wo, lead=lead),
        out_shape=jax.ShapeDtypeStruct((M, cout_p), jnp.float32),
        in_specs=[vmem() for _ in args],
        out_specs=vmem(),
        scratch_shapes=[
            pltpu.VMEM((cbuf_rows, cred_p), jnp.float32),   # row-halo staging
            pltpu.VMEM((M, 9 * cred_p), cdt),               # im2col buffer
        ],
        compiler_params=pltpu.CompilerParams(vmem_limit_bytes=vmem_limit),
    )(*args)

    out = out2d[:, :out_features].reshape(N, Ho, Wo, out_features)
    return jnp.transpose(out, (0, 3, 1, 2))


# ------------------------ pure-JAX reference (for checking) -------------------

def reference_bottleneck(x_nchw, params, stride=1):
    def conv(x, w_oihw, s=1, p=0):
        return jax.lax.conv_general_dilated(
            x, w_oihw, (s, s), [(p, p), (p, p)],
            dimension_numbers=("NCHW", "OIHW", "NCHW"))

    def bn(x, g, b):
        g = g.reshape(1, -1, 1, 1)
        b = b.reshape(1, -1, 1, 1)
        mean = jnp.mean(x, axis=(0, 2, 3), keepdims=True)
        var = jnp.mean(jnp.square(x - mean), axis=(0, 2, 3), keepdims=True)
        return (x - mean) * jax.lax.rsqrt(var + EPS) * g + b

    Cred = params["w1"].shape[1]
    w1 = jnp.transpose(params["w1"])[:, :, None, None]
    w2 = jnp.transpose(params["w2"].reshape(3, 3, Cred, Cred), (3, 2, 0, 1))
    w3 = jnp.transpose(params["w3"])[:, :, None, None]
    wsc = jnp.transpose(params["wsc"])[:, :, None, None]

    x = x_nchw.astype(jnp.float32)
    h = jax.nn.relu(bn(conv(x, w1, s=stride), params["g1"], params["b1"]))
    h = jax.nn.relu(bn(conv(h, w2, p=1), params["g2"], params["b2"]))
    h = bn(conv(h, w3), params["g3"], params["b3"])
    r = jax.nn.relu(bn(conv(x, wsc, s=stride), params["gsc"], params["bsc"]))
    return jax.nn.relu(h + r)


# ----------------------------------- main --------------------------------------

if __name__ == "__main__":
    N, Cin, H, W = 2, 4, 16, 16
    Cout, reduction, stride = 8, 4, 1
    # TODO(synk): identity-shortcut variant (in_features == out_features) is not
    # implemented; the module spec uses the conv shortcut when channels differ.

    key = jax.random.PRNGKey(0)
    kx, kp = jax.random.split(key)
    x = jax.random.normal(kx, (N, Cin, H, W), jnp.float32)
    params = init_params(kp, Cin, Cout, reduction)

    ref = jax.block_until_ready(reference_bottleneck(x, params, stride=stride))

    # f32 operand path (exact semantics of the PyTorch module).
    padded_f32 = prepare_params(params, use_bf16=False)
    out = jax.block_until_ready(
        bottleneck_block(x, padded_f32, out_features=Cout, stride=stride))
    assert out.shape == (N, Cout, H, W), out.shape
    assert jnp.allclose(out, ref, atol=1e-3, rtol=1e-3), (
        float(jnp.max(jnp.abs(out - ref))))

    # bf16 MXU-operand path (default perf path on v5e/v6e/v7x): f32 accumulate,
    # f32 BN/ReLU epilogue.  Loose sanity check against the f32 reference.
    padded_bf16 = prepare_params(params, use_bf16=True)
    out_bf16 = jax.block_until_ready(
        bottleneck_block(x, padded_bf16, out_features=Cout, stride=stride))
    assert jnp.allclose(out_bf16, ref, atol=1e-1, rtol=1e-1), (
        float(jnp.max(jnp.abs(out_bf16 - ref))))

    print("KERNEL_OK")
</pallas_src>

<mosaic_0001>
module attributes {stable_mosaic.version = 11 : i64} {
  func.func @bottleneck_kernel(%arg0: memref<512x128xf32, #tpu.memory_space<vmem>>, %arg1: memref<512x9xf32, #tpu.memory_space<vmem>>, %arg2: memref<128x256xf32, #tpu.memory_space<vmem>>, %arg3: memref<1x256xf32, #tpu.memory_space<vmem>>, %arg4: memref<1x256xf32, #tpu.memory_space<vmem>>, %arg5: memref<1152x128xf32, #tpu.memory_space<vmem>>, %arg6: memref<1x128xf32, #tpu.memory_space<vmem>>, %arg7: memref<1x128xf32, #tpu.memory_space<vmem>>, %arg8: memref<128x128xf32, #tpu.memory_space<vmem>>, %arg9: memref<1x128xf32, #tpu.memory_space<vmem>>, %arg10: memref<1x128xf32, #tpu.memory_space<vmem>>, %arg11: memref<512x128xf32, #tpu.memory_space<vmem>>, %arg12: memref<560x128xf32, #tpu.memory_space<vmem>>, %arg13: memref<512x1152xf32, #tpu.memory_space<vmem>>) attributes {dimension_semantics = [], scalar_prefetch = 0 : i64, scratch_operands = 2 : i64, tpu.core_type = #tpu.core_type<tc>} {
    %c0 = arith.constant 0 : index
    %c0_0 = arith.constant 0 : index
    %0 = vector.load %arg0[%c0, %c0_0] : memref<512x128xf32, #tpu.memory_space<vmem>>, vector<512x128xf32>
    %c0_1 = arith.constant 0 : index
    %c0_2 = arith.constant 0 : index
    %1 = vector.load %arg2[%c0_1, %c0_2] : memref<128x256xf32, #tpu.memory_space<vmem>>, vector<128x256xf32>
    %cst = arith.constant dense<0.000000e+00> : vector<512x256xf32>
    %2 = tpu.matmul %0, %1, %cst {dimension_numbers = #tpu.dot_dimension_numbers<[1], [0], [0], [1], [0, 0, 1, 1], [], []>} : vector<512x128xf32>, vector<128x256xf32>, vector<512x256xf32> -> vector<512x256xf32>
    %c0_3 = arith.constant 0 : index
    %c0_4 = arith.constant 0 : index
    %3 = vector.load %arg3[%c0_3, %c0_4] : memref<1x256xf32, #tpu.memory_space<vmem>>, vector<1x256xf32>
    %c0_5 = arith.constant 0 : index
    %c0_6 = arith.constant 0 : index
    %4 = vector.load %arg4[%c0_5, %c0_6] : memref<1x256xf32, #tpu.memory_space<vmem>>, vector<1x256xf32>
    %cst_7 = arith.constant dense<0.000000e+00> : vector<256xf32>
    %5 = vector.multi_reduction <add>, %2, %cst_7 [0] : vector<512x256xf32> to vector<256xf32>
    %6 = vector.shape_cast %5 : vector<256xf32> to vector<1x256xf32>
    %cst_8 = arith.constant 0.001953125 : f32
    %7 = vector.broadcast %cst_8 : f32 to vector<1x256xf32>
    %8 = arith.mulf %6, %7 : vector<1x256xf32>
    %9 = vector.broadcast %8 : vector<1x256xf32> to vector<512x256xf32>
    %10 = arith.subf %2, %9 : vector<512x256xf32>
    %11 = arith.mulf %10, %10 : vector<512x256xf32>
    %cst_9 = arith.constant dense<0.000000e+00> : vector<256xf32>
    %12 = vector.multi_reduction <add>, %11, %cst_9 [0] : vector<512x256xf32> to vector<256xf32>
    %13 = vector.shape_cast %12 : vector<256xf32> to vector<1x256xf32>
    %cst_10 = arith.constant 0.001953125 : f32
    %14 = vector.broadcast %cst_10 : f32 to vector<1x256xf32>
    %15 = arith.mulf %13, %14 : vector<1x256xf32>
    %cst_11 = arith.constant 9.99999974E-6 : f32
    %16 = vector.broadcast %cst_11 : f32 to vector<1x256xf32>
    %17 = arith.addf %15, %16 : vector<1x256xf32>
    %18 = math.rsqrt %17 : vector<1x256xf32>
    %19 = arith.mulf %3, %18 : vector<1x256xf32>
    %20 = arith.mulf %8, %19 : vector<1x256xf32>
    %21 = arith.subf %4, %20 : vector<1x256xf32>
    %22 = vector.broadcast %19 : vector<1x256xf32> to vector<512x256xf32>
    %23 = arith.mulf %2, %22 : vector<512x256xf32>
    %24 = vector.broadcast %21 : vector<1x256xf32> to vector<512x256xf32>
    %25 = arith.addf %23, %24 : vector<512x256xf32>
    %cst_12 = arith.constant 0.000000e+00 : f32
    %26 = vector.broadcast %cst_12 : f32 to vector<512x256xf32>
    %27 = arith.maximumf %25, %26 : vector<512x256xf32>
    %28 = vector.extract_strided_slice %27 {offsets = [0, 0], sizes = [512, 128], strides = [1, 1]} : vector<512x256xf32> to vector<512x128xf32>
    %29 = vector.extract_strided_slice %27 {offsets = [0, 128], sizes = [512, 128], strides = [1, 1]} : vector<512x256xf32> to vector<512x128xf32>
    %cst_13 = arith.constant 0.000000e+00 : f32
    %30 = vector.broadcast %cst_13 : f32 to vector<24x128xf32>
    %c0_14 = arith.constant 0 : index
    %c0_15 = arith.constant 0 : index
    %31 = vector.load %arg12[%c0_14, %c0_15] : memref<560x128xf32, #tpu.memory_space<vmem>>, vector<24x128xf32>
    tpu.vector_store %arg12[%c0_14, %c0_15], %30 {strides = array<i32>} : memref<560x128xf32, #tpu.memory_space<vmem>>, vector<24x128xf32>,
    %cst_16 = arith.constant 0.000000e+00 : f32
    %32 = vector.broadcast %cst_16 : f32 to vector<24x128xf32>
    %c536 = arith.constant 536 : index
    %c0_17 = arith.constant 0 : index
    %33 = vector.load %arg12[%c536, %c0_17] : memref<560x128xf32, #tpu.memory_space<vmem>>, vector<24x128xf32>
    tpu.vector_store %arg12[%c536, %c0_17], %32 {strides = array<i32>} : memref<560x128xf32, #tpu.memory_space<vmem>>, vector<24x128xf32>,
    %c24 = arith.constant 24 : index
    %c0_18 = arith.constant 0 : index
    %34 = vector.load %arg12[%c24, %c0_18] : memref<560x128xf32, #tpu.memory_space<vmem>>, vector<512x128xf32>
    tpu.vector_store %arg12[%c24, %c0_18], %28 {strides = array<i32>} : memref<560x128xf32, #tpu.memory_space<vmem>>, vector<512x128xf32>,
    %c7 = arith.constant 7 : index
    %c0_19 = arith.constant 0 : index
    %35 = vector.load %arg12[%c7, %c0_19] : memref<560x128xf32, #tpu.memory_space<vmem>>, vector<512x128xf32>
    %c0_20 = arith.constant 0 : index
    %c0_21 = arith.constant 0 : index
    %36 = vector.load %arg1[%c0_20, %c0_21] : memref<512x9xf32, #tpu.memory_space<vmem>>, vector<512x1xf32>
    %37 = vector.broadcast %36 : vector<512x1xf32> to vector<512x128xf32>
    %38 = arith.mulf %35, %37 : vector<512x128xf32>
    %c0_22 = arith.constant 0 : index
    %c0_23 = arith.constant 0 : index
    %39 = vector.load %arg13[%c0_22, %c0_23] : memref<512x1152xf32, #tpu.memory_space<vmem>>, vector<512x128xf32>
    tpu.vector_store %arg13[%c0_22, %c0_23], %38 {strides = array<i32>} : memref<512x1152xf32, #tpu.memory_space<vmem>>, vector<512x128xf32>,
    %c8 = arith.constant 8 : index
    %c0_24 = arith.constant 0 : index
    %40 = vector.load %arg12[%c8, %c0_24] : memref<560x128xf32, #tpu.memory_space<vmem>>, vector<512x128xf32>
    %c0_25 = arith.constant 0 : index
    %c1 = arith.constant 1 : index
    %41 = vector.load %arg1[%c0_25, %c1] : memref<512x9xf32, #tpu.memory_space<vmem>>, vector<512x1xf32>
    %42 = vector.broadcast %41 : vector<512x1xf32> to vector<512x128xf32>
    %43 = arith.mulf %40, %42 : vector<512x128xf32>
    %c0_26 = arith.constant 0 : index
    %c128 = arith.constant 128 : index
    %44 = vector.load %arg13[%c0_26, %c128] : memref<512x1152xf32, #tpu.memory_space<vmem>>, vector<512x128xf32>
    tpu.vector_store %arg13[%c0_26, %c128], %43 {strides = array<i32>} : memref<512x1152xf32, #tpu.memory_space<vmem>>, vector<512x128xf32>,
    %c9 = arith.constant 9 : index
    %c0_27 = arith.constant 0 : index
    %45 = vector.load %arg12[%c9, %c0_27] : memref<560x128xf32, #tpu.memory_space<vmem>>, vector<512x128xf32>
    %c0_28 = arith.constant 0 : index
    %c2 = arith.constant 2 : index
    %46 = vector.load %arg1[%c0_28, %c2] : memref<512x9xf32, #tpu.memory_space<vmem>>, vector<512x1xf32>
    %47 = vector.broadcast %46 : vector<512x1xf32> to vector<512x128xf32>
    %48 = arith.mulf %45, %47 : vector<512x128xf32>
    %c0_29 = arith.constant 0 : index
    %c256 = arith.constant 256 : index
    %49 = vector.load %arg13[%c0_29, %c256] : memref<512x1152xf32, #tpu.memory_space<vmem>>, vector<512x128xf32>
    tpu.vector_store %arg13[%c0_29, %c256], %48 {strides = array<i32>} : memref<512x1152xf32, #tpu.memory_space<vmem>>, vector<512x128xf32>,
    %c23 = arith.constant 23 : index
    %c0_30 = arith.constant 0 : index
    %50 = vector.load %arg12[%c23, %c0_30] : memref<560x128xf32, #tpu.memory_space<vmem>>, vector<512x128xf32>
    %c0_31 = arith.constant 0 : index
    %c3 = arith.constant 3 : index
    %51 = vector.load %arg1[%c0_31, %c3] : memref<512x9xf32, #tpu.memory_space<vmem>>, vector<512x1xf32>
    %52 = vector.broadcast %51 : vector<512x1xf32> to vector<512x128xf32>
    %53 = arith.mulf %50, %52 : vector<512x128xf32>
    %c0_32 = arith.constant 0 : index
    %c384 = arith.constant 384 : index
    %54 = vector.load %arg13[%c0_32, %c384] : memref<512x1152xf32, #tpu.memory_space<vmem>>, vector<512x128xf32>
    tpu.vector_store %arg13[%c0_32, %c384], %53 {strides = array<i32>} : memref<512x1152xf32, #tpu.memory_space<vmem>>, vector<512x128xf32>,
    %c24_33 = arith.constant 24 : index
    %c0_34 = arith.constant 0 : index
    %55 = vector.load %arg12[%c24_33, %c0_34] : memref<560x128xf32, #tpu.memory_space<vmem>>, vector<512x128xf32>
    %c0_35 = arith.constant 0 : index
    %c4 = arith.constant 4 : index
    %56 = vector.load %arg1[%c0_35, %c4] : memref<512x9xf32, #tpu.memory_space<vmem>>, vector<512x1xf32>
    %57 = vector.broadcast %56 : vector<512x1xf32> to vector<512x128xf32>
    %58 = arith.mulf %55, %57 : vector<512x128xf32>
    %c0_36 = arith.constant 0 : index
    %c512 = arith.constant 512 : index
    %59 = vector.load %arg13[%c0_36, %c512] : memref<512x1152xf32, #tpu.memory_space<vmem>>, vector<512x128xf32>
    tpu.vector_store %arg13[%c0_36, %c512], %58 {strides = array<i32>} : memref<512x1152xf32, #tpu.memory_space<vmem>>, vector<512x128xf32>,
    %c25 = arith.constant 25 : index
    %c0_37 = arith.constant 0 : index
    %60 = vector.load %arg12[%c25, %c0_37] : memref<560x128xf32, #tpu.memory_space<vmem>>, vector<512x128xf32>
    %c0_38 = arith.constant 0 : index
    %c5 = arith.constant 5 : index
    %61 = vector.load %arg1[%c0_38, %c5] : memref<512x9xf32, #tpu.memory_space<vmem>>, vector<512x1xf32>
    %62 = vector.broadcast %61 : vector<512x1xf32> to vector<512x128xf32>
    %63 = arith.mulf %60, %62 : vector<512x128xf32>
    %c0_39 = arith.constant 0 : index
    %c640 = arith.constant 640 : index
    %64 = vector.load %arg13[%c0_39, %c640] : memref<512x1152xf32, #tpu.memory_space<vmem>>, vector<512x128xf32>
    tpu.vector_store %arg13[%c0_39, %c640], %63 {strides = array<i32>} : memref<512x1152xf32, #tpu.memory_space<vmem>>, vector<512x128xf32>,
    %c39 = arith.constant 39 : index
    %c0_40 = arith.constant 0 : index
    %65 = vector.load %arg12[%c39, %c0_40] : memref<560x128xf32, #tpu.memory_space<vmem>>, vector<512x128xf32>
    %c0_41 = arith.constant 0 : index
    %c6 = arith.constant 6 : index
    %66 = vector.load %arg1[%c0_41, %c6] : memref<512x9xf32, #tpu.memory_space<vmem>>, vector<512x1xf32>
    %67 = vector.broadcast %66 : vector<512x1xf32> to vector<512x128xf32>
    %68 = arith.mulf %65, %67 : vector<512x128xf32>
    %c0_42 = arith.constant 0 : index
    %c768 = arith.constant 768 : index
    %69 = vector.load %arg13[%c0_42, %c768] : memref<512x1152xf32, #tpu.memory_space<vmem>>, vector<512x128xf32>
    tpu.vector_store %arg13[%c0_42, %c768], %68 {strides = array<i32>} : memref<512x1152xf32, #tpu.memory_space<vmem>>, vector<512x128xf32>,
    %c40 = arith.constant 40 : index
    %c0_43 = arith.constant 0 : index
    %70 = vector.load %arg12[%c40, %c0_43] : memref<560x128xf32, #tpu.memory_space<vmem>>, vector<512x128xf32>
    %c0_44 = arith.constant 0 : index
    %c7_45 = arith.constant 7 : index
    %71 = vector.load %arg1[%c0_44, %c7_45] : memref<512x9xf32, #tpu.memory_space<vmem>>, vector<512x1xf32>
    %72 = vector.broadcast %71 : vector<512x1xf32> to vector<512x128xf32>
    %73 = arith.mulf %70, %72 : vector<512x128xf32>
    %c0_46 = arith.constant 0 : index
    %c896 = arith.constant 896 : index
    %74 = vector.load %arg13[%c0_46, %c896] : memref<512x1152xf32, #tpu.memory_space<vmem>>, vector<512x128xf32>
    tpu.vector_store %arg13[%c0_46, %c896], %73 {strides = array<i32>} : memref<512x1152xf32, #tpu.memory_space<vmem>>, vector<512x128xf32>,
    %c41 = arith.constant 41 : index
    %c0_47 = arith.constant 0 : index
    %75 = vector.load %arg12[%c41, %c0_47] : memref<560x128xf32, #tpu.memory_space<vmem>>, vector<512x128xf32>
    %c0_48 = arith.constant 0 : index
    %c8_49 = arith.constant 8 : index
    %76 = vector.load %arg1[%c0_48, %c8_49] : memref<512x9xf32, #tpu.memory_space<vmem>>, vector<512x1xf32>
    %77 = vector.broadcast %76 : vector<512x1xf32> to vector<512x128xf32>
    %78 = arith.mulf %75, %77 : vector<512x128xf32>
    %c0_50 = arith.constant 0 : index
    %c1024 = arith.constant 1024 : index
    %79 = vector.load %arg13[%c0_50, %c1024] : memref<512x1152xf32, #tpu.memory_space<vmem>>, vector<512x128xf32>
    tpu.vector_store %arg13[%c0_50, %c1024], %78 {strides = array<i32>} : memref<512x1152xf32, #tpu.memory_space<vmem>>, vector<512x128xf32>,
    %c0_51 = arith.constant 0 : index
    %c0_52 = arith.constant 0 : index
    %80 = vector.load %arg13[%c0_51, %c0_52] : memref<512x1152xf32, #tpu.memory_space<vmem>>, vector<512x1152xf32>
    %c0_53 = arith.constant 0 : index
    %c0_54 = arith.constant 0 : index
    %81 = vector.load %arg5[%c0_53, %c0_54] : memref<1152x128xf32, #tpu.memory_space<vmem>>, vector<1152x128xf32>
    %cst_55 = arith.constant dense<0.000000e+00> : vector<512x128xf32>
    %82 = tpu.matmul %80, %81, %cst_55 {dimension_numbers = #tpu.dot_dimension_numbers<[1], [0], [0], [1], [0, 0, 1, 1], [], []>} : vector<512x1152xf32>, vector<1152x128xf32>, vector<512x128xf32> -> vector<512x128xf32>
    %c0_56 = arith.constant 0 : index
    %c0_57 = arith.constant 0 : index
    %83 = vector.load %arg6[%c0_56, %c0_57] : memref<1x128xf32, #tpu.memory_space<vmem>>, vector<1x128xf32>
    %c0_58 = arith.constant 0 : index
    %c0_59 = arith.constant 0 : index
    %84 = vector.load %arg7[%c0_58, %c0_59] : memref<1x128xf32, #tpu.memory_space<vmem>>, vector<1x128xf32>
    %cst_60 = arith.constant dense<0.000000e+00> : vector<128xf32>
    %85 = vector.multi_reduction <add>, %82, %cst_60 [0] : vector<512x128xf32> to vector<128xf32>
    %86 = vector.shape_cast %85 : vector<128xf32> to vector<1x128xf32>
    %cst_61 = arith.constant 0.001953125 : f32
    %87 = vector.broadcast %cst_61 : f32 to vector<1x128xf32>
    %88 = arith.mulf %86, %87 : vector<1x128xf32>
    %89 = vector.broadcast %88 : vector<1x128xf32> to vector<512x128xf32>
    %90 = arith.subf %82, %89 : vector<512x128xf32>
    %91 = arith.mulf %90, %90 : vector<512x128xf32>
    %cst_62 = arith.constant dense<0.000000e+00> : vector<128xf32>
    %92 = vector.multi_reduction <add>, %91, %cst_62 [0] : vector<512x128xf32> to vector<128xf32>
    %93 = vector.shape_cast %92 : vector<128xf32> to vector<1x128xf32>
    %cst_63 = arith.constant 0.001953125 : f32
    %94 = vector.broadcast %cst_63 : f32 to vector<1x128xf32>
    %95 = arith.mulf %93, %94 : vector<1x128xf32>
    %cst_64 = arith.constant 9.99999974E-6 : f32
    %96 = vector.broadcast %cst_64 : f32 to vector<1x128xf32>
    %97 = arith.addf %95, %96 : vector<1x128xf32>
    %98 = math.rsqrt %97 : vector<1x128xf32>
    %99 = arith.mulf %83, %98 : vector<1x128xf32>
    %100 = arith.mulf %88, %99 : vector<1x128xf32>
    %101 = arith.subf %84, %100 : vector<1x128xf32>
    %102 = vector.broadcast %99 : vector<1x128xf32> to vector<512x128xf32>
    %103 = arith.mulf %82, %102 : vector<512x128xf32>
    %104 = vector.broadcast %101 : vector<1x128xf32> to vector<512x128xf32>
    %105 = arith.addf %103, %104 : vector<512x128xf32>
    %cst_65 = arith.constant 0.000000e+00 : f32
    %106 = vector.broadcast %cst_65 : f32 to vector<512x128xf32>
    %107 = arith.maximumf %105, %106 : vector<512x128xf32>
    %c0_66 = arith.constant 0 : index
    %c0_67 = arith.constant 0 : index
    %108 = vector.load %arg8[%c0_66, %c0_67] : memref<128x128xf32, #tpu.memory_space<vmem>>, vector<128x128xf32>
    %cst_68 = arith.constant dense<0.000000e+00> : vector<512x128xf32>
    %109 = tpu.matmul %107, %108, %cst_68 {dimension_numbers = #tpu.dot_dimension_numbers<[1], [0], [0], [1], [0, 0, 1, 1], [], []>} : vector<512x128xf32>, vector<128x128xf32>, vector<512x128xf32> -> vector<512x128xf32>
    %c0_69 = arith.constant 0 : index
    %c0_70 = arith.constant 0 : index
    %110 = vector.load %arg9[%c0_69, %c0_70] : memref<1x128xf32, #tpu.memory_space<vmem>>, vector<1x128xf32>
    %c0_71 = arith.constant 0 : index
    %c0_72 = arith.constant 0 : index
    %111 = vector.load %arg10[%c0_71, %c0_72] : memref<1x128xf32, #tpu.memory_space<vmem>>, vector<1x128xf32>
    %cst_73 = arith.constant dense<0.000000e+00> : vector<128xf32>
    %112 = vector.multi_reduction <add>, %109, %cst_73 [0] : vector<512x128xf32> to vector<128xf32>
    %113 = vector.shape_cast %112 : vector<128xf32> to vector<1x128xf32>
    %cst_74 = arith.constant 0.001953125 : f32
    %114 = vector.broadcast %cst_74 : f32 to vector<1x128xf32>
    %115 = arith.mulf %113, %114 : vector<1x128xf32>
    %116 = vector.broadcast %115 : vector<1x128xf32> to vector<512x128xf32>
    %117 = arith.subf %109, %116 : vector<512x128xf32>
    %118 = arith.mulf %117, %117 : vector<512x128xf32>
    %cst_75 = arith.constant dense<0.000000e+00> : vector<128xf32>
    %119 = vector.multi_reduction <add>, %118, %cst_75 [0] : vector<512x128xf32> to vector<128xf32>
    %120 = vector.shape_cast %119 : vector<128xf32> to vector<1x128xf32>
    %cst_76 = arith.constant 0.001953125 : f32
    %121 = vector.broadcast %cst_76 : f32 to vector<1x128xf32>
    %122 = arith.mulf %120, %121 : vector<1x128xf32>
    %cst_77 = arith.constant 9.99999974E-6 : f32
    %123 = vector.broadcast %cst_77 : f32 to vector<1x128xf32>
    %124 = arith.addf %122, %123 : vector<1x128xf32>
    %125 = math.rsqrt %124 : vector<1x128xf32>
    %126 = arith.mulf %110, %125 : vector<1x128xf32>
    %127 = arith.mulf %115, %126 : vector<1x128xf32>
    %128 = arith.subf %111, %127 : vector<1x128xf32>
    %129 = vector.broadcast %126 : vector<1x128xf32> to vector<512x128xf32>
    %130 = arith.mulf %109, %129 : vector<512x128xf32>
    %131 = vector.broadcast %128 : vector<1x128xf32> to vector<512x128xf32>
    %132 = arith.addf %130, %131 : vector<512x128xf32>
    %133 = arith.addf %132, %29 : vector<512x128xf32>
    %cst_78 = arith.constant 0.000000e+00 : f32
    %134 = vector.broadcast %cst_78 : f32 to vector<512x128xf32>
    %135 = arith.maximumf %133, %134 : vector<512x128xf32>
    %c0_79 = arith.constant 0 : index
    %c0_80 = arith.constant 0 : index
    %136 = vector.load %arg11[%c0_79, %c0_80] : memref<512x128xf32, #tpu.memory_space<vmem>>, vector<512x128xf32>
    tpu.vector_store %arg11[%c0_79, %c0_80], %135 {strides = array<i32>} : memref<512x128xf32, #tpu.memory_space<vmem>>, vector<512x128xf32>,
    return
  }
}

</mosaic_0001>

<llo_original>
// kernel: bottleneck_block.1
$region0: #{bottleneck_block.1}
  #allocation0 [shape = 'u32[]', space=smem, size = 0x4, offset = 0x4, fixed_abs, tag = 'smem constant byte address 0x4 - core index']
  #allocation1 [shape = 'u32[144,128]{1,0:T(1,128)}', space=vmem, size = 0x12000, scoped, tag = 'internal scratch']
  #allocation2 [shape = 'f32[560,128]{1,0:T(8,128)}', space=vmem, size = 0x46000, scoped, tag = 'scratch operand']
  #allocation3 [shape = 'f32[512,1152]{1,0:T(8,128)}', space=vmem, size = 0x240000, scoped, tag = 'scratch operand']
  %s0 = inlined_call_operand.vmem [shape: f32[512,128], index: 0, kind: input, shape index: {}]
  %s1 = inlined_call_operand.vmem [shape: f32[512,9], index: 1, kind: input, shape index: {}]
  %s2 = inlined_call_operand.vmem [shape: f32[128,256], index: 2, kind: input, shape index: {}]
  %s3 = inlined_call_operand.vmem [shape: f32[1,256], index: 3, kind: input, shape index: {}]
  %s4 = inlined_call_operand.vmem [shape: f32[1,256], index: 4, kind: input, shape index: {}]
  %s5 = inlined_call_operand.vmem [shape: f32[1152,128], index: 5, kind: input, shape index: {}]
  %s6 = inlined_call_operand.vmem [shape: f32[1,128], index: 6, kind: input, shape index: {}]
  %s7 = inlined_call_operand.vmem [shape: f32[1,128], index: 7, kind: input, shape index: {}]
  %s8 = inlined_call_operand.vmem [shape: f32[128,128], index: 8, kind: input, shape index: {}]
  %s9 = inlined_call_operand.vmem [shape: f32[1,128], index: 9, kind: input, shape index: {}]
  %s10 = inlined_call_operand.vmem [shape: f32[1,128], index: 10, kind: input, shape index: {}]
  %s11 = inlined_call_operand.vmem [shape: f32[512,128], index: 11, kind: output, shape index: {}]
  %s12 = sld [smem:[#allocation0]]
  $region54: #{bottleneck_block.1} parent=0
    _
  %s14 = ssub.s32 1, %s12
  %s15 = scalar_select 0, %s14, %s12
  // Predicated region
  $region2: #{bottleneck_block.1} parent=0 // pred_check
    _
  $region3: #{bottleneck_block.1} parent=0 // pred_check_branch
    %17 = sbr.rel (0) target = $region5
  $region4: #{bottleneck_block.1} parent=0 // pred_region
    _
  $region5: #{bottleneck_block.1} parent=0 // pred_fallthru
    _
  // Predicated region
  $region6: #{bottleneck_block.1} parent=0 // pred_check
    _
  $region7: #{bottleneck_block.1} parent=0 // pred_check_branch
    %19 = sbr.rel (0) target = $region9
  $region8: #{bottleneck_block.1} parent=0 // pred_region
    _
  $region9: #{bottleneck_block.1} parent=0 // pred_fallthru
    _
  // Predicated region
  $region10: #{bottleneck_block.1} parent=0 // pred_check
    _
  $region11: #{bottleneck_block.1} parent=0 // pred_check_branch
    %21 = sbr.rel (0) target = $region13
  $region12: #{bottleneck_block.1} parent=0 // pred_region
    _
  $region13: #{bottleneck_block.1} parent=0 // pred_fallthru
    _
  // Predicated region
  $region14: #{bottleneck_block.1} parent=0 // pred_check
    _
  $region15: #{bottleneck_block.1} parent=0 // pred_check_branch
    %23 = sbr.rel (0) target = $region17
  $region16: #{bottleneck_block.1} parent=0 // pred_region
    _
  $region17: #{bottleneck_block.1} parent=0 // pred_fallthru
    _
  // Predicated region
  $region18: #{bottleneck_block.1} parent=0 // pred_check
    _
  $region19: #{bottleneck_block.1} parent=0 // pred_check_branch
    %25 = sbr.rel (0) target = $region21
  $region20: #{bottleneck_block.1} parent=0 // pred_region
    _
  $region21: #{bottleneck_block.1} parent=0 // pred_fallthru
    _
  // Predicated region
  $region22: #{bottleneck_block.1} parent=0 // pred_check
    _
  $region23: #{bottleneck_block.1} parent=0 // pred_check_branch
    %27 = sbr.rel (0) target = $region25
  $region24: #{bottleneck_block.1} parent=0 // pred_region
    _
  $region25: #{bottleneck_block.1} parent=0 // pred_fallthru
    _
  // Predicated region
  $region26: #{bottleneck_block.1} parent=0 // pred_check
    _
  $region27: #{bottleneck_block.1} parent=0 // pred_check_branch
    %29 = sbr.rel (0) target = $region29
  $region28: #{bottleneck_block.1} parent=0 // pred_region
    _
  $region29: #{bottleneck_block.1} parent=0 // pred_fallthru
    _
  // Predicated region
  $region30: #{bottleneck_block.1} parent=0 // pred_check
    _
  $region31: #{bottleneck_block.1} parent=0 // pred_check_branch
    %31 = sbr.rel (0) target = $region33
  $region32: #{bottleneck_block.1} parent=0 // pred_region
    _
  $region33: #{bottleneck_block.1} parent=0 // pred_fallthru
    _
  // Predicated region
  $region34: #{bottleneck_block.1} parent=0 // pred_check
    _
  $region35: #{bottleneck_block.1} parent=0 // pred_check_branch
    %33 = sbr.rel (0) target = $region37
  $region36: #{bottleneck_block.1} parent=0 // pred_region
    _
  $region37: #{bottleneck_block.1} parent=0 // pred_fallthru
    _
  // Predicated region
  $region38: #{bottleneck_block.1} parent=0 // pred_check
    _
  $region39: #{bottleneck_block.1} parent=0 // pred_check_branch
    %35 = sbr.rel (0) target = $region41
  $region40: #{bottleneck_block.1} parent=0 // pred_region
    _
  $region41: #{bottleneck_block.1} parent=0 // pred_fallthru
    _
  // Predicated region
  $region42: #{bottleneck_block.1} parent=0 // pred_check
    _
  $region43: #{bottleneck_block.1} parent=0 // pred_check_branch
    %37 = sbr.rel (0) target = $region45
  $region44: #{bottleneck_block.1} parent=0 // pred_region
    _
  $region45: #{bottleneck_block.1} parent=0 // pred_fallthru
    _
  %v38 = vld [vmem:[%s0] sm:$0xff]
  %v39 = vld [vmem:[%s0 + $0x8] sm:$0xff]
  %v40 = vld [vmem:[%s0 + $0x10] sm:$0xff]
  %v41 = vld [vmem:[%s0 + $0x18] sm:$0xff]
  %v42 = vld [vmem:[%s0 + $0x20] sm:$0xff]
  %v43 = vld [vmem:[%s0 + $0x28] sm:$0xff]
  %v44 = vld [vmem:[%s0 + $0x30] sm:$0xff]
  %v45 = vld [vmem:[%s0 + $0x38] sm:$0xff]
  %v46 = vld [vmem:[%s0 + $0x40] sm:$0xff]
  %v47 = vld [vmem:[%s0 + $0x48] sm:$0xff]
  %v48 = vld [vmem:[%s0 + $0x50] sm:$0xff]
  %v49 = vld [vmem:[%s0 + $0x58] sm:$0xff]
  %v50 = vld [vmem:[%s0 + $0x60] sm:$0xff]
  %v51 = vld [vmem:[%s0 + $0x68] sm:$0xff]
  %v52 = vld [vmem:[%s0 + $0x70] sm:$0xff]
  %v53 = vld [vmem:[%s0 + $0x78] sm:$0xff]
  %v54 = vld [vmem:[%s0 + $0x80] sm:$0xff]
  %v55 = vld [vmem:[%s0 + $0x88] sm:$0xff]
  %v56 = vld [vmem:[%s0 + $0x90] sm:$0xff]
  %v57 = vld [vmem:[%s0 + $0x98] sm:$0xff]
  %v58 = vld [vmem:[%s0 + $0xa0] sm:$0xff]
  %v59 = vld [vmem:[%s0 + $0xa8] sm:$0xff]
  %v60 = vld [vmem:[%s0 + $0xb0] sm:$0xff]
  %v61 = vld [vmem:[%s0 + $0xb8] sm:$0xff]
  %v62 = vld [vmem:[%s0 + $0xc0] sm:$0xff]
  %v63 = vld [vmem:[%s0 + $0xc8] sm:$0xff]
  %v64 = vld [vmem:[%s0 + $0xd0] sm:$0xff]
  %v65 = vld [vmem:[%s0 + $0xd8] sm:$0xff]
  %v66 = vld [vmem:[%s0 + $0xe0] sm:$0xff]
  %v67 = vld [vmem:[%s0 + $0xe8] sm:$0xff]
  %v68 = vld [vmem:[%s0 + $0xf0] sm:$0xff]
  %v69 = vld [vmem:[%s0 + $0xf8] sm:$0xff]
  %v70 = vld [vmem:[%s0 + $0x100] sm:$0xff]
  %v71 = vld [vmem:[%s0 + $0x108] sm:$0xff]
  %v72 = vld [vmem:[%s0 + $0x110] sm:$0xff]
  %v73 = vld [vmem:[%s0 + $0x118] sm:$0xff]
  %v74 = vld [vmem:[%s0 + $0x120] sm:$0xff]
  %v75 = vld [vmem:[%s0 + $0x128] sm:$0xff]
  %v76 = vld [vmem:[%s0 + $0x130] sm:$0xff]
  %v77 = vld [vmem:[%s0 + $0x138] sm:$0xff]
  %v78 = vld [vmem:[%s0 + $0x140] sm:$0xff]
  %v79 = vld [vmem:[%s0 + $0x148] sm:$0xff]
  %v80 = vld [vmem:[%s0 + $0x150] sm:$0xff]
  %v81 = vld [vmem:[%s0 + $0x158] sm:$0xff]
  %v82 = vld [vmem:[%s0 + $0x160] sm:$0xff]
  %v83 = vld [vmem:[%s0 + $0x168] sm:$0xff]
  %v84 = vld [vmem:[%s0 + $0x170] sm:$0xff]
  %v85 = vld [vmem:[%s0 + $0x178] sm:$0xff]
  %v86 = vld [vmem:[%s0 + $0x180] sm:$0xff]
  %v87 = vld [vmem:[%s0 + $0x188] sm:$0xff]
  %v88 = vld [vmem:[%s0 + $0x190] sm:$0xff]
  %v89 = vld [vmem:[%s0 + $0x198] sm:$0xff]
  %v90 = vld [vmem:[%s0 + $0x1a0] sm:$0xff]
  %v91 = vld [vmem:[%s0 + $0x1a8] sm:$0xff]
  %v92 = vld [vmem:[%s0 + $0x1b0] sm:$0xff]
  %v93 = vld [vmem:[%s0 + $0x1b8] sm:$0xff]
  %v94 = vld [vmem:[%s0 + $0x1c0] sm:$0xff]
  %v95 = vld [vmem:[%s0 + $0x1c8] sm:$0xff]
  %v96 = vld [vmem:[%s0 + $0x1d0] sm:$0xff]
  %v97 = vld [vmem:[%s0 + $0x1d8] sm:$0xff]
  %v98 = vld [vmem:[%s0 + $0x1e0] sm:$0xff]
  %v99 = vld [vmem:[%s0 + $0x1e8] sm:$0xff]
  %v100 = vld [vmem:[%s0 + $0x1f0] sm:$0xff]
  %v101 = vld [vmem:[%s0 + $0x1f8] sm:$0xff]
  %v102 = vld [vmem:[%s2] sm:$0xff]
  %v103 = vld [vmem:[%s2 + $0x8] sm:$0xff]
  %v104 = vld [vmem:[%s2 + $0x10] sm:$0xff]
  %v105 = vld [vmem:[%s2 + $0x18] sm:$0xff]
  %v106 = vld [vmem:[%s2 + $0x20] sm:$0xff]
  %v107 = vld [vmem:[%s2 + $0x28] sm:$0xff]
  %v108 = vld [vmem:[%s2 + $0x30] sm:$0xff]
  %v109 = vld [vmem:[%s2 + $0x38] sm:$0xff]
  %v110 = vld [vmem:[%s2 + $0x40] sm:$0xff]
  %v111 = vld [vmem:[%s2 + $0x48] sm:$0xff]
  %v112 = vld [vmem:[%s2 + $0x50] sm:$0xff]
  %v113 = vld [vmem:[%s2 + $0x58] sm:$0xff]
  %v114 = vld [vmem:[%s2 + $0x60] sm:$0xff]
  %v115 = vld [vmem:[%s2 + $0x68] sm:$0xff]
  %v116 = vld [vmem:[%s2 + $0x70] sm:$0xff]
  %v117 = vld [vmem:[%s2 + $0x78] sm:$0xff]
  %v118 = vld [vmem:[%s2 + $0x80] sm:$0xff]
  %v119 = vld [vmem:[%s2 + $0x88] sm:$0xff]
  %v120 = vld [vmem:[%s2 + $0x90] sm:$0xff]
  %v121 = vld [vmem:[%s2 + $0x98] sm:$0xff]
  %v122 = vld [vmem:[%s2 + $0xa0] sm:$0xff]
  %v123 = vld [vmem:[%s2 + $0xa8] sm:$0xff]
  %v124 = vld [vmem:[%s2 + $0xb0] sm:$0xff]
  %v125 = vld [vmem:[%s2 + $0xb8] sm:$0xff]
  %v126 = vld [vmem:[%s2 + $0xc0] sm:$0xff]
  %v127 = vld [vmem:[%s2 + $0xc8] sm:$0xff]
  %v128 = vld [vmem:[%s2 + $0xd0] sm:$0xff]
  %v129 = vld [vmem:[%s2 + $0xd8] sm:$0xff]
  %v130 = vld [vmem:[%s2 + $0xe0] sm:$0xff]
  %v131 = vld [vmem:[%s2 + $0xe8] sm:$0xff]
  %v132 = vld [vmem:[%s2 + $0xf0] sm:$0xff]
  %v133 = vld [vmem:[%s2 + $0xf8] sm:$0xff]
  %134 = vmatprep.subr.mxu0 %v133
  %135 = vmatpush1.msra.mxu0 %v132
  %136 = vmatprep.subr.mxu0 %v131
  %137 = vmatpush1.msra.mxu0 %v130
  %138 = vmatprep.subr.mxu0 %v129
  %139 = vmatpush1.msra.mxu0 %v128
  %140 = vmatprep.subr.mxu0 %v127
  %141 = vmatpush1.msra.mxu0 %v126
  %142 = vmatprep.subr.mxu0 %v125
  %143 = vmatpush1.msra.mxu0 %v124
  %144 = vmatprep.subr.mxu0 %v123
  %145 = vmatpush1.msra.mxu0 %v122
  %146 = vmatprep.subr.mxu0 %v121
  %147 = vmatpush1.msra.mxu0 %v120
  %148 = vmatprep.subr.mxu0 %v119
  %149 = vmatpush1.msra.mxu0 %v118
  %150 = vmatprep.subr.mxu0 %v117
  %151 = vmatpush1.msra.mxu0 %v116
  %152 = vmatprep.subr.mxu0 %v115
  %153 = vmatpush1.msra.mxu0 %v114
  %154 = vmatprep.subr.mxu0 %v113
  %155 = vmatpush1.msra.mxu0 %v112
  %156 = vmatprep.subr.mxu0 %v111
  %157 = vmatpush1.msra.mxu0 %v110
  %158 = vmatprep.subr.mxu0 %v109
  %159 = vmatpush1.msra.mxu0 %v108
  %160 = vmatprep.subr.mxu0 %v107
  %161 = vmatpush1.msra.mxu0 %v106
  %162 = vmatprep.subr.mxu0 %v105
  %163 = vmatpush1.msra.mxu0 %v104
  %164 = vmatprep.subr.mxu0 %v103
  %165 = vmatpush1.msra.mxu0 %v102
  %166 = vmatprep.subr.mxu0 0.0
  %167 = vmatpush2.msra.mxu0 0.0
  %168 = vmatprep.subr.mxu0 0.0
  %169 = vmatpush2.msra.mxu0 0.0
  %170 = vmatprep.subr.mxu0 0.0
  %171 = vmatpush2.msra.mxu0 0.0
  %172 = vmatprep.subr.mxu0 0.0
  %173 = vmatpush2.msra.mxu0 0.0
  %174 = vmatprep.subr.mxu0 0.0
  %175 = vmatpush2.msra.mxu0 0.0
  %176 = vmatprep.subr.mxu0 0.0
  %177 = vmatpush2.msra.mxu0 0.0
  %178 = vmatprep.subr.mxu0 0.0
  %179 = vmatpush2.msra.mxu0 0.0
  %180 = vmatprep.subr.mxu0 0.0
  %181 = vmatpush2.msra.mxu0 0.0
  %182 = vmatprep.subr.mxu0 0.0
  %183 = vmatpush2.msra.mxu0 0.0
  %184 = vmatprep.subr.mxu0 0.0
  %185 = vmatpush2.msra.mxu0 0.0
  %186 = vmatprep.subr.mxu0 0.0
  %187 = vmatpush2.msra.mxu0 0.0
  %188 = vmatprep.subr.mxu0 0.0
  %189 = vmatpush2.msra.mxu0 0.0
  %190 = vmatprep.subr.mxu0 0.0
  %191 = vmatpush2.msra.mxu0 0.0
  %192 = vmatprep.subr.mxu0 0.0
  %193 = vmatpush2.msra.mxu0 0.0
  %194 = vmatprep.subr.mxu0 0.0
  %195 = vmatpush2.msra.mxu0 0.0
  %196 = vmatprep.subr.mxu0 0.0
  %197 = vmatpush2.msra.mxu0 0.0
  %198 = vmatprep.mubr.f32.mxu0 0.0
  %199 = vmatmul.mubr.f32.gmra.mxu0 %v38
  %v200 = vpop.f32.mrf.mxu0
  %v201 = vadd.f32 0.0, %v200
  %v202 = vpop.f32.mrf.mxu0
  %v203 = vadd.f32 0.0, %v202
  %204 = vmatprep.mubr.f32.mxu0 0.0
  %205 = vmatmul.mubr.f32.gmra.mxu0 %v39
  %v206 = vpop.f32.mrf.mxu0
  %v207 = vadd.f32 0.0, %v206
  %v208 = vpop.f32.mrf.mxu0
  %v209 = vadd.f32 0.0, %v208
  %210 = vmatprep.mubr.f32.mxu0 0.0
  %211 = vmatmul.mubr.f32.gmra.mxu0 %v40
  %v212 = vpop.f32.mrf.mxu0
  %v213 = vadd.f32 0.0, %v212
  %v214 = vpop.f32.mrf.mxu0
  %v215 = vadd.f32 0.0, %v214
  %216 = vmatprep.mubr.f32.mxu0 0.0
  %217 = vmatmul.mubr.f32.gmra.mxu0 %v41
  %v218 = vpop.f32.mrf.mxu0
  %v219 = vadd.f32 0.0, %v218
  %v220 = vpop.f32.mrf.mxu0
  %v221 = vadd.f32 0.0, %v220
  %222 = vmatprep.mubr.f32.mxu0 0.0
  %223 = vmatmul.mubr.f32.gmra.mxu0 %v42
  %v224 = vpop.f32.mrf.mxu0
  %v225 = vadd.f32 0.0, %v224
  %v226 = vpop.f32.mrf.mxu0
  %v227 = vadd.f32 0.0, %v226
  %228 = vmatprep.mubr.f32.mxu0 0.0
  %229 = vmatmul.mubr.f32.gmra.mxu0 %v43
  %v230 = vpop.f32.mrf.mxu0
  %v231 = vadd.f32 0.0, %v230
  %v232 = vpop.f32.mrf.mxu0
  %v233 = vadd.f32 0.0, %v232
  %234 = vmatprep.mubr.f32.mxu0 0.0
  %235 = vmatmul.mubr.f32.gmra.mxu0 %v44
  %v236 = vpop.f32.mrf.mxu0
  %v237 = vadd.f32 0.0, %v236
  %v238 = vpop.f32.mrf.mxu0
  %v239 = vadd.f32 0.0, %v238
  %240 = vmatprep.mubr.f32.mxu0 0.0
  %241 = vmatmul.mubr.f32.gmra.mxu0 %v45
  %v242 = vpop.f32.mrf.mxu0
  %v243 = vadd.f32 0.0, %v242
  %v244 = vpop.f32.mrf.mxu0
  %v245 = vadd.f32 0.0, %v244
  %246 = vmatprep.mubr.f32.mxu0 0.0
  %247 = vmatmul.mubr.f32.gmra.mxu0 %v46
  %v248 = vpop.f32.mrf.mxu0
  %v249 = vadd.f32 0.0, %v248
  %v250 = vpop.f32.mrf.mxu0
  %v251 = vadd.f32 0.0, %v250
  %252 = vmatprep.mubr.f32.mxu0 0.0
  %253 = vmatmul.mubr.f32.gmra.mxu0 %v47
  %v254 = vpop.f32.mrf.mxu0
  %v255 = vadd.f32 0.0, %v254
  %v256 = vpop.f32.mrf.mxu0
  %v257 = vadd.f32 0.0, %v256
  %258 = vmatprep.mubr.f32.mxu0 0.0
  %259 = vmatmul.mubr.f32.gmra.mxu0 %v48
  %v260 = vpop.f32.mrf.mxu0
  %v261 = vadd.f32 0.0, %v260
  %v262 = vpop.f32.mrf.mxu0
  %v263 = vadd.f32 0.0, %v262
  %264 = vmatprep.mubr.f32.mxu0 0.0
  %265 = vmatmul.mubr.f32.gmra.mxu0 %v49
  %v266 = vpop.f32.mrf.mxu0
  %v267 = vadd.f32 0.0, %v266
  %v268 = vpop.f32.mrf.mxu0
  %v269 = vadd.f32 0.0, %v268
  %270 = vmatprep.mubr.f32.mxu0 0.0
  %271 = vmatmul.mubr.f32.gmra.mxu0 %v50
  %v272 = vpop.f32.mrf.mxu0
  %v273 = vadd.f32 0.0, %v272
  %v274 = vpop.f32.mrf.mxu0
  %v275 = vadd.f32 0.0, %v274
  %276 = vmatprep.mubr.f32.mxu0 0.0
  %277 = vmatmul.mubr.f32.gmra.mxu0 %v51
  %v278 = vpop.f32.mrf.mxu0
  %v279 = vadd.f32 0.0, %v278
  %v280 = vpop.f32.mrf.mxu0
  %v281 = vadd.f32 0.0, %v280
  %282 = vmatprep.mubr.f32.mxu0 0.0
  %283 = vmatmul.mubr.f32.gmra.mxu0 %v52
  %v284 = vpop.f32.mrf.mxu0
  %v285 = vadd.f32 0.0, %v284
  %v286 = vpop.f32.mrf.mxu0
  %v287 = vadd.f32 0.0, %v286
  %288 = vmatprep.mubr.f32.mxu0 0.0
  %289 = vmatmul.mubr.f32.gmra.mxu0 %v53
  %v290 = vpop.f32.mrf.mxu0
  %v291 = vadd.f32 0.0, %v290
  %v292 = vpop.f32.mrf.mxu0
  %v293 = vadd.f32 0.0, %v292
  %294 = vmatprep.mubr.f32.mxu0 0.0
  %295 = vmatmul.mubr.f32.gmra.mxu0 %v54
  %v296 = vpop.f32.mrf.mxu0
  %v297 = vadd.f32 0.0, %v296
  %v298 = vpop.f32.mrf.mxu0
  %v299 = vadd.f32 0.0, %v298
  %300 = vmatprep.mubr.f32.mxu0 0.0
  %301 = vmatmul.mubr.f32.gmra.mxu0 %v55
  %v302 = vpop.f32.mrf.mxu0
  %v303 = vadd.f32 0.0, %v302
  %v304 = vpop.f32.mrf.mxu0
  %v305 = vadd.f32 0.0, %v304
  %306 = vmatprep.mubr.f32.mxu0 0.0
  %307 = vmatmul.mubr.f32.gmra.mxu0 %v56
  %v308 = vpop.f32.mrf.mxu0
  %v309 = vadd.f32 0.0, %v308
  %v310 = vpop.f32.mrf.mxu0
  %v311 = vadd.f32 0.0, %v310
  %312 = vmatprep.mubr.f32.mxu0 0.0
  %313 = vmatmul.mubr.f32.gmra.mxu0 %v57
  %v314 = vpop.f32.mrf.mxu0
  %v315 = vadd.f32 0.0, %v314
  %v316 = vpop.f32.mrf.mxu0
  %v317 = vadd.f32 0.0, %v316
  %318 = vmatprep.mubr.f32.mxu0 0.0
  %319 = vmatmul.mubr.f32.gmra.mxu0 %v58
  %v320 = vpop.f32.mrf.mxu0
  %v321 = vadd.f32 0.0, %v320
  %v322 = vpop.f32.mrf.mxu0
  %v323 = vadd.f32 0.0, %v322
  %324 = vmatprep.mubr.f32.mxu0 0.0
  %325 = vmatmul.mubr.f32.gmra.mxu0 %v59
  %v326 = vpop.f32.mrf.mxu0
  %v327 = vadd.f32 0.0, %v326
  %v328 = vpop.f32.mrf.mxu0
  %v329 = vadd.f32 0.0, %v328
  %330 = vmatprep.mubr.f32.mxu0 0.0
  %331 = vmatmul.mubr.f32.gmra.mxu0 %v60
  %v332 = vpop.f32.mrf.mxu0
  %v333 = vadd.f32 0.0, %v332
  %v334 = vpop.f32.mrf.mxu0
  %v335 = vadd.f32 0.0, %v334
  %336 = vmatprep.mubr.f32.mxu0 0.0
  %337 = vmatmul.mubr.f32.gmra.mxu0 %v61
  %v338 = vpop.f32.mrf.mxu0
  %v339 = vadd.f32 0.0, %v338
  %v340 = vpop.f32.mrf.mxu0
  %v341 = vadd.f32 0.0, %v340
  %342 = vmatprep.mubr.f32.mxu0 0.0
  %343 = vmatmul.mubr.f32.gmra.mxu0 %v62
  %v344 = vpop.f32.mrf.mxu0
  %v345 = vadd.f32 0.0, %v344
  %v346 = vpop.f32.mrf.mxu0
  %v347 = vadd.f32 0.0, %v346
  %348 = vmatprep.mubr.f32.mxu0 0.0
  %349 = vmatmul.mubr.f32.gmra.mxu0 %v63
  %v350 = vpop.f32.mrf.mxu0
  %v351 = vadd.f32 0.0, %v350
  %v352 = vpop.f32.mrf.mxu0
  %v353 = vadd.f32 0.0, %v352
  %354 = vmatprep.mubr.f32.mxu0 0.0
  %355 = vmatmul.mubr.f32.gmra.mxu0 %v64
  %v356 = vpop.f32.mrf.mxu0
  %v357 = vadd.f32 0.0, %v356
  %v358 = vpop.f32.mrf.mxu0
  %v359 = vadd.f32 0.0, %v358
  %360 = vmatprep.mubr.f32.mxu0 0.0
  %361 = vmatmul.mubr.f32.gmra.mxu0 %v65
  %v362 = vpop.f32.mrf.mxu0
  %v363 = vadd.f32 0.0, %v362
  %v364 = vpop.f32.mrf.mxu0
  %v365 = vadd.f32 0.0, %v364
  %366 = vmatprep.mubr.f32.mxu0 0.0
  %367 = vmatmul.mubr.f32.gmra.mxu0 %v66
  %v368 = vpop.f32.mrf.mxu0
  %v369 = vadd.f32 0.0, %v368
  %v370 = vpop.f32.mrf.mxu0
  %v371 = vadd.f32 0.0, %v370
  %372 = vmatprep.mubr.f32.mxu0 0.0
  %373 = vmatmul.mubr.f32.gmra.mxu0 %v67
  %v374 = vpop.f32.mrf.mxu0
  %v375 = vadd.f32 0.0, %v374
  %v376 = vpop.f32.mrf.mxu0
  %v377 = vadd.f32 0.0, %v376
  %378 = vmatprep.mubr.f32.mxu0 0.0
  %379 = vmatmul.mubr.f32.gmra.mxu0 %v68
  %v380 = vpop.f32.mrf.mxu0
  %v381 = vadd.f32 0.0, %v380
  %v382 = vpop.f32.mrf.mxu0
  %v383 = vadd.f32 0.0, %v382
  %384 = vmatprep.mubr.f32.mxu0 0.0
  %385 = vmatmul.mubr.f32.gmra.mxu0 %v69
  %v386 = vpop.f32.mrf.mxu0
  %v387 = vadd.f32 0.0, %v386
  %v388 = vpop.f32.mrf.mxu0
  %v389 = vadd.f32 0.0, %v388
  %390 = vmatprep.mubr.f32.mxu0 0.0
  %391 = vmatmul.mubr.f32.gmra.mxu0 %v70
  %v392 = vpop.f32.mrf.mxu0
  %v393 = vadd.f32 0.0, %v392
  %v394 = vpop.f32.mrf.mxu0
  %v395 = vadd.f32 0.0, %v394
  %396 = vmatprep.mubr.f32.mxu0 0.0
  %397 = vmatmul.mubr.f32.gmra.mxu0 %v71
  %v398 = vpop.f32.mrf.mxu0
  %v399 = vadd.f32 0.0, %v398
  %v400 = vpop.f32.mrf.mxu0
  %v401 = vadd.f32 0.0, %v400
  %402 = vmatprep.mubr.f32.mxu0 0.0
  %403 = vmatmul.mubr.f32.gmra.mxu0 %v72
  %v404 = vpop.f32.mrf.mxu0
  %v405 = vadd.f32 0.0, %v404
  %v406 = vpop.f32.mrf.mxu0
  %v407 = vadd.f32 0.0, %v406
  %408 = vmatprep.mubr.f32.mxu0 0.0
  %409 = vmatmul.mubr.f32.gmra.mxu0 %v73
  %v410 = vpop.f32.mrf.mxu0
  %v411 = vadd.f32 0.0, %v410
  %v412 = vpop.f32.mrf.mxu0
  %v413 = vadd.f32 0.0, %v412
  %414 = vmatprep.mubr.f32.mxu0 0.0
  %415 = vmatmul.mubr.f32.gmra.mxu0 %v74
  %v416 = vpop.f32.mrf.mxu0
  %v417 = vadd.f32 0.0, %v416
  %v418 = vpop.f32.mrf.mxu0
  %v419 = vadd.f32 0.0, %v418
  %420 = vmatprep.mubr.f32.mxu0 0.0
  %421 = vmatmul.mubr.f32.gmra.mxu0 %v75
  %v422 = vpop.f32.mrf.mxu0
  %v423 = vadd.f32 0.0, %v422
  %v424 = vpop.f32.mrf.mxu0
  %v425 = vadd.f32 0.0, %v424
  %426 = vmatprep.mubr.f32.mxu0 0.0
  %427 = vmatmul.mubr.f32.gmra.mxu0 %v76
  %v428 = vpop.f32.mrf.mxu0
  %v429 = vadd.f32 0.0, %v428
  %v430 = vpop.f32.mrf.mxu0
  %v431 = vadd.f32 0.0, %v430
  %432 = vmatprep.mubr.f32.mxu0 0.0
  %433 = vmatmul.mubr.f32.gmra.mxu0 %v77
  %v434 = vpop.f32.mrf.mxu0
  %v435 = vadd.f32 0.0, %v434
  %v436 = vpop.f32.mrf.mxu0
  %v437 = vadd.f32 0.0, %v436
  %438 = vmatprep.mubr.f32.mxu0 0.0
  %439 = vmatmul.mubr.f32.gmra.mxu0 %v78
  %v440 = vpop.f32.mrf.mxu0
  %v441 = vadd.f32 0.0, %v440
  %v442 = vpop.f32.mrf.mxu0
  %v443 = vadd.f32 0.0, %v442
  %444 = vmatprep.mubr.f32.mxu0 0.0
  %445 = vmatmul.mubr.f32.gmra.mxu0 %v79
  %v446 = vpop.f32.mrf.mxu0
  %v447 = vadd.f32 0.0, %v446
  %v448 = vpop.f32.mrf.mxu0
  %v449 = vadd.f32 0.0, %v448
  %450 = vmatprep.mubr.f32.mxu0 0.0
  %451 = vmatmul.mubr.f32.gmra.mxu0 %v80
  %v452 = vpop.f32.mrf.mxu0
  %v453 = vadd.f32 0.0, %v452
  %v454 = vpop.f32.mrf.mxu0
  %v455 = vadd.f32 0.0, %v454
  %456 = vmatprep.mubr.f32.mxu0 0.0
  %457 = vmatmul.mubr.f32.gmra.mxu0 %v81
  %v458 = vpop.f32.mrf.mxu0
  %v459 = vadd.f32 0.0, %v458
  %v460 = vpop.f32.mrf.mxu0
  %v461 = vadd.f32 0.0, %v460
  %462 = vmatprep.mubr.f32.mxu0 0.0
  %463 = vmatmul.mubr.f32.gmra.mxu0 %v82
  %v464 = vpop.f32.mrf.mxu0
  %v465 = vadd.f32 0.0, %v464
  %v466 = vpop.f32.mrf.mxu0
  %v467 = vadd.f32 0.0, %v466
  %468 = vmatprep.mubr.f32.mxu0 0.0
  %469 = vmatmul.mubr.f32.gmra.mxu0 %v83
  %v470 = vpop.f32.mrf.mxu0
  %v471 = vadd.f32 0.0, %v470
  %v472 = vpop.f32.mrf.mxu0
  %v473 = vadd.f32 0.0, %v472
  %474 = vmatprep.mubr.f32.mxu0 0.0
  %475 = vmatmul.mubr.f32.gmra.mxu0 %v84
  %v476 = vpop.f32.mrf.mxu0
  %v477 = vadd.f32 0.0, %v476
  %v478 = vpop.f32.mrf.mxu0
  %v479 = vadd.f32 0.0, %v478
  %480 = vmatprep.mubr.f32.mxu0 0.0
  %481 = vmatmul.mubr.f32.gmra.mxu0 %v85
  %v482 = vpop.f32.mrf.mxu0
  %v483 = vadd.f32 0.0, %v482
  %v484 = vpop.f32.mrf.mxu0
  %v485 = vadd.f32 0.0, %v484
  %486 = vmatprep.mubr.f32.mxu0 0.0
  %487 = vmatmul.mubr.f32.gmra.mxu0 %v86
  %v488 = vpop.f32.mrf.mxu0
  %v489 = vadd.f32 0.0, %v488
  %v490 = vpop.f32.mrf.mxu0
  %v491 = vadd.f32 0.0, %v490
  %492 = vmatprep.mubr.f32.mxu0 0.0
  %493 = vmatmul.mubr.f32.gmra.mxu0 %v87
  %v494 = vpop.f32.mrf.mxu0
  %v495 = vadd.f32 0.0, %v494
  %v496 = vpop.f32.mrf.mxu0
  %v497 = vadd.f32 0.0, %v496
  %498 = vmatprep.mubr.f32.mxu0 0.0
  %499 = vmatmul.mubr.f32.gmra.mxu0 %v88
  %v500 = vpop.f32.mrf.mxu0
  %v501 = vadd.f32 0.0, %v500
  %v502 = vpop.f32.mrf.mxu0
  %v503 = vadd.f32 0.0, %v502
  %504 = vmatprep.mubr.f32.mxu0 0.0
  %505 = vmatmul.mubr.f32.gmra.mxu0 %v89
  %v506 = vpop.f32.mrf.mxu0
  %v507 = vadd.f32 0.0, %v506
  %v508 = vpop.f32.mrf.mxu0
  %v509 = vadd.f32 0.0, %v508
  %510 = vmatprep.mubr.f32.mxu0 0.0
  %511 = vmatmul.mubr.f32.gmra.mxu0 %v90
  %v512 = vpop.f32.mrf.mxu0
  %v513 = vadd.f32 0.0, %v512
  %v514 = vpop.f32.mrf.mxu0
  %v515 = vadd.f32 0.0, %v514
  %516 = vmatprep.mubr.f32.mxu0 0.0
  %517 = vmatmul.mubr.f32.gmra.mxu0 %v91
  %v518 = vpop.f32.mrf.mxu0
  %v519 = vadd.f32 0.0, %v518
  %v520 = vpop.f32.mrf.mxu0
  %v521 = vadd.f32 0.0, %v520
  %522 = vmatprep.mubr.f32.mxu0 0.0
  %523 = vmatmul.mubr.f32.gmra.mxu0 %v92
  %v524 = vpop.f32.mrf.mxu0
  %v525 = vadd.f32 0.0, %v524
  %v526 = vpop.f32.mrf.mxu0
  %v527 = vadd.f32 0.0, %v526
  %528 = vmatprep.mubr.f32.mxu0 0.0
  %529 = vmatmul.mubr.f32.gmra.mxu0 %v93
  %v530 = vpop.f32.mrf.mxu0
  %v531 = vadd.f32 0.0, %v530
  %v532 = vpop.f32.mrf.mxu0
  %v533 = vadd.f32 0.0, %v532
  %534 = vmatprep.mubr.f32.mxu0 0.0
  %535 = vmatmul.mubr.f32.gmra.mxu0 %v94
  %v536 = vpop.f32.mrf.mxu0
  %v537 = vadd.f32 0.0, %v536
  %v538 = vpop.f32.mrf.mxu0
  %v539 = vadd.f32 0.0, %v538
  %540 = vmatprep.mubr.f32.mxu0 0.0
  %541 = vmatmul.mubr.f32.gmra.mxu0 %v95
  %v542 = vpop.f32.mrf.mxu0
  %v543 = vadd.f32 0.0, %v542
  %v544 = vpop.f32.mrf.mxu0
  %v545 = vadd.f32 0.0, %v544
  %546 = vmatprep.mubr.f32.mxu0 0.0
  %547 = vmatmul.mubr.f32.gmra.mxu0 %v96
  %v548 = vpop.f32.mrf.mxu0
  %v549 = vadd.f32 0.0, %v548
  %v550 = vpop.f32.mrf.mxu0
  %v551 = vadd.f32 0.0, %v550
  %552 = vmatprep.mubr.f32.mxu0 0.0
  %553 = vmatmul.mubr.f32.gmra.mxu0 %v97
  %v554 = vpop.f32.mrf.mxu0
  %v555 = vadd.f32 0.0, %v554
  %v556 = vpop.f32.mrf.mxu0
  %v557 = vadd.f32 0.0, %v556
  %558 = vmatprep.mubr.f32.mxu0 0.0
  %559 = vmatmul.mubr.f32.gmra.mxu0 %v98
  %v560 = vpop.f32.mrf.mxu0
  %v561 = vadd.f32 0.0, %v560
  %v562 = vpop.f32.mrf.mxu0
  %v563 = vadd.f32 0.0, %v562
  %564 = vmatprep.mubr.f32.mxu0 0.0
  %565 = vmatmul.mubr.f32.gmra.mxu0 %v99
  %v566 = vpop.f32.mrf.mxu0
  %v567 = vadd.f32 0.0, %v566
  %v568 = vpop.f32.mrf.mxu0
  %v569 = vadd.f32 0.0, %v568
  %570 = vmatprep.mubr.f32.mxu0 0.0
  %571 = vmatmul.mubr.f32.gmra.mxu0 %v100
  %v572 = vpop.f32.mrf.mxu0
  %v573 = vadd.f32 0.0, %v572
  %v574 = vpop.f32.mrf.mxu0
  %v575 = vadd.f32 0.0, %v574
  %576 = vmatprep.mubr.f32.mxu0 0.0
  %577 = vmatmul.mubr.f32.gmra.mxu0 %v101
  %v578 = vpop.f32.mrf.mxu0
  %v579 = vadd.f32 0.0, %v578
  %v580 = vpop.f32.mrf.mxu0
  %v581 = vadd.f32 0.0, %v580
  %582 = vdwg.mxu0
  %v583 = vld [vmem:[%s3] sm:$0x3]
  %v584 = vld [vmem:[%s4] sm:$0x3]
  %v585 = vadd.f32 %v201, %v207
  %v586 = vadd.f32 %v585, %v213
  %v587 = vadd.f32 %v586, %v219
  %v588 = vadd.f32 %v587, %v225
  %v589 = vadd.f32 %v588, %v231
  %v590 = vadd.f32 %v589, %v237
  %v591 = vadd.f32 %v590, %v243
  %v592 = vadd.f32 %v591, %v249
  %v593 = vadd.f32 %v592, %v255
  %v594 = vadd.f32 %v593, %v261
  %v595 = vadd.f32 %v594, %v267
  %v596 = vadd.f32 %v595, %v273
  %v597 = vadd.f32 %v596, %v279
  %v598 = vadd.f32 %v597, %v285
  %v599 = vadd.f32 %v598, %v291
  %v600 = vadd.f32 %v599, %v297
  %v601 = vadd.f32 %v600, %v303
  %v602 = vadd.f32 %v601, %v309
  %v603 = vadd.f32 %v602, %v315
  %v604 = vadd.f32 %v603, %v321
  %v605 = vadd.f32 %v604, %v327
  %v606 = vadd.f32 %v605, %v333
  %v607 = vadd.f32 %v606, %v339
  %v608 = vadd.f32 %v607, %v345
  %v609 = vadd.f32 %v608, %v351
  %v610 = vadd.f32 %v609, %v357
  %v611 = vadd.f32 %v610, %v363
  %v612 = vadd.f32 %v611, %v369
  %v613 = vadd.f32 %v612, %v375
  %v614 = vadd.f32 %v613, %v381
  %v615 = vadd.f32 %v614, %v387
  %v616 = vadd.f32 %v615, %v393
  %v617 = vadd.f32 %v616, %v399
  %v618 = vadd.f32 %v617, %v405
  %v619 = vadd.f32 %v618, %v411
  %v620 = vadd.f32 %v619, %v417
  %v621 = vadd.f32 %v620, %v423
  %v622 = vadd.f32 %v621, %v429
  %v623 = vadd.f32 %v622, %v435
  %v624 = vadd.f32 %v623, %v441
  %v625 = vadd.f32 %v624, %v447
  %v626 = vadd.f32 %v625, %v453
  %v627 = vadd.f32 %v626, %v459
  %v628 = vadd.f32 %v627, %v465
  %v629 = vadd.f32 %v628, %v471
  %v630 = vadd.f32 %v629, %v477
  %v631 = vadd.f32 %v630, %v483
  %v632 = vadd.f32 %v631, %v489
  %v633 = vadd.f32 %v632, %v495
  %v634 = vadd.f32 %v633, %v501
  %v635 = vadd.f32 %v634, %v507
  %v636 = vadd.f32 %v635, %v513
  %v637 = vadd.f32 %v636, %v519
  %v638 = vadd.f32 %v637, %v525
  %v639 = vadd.f32 %v638, %v531
  %v640 = vadd.f32 %v639, %v537
  %v641 = vadd.f32 %v640, %v543
  %v642 = vadd.f32 %v641, %v549
  %v643 = vadd.f32 %v642, %v555
  %v644 = vadd.f32 %v643, %v561
  %v645 = vadd.f32 %v644, %v567
  %v646 = vadd.f32 %v645, %v573
  %v647 = vadd.f32 %v646, %v579
  %v648 = vrot.slane %v647, 4
  %v649 = vadd.f32 %v647, %v648
  %v650 = vrot.slane %v649, 2
  %v651 = vadd.f32 %v649, %v650
  %v652 = vrot.slane %v651, 1
  %v653 = vadd.f32 %v651, %v652
  %v654 = vadd.f32 %v203, %v209
  %v655 = vadd.f32 %v654, %v215
  %v656 = vadd.f32 %v655, %v221
  %v657 = vadd.f32 %v656, %v227
  %v658 = vadd.f32 %v657, %v233
  %v659 = vadd.f32 %v658, %v239
  %v660 = vadd.f32 %v659, %v245
  %v661 = vadd.f32 %v660, %v251
  %v662 = vadd.f32 %v661, %v257
  %v663 = vadd.f32 %v662, %v263
  %v664 = vadd.f32 %v663, %v269
  %v665 = vadd.f32 %v664, %v275
  %v666 = vadd.f32 %v665, %v281
  %v667 = vadd.f32 %v666, %v287
  %v668 = vadd.f32 %v667, %v293
  %v669 = vadd.f32 %v668, %v299
  %v670 = vadd.f32 %v669, %v305
  %v671 = vadd.f32 %v670, %v311
  %v672 = vadd.f32 %v671, %v317
  %v673 = vadd.f32 %v672, %v323
  %v674 = vadd.f32 %v673, %v329
  %v675 = vadd.f32 %v674, %v335
  %v676 = vadd.f32 %v675, %v341
  %v677 = vadd.f32 %v676, %v347
  %v678 = vadd.f32 %v677, %v353
  %v679 = vadd.f32 %v678, %v359
  %v680 = vadd.f32 %v679, %v365
  %v681 = vadd.f32 %v680, %v371
  %v682 = vadd.f32 %v681, %v377
  %v683 = vadd.f32 %v682, %v383
  %v684 = vadd.f32 %v683, %v389
  %v685 = vadd.f32 %v684, %v395
  %v686 = vadd.f32 %v685, %v401
  %v687 = vadd.f32 %v686, %v407
  %v688 = vadd.f32 %v687, %v413
  %v689 = vadd.f32 %v688, %v419
  %v690 = vadd.f32 %v689, %v425
  %v691 = vadd.f32 %v690, %v431
  %v692 = vadd.f32 %v691, %v437
  %v693 = vadd.f32 %v692, %v443
  %v694 = vadd.f32 %v693, %v449
  %v695 = vadd.f32 %v694, %v455
  %v696 = vadd.f32 %v695, %v461
  %v697 = vadd.f32 %v696, %v467
  %v698 = vadd.f32 %v697, %v473
  %v699 = vadd.f32 %v698, %v479
  %v700 = vadd.f32 %v699, %v485
  %v701 = vadd.f32 %v700, %v491
  %v702 = vadd.f32 %v701, %v497
  %v703 = vadd.f32 %v702, %v503
  %v704 = vadd.f32 %v703, %v509
  %v705 = vadd.f32 %v704, %v515
  %v706 = vadd.f32 %v705, %v521
  %v707 = vadd.f32 %v706, %v527
  %v708 = vadd.f32 %v707, %v533
  %v709 = vadd.f32 %v708, %v539
  %v710 = vadd.f32 %v709, %v545
  %v711 = vadd.f32 %v710, %v551
  %v712 = vadd.f32 %v711, %v557
  %v713 = vadd.f32 %v712, %v563
  %v714 = vadd.f32 %v713, %v569
  %v715 = vadd.f32 %v714, %v575
  %v716 = vadd.f32 %v715, %v581
  %v717 = vrot.slane %v716, 4
  %v718 = vadd.f32 %v716, %v717
  %v719 = vrot.slane %v718, 2
  %v720 = vadd.f32 %v718, %v719
  %v721 = vrot.slane %v720, 1
  %v722 = vadd.f32 %v720, %v721
  %v723 = vmul.f32 %v653, 0.001953125
  %v724 = vmul.f32 %v722, 0.001953125
  %v725 = vsub.f32 %v201, %v723
  %v726 = vsub.f32 %v203, %v724
  %v727 = vsub.f32 %v207, %v723
  %v728 = vsub.f32 %v209, %v724
  %v729 = vsub.f32 %v213, %v723
  %v730 = vsub.f32 %v215, %v724
  %v731 = vsub.f32 %v219, %v723
  %v732 = vsub.f32 %v221, %v724
  %v733 = vsub.f32 %v225, %v723
  %v734 = vsub.f32 %v227, %v724
  %v735 = vsub.f32 %v231, %v723
  %v736 = vsub.f32 %v233, %v724
  %v737 = vsub.f32 %v237, %v723
  %v738 = vsub.f32 %v239, %v724
  %v739 = vsub.f32 %v243, %v723
  %v740 = vsub.f32 %v245, %v724
  %v741 = vsub.f32 %v249, %v723
  %v742 = vsub.f32 %v251, %v724
  %v743 = vsub.f32 %v255, %v723
  %v744 = vsub.f32 %v257, %v724
  %v745 = vsub.f32 %v261, %v723
  %v746 = vsub.f32 %v263, %v724
  %v747 = vsub.f32 %v267, %v723
  %v748 = vsub.f32 %v269, %v724
  %v749 = vsub.f32 %v273, %v723
  %v750 = vsub.f32 %v275, %v724
  %v751 = vsub.f32 %v279, %v723
  %v752 = vsub.f32 %v281, %v724
  %v753 = vsub.f32 %v285, %v723
  %v754 = vsub.f32 %v287, %v724
  %v755 = vsub.f32 %v291, %v723
  %v756 = vsub.f32 %v293, %v724
  %v757 = vsub.f32 %v297, %v723
  %v758 = vsub.f32 %v299, %v724
  %v759 = vsub.f32 %v303, %v723
  %v760 = vsub.f32 %v305, %v724
  %v761 = vsub.f32 %v309, %v723
  %v762 = vsub.f32 %v311, %v724
  %v763 = vsub.f32 %v315, %v723
  %v764 = vsub.f32 %v317, %v724
  %v765 = vsub.f32 %v321, %v723
  %v766 = vsub.f32 %v323, %v724
  %v767 = vsub.f32 %v327, %v723
  %v768 = vsub.f32 %v329, %v724
  %v769 = vsub.f32 %v333, %v723
  %v770 = vsub.f32 %v335, %v724
  %v771 = vsub.f32 %v339, %v723
  %v772 = vsub.f32 %v341, %v724
  %v773 = vsub.f32 %v345, %v723
  %v774 = vsub.f32 %v347, %v724
  %v775 = vsub.f32 %v351, %v723
  %v776 = vsub.f32 %v353, %v724
  %v777 = vsub.f32 %v357, %v723
  %v778 = vsub.f32 %v359, %v724
  %v779 = vsub.f32 %v363, %v723
  %v780 = vsub.f32 %v365, %v724
  %v781 = vsub.f32 %v369, %v723
  %v782 = vsub.f32 %v371, %v724
  %v783 = vsub.f32 %v375, %v723
  %v784 = vsub.f32 %v377, %v724
  %v785 = vsub.f32 %v381, %v723
  %v786 = vsub.f32 %v383, %v724
  %v787 = vsub.f32 %v387, %v723
  %v788 = vsub.f32 %v389, %v724
  %v789 = vsub.f32 %v393, %v723
  %v790 = vsub.f32 %v395, %v724
  %v791 = vsub.f32 %v399, %v723
  %v792 = vsub.f32 %v401, %v724
  %v793 = vsub.f32 %v405, %v723
  %v794 = vsub.f32 %v407, %v724
  %v795 = vsub.f32 %v411, %v723
  %v796 = vsub.f32 %v413, %v724
  %v797 = vsub.f32 %v417, %v723
  %v798 = vsub.f32 %v419, %v724
  %v799 = vsub.f32 %v423, %v723
  %v800 = vsub.f32 %v425, %v724
  %v801 = vsub.f32 %v429, %v723
  %v802 = vsub.f32 %v431, %v724
  %v803 = vsub.f32 %v435, %v723
  %v804 = vsub.f32 %v437, %v724
  %v805 = vsub.f32 %v441, %v723
  %v806 = vsub.f32 %v443, %v724
  %v807 = vsub.f32 %v447, %v723
  %v808 = vsub.f32 %v449, %v724
  %v809 = vsub.f32 %v453, %v723
  %v810 = vsub.f32 %v455, %v724
  %v811 = vsub.f32 %v459, %v723
  %v812 = vsub.f32 %v461, %v724
  %v813 = vsub.f32 %v465, %v723
  %v814 = vsub.f32 %v467, %v724
  %v815 = vsub.f32 %v471, %v723
  %v816 = vsub.f32 %v473, %v724
  %v817 = vsub.f32 %v477, %v723
  %v818 = vsub.f32 %v479, %v724
  %v819 = vsub.f32 %v483, %v723
  %v820 = vsub.f32 %v485, %v724
  %v821 = vsub.f32 %v489, %v723
  %v822 = vsub.f32 %v491, %v724
  %v823 = vsub.f32 %v495, %v723
  %v824 = vsub.f32 %v497, %v724
  %v825 = vsub.f32 %v501, %v723
  %v826 = vsub.f32 %v503, %v724
  %v827 = vsub.f32 %v507, %v723
  %v828 = vsub.f32 %v509, %v724
  %v829 = vsub.f32 %v513, %v723
  %v830 = vsub.f32 %v515, %v724
  %v831 = vsub.f32 %v519, %v723
  %v832 = vsub.f32 %v521, %v724
  %v833 = vsub.f32 %v525, %v723
  %v834 = vsub.f32 %v527, %v724
  %v835 = vsub.f32 %v531, %v723
  %v836 = vsub.f32 %v533, %v724
  %v837 = vsub.f32 %v537, %v723
  %v838 = vsub.f32 %v539, %v724
  %v839 = vsub.f32 %v543, %v723
  %v840 = vsub.f32 %v545, %v724
  %v841 = vsub.f32 %v549, %v723
  %v842 = vsub.f32 %v551, %v724
  %v843 = vsub.f32 %v555, %v723
  %v844 = vsub.f32 %v557, %v724
  %v845 = vsub.f32 %v561, %v723
  %v846 = vsub.f32 %v563, %v724
  %v847 = vsub.f32 %v567, %v723
  %v848 = vsub.f32 %v569, %v724
  %v849 = vsub.f32 %v573, %v723
  %v850 = vsub.f32 %v575, %v724
  %v851 = vsub.f32 %v579, %v723
  %v852 = vsub.f32 %v581, %v724
  %v853 = vmul.f32 %v725, %v725
  %v854 = vmul.f32 %v726, %v726
  %v855 = vmul.f32 %v727, %v727
  %v856 = vmul.f32 %v728, %v728
  %v857 = vmul.f32 %v729, %v729
  %v858 = vmul.f32 %v730, %v730
  %v859 = vmul.f32 %v731, %v731
  %v860 = vmul.f32 %v732, %v732
  %v861 = vmul.f32 %v733, %v733
  %v862 = vmul.f32 %v734, %v734
  %v863 = vmul.f32 %v735, %v735
  %v864 = vmul.f32 %v736, %v736
  %v865 = vmul.f32 %v737, %v737
  %v866 = vmul.f32 %v738, %v738
  %v867 = vmul.f32 %v739, %v739
  %v868 = vmul.f32 %v740, %v740
  %v869 = vmul.f32 %v741, %v741
  %v870 = vmul.f32 %v742, %v742
  %v871 = vmul.f32 %v743, %v743
  %v872 = vmul.f32 %v744, %v744
  %v873 = vmul.f32 %v745, %v745
  %v874 = vmul.f32 %v746, %v746
  %v875 = vmul.f32 %v747, %v747
  %v876 = vmul.f32 %v748, %v748
  %v877 = vmul.f32 %v749, %v749
  %v878 = vmul.f32 %v750, %v750
  %v879 = vmul.f32 %v751, %v751
  %v880 = vmul.f32 %v752, %v752
  %v881 = vmul.f32 %v753, %v753
  %v882 = vmul.f32 %v754, %v754
  %v883 = vmul.f32 %v755, %v755
  %v884 = vmul.f32 %v756, %v756
  %v885 = vmul.f32 %v757, %v757
  %v886 = vmul.f32 %v758, %v758
  %v887 = vmul.f32 %v759, %v759
  %v888 = vmul.f32 %v760, %v760
  %v889 = vmul.f32 %v761, %v761
  %v890 = vmul.f32 %v762, %v762
  %v891 = vmul.f32 %v763, %v763
  %v892 = vmul.f32 %v764, %v764
  %v893 = vmul.f32 %v765, %v765
  %v894 = vmul.f32 %v766, %v766
  %v895 = vmul.f32 %v767, %v767
  %v896 = vmul.f32 %v768, %v768
  %v897 = vmul.f32 %v769, %v769
  %v898 = vmul.f32 %v770, %v770
  %v899 = vmul.f32 %v771, %v771
  %v900 = vmul.f32 %v772, %v772
  %v901 = vmul.f32 %v773, %v773
  %v902 = vmul.f32 %v774, %v774
  %v903 = vmul.f32 %v775, %v775
  %v904 = vmul.f32 %v776, %v776
  %v905 = vmul.f32 %v777, %v777
  %v906 = vmul.f32 %v778, %v778
  %v907 = vmul.f32 %v779, %v779
  %v908 = vmul.f32 %v780, %v780
  %v909 = vmul.f32 %v781, %v781
  %v910 = vmul.f32 %v782, %v782
  %v911 = vmul.f32 %v783, %v783
  %v912 = vmul.f32 %v784, %v784
  %v913 = vmul.f32 %v785, %v785
  %v914 = vmul.f32 %v786, %v786
  %v915 = vmul.f32 %v787, %v787
  %v916 = vmul.f32 %v788, %v788
  %v917 = vmul.f32 %v789, %v789
  %v918 = vmul.f32 %v790, %v790
  %v919 = vmul.f32 %v791, %v791
  %v920 = vmul.f32 %v792, %v792
  %v921 = vmul.f32 %v793, %v793
  %v922 = vmul.f32 %v794, %v794
  %v923 = vmul.f32 %v795, %v795
  %v924 = vmul.f32 %v796, %v796
  %v925 = vmul.f32 %v797, %v797
  %v926 = vmul.f32 %v798, %v798
  %v927 = vmul.f32 %v799, %v799
  %v928 = vmul.f32 %v800, %v800
  %v929 = vmul.f32 %v801, %v801
  %v930 = vmul.f32 %v802, %v802
  %v931 = vmul.f32 %v803, %v803
  %v932 = vmul.f32 %v804, %v804
  %v933 = vmul.f32 %v805, %v805
  %v934 = vmul.f32 %v806, %v806
  %v935 = vmul.f32 %v807, %v807
  %v936 = vmul.f32 %v808, %v808
  %v937 = vmul.f32 %v809, %v809
  %v938 = vmul.f32 %v810, %v810
  %v939 = vmul.f32 %v811, %v811
  %v940 = vmul.f32 %v812, %v812
  %v941 = vmul.f32 %v813, %v813
  %v942 = vmul.f32 %v814, %v814
  %v943 = vmul.f32 %v815, %v815
  %v944 = vmul.f32 %v816, %v816
  %v945 = vmul.f32 %v817, %v817
  %v946 = vmul.f32 %v818, %v818
  %v947 = vmul.f32 %v819, %v819
  %v948 = vmul.f32 %v820, %v820
  %v949 = vmul.f32 %v821, %v821
  %v950 = vmul.f32 %v822, %v822
  %v951 = vmul.f32 %v823, %v823
  %v952 = vmul.f32 %v824, %v824
  %v953 = vmul.f32 %v825, %v825
  %v954 = vmul.f32 %v826, %v826
  %v955 = vmul.f32 %v827, %v827
  %v956 = vmul.f32 %v828, %v828
  %v957 = vmul.f32 %v829, %v829
  %v958 = vmul.f32 %v830, %v830
  %v959 = vmul.f32 %v831, %v831
  %v960 = vmul.f32 %v832, %v832
  %v961 = vmul.f32 %v833, %v833
  %v962 = vmul.f32 %v834, %v834
  %v963 = vmul.f32 %v835, %v835
  %v964 = vmul.f32 %v836, %v836
  %v965 = vmul.f32 %v837, %v837
  %v966 = vmul.f32 %v838, %v838
  %v967 = vmul.f32 %v839, %v839
  %v968 = vmul.f32 %v840, %v840
  %v969 = vmul.f32 %v841, %v841
  %v970 = vmul.f32 %v842, %v842
  %v971 = vmul.f32 %v843, %v843
  %v972 = vmul.f32 %v844, %v844
  %v973 = vmul.f32 %v845, %v845
  %v974 = vmul.f32 %v846, %v846
  %v975 = vmul.f32 %v847, %v847
  %v976 = vmul.f32 %v848, %v848
  %v977 = vmul.f32 %v849, %v849
  %v978 = vmul.f32 %v850, %v850
  %v979 = vmul.f32 %v851, %v851
  %v980 = vmul.f32 %v852, %v852
  %v981 = vadd.f32 %v853, %v855
  %v982 = vadd.f32 %v981, %v857
  %v983 = vadd.f32 %v982, %v859
  %v984 = vadd.f32 %v983, %v861
  %v985 = vadd.f32 %v984, %v863
  %v986 = vadd.f32 %v985, %v865
  %v987 = vadd.f32 %v986, %v867
  %v988 = vadd.f32 %v987, %v869
  %v989 = vadd.f32 %v988, %v871
  %v990 = vadd.f32 %v989, %v873
  %v991 = vadd.f32 %v990, %v875
  %v992 = vadd.f32 %v991, %v877
  %v993 = vadd.f32 %v992, %v879
  %v994 = vadd.f32 %v993, %v881
  %v995 = vadd.f32 %v994, %v883
  %v996 = vadd.f32 %v995, %v885
  %v997 = vadd.f32 %v996, %v887
  %v998 = vadd.f32 %v997, %v889
  %v999 = vadd.f32 %v998, %v891
  %v1000 = vadd.f32 %v999, %v893
  %v1001 = vadd.f32 %v1000, %v895
  %v1002 = vadd.f32 %v1001, %v897
  %v1003 = vadd.f32 %v1002, %v899
  %v1004 = vadd.f32 %v1003, %v901
  %v1005 = vadd.f32 %v1004, %v903
  %v1006 = vadd.f32 %v1005, %v905
  %v1007 = vadd.f32 %v1006, %v907
  %v1008 = vadd.f32 %v1007, %v909
  %v1009 = vadd.f32 %v1008, %v911
  %v1010 = vadd.f32 %v1009, %v913
  %v1011 = vadd.f32 %v1010, %v915
  %v1012 = vadd.f32 %v1011, %v917
  %v1013 = vadd.f32 %v1012, %v919
  %v1014 = vadd.f32 %v1013, %v921
  %v1015 = vadd.f32 %v1014, %v923
  %v1016 = vadd.f32 %v1015, %v925
  %v1017 = vadd.f32 %v1016, %v927
  %v1018 = vadd.f32 %v1017, %v929
  %v1019 = vadd.f32 %v1018, %v931
  %v1020 = vadd.f32 %v1019, %v933
  %v1021 = vadd.f32 %v1020, %v935
  %v1022 = vadd.f32 %v1021, %v937
  %v1023 = vadd.f32 %v1022, %v939
  %v1024 = vadd.f32 %v1023, %v941
  %v1025 = vadd.f32 %v1024, %v943
  %v1026 = vadd.f32 %v1025, %v945
  %v1027 = vadd.f32 %v1026, %v947
  %v1028 = vadd.f32 %v1027, %v949
  %v1029 = vadd.f32 %v1028, %v951
  %v1030 = vadd.f32 %v1029, %v953
  %v1031 = vadd.f32 %v1030, %v955
  %v1032 = vadd.f32 %v1031, %v957
  %v1033 = vadd.f32 %v1032, %v959
  %v1034 = vadd.f32 %v1033, %v961
  %v1035 = vadd.f32 %v1034, %v963
  %v1036 = vadd.f32 %v1035, %v965
  %v1037 = vadd.f32 %v1036, %v967
  %v1038 = vadd.f32 %v1037, %v969
  %v1039 = vadd.f32 %v1038, %v971
  %v1040 = vadd.f32 %v1039, %v973
  %v1041 = vadd.f32 %v1040, %v975
  %v1042 = vadd.f32 %v1041, %v977
  %v1043 = vadd.f32 %v1042, %v979
  %v1044 = vrot.slane %v1043, 4
  %v1045 = vadd.f32 %v1043, %v1044
  %v1046 = vrot.slane %v1045, 2
  %v1047 = vadd.f32 %v1045, %v1046
  %v1048 = vrot.slane %v1047, 1
  %v1049 = vadd.f32 %v1047, %v1048
  %v1050 = vadd.f32 %v854, %v856
  %v1051 = vadd.f32 %v1050, %v858
  %v1052 = vadd.f32 %v1051, %v860
  %v1053 = vadd.f32 %v1052, %v862
  %v1054 = vadd.f32 %v1053, %v864
  %v1055 = vadd.f32 %v1054, %v866
  %v1056 = vadd.f32 %v1055, %v868
  %v1057 = vadd.f32 %v1056, %v870
  %v1058 = vadd.f32 %v1057, %v872
  %v1059 = vadd.f32 %v1058, %v874
  %v1060 = vadd.f32 %v1059, %v876
  %v1061 = vadd.f32 %v1060, %v878
  %v1062 = vadd.f32 %v1061, %v880
  %v1063 = vadd.f32 %v1062, %v882
  %v1064 = vadd.f32 %v1063, %v884
  %v1065 = vadd.f32 %v1064, %v886
  %v1066 = vadd.f32 %v1065, %v888
  %v1067 = vadd.f32 %v1066, %v890
  %v1068 = vadd.f32 %v1067, %v892
  %v1069 = vadd.f32 %v1068, %v894
  %v1070 = vadd.f32 %v1069, %v896
  %v1071 = vadd.f32 %v1070, %v898
  %v1072 = vadd.f32 %v1071, %v900
  %v1073 = vadd.f32 %v1072, %v902
  %v1074 = vadd.f32 %v1073, %v904
  %v1075 = vadd.f32 %v1074, %v906
  %v1076 = vadd.f32 %v1075, %v908
  %v1077 = vadd.f32 %v1076, %v910
  %v1078 = vadd.f32 %v1077, %v912
  %v1079 = vadd.f32 %v1078, %v914
  %v1080 = vadd.f32 %v1079, %v916
  %v1081 = vadd.f32 %v1080, %v918
  %v1082 = vadd.f32 %v1081, %v920
  %v1083 = vadd.f32 %v1082, %v922
  %v1084 = vadd.f32 %v1083, %v924
  %v1085 = vadd.f32 %v1084, %v926
  %v1086 = vadd.f32 %v1085, %v928
  %v1087 = vadd.f32 %v1086, %v930
  %v1088 = vadd.f32 %v1087, %v932
  %v1089 = vadd.f32 %v1088, %v934
  %v1090 = vadd.f32 %v1089, %v936
  %v1091 = vadd.f32 %v1090, %v938
  %v1092 = vadd.f32 %v1091, %v940
  %v1093 = vadd.f32 %v1092, %v942
  %v1094 = vadd.f32 %v1093, %v944
  %v1095 = vadd.f32 %v1094, %v946
  %v1096 = vadd.f32 %v1095, %v948
  %v1097 = vadd.f32 %v1096, %v950
  %v1098 = vadd.f32 %v1097, %v952
  %v1099 = vadd.f32 %v1098, %v954
  %v1100 = vadd.f32 %v1099, %v956
  %v1101 = vadd.f32 %v1100, %v958
  %v1102 = vadd.f32 %v1101, %v960
  %v1103 = vadd.f32 %v1102, %v962
  %v1104 = vadd.f32 %v1103, %v964
  %v1105 = vadd.f32 %v1104, %v966
  %v1106 = vadd.f32 %v1105, %v968
  %v1107 = vadd.f32 %v1106, %v970
  %v1108 = vadd.f32 %v1107, %v972
  %v1109 = vadd.f32 %v1108, %v974
  %v1110 = vadd.f32 %v1109, %v976
  %v1111 = vadd.f32 %v1110, %v978
  %v1112 = vadd.f32 %v1111, %v980
  %v1113 = vrot.slane %v1112, 4
  %v1114 = vadd.f32 %v1112, %v1113
  %v1115 = vrot.slane %v1114, 2
  %v1116 = vadd.f32 %v1114, %v1115
  %v1117 = vrot.slane %v1116, 1
  %v1118 = vadd.f32 %v1116, %v1117
  %v1119 = vmul.f32 %v1049, 0.001953125
  %v1120 = vmul.f32 %v1118, 0.001953125
  %v1121 = vadd.f32 %v1119, 1e-05
  %v1122 = vadd.f32 %v1120, 1e-05
  %v1123 = vrsqrt.pop %v1121
  %v1124 = vrsqrt.pop %v1122
  %v1127 = vcombine.low %v1123, %v1124
  %v1129 = vunpack.c.l.s4 1966171168
  %v1130 = vunpack.c.0.s8 %v1129
  %v1131 = vlaneseq
  %v1132 = vshrl.u32 %v1131, 7
  %v1133 = vsub.s32 %v1130, %v1132
  %v1134 = vrot.slane %v1127, %v1133
  %v1136 = vunpack.c.l.s4 1966171168
  %v1137 = vunpack.c.0.s8 %v1136
  %v1138 = vlaneseq
  %v1139 = vshrl.u32 %v1138, 7
  %v1140 = vsub.s32 %v1137, %v1139
  %v1141 = vrot.slane %v1134, %v1140
  %v1143 = vmul.f32 %v583, %v1141
  %v1145 = vlaneseq
  %v1146 = vshrl.u32 %v1145, 7
  %v1147 = vsub.s32 0, %v1146
  %v1148 = vrot.slane %v1143, %v1147
  %v1149 = vlaneseq
  %v1150 = vshrl.u32 %v1149, 7
  %v1151 = vsub.s32 1, %v1150
  %v1152 = vrot.slane %v1143, %v1151
  %v1155 = vmul.f32 %v723, %v1148
  %v1156 = vmul.f32 %v724, %v1152
  %v1159 = vcombine.low %v1155, %v1156
  %v1161 = vunpack.c.l.s4 1966171168
  %v1162 = vunpack.c.0.s8 %v1161
  %v1163 = vlaneseq
  %v1164 = vshrl.u32 %v1163, 7
  %v1165 = vsub.s32 %v1162, %v1164
  %v1166 = vrot.slane %v1159, %v1165
  %v1168 = vunpack.c.l.s4 1966171168
  %v1169 = vunpack.c.0.s8 %v1168
  %v1170 = vlaneseq
  %v1171 = vshrl.u32 %v1170, 7
  %v1172 = vsub.s32 %v1169, %v1171
  %v1173 = vrot.slane %v1166, %v1172
  %v1175 = vsub.f32 %v584, %v1173
  %v1176 = vmul.f32 %v201, %v1148
  %v1177 = vmul.f32 %v203, %v1152
  %v1178 = vmul.f32 %v207, %v1148
  %v1179 = vmul.f32 %v209, %v1152
  %v1180 = vmul.f32 %v213, %v1148
  %v1181 = vmul.f32 %v215, %v1152
  %v1182 = vmul.f32 %v219, %v1148
  %v1183 = vmul.f32 %v221, %v1152
  %v1184 = vmul.f32 %v225, %v1148
  %v1185 = vmul.f32 %v227, %v1152
  %v1186 = vmul.f32 %v231, %v1148
  %v1187 = vmul.f32 %v233, %v1152
  %v1188 = vmul.f32 %v237, %v1148
  %v1189 = vmul.f32 %v239, %v1152
  %v1190 = vmul.f32 %v243, %v1148
  %v1191 = vmul.f32 %v245, %v1152
  %v1192 = vmul.f32 %v249, %v1148
  %v1193 = vmul.f32 %v251, %v1152
  %v1194 = vmul.f32 %v255, %v1148
  %v1195 = vmul.f32 %v257, %v1152
  %v1196 = vmul.f32 %v261, %v1148
  %v1197 = vmul.f32 %v263, %v1152
  %v1198 = vmul.f32 %v267, %v1148
  %v1199 = vmul.f32 %v269, %v1152
  %v1200 = vmul.f32 %v273, %v1148
  %v1201 = vmul.f32 %v275, %v1152
  %v1202 = vmul.f32 %v279, %v1148
  %v1203 = vmul.f32 %v281, %v1152
  %v1204 = vmul.f32 %v285, %v1148
  %v1205 = vmul.f32 %v287, %v1152
  %v1206 = vmul.f32 %v291, %v1148
  %v1207 = vmul.f32 %v293, %v1152
  %v1208 = vmul.f32 %v297, %v1148
  %v1209 = vmul.f32 %v299, %v1152
  %v1210 = vmul.f32 %v303, %v1148
  %v1211 = vmul.f32 %v305, %v1152
  %v1212 = vmul.f32 %v309, %v1148
  %v1213 = vmul.f32 %v311, %v1152
  %v1214 = vmul.f32 %v315, %v1148
  %v1215 = vmul.f32 %v317, %v1152
  %v1216 = vmul.f32 %v321, %v1148
  %v1217 = vmul.f32 %v323, %v1152
  %v1218 = vmul.f32 %v327, %v1148
  %v1219 = vmul.f32 %v329, %v1152
  %v1220 = vmul.f32 %v333, %v1148
  %v1221 = vmul.f32 %v335, %v1152
  %v1222 = vmul.f32 %v339, %v1148
  %v1223 = vmul.f32 %v341, %v1152
  %v1224 = vmul.f32 %v345, %v1148
  %v1225 = vmul.f32 %v347, %v1152
  %v1226 = vmul.f32 %v351, %v1148
  %v1227 = vmul.f32 %v353, %v1152
  %v1228 = vmul.f32 %v357, %v1148
  %v1229 = vmul.f32 %v359, %v1152
  %v1230 = vmul.f32 %v363, %v1148
  %v1231 = vmul.f32 %v365, %v1152
  %v1232 = vmul.f32 %v369, %v1148
  %v1233 = vmul.f32 %v371, %v1152
  %v1234 = vmul.f32 %v375, %v1148
  %v1235 = vmul.f32 %v377, %v1152
  %v1236 = vmul.f32 %v381, %v1148
  %v1237 = vmul.f32 %v383, %v1152
  %v1238 = vmul.f32 %v387, %v1148
  %v1239 = vmul.f32 %v389, %v1152
  %v1240 = vmul.f32 %v393, %v1148
  %v1241 = vmul.f32 %v395, %v1152
  %v1242 = vmul.f32 %v399, %v1148
  %v1243 = vmul.f32 %v401, %v1152
  %v1244 = vmul.f32 %v405, %v1148
  %v1245 = vmul.f32 %v407, %v1152
  %v1246 = vmul.f32 %v411, %v1148
  %v1247 = vmul.f32 %v413, %v1152
  %v1248 = vmul.f32 %v417, %v1148
  %v1249 = vmul.f32 %v419, %v1152
  %v1250 = vmul.f32 %v423, %v1148
  %v1251 = vmul.f32 %v425, %v1152
  %v1252 = vmul.f32 %v429, %v1148
  %v1253 = vmul.f32 %v431, %v1152
  %v1254 = vmul.f32 %v435, %v1148
  %v1255 = vmul.f32 %v437, %v1152
  %v1256 = vmul.f32 %v441, %v1148
  %v1257 = vmul.f32 %v443, %v1152
  %v1258 = vmul.f32 %v447, %v1148
  %v1259 = vmul.f32 %v449, %v1152
  %v1260 = vmul.f32 %v453, %v1148
  %v1261 = vmul.f32 %v455, %v1152
  %v1262 = vmul.f32 %v459, %v1148
  %v1263 = vmul.f32 %v461, %v1152
  %v1264 = vmul.f32 %v465, %v1148
  %v1265 = vmul.f32 %v467, %v1152
  %v1266 = vmul.f32 %v471, %v1148
  %v1267 = vmul.f32 %v473, %v1152
  %v1268 = vmul.f32 %v477, %v1148
  %v1269 = vmul.f32 %v479, %v1152
  %v1270 = vmul.f32 %v483, %v1148
  %v1271 = vmul.f32 %v485, %v1152
  %v1272 = vmul.f32 %v489, %v1148
  %v1273 = vmul.f32 %v491, %v1152
  %v1274 = vmul.f32 %v495, %v1148
  %v1275 = vmul.f32 %v497, %v1152
  %v1276 = vmul.f32 %v501, %v1148
  %v1277 = vmul.f32 %v503, %v1152
  %v1278 = vmul.f32 %v507, %v1148
  %v1279 = vmul.f32 %v509, %v1152
  %v1280 = vmul.f32 %v513, %v1148
  %v1281 = vmul.f32 %v515, %v1152
  %v1282 = vmul.f32 %v519, %v1148
  %v1283 = vmul.f32 %v521, %v1152
  %v1284 = vmul.f32 %v525, %v1148
  %v1285 = vmul.f32 %v527, %v1152
  %v1286 = vmul.f32 %v531, %v1148
  %v1287 = vmul.f32 %v533, %v1152
  %v1288 = vmul.f32 %v537, %v1148
  %v1289 = vmul.f32 %v539, %v1152
  %v1290 = vmul.f32 %v543, %v1148
  %v1291 = vmul.f32 %v545, %v1152
  %v1292 = vmul.f32 %v549, %v1148
  %v1293 = vmul.f32 %v551, %v1152
  %v1294 = vmul.f32 %v555, %v1148
  %v1295 = vmul.f32 %v557, %v1152
  %v1296 = vmul.f32 %v561, %v1148
  %v1297 = vmul.f32 %v563, %v1152
  %v1298 = vmul.f32 %v567, %v1148
  %v1299 = vmul.f32 %v569, %v1152
  %v1300 = vmul.f32 %v573, %v1148
  %v1301 = vmul.f32 %v575, %v1152
  %v1302 = vmul.f32 %v579, %v1148
  %v1303 = vmul.f32 %v581, %v1152
  %v1305 = vlaneseq
  %v1306 = vshrl.u32 %v1305, 7
  %v1307 = vsub.s32 0, %v1306
  %v1308 = vrot.slane %v1175, %v1307
  %v1309 = vlaneseq
  %v1310 = vshrl.u32 %v1309, 7
  %v1311 = vsub.s32 1, %v1310
  %v1312 = vrot.slane %v1175, %v1311
  %v1315 = vadd.f32 %v1176, %v1308
  %v1316 = vadd.f32 %v1177, %v1312
  %v1317 = vadd.f32 %v1178, %v1308
  %v1318 = vadd.f32 %v1179, %v1312
  %v1319 = vadd.f32 %v1180, %v1308
  %v1320 = vadd.f32 %v1181, %v1312
  %v1321 = vadd.f32 %v1182, %v1308
  %v1322 = vadd.f32 %v1183, %v1312
  %v1323 = vadd.f32 %v1184, %v1308
  %v1324 = vadd.f32 %v1185, %v1312
  %v1325 = vadd.f32 %v1186, %v1308
  %v1326 = vadd.f32 %v1187, %v1312
  %v1327 = vadd.f32 %v1188, %v1308
  %v1328 = vadd.f32 %v1189, %v1312
  %v1329 = vadd.f32 %v1190, %v1308
  %v1330 = vadd.f32 %v1191, %v1312
  %v1331 = vadd.f32 %v1192, %v1308
  %v1332 = vadd.f32 %v1193, %v1312
  %v1333 = vadd.f32 %v1194, %v1308
  %v1334 = vadd.f32 %v1195, %v1312
  %v1335 = vadd.f32 %v1196, %v1308
  %v1336 = vadd.f32 %v1197, %v1312
  %v1337 = vadd.f32 %v1198, %v1308
  %v1338 = vadd.f32 %v1199, %v1312
  %v1339 = vadd.f32 %v1200, %v1308
  %v1340 = vadd.f32 %v1201, %v1312
  %v1341 = vadd.f32 %v1202, %v1308
  %v1342 = vadd.f32 %v1203, %v1312
  %v1343 = vadd.f32 %v1204, %v1308
  %v1344 = vadd.f32 %v1205, %v1312
  %v1345 = vadd.f32 %v1206, %v1308
  %v1346 = vadd.f32 %v1207, %v1312
  %v1347 = vadd.f32 %v1208, %v1308
  %v1348 = vadd.f32 %v1209, %v1312
  %v1349 = vadd.f32 %v1210, %v1308
  %v1350 = vadd.f32 %v1211, %v1312
  %v1351 = vadd.f32 %v1212, %v1308
  %v1352 = vadd.f32 %v1213, %v1312
  %v1353 = vadd.f32 %v1214, %v1308
  %v1354 = vadd.f32 %v1215, %v1312
  %v1355 = vadd.f32 %v1216, %v1308
  %v1356 = vadd.f32 %v1217, %v1312
  %v1357 = vadd.f32 %v1218, %v1308
  %v1358 = vadd.f32 %v1219, %v1312
  %v1359 = vadd.f32 %v1220, %v1308
  %v1360 = vadd.f32 %v1221, %v1312
  %v1361 = vadd.f32 %v1222, %v1308
  %v1362 = vadd.f32 %v1223, %v1312
  %v1363 = vadd.f32 %v1224, %v1308
  %v1364 = vadd.f32 %v1225, %v1312
  %v1365 = vadd.f32 %v1226, %v1308
  %v1366 = vadd.f32 %v1227, %v1312
  %v1367 = vadd.f32 %v1228, %v1308
  %v1368 = vadd.f32 %v1229, %v1312
  %v1369 = vadd.f32 %v1230, %v1308
  %v1370 = vadd.f32 %v1231, %v1312
  %v1371 = vadd.f32 %v1232, %v1308
  %v1372 = vadd.f32 %v1233, %v1312
  %v1373 = vadd.f32 %v1234, %v1308
  %v1374 = vadd.f32 %v1235, %v1312
  %v1375 = vadd.f32 %v1236, %v1308
  %v1376 = vadd.f32 %v1237, %v1312
  %v1377 = vadd.f32 %v1238, %v1308
  %v1378 = vadd.f32 %v1239, %v1312
  %v1379 = vadd.f32 %v1240, %v1308
  %v1380 = vadd.f32 %v1241, %v1312
  %v1381 = vadd.f32 %v1242, %v1308
  %v1382 = vadd.f32 %v1243, %v1312
  %v1383 = vadd.f32 %v1244, %v1308
  %v1384 = vadd.f32 %v1245, %v1312
  %v1385 = vadd.f32 %v1246, %v1308
  %v1386 = vadd.f32 %v1247, %v1312
  %v1387 = vadd.f32 %v1248, %v1308
  %v1388 = vadd.f32 %v1249, %v1312
  %v1389 = vadd.f32 %v1250, %v1308
  %v1390 = vadd.f32 %v1251, %v1312
  %v1391 = vadd.f32 %v1252, %v1308
  %v1392 = vadd.f32 %v1253, %v1312
  %v1393 = vadd.f32 %v1254, %v1308
  %v1394 = vadd.f32 %v1255, %v1312
  %v1395 = vadd.f32 %v1256, %v1308
  %v1396 = vadd.f32 %v1257, %v1312
  %v1397 = vadd.f32 %v1258, %v1308
  %v1398 = vadd.f32 %v1259, %v1312
  %v1399 = vadd.f32 %v1260, %v1308
  %v1400 = vadd.f32 %v1261, %v1312
  %v1401 = vadd.f32 %v1262, %v1308
  %v1402 = vadd.f32 %v1263, %v1312
  %v1403 = vadd.f32 %v1264, %v1308
  %v1404 = vadd.f32 %v1265, %v1312
  %v1405 = vadd.f32 %v1266, %v1308
  %v1406 = vadd.f32 %v1267, %v1312
  %v1407 = vadd.f32 %v1268, %v1308
  %v1408 = vadd.f32 %v1269, %v1312
  %v1409 = vadd.f32 %v1270, %v1308
  %v1410 = vadd.f32 %v1271, %v1312
  %v1411 = vadd.f32 %v1272, %v1308
  %v1412 = vadd.f32 %v1273, %v1312
  %v1413 = vadd.f32 %v1274, %v1308
  %v1414 = vadd.f32 %v1275, %v1312
  %v1415 = vadd.f32 %v1276, %v1308
  %v1416 = vadd.f32 %v1277, %v1312
  %v1417 = vadd.f32 %v1278, %v1308
  %v1418 = vadd.f32 %v1279, %v1312
  %v1419 = vadd.f32 %v1280, %v1308
  %v1420 = vadd.f32 %v1281, %v1312
  %v1421 = vadd.f32 %v1282, %v1308
  %v1422 = vadd.f32 %v1283, %v1312
  %v1423 = vadd.f32 %v1284, %v1308
  %v1424 = vadd.f32 %v1285, %v1312
  %v1425 = vadd.f32 %v1286, %v1308
  %v1426 = vadd.f32 %v1287, %v1312
  %v1427 = vadd.f32 %v1288, %v1308
  %v1428 = vadd.f32 %v1289, %v1312
  %v1429 = vadd.f32 %v1290, %v1308
  %v1430 = vadd.f32 %v1291, %v1312
  %v1431 = vadd.f32 %v1292, %v1308
  %v1432 = vadd.f32 %v1293, %v1312
  %v1433 = vadd.f32 %v1294, %v1308
  %v1434 = vadd.f32 %v1295, %v1312
  %v1435 = vadd.f32 %v1296, %v1308
  %v1436 = vadd.f32 %v1297, %v1312
  %v1437 = vadd.f32 %v1298, %v1308
  %v1438 = vadd.f32 %v1299, %v1312
  %v1439 = vadd.f32 %v1300, %v1308
  %v1440 = vadd.f32 %v1301, %v1312
  %v1441 = vadd.f32 %v1302, %v1308
  %v1442 = vadd.f32 %v1303, %v1312
  %v1443 = vmax.f32 %v1315, 0.0
  %v1444 = vmax.f32 %v1316, 0.0
  %v1445 = vmax.f32 %v1317, 0.0
  %v1446 = vmax.f32 %v1318, 0.0
  %v1447 = vmax.f32 %v1319, 0.0
  %v1448 = vmax.f32 %v1320, 0.0
  %v1449 = vmax.f32 %v1321, 0.0
  %v1450 = vmax.f32 %v1322, 0.0
  %v1451 = vmax.f32 %v1323, 0.0
  %v1452 = vmax.f32 %v1324, 0.0
  %v1453 = vmax.f32 %v1325, 0.0
  %v1454 = vmax.f32 %v1326, 0.0
  %v1455 = vmax.f32 %v1327, 0.0
  %v1456 = vmax.f32 %v1328, 0.0
  %v1457 = vmax.f32 %v1329, 0.0
  %v1458 = vmax.f32 %v1330, 0.0
  %v1459 = vmax.f32 %v1331, 0.0
  %v1460 = vmax.f32 %v1332, 0.0
  %v1461 = vmax.f32 %v1333, 0.0
  %v1462 = vmax.f32 %v1334, 0.0
  %v1463 = vmax.f32 %v1335, 0.0
  %v1464 = vmax.f32 %v1336, 0.0
  %v1465 = vmax.f32 %v1337, 0.0
  %v1466 = vmax.f32 %v1338, 0.0
  %v1467 = vmax.f32 %v1339, 0.0
  %v1468 = vmax.f32 %v1340, 0.0
  %v1469 = vmax.f32 %v1341, 0.0
  %v1470 = vmax.f32 %v1342, 0.0
  %v1471 = vmax.f32 %v1343, 0.0
  %v1472 = vmax.f32 %v1344, 0.0
  %v1473 = vmax.f32 %v1345, 0.0
  %v1474 = vmax.f32 %v1346, 0.0
  %v1475 = vmax.f32 %v1347, 0.0
  %v1476 = vmax.f32 %v1348, 0.0
  %v1477 = vmax.f32 %v1349, 0.0
  %v1478 = vmax.f32 %v1350, 0.0
  %v1479 = vmax.f32 %v1351, 0.0
  %v1480 = vmax.f32 %v1352, 0.0
  %v1481 = vmax.f32 %v1353, 0.0
  %v1482 = vmax.f32 %v1354, 0.0
  %v1483 = vmax.f32 %v1355, 0.0
  %v1484 = vmax.f32 %v1356, 0.0
  %v1485 = vmax.f32 %v1357, 0.0
  %v1486 = vmax.f32 %v1358, 0.0
  %v1487 = vmax.f32 %v1359, 0.0
  %v1488 = vmax.f32 %v1360, 0.0
  %v1489 = vmax.f32 %v1361, 0.0
  %v1490 = vmax.f32 %v1362, 0.0
  %v1491 = vmax.f32 %v1363, 0.0
  %v1492 = vmax.f32 %v1364, 0.0
  %v1493 = vmax.f32 %v1365, 0.0
  %v1494 = vmax.f32 %v1366, 0.0
  %v1495 = vmax.f32 %v1367, 0.0
  %v1496 = vmax.f32 %v1368, 0.0
  %v1497 = vmax.f32 %v1369, 0.0
  %v1498 = vmax.f32 %v1370, 0.0
  %v1499 = vmax.f32 %v1371, 0.0
  %v1500 = vmax.f32 %v1372, 0.0
  %v1501 = vmax.f32 %v1373, 0.0
  %v1502 = vmax.f32 %v1374, 0.0
  %v1503 = vmax.f32 %v1375, 0.0
  %v1504 = vmax.f32 %v1376, 0.0
  %v1505 = vmax.f32 %v1377, 0.0
  %v1506 = vmax.f32 %v1378, 0.0
  %v1507 = vmax.f32 %v1379, 0.0
  %v1508 = vmax.f32 %v1380, 0.0
  %v1509 = vmax.f32 %v1381, 0.0
  %v1510 = vmax.f32 %v1382, 0.0
  %v1511 = vmax.f32 %v1383, 0.0
  %v1512 = vmax.f32 %v1384, 0.0
  %v1513 = vmax.f32 %v1385, 0.0
  %v1514 = vmax.f32 %v1386, 0.0
  %v1515 = vmax.f32 %v1387, 0.0
  %v1516 = vmax.f32 %v1388, 0.0
  %v1517 = vmax.f32 %v1389, 0.0
  %v1518 = vmax.f32 %v1390, 0.0
  %v1519 = vmax.f32 %v1391, 0.0
  %v1520 = vmax.f32 %v1392, 0.0
  %v1521 = vmax.f32 %v1393, 0.0
  %v1522 = vmax.f32 %v1394, 0.0
  %v1523 = vmax.f32 %v1395, 0.0
  %v1524 = vmax.f32 %v1396, 0.0
  %v1525 = vmax.f32 %v1397, 0.0
  %v1526 = vmax.f32 %v1398, 0.0
  %v1527 = vmax.f32 %v1399, 0.0
  %v1528 = vmax.f32 %v1400, 0.0
  %v1529 = vmax.f32 %v1401, 0.0
  %v1530 = vmax.f32 %v1402, 0.0
  %v1531 = vmax.f32 %v1403, 0.0
  %v1532 = vmax.f32 %v1404, 0.0
  %v1533 = vmax.f32 %v1405, 0.0
  %v1534 = vmax.f32 %v1406, 0.0
  %v1535 = vmax.f32 %v1407, 0.0
  %v1536 = vmax.f32 %v1408, 0.0
  %v1537 = vmax.f32 %v1409, 0.0
  %v1538 = vmax.f32 %v1410, 0.0
  %v1539 = vmax.f32 %v1411, 0.0
  %v1540 = vmax.f32 %v1412, 0.0
  %v1541 = vmax.f32 %v1413, 0.0
  %v1542 = vmax.f32 %v1414, 0.0
  %v1543 = vmax.f32 %v1415, 0.0
  %v1544 = vmax.f32 %v1416, 0.0
  %v1545 = vmax.f32 %v1417, 0.0
  %v1546 = vmax.f32 %v1418, 0.0
  %v1547 = vmax.f32 %v1419, 0.0
  %v1548 = vmax.f32 %v1420, 0.0
  %v1549 = vmax.f32 %v1421, 0.0
  %v1550 = vmax.f32 %v1422, 0.0
  %v1551 = vmax.f32 %v1423, 0.0
  %v1552 = vmax.f32 %v1424, 0.0
  %v1553 = vmax.f32 %v1425, 0.0
  %v1554 = vmax.f32 %v1426, 0.0
  %v1555 = vmax.f32 %v1427, 0.0
  %v1556 = vmax.f32 %v1428, 0.0
  %v1557 = vmax.f32 %v1429, 0.0
  %v1558 = vmax.f32 %v1430, 0.0
  %v1559 = vmax.f32 %v1431, 0.0
  %v1560 = vmax.f32 %v1432, 0.0
  %v1561 = vmax.f32 %v1433, 0.0
  %v1562 = vmax.f32 %v1434, 0.0
  %v1563 = vmax.f32 %v1435, 0.0
  %v1564 = vmax.f32 %v1436, 0.0
  %v1565 = vmax.f32 %v1437, 0.0
  %v1566 = vmax.f32 %v1438, 0.0
  %v1567 = vmax.f32 %v1439, 0.0
  %v1568 = vmax.f32 %v1440, 0.0
  %v1569 = vmax.f32 %v1441, 0.0
  %v1570 = vmax.f32 %v1442, 0.0
  %1571 = vst [vmem:[#allocation2] sm:$0xff] 0.0
  %1572 = vst [vmem:[#allocation2 + $0x8] sm:$0xff] 0.0
  %1573 = vst [vmem:[#allocation2 + $0x10] sm:$0xff] 0.0
  %1574 = vst [vmem:[#allocation2 + $0x218] sm:$0xff] 0.0
  %1575 = vst [vmem:[#allocation2 + $0x220] sm:$0xff] 0.0
  %1576 = vst [vmem:[#allocation2 + $0x228] sm:$0xff] 0.0
  %1577 = vst [vmem:[#allocation2 + $0x18] sm:$0xff] %v1443
  %1578 = vst [vmem:[#allocation2 + $0x20] sm:$0xff] %v1445
  %1579 = vst [vmem:[#allocation2 + $0x28] sm:$0xff] %v1447
  %1580 = vst [vmem:[#allocation2 + $0x30] sm:$0xff] %v1449
  %1581 = vst [vmem:[#allocation2 + $0x38] sm:$0xff] %v1451
  %1582 = vst [vmem:[#allocation2 + $0x40] sm:$0xff] %v1453
  %1583 = vst [vmem:[#allocation2 + $0x48] sm:$0xff] %v1455
  %1584 = vst [vmem:[#allocation2 + $0x50] sm:$0xff] %v1457
  %1585 = vst [vmem:[#allocation2 + $0x58] sm:$0xff] %v1459
  %1586 = vst [vmem:[#allocation2 + $0x60] sm:$0xff] %v1461
  %1587 = vst [vmem:[#allocation2 + $0x68] sm:$0xff] %v1463
  %1588 = vst [vmem:[#allocation2 + $0x70] sm:$0xff] %v1465
  %1589 = vst [vmem:[#allocation2 + $0x78] sm:$0xff] %v1467
  %1590 = vst [vmem:[#allocation2 + $0x80] sm:$0xff] %v1469
  %1591 = vst [vmem:[#allocation2 + $0x88] sm:$0xff] %v1471
  %1592 = vst [vmem:[#allocation2 + $0x90] sm:$0xff] %v1473
  %1593 = vst [vmem:[#allocation2 + $0x98] sm:$0xff] %v1475
  %1594 = vst [vmem:[#allocation2 + $0xa0] sm:$0xff] %v1477
  %1595 = vst [vmem:[#allocation2 + $0xa8] sm:$0xff] %v1479
  %1596 = vst [vmem:[#allocation2 + $0xb0] sm:$0xff] %v1481
  %1597 = vst [vmem:[#allocation2 + $0xb8] sm:$0xff] %v1483
  %1598 = vst [vmem:[#allocation2 + $0xc0] sm:$0xff] %v1485
  %1599 = vst [vmem:[#allocation2 + $0xc8] sm:$0xff] %v1487
  %1600 = vst [vmem:[#allocation2 + $0xd0] sm:$0xff] %v1489
  %1601 = vst [vmem:[#allocation2 + $0xd8] sm:$0xff] %v1491
  %1602 = vst [vmem:[#allocation2 + $0xe0] sm:$0xff] %v1493
  %1603 = vst [vmem:[#allocation2 + $0xe8] sm:$0xff] %v1495
  %1604 = vst [vmem:[#allocation2 + $0xf0] sm:$0xff] %v1497
  %1605 = vst [vmem:[#allocation2 + $0xf8] sm:$0xff] %v1499
  %1606 = vst [vmem:[#allocation2 + $0x100] sm:$0xff] %v1501
  %1607 = vst [vmem:[#allocation2 + $0x108] sm:$0xff] %v1503
  %1608 = vst [vmem:[#allocation2 + $0x110] sm:$0xff] %v1505
  %1609 = vst [vmem:[#allocation2 + $0x118] sm:$0xff] %v1507
  %1610 = vst [vmem:[#allocation2 + $0x120] sm:$0xff] %v1509
  %1611 = vst [vmem:[#allocation2 + $0x128] sm:$0xff] %v1511
  %1612 = vst [vmem:[#allocation2 + $0x130] sm:$0xff] %v1513
  %1613 = vst [vmem:[#allocation2 + $0x138] sm:$0xff] %v1515
  %1614 = vst [vmem:[#allocation2 + $0x140] sm:$0xff] %v1517
  %1615 = vst [vmem:[#allocation2 + $0x148] sm:$0xff] %v1519
  %1616 = vst [vmem:[#allocation2 + $0x150] sm:$0xff] %v1521
  %1617 = vst [vmem:[#allocation2 + $0x158] sm:$0xff] %v1523
  %1618 = vst [vmem:[#allocation2 + $0x160] sm:$0xff] %v1525
  %1619 = vst [vmem:[#allocation2 + $0x168] sm:$0xff] %v1527
  %1620 = vst [vmem:[#allocation2 + $0x170] sm:$0xff] %v1529
  %1621 = vst [vmem:[#allocation2 + $0x178] sm:$0xff] %v1531
  %1622 = vst [vmem:[#allocation2 + $0x180] sm:$0xff] %v1533
  %1623 = vst [vmem:[#allocation2 + $0x188] sm:$0xff] %v1535
  %1624 = vst [vmem:[#allocation2 + $0x190] sm:$0xff] %v1537
  %1625 = vst [vmem:[#allocation2 + $0x198] sm:$0xff] %v1539
  %1626 = vst [vmem:[#allocation2 + $0x1a0] sm:$0xff] %v1541
  %1627 = vst [vmem:[#allocation2 + $0x1a8] sm:$0xff] %v1543
  %1628 = vst [vmem:[#allocation2 + $0x1b0] sm:$0xff] %v1545
  %1629 = vst [vmem:[#allocation2 + $0x1b8] sm:$0xff] %v1547
  %1630 = vst [vmem:[#allocation2 + $0x1c0] sm:$0xff] %v1549
  %1631 = vst [vmem:[#allocation2 + $0x1c8] sm:$0xff] %v1551
  %1632 = vst [vmem:[#allocation2 + $0x1d0] sm:$0xff] %v1553
  %1633 = vst [vmem:[#allocation2 + $0x1d8] sm:$0xff] %v1555
  %1634 = vst [vmem:[#allocation2 + $0x1e0] sm:$0xff] %v1557
  %1635 = vst [vmem:[#allocation2 + $0x1e8] sm:$0xff] %v1559
  %1636 = vst [vmem:[#allocation2 + $0x1f0] sm:$0xff] %v1561
  %1637 = vst [vmem:[#allocation2 + $0x1f8] sm:$0xff] %v1563
  %1638 = vst [vmem:[#allocation2 + $0x200] sm:$0xff] %v1565
  %1639 = vst [vmem:[#allocation2 + $0x208] sm:$0xff] %v1567
  %1640 = vst [vmem:[#allocation2 + $0x210] sm:$0xff] %v1569
  %v1641 = vld [vmem:[#allocation2 + $0x7] sm:$0xff]
  %v1642 = vld [vmem:[#allocation2 + $0xf] sm:$0xff]
  %v1643 = vld [vmem:[#allocation2 + $0x17] sm:$0xff]
  %v1644 = vld [vmem:[#allocation2 + $0x1f] sm:$0xff]
  %v1645 = vld [vmem:[#allocation2 + $0x27] sm:$0xff]
  %v1646 = vld [vmem:[#allocation2 + $0x2f] sm:$0xff]
  %v1647 = vld [vmem:[#allocation2 + $0x37] sm:$0xff]
  %v1648 = vld [vmem:[#allocation2 + $0x3f] sm:$0xff]
  %v1649 = vld [vmem:[#allocation2 + $0x47] sm:$0xff]
  %v1650 = vld [vmem:[#allocation2 + $0x4f] sm:$0xff]
  %v1651 = vld [vmem:[#allocation2 + $0x57] sm:$0xff]
  %v1652 = vld [vmem:[#allocation2 + $0x5f] sm:$0xff]
  %v1653 = vld [vmem:[#allocation2 + $0x67] sm:$0xff]
  %v1654 = vld [vmem:[#allocation2 + $0x6f] sm:$0xff]
  %v1655 = vld [vmem:[#allocation2 + $0x77] sm:$0xff]
  %v1656 = vld [vmem:[#allocation2 + $0x7f] sm:$0xff]
  %v1657 = vld [vmem:[#allocation2 + $0x87] sm:$0xff]
  %v1658 = vld [vmem:[#allocation2 + $0x8f] sm:$0xff]
  %v1659 = vld [vmem:[#allocation2 + $0x97] sm:$0xff]
  %v1660 = vld [vmem:[#allocation2 + $0x9f] sm:$0xff]
  %v1661 = vld [vmem:[#allocation2 + $0xa7] sm:$0xff]
  %v1662 = vld [vmem:[#allocation2 + $0xaf] sm:$0xff]
  %v1663 = vld [vmem:[#allocation2 + $0xb7] sm:$0xff]
  %v1664 = vld [vmem:[#allocation2 + $0xbf] sm:$0xff]
  %v1665 = vld [vmem:[#allocation2 + $0xc7] sm:$0xff]
  %v1666 = vld [vmem:[#allocation2 + $0xcf] sm:$0xff]
  %v1667 = vld [vmem:[#allocation2 + $0xd7] sm:$0xff]
  %v1668 = vld [vmem:[#allocation2 + $0xdf] sm:$0xff]
  %v1669 = vld [vmem:[#allocation2 + $0xe7] sm:$0xff]
  %v1670 = vld [vmem:[#allocation2 + $0xef] sm:$0xff]
  %v1671 = vld [vmem:[#allocation2 + $0xf7] sm:$0xff]
  %v1672 = vld [vmem:[#allocation2 + $0xff] sm:$0xff]
  %v1673 = vld [vmem:[#allocation2 + $0x107] sm:$0xff]
  %v1674 = vld [vmem:[#allocation2 + $0x10f] sm:$0xff]
  %v1675 = vld [vmem:[#allocation2 + $0x117] sm:$0xff]
  %v1676 = vld [vmem:[#allocation2 + $0x11f] sm:$0xff]
  %v1677 = vld [vmem:[#allocation2 + $0x127] sm:$0xff]
  %v1678 = vld [vmem:[#allocation2 + $0x12f] sm:$0xff]
  %v1679 = vld [vmem:[#allocation2 + $0x137] sm:$0xff]
  %v1680 = vld [vmem:[#allocation2 + $0x13f] sm:$0xff]
  %v1681 = vld [vmem:[#allocation2 + $0x147] sm:$0xff]
  %v1682 = vld [vmem:[#allocation2 + $0x14f] sm:$0xff]
  %v1683 = vld [vmem:[#allocation2 + $0x157] sm:$0xff]
  %v1684 = vld [vmem:[#allocation2 + $0x15f] sm:$0xff]
  %v1685 = vld [vmem:[#allocation2 + $0x167] sm:$0xff]
  %v1686 = vld [vmem:[#allocation2 + $0x16f] sm:$0xff]
  %v1687 = vld [vmem:[#allocation2 + $0x177] sm:$0xff]
  %v1688 = vld [vmem:[#allocation2 + $0x17f] sm:$0xff]
  %v1689 = vld [vmem:[#allocation2 + $0x187] sm:$0xff]
  %v1690 = vld [vmem:[#allocation2 + $0x18f] sm:$0xff]
  %v1691 = vld [vmem:[#allocation2 + $0x197] sm:$0xff]
  %v1692 = vld [vmem:[#allocation2 + $0x19f] sm:$0xff]
  %v1693 = vld [vmem:[#allocation2 + $0x1a7] sm:$0xff]
  %v1694 = vld [vmem:[#allocation2 + $0x1af] sm:$0xff]
  %v1695 = vld [vmem:[#allocation2 + $0x1b7] sm:$0xff]
  %v1696 = vld [vmem:[#allocation2 + $0x1bf] sm:$0xff]
  %v1697 = vld [vmem:[#allocation2 + $0x1c7] sm:$0xff]
  %v1698 = vld [vmem:[#allocation2 + $0x1cf] sm:$0xff]
  %v1699 = vld [vmem:[#allocation2 + $0x1d7] sm:$0xff]
  %v1700 = vld [vmem:[#allocation2 + $0x1df] sm:$0xff]
  %v1701 = vld [vmem:[#allocation2 + $0x1e7] sm:$0xff]
  %v1702 = vld [vmem:[#allocation2 + $0x1ef] sm:$0xff]
  %v1703 = vld [vmem:[#allocation2 + $0x1f7] sm:$0xff]
  %v1704 = vld [vmem:[#allocation2 + $0x1ff] sm:$0xff]
  %v1705 = vld [vmem:[%s1] sm:$0xff]
  %v1706 = vld [vmem:[%s1 + $0x8] sm:$0xff]
  %v1707 = vld [vmem:[%s1 + $0x10] sm:$0xff]
  %v1708 = vld [vmem:[%s1 + $0x18] sm:$0xff]
  %v1709 = vld [vmem:[%s1 + $0x20] sm:$0xff]
  %v1710 = vld [vmem:[%s1 + $0x28] sm:$0xff]
  %v1711 = vld [vmem:[%s1 + $0x30] sm:$0xff]
  %v1712 = vld [vmem:[%s1 + $0x38] sm:$0xff]
  %v1713 = vld [vmem:[%s1 + $0x40] sm:$0xff]
  %v1714 = vld [vmem:[%s1 + $0x48] sm:$0xff]
  %v1715 = vld [vmem:[%s1 + $0x50] sm:$0xff]
  %v1716 = vld [vmem:[%s1 + $0x58] sm:$0xff]
  %v1717 = vld [vmem:[%s1 + $0x60] sm:$0xff]
  %v1718 = vld [vmem:[%s1 + $0x68] sm:$0xff]
  %v1719 = vld [vmem:[%s1 + $0x70] sm:$0xff]
  %v1720 = vld [vmem:[%s1 + $0x78] sm:$0xff]
  %v1721 = vld [vmem:[%s1 + $0x80] sm:$0xff]
  %v1722 = vld [vmem:[%s1 + $0x88] sm:$0xff]
  %v1723 = vld [vmem:[%s1 + $0x90] sm:$0xff]
  %v1724 = vld [vmem:[%s1 + $0x98] sm:$0xff]
  %v1725 = vld [vmem:[%s1 + $0xa0] sm:$0xff]
  %v1726 = vld [vmem:[%s1 + $0xa8] sm:$0xff]
  %v1727 = vld [vmem:[%s1 + $0xb0] sm:$0xff]
  %v1728 = vld [vmem:[%s1 + $0xb8] sm:$0xff]
  %v1729 = vld [vmem:[%s1 + $0xc0] sm:$0xff]
  %v1730 = vld [vmem:[%s1 + $0xc8] sm:$0xff]
  %v1731 = vld [vmem:[%s1 + $0xd0] sm:$0xff]
  %v1732 = vld [vmem:[%s1 + $0xd8] sm:$0xff]
  %v1733 = vld [vmem:[%s1 + $0xe0] sm:$0xff]
  %v1734 = vld [vmem:[%s1 + $0xe8] sm:$0xff]
  %v1735 = vld [vmem:[%s1 + $0xf0] sm:$0xff]
  %v1736 = vld [vmem:[%s1 + $0xf8] sm:$0xff]
  %v1737 = vld [vmem:[%s1 + $0x100] sm:$0xff]
  %v1738 = vld [vmem:[%s1 + $0x108] sm:$0xff]
  %v1739 = vld [vmem:[%s1 + $0x110] sm:$0xff]
  %v1740 = vld [vmem:[%s1 + $0x118] sm:$0xff]
  %v1741 = vld [vmem:[%s1 + $0x120] sm:$0xff]
  %v1742 = vld [vmem:[%s1 + $0x128] sm:$0xff]
  %v1743 = vld [vmem:[%s1 + $0x130] sm:$0xff]
  %v1744 = vld [vmem:[%s1 + $0x138] sm:$0xff]
  %v1745 = vld [vmem:[%s1 + $0x140] sm:$0xff]
  %v1746 = vld [vmem:[%s1 + $0x148] sm:$0xff]
  %v1747 = vld [vmem:[%s1 + $0x150] sm:$0xff]
  %v1748 = vld [vmem:[%s1 + $0x158] sm:$0xff]
  %v1749 = vld [vmem:[%s1 + $0x160] sm:$0xff]
  %v1750 = vld [vmem:[%s1 + $0x168] sm:$0xff]
  %v1751 = vld [vmem:[%s1 + $0x170] sm:$0xff]
  %v1752 = vld [vmem:[%s1 + $0x178] sm:$0xff]
  %v1753 = vld [vmem:[%s1 + $0x180] sm:$0xff]
  %v1754 = vld [vmem:[%s1 + $0x188] sm:$0xff]
  %v1755 = vld [vmem:[%s1 + $0x190] sm:$0xff]
  %v1756 = vld [vmem:[%s1 + $0x198] sm:$0xff]
  %v1757 = vld [vmem:[%s1 + $0x1a0] sm:$0xff]
  %v1758 = vld [vmem:[%s1 + $0x1a8] sm:$0xff]
  %v1759 = vld [vmem:[%s1 + $0x1b0] sm:$0xff]
  %v1760 = vld [vmem:[%s1 + $0x1b8] sm:$0xff]
  %v1761 = vld [vmem:[%s1 + $0x1c0] sm:$0xff]
  %v1762 = vld [vmem:[%s1 + $0x1c8] sm:$0xff]
  %v1763 = vld [vmem:[%s1 + $0x1d0] sm:$0xff]
  %v1764 = vld [vmem:[%s1 + $0x1d8] sm:$0xff]
  %v1765 = vld [vmem:[%s1 + $0x1e0] sm:$0xff]
  %v1766 = vld [vmem:[%s1 + $0x1e8] sm:$0xff]
  %v1767 = vld [vmem:[%s1 + $0x1f0] sm:$0xff]
  %v1768 = vld [vmem:[%s1 + $0x1f8] sm:$0xff]
  %1770 = vset.pattern.permute.xlu0 0
  %1771 = vperm.xlu0 %1770, %v1705
  %v1772 = vpop.permute.xlu0 %1771
  %1775 = vset.pattern.permute.xlu0 0
  %1776 = vperm.xlu0 %1775, %v1706
  %v1777 = vpop.permute.xlu0 %1776
  %1780 = vset.pattern.permute.xlu0 0
  %1781 = vperm.xlu0 %1780, %v1707
  %v1782 = vpop.permute.xlu0 %1781
  %1785 = vset.pattern.permute.xlu0 0
  %1786 = vperm.xlu0 %1785, %v1708
  %v1787 = vpop.permute.xlu0 %1786
  %1790 = vset.pattern.permute.xlu0 0
  %1791 = vperm.xlu0 %1790, %v1709
  %v1792 = vpop.permute.xlu0 %1791
  %1795 = vset.pattern.permute.xlu0 0
  %1796 = vperm.xlu0 %1795, %v1710
  %v1797 = vpop.permute.xlu0 %1796
  %1800 = vset.pattern.permute.xlu0 0
  %1801 = vperm.xlu0 %1800, %v1711
  %v1802 = vpop.permute.xlu0 %1801
  %1805 = vset.pattern.permute.xlu0 0
  %1806 = vperm.xlu0 %1805, %v1712
  %v1807 = vpop.permute.xlu0 %1806
  %1810 = vset.pattern.permute.xlu0 0
  %1811 = vperm.xlu0 %1810, %v1713
  %v1812 = vpop.permute.xlu0 %1811
  %1815 = vset.pattern.permute.xlu0 0
  %1816 = vperm.xlu0 %1815, %v1714
  %v1817 = vpop.permute.xlu0 %1816
  %1820 = vset.pattern.permute.xlu0 0
  %1821 = vperm.xlu0 %1820, %v1715
  %v1822 = vpop.permute.xlu0 %1821
  %1825 = vset.pattern.permute.xlu0 0
  %1826 = vperm.xlu0 %1825, %v1716
  %v1827 = vpop.permute.xlu0 %1826
  %1830 = vset.pattern.permute.xlu0 0
  %1831 = vperm.xlu0 %1830, %v1717
  %v1832 = vpop.permute.xlu0 %1831
  %1835 = vset.pattern.permute.xlu0 0
  %1836 = vperm.xlu0 %1835, %v1718
  %v1837 = vpop.permute.xlu0 %1836
  %1840 = vset.pattern.permute.xlu0 0
  %1841 = vperm.xlu0 %1840, %v1719
  %v1842 = vpop.permute.xlu0 %1841
  %1845 = vset.pattern.permute.xlu0 0
  %1846 = vperm.xlu0 %1845, %v1720
  %v1847 = vpop.permute.xlu0 %1846
  %1850 = vset.pattern.permute.xlu0 0
  %1851 = vperm.xlu0 %1850, %v1721
  %v1852 = vpop.permute.xlu0 %1851
  %1855 = vset.pattern.permute.xlu0 0
  %1856 = vperm.xlu0 %1855, %v1722
  %v1857 = vpop.permute.xlu0 %1856
  %1860 = vset.pattern.permute.xlu0 0
  %1861 = vperm.xlu0 %1860, %v1723
  %v1862 = vpop.permute.xlu0 %1861
  %1865 = vset.pattern.permute.xlu0 0
  %1866 = vperm.xlu0 %1865, %v1724
  %v1867 = vpop.permute.xlu0 %1866
  %1870 = vset.pattern.permute.xlu0 0
  %1871 = vperm.xlu0 %1870, %v1725
  %v1872 = vpop.permute.xlu0 %1871
  %1875 = vset.pattern.permute.xlu0 0
  %1876 = vperm.xlu0 %1875, %v1726
  %v1877 = vpop.permute.xlu0 %1876
  %1880 = vset.pattern.permute.xlu0 0
  %1881 = vperm.xlu0 %1880, %v1727
  %v1882 = vpop.permute.xlu0 %1881
  %1885 = vset.pattern.permute.xlu0 0
  %1886 = vperm.xlu0 %1885, %v1728
  %v1887 = vpop.permute.xlu0 %1886
  %1890 = vset.pattern.permute.xlu0 0
  %1891 = vperm.xlu0 %1890, %v1729
  %v1892 = vpop.permute.xlu0 %1891
  %1895 = vset.pattern.permute.xlu0 0
  %1896 = vperm.xlu0 %1895, %v1730
  %v1897 = vpop.permute.xlu0 %1896
  %1900 = vset.pattern.permute.xlu0 0
  %1901 = vperm.xlu0 %1900, %v1731
  %v1902 = vpop.permute.xlu0 %1901
  %1905 = vset.pattern.permute.xlu0 0
  %1906 = vperm.xlu0 %1905, %v1732
  %v1907 = vpop.permute.xlu0 %1906
  %1910 = vset.pattern.permute.xlu0 0
  %1911 = vperm.xlu0 %1910, %v1733
  %v1912 = vpop.permute.xlu0 %1911
  %1915 = vset.pattern.permute.xlu0 0
  %1916 = vperm.xlu0 %1915, %v1734
  %v1917 = vpop.permute.xlu0 %1916
  %1920 = vset.pattern.permute.xlu0 0
  %1921 = vperm.xlu0 %1920, %v1735
  %v1922 = vpop.permute.xlu0 %1921
  %1925 = vset.pattern.permute.xlu0 0
  %1926 = vperm.xlu0 %1925, %v1736
  %v1927 = vpop.permute.xlu0 %1926
  %1930 = vset.pattern.permute.xlu0 0
  %1931 = vperm.xlu0 %1930, %v1737
  %v1932 = vpop.permute.xlu0 %1931
  %1935 = vset.pattern.permute.xlu0 0
  %1936 = vperm.xlu0 %1935, %v1738
  %v1937 = vpop.permute.xlu0 %1936
  %1940 = vset.pattern.permute.xlu0 0
  %1941 = vperm.xlu0 %1940, %v1739
  %v1942 = vpop.permute.xlu0 %1941
  %1945 = vset.pattern.permute.xlu0 0
  %1946 = vperm.xlu0 %1945, %v1740
  %v1947 = vpop.permute.xlu0 %1946
  %1950 = vset.pattern.permute.xlu0 0
  %1951 = vperm.xlu0 %1950, %v1741
  %v1952 = vpop.permute.xlu0 %1951
  %1955 = vset.pattern.permute.xlu0 0
  %1956 = vperm.xlu0 %1955, %v1742
  %v1957 = vpop.permute.xlu0 %1956
  %1960 = vset.pattern.permute.xlu0 0
  %1961 = vperm.xlu0 %1960, %v1743
  %v1962 = vpop.permute.xlu0 %1961
  %1965 = vset.pattern.permute.xlu0 0
  %1966 = vperm.xlu0 %1965, %v1744
  %v1967 = vpop.permute.xlu0 %1966
  %1970 = vset.pattern.permute.xlu0 0
  %1971 = vperm.xlu0 %1970, %v1745
  %v1972 = vpop.permute.xlu0 %1971
  %1975 = vset.pattern.permute.xlu0 0
  %1976 = vperm.xlu0 %1975, %v1746
  %v1977 = vpop.permute.xlu0 %1976
  %1980 = vset.pattern.permute.xlu0 0
  %1981 = vperm.xlu0 %1980, %v1747
  %v1982 = vpop.permute.xlu0 %1981
  %1985 = vset.pattern.permute.xlu0 0
  %1986 = vperm.xlu0 %1985, %v1748
  %v1987 = vpop.permute.xlu0 %1986
  %1990 = vset.pattern.permute.xlu0 0
  %1991 = vperm.xlu0 %1990, %v1749
  %v1992 = vpop.permute.xlu0 %1991
  %1995 = vset.pattern.permute.xlu0 0
  %1996 = vperm.xlu0 %1995, %v1750
  %v1997 = vpop.permute.xlu0 %1996
  %2000 = vset.pattern.permute.xlu0 0
  %2001 = vperm.xlu0 %2000, %v1751
  %v2002 = vpop.permute.xlu0 %2001
  %2005 = vset.pattern.permute.xlu0 0
  %2006 = vperm.xlu0 %2005, %v1752
  %v2007 = vpop.permute.xlu0 %2006
  %2010 = vset.pattern.permute.xlu0 0
  %2011 = vperm.xlu0 %2010, %v1753
  %v2012 = vpop.permute.xlu0 %2011
  %2015 = vset.pattern.permute.xlu0 0
  %2016 = vperm.xlu0 %2015, %v1754
  %v2017 = vpop.permute.xlu0 %2016
  %2020 = vset.pattern.permute.xlu0 0
  %2021 = vperm.xlu0 %2020, %v1755
  %v2022 = vpop.permute.xlu0 %2021
  %2025 = vset.pattern.permute.xlu0 0
  %2026 = vperm.xlu0 %2025, %v1756
  %v2027 = vpop.permute.xlu0 %2026
  %2030 = vset.pattern.permute.xlu0 0
  %2031 = vperm.xlu0 %2030, %v1757
  %v2032 = vpop.permute.xlu0 %2031
  %2035 = vset.pattern.permute.xlu0 0
  %2036 = vperm.xlu0 %2035, %v1758
  %v2037 = vpop.permute.xlu0 %2036
  %2040 = vset.pattern.permute.xlu0 0
  %2041 = vperm.xlu0 %2040, %v1759
  %v2042 = vpop.permute.xlu0 %2041
  %2045 = vset.pattern.permute.xlu0 0
  %2046 = vperm.xlu0 %2045, %v1760
  %v2047 = vpop.permute.xlu0 %2046
  %2050 = vset.pattern.permute.xlu0 0
  %2051 = vperm.xlu0 %2050, %v1761
  %v2052 = vpop.permute.xlu0 %2051
  %2055 = vset.pattern.permute.xlu0 0
  %2056 = vperm.xlu0 %2055, %v1762
  %v2057 = vpop.permute.xlu0 %2056
  %2060 = vset.pattern.permute.xlu0 0
  %2061 = vperm.xlu0 %2060, %v1763
  %v2062 = vpop.permute.xlu0 %2061
  %2065 = vset.pattern.permute.xlu0 0
  %2066 = vperm.xlu0 %2065, %v1764
  %v2067 = vpop.permute.xlu0 %2066
  %2070 = vset.pattern.permute.xlu0 0
  %2071 = vperm.xlu0 %2070, %v1765
  %v2072 = vpop.permute.xlu0 %2071
  %2075 = vset.pattern.permute.xlu0 0
  %2076 = vperm.xlu0 %2075, %v1766
  %v2077 = vpop.permute.xlu0 %2076
  %2080 = vset.pattern.permute.xlu0 0
  %2081 = vperm.xlu0 %2080, %v1767
  %v2082 = vpop.permute.xlu0 %2081
  %2085 = vset.pattern.permute.xlu0 0
  %2086 = vperm.xlu0 %2085, %v1768
  %v2087 = vpop.permute.xlu0 %2086
  %v2089 = vmul.f32 %v1641, %v1772
  %v2090 = vmul.f32 %v1642, %v1777
  %v2091 = vmul.f32 %v1643, %v1782
  %v2092 = vmul.f32 %v1644, %v1787
  %v2093 = vmul.f32 %v1645, %v1792
  %v2094 = vmul.f32 %v1646, %v1797
  %v2095 = vmul.f32 %v1647, %v1802
  %v2096 = vmul.f32 %v1648, %v1807
  %v2097 = vmul.f32 %v1649, %v1812
  %v2098 = vmul.f32 %v1650, %v1817
  %v2099 = vmul.f32 %v1651, %v1822
  %v2100 = vmul.f32 %v1652, %v1827
  %v2101 = vmul.f32 %v1653, %v1832
  %v2102 = vmul.f32 %v1654, %v1837
  %v2103 = vmul.f32 %v1655, %v1842
  %v2104 = vmul.f32 %v1656, %v1847
  %v2105 = vmul.f32 %v1657, %v1852
  %v2106 = vmul.f32 %v1658, %v1857
  %v2107 = vmul.f32 %v1659, %v1862
  %v2108 = vmul.f32 %v1660, %v1867
  %v2109 = vmul.f32 %v1661, %v1872
  %v2110 = vmul.f32 %v1662, %v1877
  %v2111 = vmul.f32 %v1663, %v1882
  %v2112 = vmul.f32 %v1664, %v1887
  %v2113 = vmul.f32 %v1665, %v1892
  %v2114 = vmul.f32 %v1666, %v1897
  %v2115 = vmul.f32 %v1667, %v1902
  %v2116 = vmul.f32 %v1668, %v1907
  %v2117 = vmul.f32 %v1669, %v1912
  %v2118 = vmul.f32 %v1670, %v1917
  %v2119 = vmul.f32 %v1671, %v1922
  %v2120 = vmul.f32 %v1672, %v1927
  %v2121 = vmul.f32 %v1673, %v1932
  %v2122 = vmul.f32 %v1674, %v1937
  %v2123 = vmul.f32 %v1675, %v1942
  %v2124 = vmul.f32 %v1676, %v1947
  %v2125 = vmul.f32 %v1677, %v1952
  %v2126 = vmul.f32 %v1678, %v1957
  %v2127 = vmul.f32 %v1679, %v1962
  %v2128 = vmul.f32 %v1680, %v1967
  %v2129 = vmul.f32 %v1681, %v1972
  %v2130 = vmul.f32 %v1682, %v1977
  %v2131 = vmul.f32 %v1683, %v1982
  %v2132 = vmul.f32 %v1684, %v1987
  %v2133 = vmul.f32 %v1685, %v1992
  %v2134 = vmul.f32 %v1686, %v1997
  %v2135 = vmul.f32 %v1687, %v2002
  %v2136 = vmul.f32 %v1688, %v2007
  %v2137 = vmul.f32 %v1689, %v2012
  %v2138 = vmul.f32 %v1690, %v2017
  %v2139 = vmul.f32 %v1691, %v2022
  %v2140 = vmul.f32 %v1692, %v2027
  %v2141 = vmul.f32 %v1693, %v2032
  %v2142 = vmul.f32 %v1694, %v2037
  %v2143 = vmul.f32 %v1695, %v2042
  %v2144 = vmul.f32 %v1696, %v2047
  %v2145 = vmul.f32 %v1697, %v2052
  %v2146 = vmul.f32 %v1698, %v2057
  %v2147 = vmul.f32 %v1699, %v2062
  %v2148 = vmul.f32 %v1700, %v2067
  %v2149 = vmul.f32 %v1701, %v2072
  %v2150 = vmul.f32 %v1702, %v2077
  %v2151 = vmul.f32 %v1703, %v2082
  %v2152 = vmul.f32 %v1704, %v2087
  %2153 = vst [vmem:[#allocation3] sm:$0xff] %v2089
  %2154 = vst [vmem:[#allocation3 + $0x48] sm:$0xff] %v2090
  %2155 = vst [vmem:[#allocation3 + $0x90] sm:$0xff] %v2091
  %2156 = vst [vmem:[#allocation3 + $0xd8] sm:$0xff] %v2092
  %2157 = vst [vmem:[#allocation3 + $0x120] sm:$0xff] %v2093
  %2158 = vst [vmem:[#allocation3 + $0x168] sm:$0xff] %v2094
  %2159 = vst [vmem:[#allocation3 + $0x1b0] sm:$0xff] %v2095
  %2160 = vst [vmem:[#allocation3 + $0x1f8] sm:$0xff] %v2096
  %2161 = vst [vmem:[#allocation3 + $0x240] sm:$0xff] %v2097
  %2162 = vst [vmem:[#allocation3 + $0x288] sm:$0xff] %v2098
  %2163 = vst [vmem:[#allocation3 + $0x2d0] sm:$0xff] %v2099
  %2164 = vst [vmem:[#allocation3 + $0x318] sm:$0xff] %v2100
  %2165 = vst [vmem:[#allocation3 + $0x360] sm:$0xff] %v2101
  %2166 = vst [vmem:[#allocation3 + $0x3a8] sm:$0xff] %v2102
  %2167 = vst [vmem:[#allocation3 + $0x3f0] sm:$0xff] %v2103
  %2168 = vst [vmem:[#allocation3 + $0x438] sm:$0xff] %v2104
  %2169 = vst [vmem:[#allocation3 + $0x480] sm:$0xff] %v2105
  %2170 = vst [vmem:[#allocation3 + $0x4c8] sm:$0xff] %v2106
  %2171 = vst [vmem:[#allocation3 + $0x510] sm:$0xff] %v2107
  %2172 = vst [vmem:[#allocation3 + $0x558] sm:$0xff] %v2108
  %2173 = vst [vmem:[#allocation3 + $0x5a0] sm:$0xff] %v2109
  %2174 = vst [vmem:[#allocation3 + $0x5e8] sm:$0xff] %v2110
  %2175 = vst [vmem:[#allocation3 + $0x630] sm:$0xff] %v2111
  %2176 = vst [vmem:[#allocation3 + $0x678] sm:$0xff] %v2112
  %2177 = vst [vmem:[#allocation3 + $0x6c0] sm:$0xff] %v2113
  %2178 = vst [vmem:[#allocation3 + $0x708] sm:$0xff] %v2114
  %2179 = vst [vmem:[#allocation3 + $0x750] sm:$0xff] %v2115
  %2180 = vst [vmem:[#allocation3 + $0x798] sm:$0xff] %v2116
  %2181 = vst [vmem:[#allocation3 + $0x7e0] sm:$0xff] %v2117
  %2182 = vst [vmem:[#allocation3 + $0x828] sm:$0xff] %v2118
  %2183 = vst [vmem:[#allocation3 + $0x870] sm:$0xff] %v2119
  %2184 = vst [vmem:[#allocation3 + $0x8b8] sm:$0xff] %v2120
  %2185 = vst [vmem:[#allocation3 + $0x900] sm:$0xff] %v2121
  %2186 = vst [vmem:[#allocation3 + $0x948] sm:$0xff] %v2122
  %2187 = vst [vmem:[#allocation3 + $0x990] sm:$0xff] %v2123
  %2188 = vst [vmem:[#allocation3 + $0x9d8] sm:$0xff] %v2124
  %2189 = vst [vmem:[#allocation3 + $0xa20] sm:$0xff] %v2125
  %2190 = vst [vmem:[#allocation3 + $0xa68] sm:$0xff] %v2126
  %2191 = vst [vmem:[#allocation3 + $0xab0] sm:$0xff] %v2127
  %2192 = vst [vmem:[#allocation3 + $0xaf8] sm:$0xff] %v2128
  %2193 = vst [vmem:[#allocation3 + $0xb40] sm:$0xff] %v2129
  %2194 = vst [vmem:[#allocation3 + $0xb88] sm:$0xff] %v2130
  %2195 = vst [vmem:[#allocation3 + $0xbd0] sm:$0xff] %v2131
  %2196 = vst [vmem:[#allocation3 + $0xc18] sm:$0xff] %v2132
  %2197 = vst [vmem:[#allocation3 + $0xc60] sm:$0xff] %v2133
  %2198 = vst [vmem:[#allocation3 + $0xca8] sm:$0xff] %v2134
  %2199 = vst [vmem:[#allocation3 + $0xcf0] sm:$0xff] %v2135
  %2200 = vst [vmem:[#allocation3 + $0xd38] sm:$0xff] %v2136
  %2201 = vst [vmem:[#allocation3 + $0xd80] sm:$0xff] %v2137
  %2202 = vst [vmem:[#allocation3 + $0xdc8] sm:$0xff] %v2138
  %2203 = vst [vmem:[#allocation3 + $0xe10] sm:$0xff] %v2139
  %2204 = vst [vmem:[#allocation3 + $0xe58] sm:$0xff] %v2140
  %2205 = vst [vmem:[#allocation3 + $0xea0] sm:$0xff] %v2141
  %2206 = vst [vmem:[#allocation3 + $0xee8] sm:$0xff] %v2142
  %2207 = vst [vmem:[#allocation3 + $0xf30] sm:$0xff] %v2143
  %2208 = vst [vmem:[#allocation3 + $0xf78] sm:$0xff] %v2144
  %2209 = vst [vmem:[#allocation3 + $0xfc0] sm:$0xff] %v2145
  %2210 = vst [vmem:[#allocation3 + $0x1008] sm:$0xff] %v2146
  %2211 = vst [vmem:[#allocation3 + $0x1050] sm:$0xff] %v2147
  %2212 = vst [vmem:[#allocation3 + $0x1098] sm:$0xff] %v2148
  %2213 = vst [vmem:[#allocation3 + $0x10e0] sm:$0xff] %v2149
  %2214 = vst [vmem:[#allocation3 + $0x1128] sm:$0xff] %v2150
  %2215 = vst [vmem:[#allocation3 + $0x1170] sm:$0xff] %v2151
  %2216 = vst [vmem:[#allocation3 + $0x11b8] sm:$0xff] %v2152
  %v2217 = vld [vmem:[#allocation2 + $0x8] sm:$0xff]
  %v2218 = vld [vmem:[#allocation2 + $0x10] sm:$0xff]
  %v2219 = vld [vmem:[#allocation2 + $0x18] sm:$0xff]
  %v2220 = vld [vmem:[#allocation2 + $0x20] sm:$0xff]
  %v2221 = vld [vmem:[#allocation2 + $0x28] sm:$0xff]
  %v2222 = vld [vmem:[#allocation2 + $0x30] sm:$0xff]
  %v2223 = vld [vmem:[#allocation2 + $0x38] sm:$0xff]
  %v2224 = vld [vmem:[#allocation2 + $0x40] sm:$0xff]
  %v2225 = vld [vmem:[#allocation2 + $0x48] sm:$0xff]
  %v2226 = vld [vmem:[#allocation2 + $0x50] sm:$0xff]
  %v2227 = vld [vmem:[#allocation2 + $0x58] sm:$0xff]
  %v2228 = vld [vmem:[#allocation2 + $0x60] sm:$0xff]
  %v2229 = vld [vmem:[#allocation2 + $0x68] sm:$0xff]
  %v2230 = vld [vmem:[#allocation2 + $0x70] sm:$0xff]
  %v2231 = vld [vmem:[#allocation2 + $0x78] sm:$0xff]
  %v2232 = vld [vmem:[#allocation2 + $0x80] sm:$0xff]
  %v2233 = vld [vmem:[#allocation2 + $0x88] sm:$0xff]
  %v2234 = vld [vmem:[#allocation2 + $0x90] sm:$0xff]
  %v2235 = vld [vmem:[#allocation2 + $0x98] sm:$0xff]
  %v2236 = vld [vmem:[#allocation2 + $0xa0] sm:$0xff]
  %v2237 = vld [vmem:[#allocation2 + $0xa8] sm:$0xff]
  %v2238 = vld [vmem:[#allocation2 + $0xb0] sm:$0xff]
  %v2239 = vld [vmem:[#allocation2 + $0xb8] sm:$0xff]
  %v2240 = vld [vmem:[#allocation2 + $0xc0] sm:$0xff]
  %v2241 = vld [vmem:[#allocation2 + $0xc8] sm:$0xff]
  %v2242 = vld [vmem:[#allocation2 + $0xd0] sm:$0xff]
  %v2243 = vld [vmem:[#allocation2 + $0xd8] sm:$0xff]
  %v2244 = vld [vmem:[#allocation2 + $0xe0] sm:$0xff]
  %v2245 = vld [vmem:[#allocation2 + $0xe8] sm:$0xff]
  %v2246 = vld [vmem:[#allocation2 + $0xf0] sm:$0xff]
  %v2247 = vld [vmem:[#allocation2 + $0xf8] sm:$0xff]
  %v2248 = vld [vmem:[#allocation2 + $0x100] sm:$0xff]
  %v2249 = vld [vmem:[#allocation2 + $0x108] sm:$0xff]
  %v2250 = vld [vmem:[#allocation2 + $0x110] sm:$0xff]
  %v2251 = vld [vmem:[#allocation2 + $0x118] sm:$0xff]
  %v2252 = vld [vmem:[#allocation2 + $0x120] sm:$0xff]
  %v2253 = vld [vmem:[#allocation2 + $0x128] sm:$0xff]
  %v2254 = vld [vmem:[#allocation2 + $0x130] sm:$0xff]
  %v2255 = vld [vmem:[#allocation2 + $0x138] sm:$0xff]
  %v2256 = vld [vmem:[#allocation2 + $0x140] sm:$0xff]
  %v2257 = vld [vmem:[#allocation2 + $0x148] sm:$0xff]
  %v2258 = vld [vmem:[#allocation2 + $0x150] sm:$0xff]
  %v2259 = vld [vmem:[#allocation2 + $0x158] sm:$0xff]
  %v2260 = vld [vmem:[#allocation2 + $0x160] sm:$0xff]
  %v2261 = vld [vmem:[#allocation2 + $0x168] sm:$0xff]
  %v2262 = vld [vmem:[#allocation2 + $0x170] sm:$0xff]
  %v2263 = vld [vmem:[#allocation2 + $0x178] sm:$0xff]
  %v2264 = vld [vmem:[#allocation2 + $0x180] sm:$0xff]
  %v2265 = vld [vmem:[#allocation2 + $0x188] sm:$0xff]
  %v2266 = vld [vmem:[#allocation2 + $0x190] sm:$0xff]
  %v2267 = vld [vmem:[#allocation2 + $0x198] sm:$0xff]
  %v2268 = vld [vmem:[#allocation2 + $0x1a0] sm:$0xff]
  %v2269 = vld [vmem:[#allocation2 + $0x1a8] sm:$0xff]
  %v2270 = vld [vmem:[#allocation2 + $0x1b0] sm:$0xff]
  %v2271 = vld [vmem:[#allocation2 + $0x1b8] sm:$0xff]
  %v2272 = vld [vmem:[#allocation2 + $0x1c0] sm:$0xff]
  %v2273 = vld [vmem:[#allocation2 + $0x1c8] sm:$0xff]
  %v2274 = vld [vmem:[#allocation2 + $0x1d0] sm:$0xff]
  %v2275 = vld [vmem:[#allocation2 + $0x1d8] sm:$0xff]
  %v2276 = vld [vmem:[#allocation2 + $0x1e0] sm:$0xff]
  %v2277 = vld [vmem:[#allocation2 + $0x1e8] sm:$0xff]
  %v2278 = vld [vmem:[#allocation2 + $0x1f0] sm:$0xff]
  %v2279 = vld [vmem:[#allocation2 + $0x1f8] sm:$0xff]
  %v2280 = vld [vmem:[#allocation2 + $0x200] sm:$0xff]
  %v2281 = vld [vmem:[%s1] sm:$0xff]
  %v2282 = vld [vmem:[%s1 + $0x8] sm:$0xff]
  %v2283 = vld [vmem:[%s1 + $0x10] sm:$0xff]
  %v2284 = vld [vmem:[%s1 + $0x18] sm:$0xff]
  %v2285 = vld [vmem:[%s1 + $0x20] sm:$0xff]
  %v2286 = vld [vmem:[%s1 + $0x28] sm:$0xff]
  %v2287 = vld [vmem:[%s1 + $0x30] sm:$0xff]
  %v2288 = vld [vmem:[%s1 + $0x38] sm:$0xff]
  %v2289 = vld [vmem:[%s1 + $0x40] sm:$0xff]
  %v2290 = vld [vmem:[%s1 + $0x48] sm:$0xff]
  %v2291 = vld [vmem:[%s1 + $0x50] sm:$0xff]
  %v2292 = vld [vmem:[%s1 + $0x58] sm:$0xff]
  %v2293 = vld [vmem:[%s1 + $0x60] sm:$0xff]
  %v2294 = vld [vmem:[%s1 + $0x68] sm:$0xff]
  %v2295 = vld [vmem:[%s1 + $0x70] sm:$0xff]
  %v2296 = vld [vmem:[%s1 + $0x78] sm:$0xff]
  %v2297 = vld [vmem:[%s1 + $0x80] sm:$0xff]
  %v2298 = vld [vmem:[%s1 + $0x88] sm:$0xff]
  %v2299 = vld [vmem:[%s1 + $0x90] sm:$0xff]
  %v2300 = vld [vmem:[%s1 + $0x98] sm:$0xff]
  %v2301 = vld [vmem:[%s1 + $0xa0] sm:$0xff]
  %v2302 = vld [vmem:[%s1 + $0xa8] sm:$0xff]
  %v2303 = vld [vmem:[%s1 + $0xb0] sm:$0xff]
  %v2304 = vld [vmem:[%s1 + $0xb8] sm:$0xff]
  %v2305 = vld [vmem:[%s1 + $0xc0] sm:$0xff]
  %v2306 = vld [vmem:[%s1 + $0xc8] sm:$0xff]
  %v2307 = vld [vmem:[%s1 + $0xd0] sm:$0xff]
  %v2308 = vld [vmem:[%s1 + $0xd8] sm:$0xff]
  %v2309 = vld [vmem:[%s1 + $0xe0] sm:$0xff]
  %v2310 = vld [vmem:[%s1 + $0xe8] sm:$0xff]
  %v2311 = vld [vmem:[%s1 + $0xf0] sm:$0xff]
  %v2312 = vld [vmem:[%s1 + $0xf8] sm:$0xff]
  %v2313 = vld [vmem:[%s1 + $0x100] sm:$0xff]
  %v2314 = vld [vmem:[%s1 + $0x108] sm:$0xff]
  %v2315 = vld [vmem:[%s1 + $0x110] sm:$0xff]
  %v2316 = vld [vmem:[%s1 + $0x118] sm:$0xff]
  %v2317 = vld [vmem:[%s1 + $0x120] sm:$0xff]
  %v2318 = vld [vmem:[%s1 + $0x128] sm:$0xff]
  %v2319 = vld [vmem:[%s1 + $0x130] sm:$0xff]
  %v2320 = vld [vmem:[%s1 + $0x138] sm:$0xff]
  %v2321 = vld [vmem:[%s1 + $0x140] sm:$0xff]
  %v2322 = vld [vmem:[%s1 + $0x148] sm:$0xff]
  %v2323 = vld [vmem:[%s1 + $0x150] sm:$0xff]
  %v2324 = vld [vmem:[%s1 + $0x158] sm:$0xff]
  %v2325 = vld [vmem:[%s1 + $0x160] sm:$0xff]
  %v2326 = vld [vmem:[%s1 + $0x168] sm:$0xff]
  %v2327 = vld [vmem:[%s1 + $0x170] sm:$0xff]
  %v2328 = vld [vmem:[%s1 + $0x178] sm:$0xff]
  %v2329 = vld [vmem:[%s1 + $0x180] sm:$0xff]
  %v2330 = vld [vmem:[%s1 + $0x188] sm:$0xff]
  %v2331 = vld [vmem:[%s1 + $0x190] sm:$0xff]
  %v2332 = vld [vmem:[%s1 + $0x198] sm:$0xff]
  %v2333 = vld [vmem:[%s1 + $0x1a0] sm:$0xff]
  %v2334 = vld [vmem:[%s1 + $0x1a8] sm:$0xff]
  %v2335 = vld [vmem:[%s1 + $0x1b0] sm:$0xff]
  %v2336 = vld [vmem:[%s1 + $0x1b8] sm:$0xff]
  %v2337 = vld [vmem:[%s1 + $0x1c0] sm:$0xff]
  %v2338 = vld [vmem:[%s1 + $0x1c8] sm:$0xff]
  %v2339 = vld [vmem:[%s1 + $0x1d0] sm:$0xff]
  %v2340 = vld [vmem:[%s1 + $0x1d8] sm:$0xff]
  %v2341 = vld [vmem:[%s1 + $0x1e0] sm:$0xff]
  %v2342 = vld [vmem:[%s1 + $0x1e8] sm:$0xff]
  %v2343 = vld [vmem:[%s1 + $0x1f0] sm:$0xff]
  %v2344 = vld [vmem:[%s1 + $0x1f8] sm:$0xff]
  %2346 = vset.pattern.permute.xlu0 1
  %2347 = vperm.xlu0 %2346, %v2281
  %v2348 = vpop.permute.xlu0 %2347
  %2351 = vset.pattern.permute.xlu0 1
  %2352 = vperm.xlu0 %2351, %v2282
  %v2353 = vpop.permute.xlu0 %2352
  %2356 = vset.pattern.permute.xlu0 1
  %2357 = vperm.xlu0 %2356, %v2283
  %v2358 = vpop.permute.xlu0 %2357
  %2361 = vset.pattern.permute.xlu0 1
  %2362 = vperm.xlu0 %2361, %v2284
  %v2363 = vpop.permute.xlu0 %2362
  %2366 = vset.pattern.permute.xlu0 1
  %2367 = vperm.xlu0 %2366, %v2285
  %v2368 = vpop.permute.xlu0 %2367
  %2371 = vset.pattern.permute.xlu0 1
  %2372 = vperm.xlu0 %2371, %v2286
  %v2373 = vpop.permute.xlu0 %2372
  %2376 = vset.pattern.permute.xlu0 1
  %2377 = vperm.xlu0 %2376, %v2287
  %v2378 = vpop.permute.xlu0 %2377
  %2381 = vset.pattern.permute.xlu0 1
  %2382 = vperm.xlu0 %2381, %v2288
  %v2383 = vpop.permute.xlu0 %2382
  %2386 = vset.pattern.permute.xlu0 1
  %2387 = vperm.xlu0 %2386, %v2289
  %v2388 = vpop.permute.xlu0 %2387
  %2391 = vset.pattern.permute.xlu0 1
  %2392 = vperm.xlu0 %2391, %v2290
  %v2393 = vpop.permute.xlu0 %2392
  %2396 = vset.pattern.permute.xlu0 1
  %2397 = vperm.xlu0 %2396, %v2291
  %v2398 = vpop.permute.xlu0 %2397
  %2401 = vset.pattern.permute.xlu0 1
  %2402 = vperm.xlu0 %2401, %v2292
  %v2403 = vpop.permute.xlu0 %2402
  %2406 = vset.pattern.permute.xlu0 1
  %2407 = vperm.xlu0 %2406, %v2293
  %v2408 = vpop.permute.xlu0 %2407
  %2411 = vset.pattern.permute.xlu0 1
  %2412 = vperm.xlu0 %2411, %v2294
  %v2413 = vpop.permute.xlu0 %2412
  %2416 = vset.pattern.permute.xlu0 1
  %2417 = vperm.xlu0 %2416, %v2295
  %v2418 = vpop.permute.xlu0 %2417
  %2421 = vset.pattern.permute.xlu0 1
  %2422 = vperm.xlu0 %2421, %v2296
  %v2423 = vpop.permute.xlu0 %2422
  %2426 = vset.pattern.permute.xlu0 1
  %2427 = vperm.xlu0 %2426, %v2297
  %v2428 = vpop.permute.xlu0 %2427
  %2431 = vset.pattern.permute.xlu0 1
  %2432 = vperm.xlu0 %2431, %v2298
  %v2433 = vpop.permute.xlu0 %2432
  %2436 = vset.pattern.permute.xlu0 1
  %2437 = vperm.xlu0 %2436, %v2299
  %v2438 = vpop.permute.xlu0 %2437
  %2441 = vset.pattern.permute.xlu0 1
  %2442 = vperm.xlu0 %2441, %v2300
  %v2443 = vpop.permute.xlu0 %2442
  %2446 = vset.pattern.permute.xlu0 1
  %2447 = vperm.xlu0 %2446, %v2301
  %v2448 = vpop.permute.xlu0 %2447
  %2451 = vset.pattern.permute.xlu0 1
  %2452 = vperm.xlu0 %2451, %v2302
  %v2453 = vpop.permute.xlu0 %2452
  %2456 = vset.pattern.permute.xlu0 1
  %2457 = vperm.xlu0 %2456, %v2303
  %v2458 = vpop.permute.xlu0 %2457
  %2461 = vset.pattern.permute.xlu0 1
  %2462 = vperm.xlu0 %2461, %v2304
  %v2463 = vpop.permute.xlu0 %2462
  %2466 = vset.pattern.permute.xlu0 1
  %2467 = vperm.xlu0 %2466, %v2305
  %v2468 = vpop.permute.xlu0 %2467
  %2471 = vset.pattern.permute.xlu0 1
  %2472 = vperm.xlu0 %2471, %v2306
  %v2473 = vpop.permute.xlu0 %2472
  %2476 = vset.pattern.permute.xlu0 1
  %2477 = vperm.xlu0 %2476, %v2307
  %v2478 = vpop.permute.xlu0 %2477
  %2481 = vset.pattern.permute.xlu0 1
  %2482 = vperm.xlu0 %2481, %v2308
  %v2483 = vpop.permute.xlu0 %2482
  %2486 = vset.pattern.permute.xlu0 1
  %2487 = vperm.xlu0 %2486, %v2309
  %v2488 = vpop.permute.xlu0 %2487
  %2491 = vset.pattern.permute.xlu0 1
  %2492 = vperm.xlu0 %2491, %v2310
  %v2493 = vpop.permute.xlu0 %2492
  %2496 = vset.pattern.permute.xlu0 1
  %2497 = vperm.xlu0 %2496, %v2311
  %v2498 = vpop.permute.xlu0 %2497
  %2501 = vset.pattern.permute.xlu0 1
  %2502 = vperm.xlu0 %2501, %v2312
  %v2503 = vpop.permute.xlu0 %2502
  %2506 = vset.pattern.permute.xlu0 1
  %2507 = vperm.xlu0 %2506, %v2313
  %v2508 = vpop.permute.xlu0 %2507
  %2511 = vset.pattern.permute.xlu0 1
  %2512 = vperm.xlu0 %2511, %v2314
  %v2513 = vpop.permute.xlu0 %2512
  %2516 = vset.pattern.permute.xlu0 1
  %2517 = vperm.xlu0 %2516, %v2315
  %v2518 = vpop.permute.xlu0 %2517
  %2521 = vset.pattern.permute.xlu0 1
  %2522 = vperm.xlu0 %2521, %v2316
  %v2523 = vpop.permute.xlu0 %2522
  %2526 = vset.pattern.permute.xlu0 1
  %2527 = vperm.xlu0 %2526, %v2317
  %v2528 = vpop.permute.xlu0 %2527
  %2531 = vset.pattern.permute.xlu0 1
  %2532 = vperm.xlu0 %2531, %v2318
  %v2533 = vpop.permute.xlu0 %2532
  %2536 = vset.pattern.permute.xlu0 1
  %2537 = vperm.xlu0 %2536, %v2319
  %v2538 = vpop.permute.xlu0 %2537
  %2541 = vset.pattern.permute.xlu0 1
  %2542 = vperm.xlu0 %2541, %v2320
  %v2543 = vpop.permute.xlu0 %2542
  %2546 = vset.pattern.permute.xlu0 1
  %2547 = vperm.xlu0 %2546, %v2321
  %v2548 = vpop.permute.xlu0 %2547
  %2551 = vset.pattern.permute.xlu0 1
  %2552 = vperm.xlu0 %2551, %v2322
  %v2553 = vpop.permute.xlu0 %2552
  %2556 = vset.pattern.permute.xlu0 1
  %2557 = vperm.xlu0 %2556, %v2323
  %v2558 = vpop.permute.xlu0 %2557
  %2561 = vset.pattern.permute.xlu0 1
  %2562 = vperm.xlu0 %2561, %v2324
  %v2563 = vpop.permute.xlu0 %2562
  %2566 = vset.pattern.permute.xlu0 1
  %2567 = vperm.xlu0 %2566, %v2325
  %v2568 = vpop.permute.xlu0 %2567
  %2571 = vset.pattern.permute.xlu0 1
  %2572 = vperm.xlu0 %2571, %v2326
  %v2573 = vpop.permute.xlu0 %2572
  %2576 = vset.pattern.permute.xlu0 1
  %2577 = vperm.xlu0 %2576, %v2327
  %v2578 = vpop.permute.xlu0 %2577
  %2581 = vset.pattern.permute.xlu0 1
  %2582 = vperm.xlu0 %2581, %v2328
  %v2583 = vpop.permute.xlu0 %2582
  %2586 = vset.pattern.permute.xlu0 1
  %2587 = vperm.xlu0 %2586, %v2329
  %v2588 = vpop.permute.xlu0 %2587
  %2591 = vset.pattern.permute.xlu0 1
  %2592 = vperm.xlu0 %2591, %v2330
  %v2593 = vpop.permute.xlu0 %2592
  %2596 = vset.pattern.permute.xlu0 1
  %2597 = vperm.xlu0 %2596, %v2331
  %v2598 = vpop.permute.xlu0 %2597
  %2601 = vset.pattern.permute.xlu0 1
  %2602 = vperm.xlu0 %2601, %v2332
  %v2603 = vpop.permute.xlu0 %2602
  %2606 = vset.pattern.permute.xlu0 1
  %2607 = vperm.xlu0 %2606, %v2333
  %v2608 = vpop.permute.xlu0 %2607
  %2611 = vset.pattern.permute.xlu0 1
  %2612 = vperm.xlu0 %2611, %v2334
  %v2613 = vpop.permute.xlu0 %2612
  %2616 = vset.pattern.permute.xlu0 1
  %2617 = vperm.xlu0 %2616, %v2335
  %v2618 = vpop.permute.xlu0 %2617
  %2621 = vset.pattern.permute.xlu0 1
  %2622 = vperm.xlu0 %2621, %v2336
  %v2623 = vpop.permute.xlu0 %2622
  %2626 = vset.pattern.permute.xlu0 1
  %2627 = vperm.xlu0 %2626, %v2337
  %v2628 = vpop.permute.xlu0 %2627
  %2631 = vset.pattern.permute.xlu0 1
  %2632 = vperm.xlu0 %2631, %v2338
  %v2633 = vpop.permute.xlu0 %2632
  %2636 = vset.pattern.permute.xlu0 1
  %2637 = vperm.xlu0 %2636, %v2339
  %v2638 = vpop.permute.xlu0 %2637
  %2641 = vset.pattern.permute.xlu0 1
  %2642 = vperm.xlu0 %2641, %v2340
  %v2643 = vpop.permute.xlu0 %2642
  %2646 = vset.pattern.permute.xlu0 1
  %2647 = vperm.xlu0 %2646, %v2341
  %v2648 = vpop.permute.xlu0 %2647
  %2651 = vset.pattern.permute.xlu0 1
  %2652 = vperm.xlu0 %2651, %v2342
  %v2653 = vpop.permute.xlu0 %2652
  %2656 = vset.pattern.permute.xlu0 1
  %2657 = vperm.xlu0 %2656, %v2343
  %v2658 = vpop.permute.xlu0 %2657
  %2661 = vset.pattern.permute.xlu0 1
  %2662 = vperm.xlu0 %2661, %v2344
  %v2663 = vpop.permute.xlu0 %2662
  %v2665 = vmul.f32 %v2217, %v2348
  %v2666 = vmul.f32 %v2218, %v2353
  %v2667 = vmul.f32 %v2219, %v2358
  %v2668 = vmul.f32 %v2220, %v2363
  %v2669 = vmul.f32 %v2221, %v2368
  %v2670 = vmul.f32 %v2222, %v2373
  %v2671 = vmul.f32 %v2223, %v2378
  %v2672 = vmul.f32 %v2224, %v2383
  %v2673 = vmul.f32 %v2225, %v2388
  %v2674 = vmul.f32 %v2226, %v2393
  %v2675 = vmul.f32 %v2227, %v2398
  %v2676 = vmul.f32 %v2228, %v2403
  %v2677 = vmul.f32 %v2229, %v2408
  %v2678 = vmul.f32 %v2230, %v2413
  %v2679 = vmul.f32 %v2231, %v2418
  %v2680 = vmul.f32 %v2232, %v2423
  %v2681 = vmul.f32 %v2233, %v2428
  %v2682 = vmul.f32 %v2234, %v2433
  %v2683 = vmul.f32 %v2235, %v2438
  %v2684 = vmul.f32 %v2236, %v2443
  %v2685 = vmul.f32 %v2237, %v2448
  %v2686 = vmul.f32 %v2238, %v2453
  %v2687 = vmul.f32 %v2239, %v2458
  %v2688 = vmul.f32 %v2240, %v2463
  %v2689 = vmul.f32 %v2241, %v2468
  %v2690 = vmul.f32 %v2242, %v2473
  %v2691 = vmul.f32 %v2243, %v2478
  %v2692 = vmul.f32 %v2244, %v2483
  %v2693 = vmul.f32 %v2245, %v2488
  %v2694 = vmul.f32 %v2246, %v2493
  %v2695 = vmul.f32 %v2247, %v2498
  %v2696 = vmul.f32 %v2248, %v2503
  %v2697 = vmul.f32 %v2249, %v2508
  %v2698 = vmul.f32 %v2250, %v2513
  %v2699 = vmul.f32 %v2251, %v2518
  %v2700 = vmul.f32 %v2252, %v2523
  %v2701 = vmul.f32 %v2253, %v2528
  %v2702 = vmul.f32 %v2254, %v2533
  %v2703 = vmul.f32 %v2255, %v2538
  %v2704 = vmul.f32 %v2256, %v2543
  %v2705 = vmul.f32 %v2257, %v2548
  %v2706 = vmul.f32 %v2258, %v2553
  %v2707 = vmul.f32 %v2259, %v2558
  %v2708 = vmul.f32 %v2260, %v2563
  %v2709 = vmul.f32 %v2261, %v2568
  %v2710 = vmul.f32 %v2262, %v2573
  %v2711 = vmul.f32 %v2263, %v2578
  %v2712 = vmul.f32 %v2264, %v2583
  %v2713 = vmul.f32 %v2265, %v2588
  %v2714 = vmul.f32 %v2266, %v2593
  %v2715 = vmul.f32 %v2267, %v2598
  %v2716 = vmul.f32 %v2268, %v2603
  %v2717 = vmul.f32 %v2269, %v2608
  %v2718 = vmul.f32 %v2270, %v2613
  %v2719 = vmul.f32 %v2271, %v2618
  %v2720 = vmul.f32 %v2272, %v2623
  %v2721 = vmul.f32 %v2273, %v2628
  %v2722 = vmul.f32 %v2274, %v2633
  %v2723 = vmul.f32 %v2275, %v2638
  %v2724 = vmul.f32 %v2276, %v2643
  %v2725 = vmul.f32 %v2277, %v2648
  %v2726 = vmul.f32 %v2278, %v2653
  %v2727 = vmul.f32 %v2279, %v2658
  %v2728 = vmul.f32 %v2280, %v2663
  %2729 = vst [vmem:[#allocation3 + $0x8] sm:$0xff] %v2665
  %2730 = vst [vmem:[#allocation3 + $0x50] sm:$0xff] %v2666
  %2731 = vst [vmem:[#allocation3 + $0x98] sm:$0xff] %v2667
  %2732 = vst [vmem:[#allocation3 + $0xe0] sm:$0xff] %v2668
  %2733 = vst [vmem:[#allocation3 + $0x128] sm:$0xff] %v2669
  %2734 = vst [vmem:[#allocation3 + $0x170] sm:$0xff] %v2670
  %2735 = vst [vmem:[#allocation3 + $0x1b8] sm:$0xff] %v2671
  %2736 = vst [vmem:[#allocation3 + $0x200] sm:$0xff] %v2672
  %2737 = vst [vmem:[#allocation3 + $0x248] sm:$0xff] %v2673
  %2738 = vst [vmem:[#allocation3 + $0x290] sm:$0xff] %v2674
  %2739 = vst [vmem:[#allocation3 + $0x2d8] sm:$0xff] %v2675
  %2740 = vst [vmem:[#allocation3 + $0x320] sm:$0xff] %v2676
  %2741 = vst [vmem:[#allocation3 + $0x368] sm:$0xff] %v2677
  %2742 = vst [vmem:[#allocation3 + $0x3b0] sm:$0xff] %v2678
  %2743 = vst [vmem:[#allocation3 + $0x3f8] sm:$0xff] %v2679
  %2744 = vst [vmem:[#allocation3 + $0x440] sm:$0xff] %v2680
  %2745 = vst [vmem:[#allocation3 + $0x488] sm:$0xff] %v2681
  %2746 = vst [vmem:[#allocation3 + $0x4d0] sm:$0xff] %v2682
  %2747 = vst [vmem:[#allocation3 + $0x518] sm:$0xff] %v2683
  %2748 = vst [vmem:[#allocation3 + $0x560] sm:$0xff] %v2684
  %2749 = vst [vmem:[#allocation3 + $0x5a8] sm:$0xff] %v2685
  %2750 = vst [vmem:[#allocation3 + $0x5f0] sm:$0xff] %v2686
  %2751 = vst [vmem:[#allocation3 + $0x638] sm:$0xff] %v2687
  %2752 = vst [vmem:[#allocation3 + $0x680] sm:$0xff] %v2688
  %2753 = vst [vmem:[#allocation3 + $0x6c8] sm:$0xff] %v2689
  %2754 = vst [vmem:[#allocation3 + $0x710] sm:$0xff] %v2690
  %2755 = vst [vmem:[#allocation3 + $0x758] sm:$0xff] %v2691
  %2756 = vst [vmem:[#allocation3 + $0x7a0] sm:$0xff] %v2692
  %2757 = vst [vmem:[#allocation3 + $0x7e8] sm:$0xff] %v2693
  %2758 = vst [vmem:[#allocation3 + $0x830] sm:$0xff] %v2694
  %2759 = vst [vmem:[#allocation3 + $0x878] sm:$0xff] %v2695
  %2760 = vst [vmem:[#allocation3 + $0x8c0] sm:$0xff] %v2696
  %2761 = vst [vmem:[#allocation3 + $0x908] sm:$0xff] %v2697
  %2762 = vst [vmem:[#allocation3 + $0x950] sm:$0xff] %v2698
  %2763 = vst [vmem:[#allocation3 + $0x998] sm:$0xff] %v2699
  %2764 = vst [vmem:[#allocation3 + $0x9e0] sm:$0xff] %v2700
  %2765 = vst [vmem:[#allocation3 + $0xa28] sm:$0xff] %v2701
  %2766 = vst [vmem:[#allocation3 + $0xa70] sm:$0xff] %v2702
  %2767 = vst [vmem:[#allocation3 + $0xab8] sm:$0xff] %v2703
  %2768 = vst [vmem:[#allocation3 + $0xb00] sm:$0xff] %v2704
  %2769 = vst [vmem:[#allocation3 + $0xb48] sm:$0xff] %v2705
  %2770 = vst [vmem:[#allocation3 + $0xb90] sm:$0xff] %v2706
  %2771 = vst [vmem:[#allocation3 + $0xbd8] sm:$0xff] %v2707
  %2772 = vst [vmem:[#allocation3 + $0xc20] sm:$0xff] %v2708
  %2773 = vst [vmem:[#allocation3 + $0xc68] sm:$0xff] %v2709
  %2774 = vst [vmem:[#allocation3 + $0xcb0] sm:$0xff] %v2710
  %2775 = vst [vmem:[#allocation3 + $0xcf8] sm:$0xff] %v2711
  %2776 = vst [vmem:[#allocation3 + $0xd40] sm:$0xff] %v2712
  %2777 = vst [vmem:[#allocation3 + $0xd88] sm:$0xff] %v2713
  %2778 = vst [vmem:[#allocation3 + $0xdd0] sm:$0xff] %v2714
  %2779 = vst [vmem:[#allocation3 + $0xe18] sm:$0xff] %v2715
  %2780 = vst [vmem:[#allocation3 + $0xe60] sm:$0xff] %v2716
  %2781 = vst [vmem:[#allocation3 + $0xea8] sm:$0xff] %v2717
  %2782 = vst [vmem:[#allocation3 + $0xef0] sm:$0xff] %v2718
  %2783 = vst [vmem:[#allocation3 + $0xf38] sm:$0xff] %v2719
  %2784 = vst [vmem:[#allocation3 + $0xf80] sm:$0xff] %v2720
  %2785 = vst [vmem:[#allocation3 + $0xfc8] sm:$0xff] %v2721
  %2786 = vst [vmem:[#allocation3 + $0x1010] sm:$0xff] %v2722
  %2787 = vst [vmem:[#allocation3 + $0x1058] sm:$0xff] %v2723
  %2788 = vst [vmem:[#allocation3 + $0x10a0] sm:$0xff] %v2724
  %2789 = vst [vmem:[#allocation3 + $0x10e8] sm:$0xff] %v2725
  %2790 = vst [vmem:[#allocation3 + $0x1130] sm:$0xff] %v2726
  %2791 = vst [vmem:[#allocation3 + $0x1178] sm:$0xff] %v2727
  %2792 = vst [vmem:[#allocation3 + $0x11c0] sm:$0xff] %v2728
  %v2793 = vld [vmem:[#allocation2 + $0x9] sm:$0xff]
  %v2794 = vld [vmem:[#allocation2 + $0x11] sm:$0xff]
  %v2795 = vld [vmem:[#allocation2 + $0x19] sm:$0xff]
  %v2796 = vld [vmem:[#allocation2 + $0x21] sm:$0xff]
  %v2797 = vld [vmem:[#allocation2 + $0x29] sm:$0xff]
  %v2798 = vld [vmem:[#allocation2 + $0x31] sm:$0xff]
  %v2799 = vld [vmem:[#allocation2 + $0x39] sm:$0xff]
  %v2800 = vld [vmem:[#allocation2 + $0x41] sm:$0xff]
  %v2801 = vld [vmem:[#allocation2 + $0x49] sm:$0xff]
  %v2802 = vld [vmem:[#allocation2 + $0x51] sm:$0xff]
  %v2803 = vld [vmem:[#allocation2 + $0x59] sm:$0xff]
  %v2804 = vld [vmem:[#allocation2 + $0x61] sm:$0xff]
  %v2805 = vld [vmem:[#allocation2 + $0x69] sm:$0xff]
  %v2806 = vld [vmem:[#allocation2 + $0x71] sm:$0xff]
  %v2807 = vld [vmem:[#allocation2 + $0x79] sm:$0xff]
  %v2808 = vld [vmem:[#allocation2 + $0x81] sm:$0xff]
  %v2809 = vld [vmem:[#allocation2 + $0x89] sm:$0xff]
  %v2810 = vld [vmem:[#allocation2 + $0x91] sm:$0xff]
  %v2811 = vld [vmem:[#allocation2 + $0x99] sm:$0xff]
  %v2812 = vld [vmem:[#allocation2 + $0xa1] sm:$0xff]
  %v2813 = vld [vmem:[#allocation2 + $0xa9] sm:$0xff]
  %v2814 = vld [vmem:[#allocation2 + $0xb1] sm:$0xff]
  %v2815 = vld [vmem:[#allocation2 + $0xb9] sm:$0xff]
  %v2816 = vld [vmem:[#allocation2 + $0xc1] sm:$0xff]
  %v2817 = vld [vmem:[#allocation2 + $0xc9] sm:$0xff]
  %v2818 = vld [vmem:[#allocation2 + $0xd1] sm:$0xff]
  %v2819 = vld [vmem:[#allocation2 + $0xd9] sm:$0xff]
  %v2820 = vld [vmem:[#allocation2 + $0xe1] sm:$0xff]
  %v2821 = vld [vmem:[#allocation2 + $0xe9] sm:$0xff]
  %v2822 = vld [vmem:[#allocation2 + $0xf1] sm:$0xff]
  %v2823 = vld [vmem:[#allocation2 + $0xf9] sm:$0xff]
  %v2824 = vld [vmem:[#allocation2 + $0x101] sm:$0xff]
  %v2825 = vld [vmem:[#allocation2 + $0x109] sm:$0xff]
  %v2826 = vld [vmem:[#allocation2 + $0x111] sm:$0xff]
  %v2827 = vld [vmem:[#allocation2 + $0x119] sm:$0xff]
  %v2828 = vld [vmem:[#allocation2 + $0x121] sm:$0xff]
  %v2829 = vld [vmem:[#allocation2 + $0x129] sm:$0xff]
  %v2830 = vld [vmem:[#allocation2 + $0x131] sm:$0xff]
  %v2831 = vld [vmem:[#allocation2 + $0x139] sm:$0xff]
  %v2832 = vld [vmem:[#allocation2 + $0x141] sm:$0xff]
  %v2833 = vld [vmem:[#allocation2 + $0x149] sm:$0xff]
  %v2834 = vld [vmem:[#allocation2 + $0x151] sm:$0xff]
  %v2835 = vld [vmem:[#allocation2 + $0x159] sm:$0xff]
  %v2836 = vld [vmem:[#allocation2 + $0x161] sm:$0xff]
  %v2837 = vld [vmem:[#allocation2 + $0x169] sm:$0xff]
  %v2838 = vld [vmem:[#allocation2 + $0x171] sm:$0xff]
  %v2839 = vld [vmem:[#allocation2 + $0x179] sm:$0xff]
  %v2840 = vld [vmem:[#allocation2 + $0x181] sm:$0xff]
  %v2841 = vld [vmem:[#allocation2 + $0x189] sm:$0xff]
  %v2842 = vld [vmem:[#allocation2 + $0x191] sm:$0xff]
  %v2843 = vld [vmem:[#allocation2 + $0x199] sm:$0xff]
  %v2844 = vld [vmem:[#allocation2 + $0x1a1] sm:$0xff]
  %v2845 = vld [vmem:[#allocation2 + $0x1a9] sm:$0xff]
  %v2846 = vld [vmem:[#allocation2 + $0x1b1] sm:$0xff]
  %v2847 = vld [vmem:[#allocation2 + $0x1b9] sm:$0xff]
  %v2848 = vld [vmem:[#allocation2 + $0x1c1] sm:$0xff]
  %v2849 = vld [vmem:[#allocation2 + $0x1c9] sm:$0xff]
  %v2850 = vld [vmem:[#allocation2 + $0x1d1] sm:$0xff]
  %v2851 = vld [vmem:[#allocation2 + $0x1d9] sm:$0xff]
  %v2852 = vld [vmem:[#allocation2 + $0x1e1] sm:$0xff]
  %v2853 = vld [vmem:[#allocation2 + $0x1e9] sm:$0xff]
  %v2854 = vld [vmem:[#allocation2 + $0x1f1] sm:$0xff]
  %v2855 = vld [vmem:[#allocation2 + $0x1f9] sm:$0xff]
  %v2856 = vld [vmem:[#allocation2 + $0x201] sm:$0xff]
  %v2857 = vld [vmem:[%s1] sm:$0xff]
  %v2858 = vld [vmem:[%s1 + $0x8] sm:$0xff]
  %v2859 = vld [vmem:[%s1 + $0x10] sm:$0xff]
  %v2860 = vld [vmem:[%s1 + $0x18] sm:$0xff]
  %v2861 = vld [vmem:[%s1 + $0x20] sm:$0xff]
  %v2862 = vld [vmem:[%s1 + $0x28] sm:$0xff]
  %v2863 = vld [vmem:[%s1 + $0x30] sm:$0xff]
  %v2864 = vld [vmem:[%s1 + $0x38] sm:$0xff]
  %v2865 = vld [vmem:[%s1 + $0x40] sm:$0xff]
  %v2866 = vld [vmem:[%s1 + $0x48] sm:$0xff]
  %v2867 = vld [vmem:[%s1 + $0x50] sm:$0xff]
  %v2868 = vld [vmem:[%s1 + $0x58] sm:$0xff]
  %v2869 = vld [vmem:[%s1 + $0x60] sm:$0xff]
  %v2870 = vld [vmem:[%s1 + $0x68] sm:$0xff]
  %v2871 = vld [vmem:[%s1 + $0x70] sm:$0xff]
  %v2872 = vld [vmem:[%s1 + $0x78] sm:$0xff]
  %v2873 = vld [vmem:[%s1 + $0x80] sm:$0xff]
  %v2874 = vld [vmem:[%s1 + $0x88] sm:$0xff]
  %v2875 = vld [vmem:[%s1 + $0x90] sm:$0xff]
  %v2876 = vld [vmem:[%s1 + $0x98] sm:$0xff]
  %v2877 = vld [vmem:[%s1 + $0xa0] sm:$0xff]
  %v2878 = vld [vmem:[%s1 + $0xa8] sm:$0xff]
  %v2879 = vld [vmem:[%s1 + $0xb0] sm:$0xff]
  %v2880 = vld [vmem:[%s1 + $0xb8] sm:$0xff]
  %v2881 = vld [vmem:[%s1 + $0xc0] sm:$0xff]
  %v2882 = vld [vmem:[%s1 + $0xc8] sm:$0xff]
  %v2883 = vld [vmem:[%s1 + $0xd0] sm:$0xff]
  %v2884 = vld [vmem:[%s1 + $0xd8] sm:$0xff]
  %v2885 = vld [vmem:[%s1 + $0xe0] sm:$0xff]
  %v2886 = vld [vmem:[%s1 + $0xe8] sm:$0xff]
  %v2887 = vld [vmem:[%s1 + $0xf0] sm:$0xff]
  %v2888 = vld [vmem:[%s1 + $0xf8] sm:$0xff]
  %v2889 = vld [vmem:[%s1 + $0x100] sm:$0xff]
  %v2890 = vld [vmem:[%s1 + $0x108] sm:$0xff]
  %v2891 = vld [vmem:[%s1 + $0x110] sm:$0xff]
  %v2892 = vld [vmem:[%s1 + $0x118] sm:$0xff]
  %v2893 = vld [vmem:[%s1 + $0x120] sm:$0xff]
  %v2894 = vld [vmem:[%s1 + $0x128] sm:$0xff]
  %v2895 = vld [vmem:[%s1 + $0x130] sm:$0xff]
  %v2896 = vld [vmem:[%s1 + $0x138] sm:$0xff]
  %v2897 = vld [vmem:[%s1 + $0x140] sm:$0xff]
  %v2898 = vld [vmem:[%s1 + $0x148] sm:$0xff]
  %v2899 = vld [vmem:[%s1 + $0x150] sm:$0xff]
  %v2900 = vld [vmem:[%s1 + $0x158] sm:$0xff]
  %v2901 = vld [vmem:[%s1 + $0x160] sm:$0xff]
  %v2902 = vld [vmem:[%s1 + $0x168] sm:$0xff]
  %v2903 = vld [vmem:[%s1 + $0x170] sm:$0xff]
  %v2904 = vld [vmem:[%s1 + $0x178] sm:$0xff]
  %v2905 = vld [vmem:[%s1 + $0x180] sm:$0xff]
  %v2906 = vld [vmem:[%s1 + $0x188] sm:$0xff]
  %v2907 = vld [vmem:[%s1 + $0x190] sm:$0xff]
  %v2908 = vld [vmem:[%s1 + $0x198] sm:$0xff]
  %v2909 = vld [vmem:[%s1 + $0x1a0] sm:$0xff]
  %v2910 = vld [vmem:[%s1 + $0x1a8] sm:$0xff]
  %v2911 = vld [vmem:[%s1 + $0x1b0] sm:$0xff]
  %v2912 = vld [vmem:[%s1 + $0x1b8] sm:$0xff]
  %v2913 = vld [vmem:[%s1 + $0x1c0] sm:$0xff]
  %v2914 = vld [vmem:[%s1 + $0x1c8] sm:$0xff]
  %v2915 = vld [vmem:[%s1 + $0x1d0] sm:$0xff]
  %v2916 = vld [vmem:[%s1 + $0x1d8] sm:$0xff]
  %v2917 = vld [vmem:[%s1 + $0x1e0] sm:$0xff]
  %v2918 = vld [vmem:[%s1 + $0x1e8] sm:$0xff]
  %v2919 = vld [vmem:[%s1 + $0x1f0] sm:$0xff]
  %v2920 = vld [vmem:[%s1 + $0x1f8] sm:$0xff]
  %2922 = vset.pattern.permute.xlu0 2
  %2923 = vperm.xlu0 %2922, %v2857
  %v2924 = vpop.permute.xlu0 %2923
  %2927 = vset.pattern.permute.xlu0 2
  %2928 = vperm.xlu0 %2927, %v2858
  %v2929 = vpop.permute.xlu0 %2928
  %2932 = vset.pattern.permute.xlu0 2
  %2933 = vperm.xlu0 %2932, %v2859
  %v2934 = vpop.permute.xlu0 %2933
  %2937 = vset.pattern.permute.xlu0 2
  %2938 = vperm.xlu0 %2937, %v2860
  %v2939 = vpop.permute.xlu0 %2938
  %2942 = vset.pattern.permute.xlu0 2
  %2943 = vperm.xlu0 %2942, %v2861
  %v2944 = vpop.permute.xlu0 %2943
  %2947 = vset.pattern.permute.xlu0 2
  %2948 = vperm.xlu0 %2947, %v2862
  %v2949 = vpop.permute.xlu0 %2948
  %2952 = vset.pattern.permute.xlu0 2
  %2953 = vperm.xlu0 %2952, %v2863
  %v2954 = vpop.permute.xlu0 %2953
  %2957 = vset.pattern.permute.xlu0 2
  %2958 = vperm.xlu0 %2957, %v2864
  %v2959 = vpop.permute.xlu0 %2958
  %2962 = vset.pattern.permute.xlu0 2
  %2963 = vperm.xlu0 %2962, %v2865
  %v2964 = vpop.permute.xlu0 %2963
  %2967 = vset.pattern.permute.xlu0 2
  %2968 = vperm.xlu0 %2967, %v2866
  %v2969 = vpop.permute.xlu0 %2968
  %2972 = vset.pattern.permute.xlu0 2
  %2973 = vperm.xlu0 %2972, %v2867
  %v2974 = vpop.permute.xlu0 %2973
  %2977 = vset.pattern.permute.xlu0 2
  %2978 = vperm.xlu0 %2977, %v2868
  %v2979 = vpop.permute.xlu0 %2978
  %2982 = vset.pattern.permute.xlu0 2
  %2983 = vperm.xlu0 %2982, %v2869
  %v2984 = vpop.permute.xlu0 %2983
  %2987 = vset.pattern.permute.xlu0 2
  %2988 = vperm.xlu0 %2987, %v2870
  %v2989 = vpop.permute.xlu0 %2988
  %2992 = vset.pattern.permute.xlu0 2
  %2993 = vperm.xlu0 %2992, %v2871
  %v2994 = vpop.permute.xlu0 %2993
  %2997 = vset.pattern.permute.xlu0 2
  %2998 = vperm.xlu0 %2997, %v2872
  %v2999 = vpop.permute.xlu0 %2998
  %3002 = vset.pattern.permute.xlu0 2
  %3003 = vperm.xlu0 %3002, %v2873
  %v3004 = vpop.permute.xlu0 %3003
  %3007 = vset.pattern.permute.xlu0 2
  %3008 = vperm.xlu0 %3007, %v2874
  %v3009 = vpop.permute.xlu0 %3008
  %3012 = vset.pattern.permute.xlu0 2
  %3013 = vperm.xlu0 %3012, %v2875
  %v3014 = vpop.permute.xlu0 %3013
  %3017 = vset.pattern.permute.xlu0 2
  %3018 = vperm.xlu0 %3017, %v2876
  %v3019 = vpop.permute.xlu0 %3018
  %3022 = vset.pattern.permute.xlu0 2
  %3023 = vperm.xlu0 %3022, %v2877
  %v3024 = vpop.permute.xlu0 %3023
  %3027 = vset.pattern.permute.xlu0 2
  %3028 = vperm.xlu0 %3027, %v2878
  %v3029 = vpop.permute.xlu0 %3028
  %3032 = vset.pattern.permute.xlu0 2
  %3033 = vperm.xlu0 %3032, %v2879
  %v3034 = vpop.permute.xlu0 %3033
  %3037 = vset.pattern.permute.xlu0 2
  %3038 = vperm.xlu0 %3037, %v2880
  %v3039 = vpop.permute.xlu0 %3038
  %3042 = vset.pattern.permute.xlu0 2
  %3043 = vperm.xlu0 %3042, %v2881
  %v3044 = vpop.permute.xlu0 %3043
  %3047 = vset.pattern.permute.xlu0 2
  %3048 = vperm.xlu0 %3047, %v2882
  %v3049 = vpop.permute.xlu0 %3048
  %3052 = vset.pattern.permute.xlu0 2
  %3053 = vperm.xlu0 %3052, %v2883
  %v3054 = vpop.permute.xlu0 %3053
  %3057 = vset.pattern.permute.xlu0 2
  %3058 = vperm.xlu0 %3057, %v2884
  %v3059 = vpop.permute.xlu0 %3058
  %3062 = vset.pattern.permute.xlu0 2
  %3063 = vperm.xlu0 %3062, %v2885
  %v3064 = vpop.permute.xlu0 %3063
  %3067 = vset.pattern.permute.xlu0 2
  %3068 = vperm.xlu0 %3067, %v2886
  %v3069 = vpop.permute.xlu0 %3068
  %3072 = vset.pattern.permute.xlu0 2
  %3073 = vperm.xlu0 %3072, %v2887
  %v3074 = vpop.permute.xlu0 %3073
  %3077 = vset.pattern.permute.xlu0 2
  %3078 = vperm.xlu0 %3077, %v2888
  %v3079 = vpop.permute.xlu0 %3078
  %3082 = vset.pattern.permute.xlu0 2
  %3083 = vperm.xlu0 %3082, %v2889
  %v3084 = vpop.permute.xlu0 %3083
  %3087 = vset.pattern.permute.xlu0 2
  %3088 = vperm.xlu0 %3087, %v2890
  %v3089 = vpop.permute.xlu0 %3088
  %3092 = vset.pattern.permute.xlu0 2
  %3093 = vperm.xlu0 %3092, %v2891
  %v3094 = vpop.permute.xlu0 %3093
  %3097 = vset.pattern.permute.xlu0 2
  %3098 = vperm.xlu0 %3097, %v2892
  %v3099 = vpop.permute.xlu0 %3098
  %3102 = vset.pattern.permute.xlu0 2
  %3103 = vperm.xlu0 %3102, %v2893
  %v3104 = vpop.permute.xlu0 %3103
  %3107 = vset.pattern.permute.xlu0 2
  %3108 = vperm.xlu0 %3107, %v2894
  %v3109 = vpop.permute.xlu0 %3108
  %3112 = vset.pattern.permute.xlu0 2
  %3113 = vperm.xlu0 %3112, %v2895
  %v3114 = vpop.permute.xlu0 %3113
  %3117 = vset.pattern.permute.xlu0 2
  %3118 = vperm.xlu0 %3117, %v2896
  %v3119 = vpop.permute.xlu0 %3118
  %3122 = vset.pattern.permute.xlu0 2
  %3123 = vperm.xlu0 %3122, %v2897
  %v3124 = vpop.permute.xlu0 %3123
  %3127 = vset.pattern.permute.xlu0 2
  %3128 = vperm.xlu0 %3127, %v2898
  %v3129 = vpop.permute.xlu0 %3128
  %3132 = vset.pattern.permute.xlu0 2
  %3133 = vperm.xlu0 %3132, %v2899
  %v3134 = vpop.permute.xlu0 %3133
  %3137 = vset.pattern.permute.xlu0 2
  %3138 = vperm.xlu0 %3137, %v2900
  %v3139 = vpop.permute.xlu0 %3138
  %3142 = vset.pattern.permute.xlu0 2
  %3143 = vperm.xlu0 %3142, %v2901
  %v3144 = vpop.permute.xlu0 %3143
  %3147 = vset.pattern.permute.xlu0 2
  %3148 = vperm.xlu0 %3147, %v2902
  %v3149 = vpop.permute.xlu0 %3148
  %3152 = vset.pattern.permute.xlu0 2
  %3153 = vperm.xlu0 %3152, %v2903
  %v3154 = vpop.permute.xlu0 %3153
  %3157 = vset.pattern.permute.xlu0 2
  %3158 = vperm.xlu0 %3157, %v2904
  %v3159 = vpop.permute.xlu0 %3158
  %3162 = vset.pattern.permute.xlu0 2
  %3163 = vperm.xlu0 %3162, %v2905
  %v3164 = vpop.permute.xlu0 %3163
  %3167 = vset.pattern.permute.xlu0 2
  %3168 = vperm.xlu0 %3167, %v2906
  %v3169 = vpop.permute.xlu0 %3168
  %3172 = vset.pattern.permute.xlu0 2
  %3173 = vperm.xlu0 %3172, %v2907
  %v3174 = vpop.permute.xlu0 %3173
  %3177 = vset.pattern.permute.xlu0 2
  %3178 = vperm.xlu0 %3177, %v2908
  %v3179 = vpop.permute.xlu0 %3178
  %3182 = vset.pattern.permute.xlu0 2
  %3183 = vperm.xlu0 %3182, %v2909
  %v3184 = vpop.permute.xlu0 %3183
  %3187 = vset.pattern.permute.xlu0 2
  %3188 = vperm.xlu0 %3187, %v2910
  %v3189 = vpop.permute.xlu0 %3188
  %3192 = vset.pattern.permute.xlu0 2
  %3193 = vperm.xlu0 %3192, %v2911
  %v3194 = vpop.permute.xlu0 %3193
  %3197 = vset.pattern.permute.xlu0 2
  %3198 = vperm.xlu0 %3197, %v2912
  %v3199 = vpop.permute.xlu0 %3198
  %3202 = vset.pattern.permute.xlu0 2
  %3203 = vperm.xlu0 %3202, %v2913
  %v3204 = vpop.permute.xlu0 %3203
  %3207 = vset.pattern.permute.xlu0 2
  %3208 = vperm.xlu0 %3207, %v2914
  %v3209 = vpop.permute.xlu0 %3208
  %3212 = vset.pattern.permute.xlu0 2
  %3213 = vperm.xlu0 %3212, %v2915
  %v3214 = vpop.permute.xlu0 %3213
  %3217 = vset.pattern.permute.xlu0 2
  %3218 = vperm.xlu0 %3217, %v2916
  %v3219 = vpop.permute.xlu0 %3218
  %3222 = vset.pattern.permute.xlu0 2
  %3223 = vperm.xlu0 %3222, %v2917
  %v3224 = vpop.permute.xlu0 %3223
  %3227 = vset.pattern.permute.xlu0 2
  %3228 = vperm.xlu0 %3227, %v2918
  %v3229 = vpop.permute.xlu0 %3228
  %3232 = vset.pattern.permute.xlu0 2
  %3233 = vperm.xlu0 %3232, %v2919
  %v3234 = vpop.permute.xlu0 %3233
  %3237 = vset.pattern.permute.xlu0 2
  %3238 = vperm.xlu0 %3237, %v2920
  %v3239 = vpop.permute.xlu0 %3238
  %v3241 = vmul.f32 %v2793, %v2924
  %v3242 = vmul.f32 %v2794, %v2929
  %v3243 = vmul.f32 %v2795, %v2934
  %v3244 = vmul.f32 %v2796, %v2939
  %v3245 = vmul.f32 %v2797, %v2944
  %v3246 = vmul.f32 %v2798, %v2949
  %v3247 = vmul.f32 %v2799, %v2954
  %v3248 = vmul.f32 %v2800, %v2959
  %v3249 = vmul.f32 %v2801, %v2964
  %v3250 = vmul.f32 %v2802, %v2969
  %v3251 = vmul.f32 %v2803, %v2974
  %v3252 = vmul.f32 %v2804, %v2979
  %v3253 = vmul.f32 %v2805, %v2984
  %v3254 = vmul.f32 %v2806, %v2989
  %v3255 = vmul.f32 %v2807, %v2994
  %v3256 = vmul.f32 %v2808, %v2999
  %v3257 = vmul.f32 %v2809, %v3004
  %v3258 = vmul.f32 %v2810, %v3009
  %v3259 = vmul.f32 %v2811, %v3014
  %v3260 = vmul.f32 %v2812, %v3019
  %v3261 = vmul.f32 %v2813, %v3024
  %v3262 = vmul.f32 %v2814, %v3029
  %v3263 = vmul.f32 %v2815, %v3034
  %v3264 = vmul.f32 %v2816, %v3039
  %v3265 = vmul.f32 %v2817, %v3044
  %v3266 = vmul.f32 %v2818, %v3049
  %v3267 = vmul.f32 %v2819, %v3054
  %v3268 = vmul.f32 %v2820, %v3059
  %v3269 = vmul.f32 %v2821, %v3064
  %v3270 = vmul.f32 %v2822, %v3069
  %v3271 = vmul.f32 %v2823, %v3074
  %v3272 = vmul.f32 %v2824, %v3079
  %v3273 = vmul.f32 %v2825, %v3084
  %v3274 = vmul.f32 %v2826, %v3089
  %v3275 = vmul.f32 %v2827, %v3094
  %v3276 = vmul.f32 %v2828, %v3099
  %v3277 = vmul.f32 %v2829, %v3104
  %v3278 = vmul.f32 %v2830, %v3109
  %v3279 = vmul.f32 %v2831, %v3114
  %v3280 = vmul.f32 %v2832, %v3119
  %v3281 = vmul.f32 %v2833, %v3124
  %v3282 = vmul.f32 %v2834, %v3129
  %v3283 = vmul.f32 %v2835, %v3134
  %v3284 = vmul.f32 %v2836, %v3139
  %v3285 = vmul.f32 %v2837, %v3144
  %v3286 = vmul.f32 %v2838, %v3149
  %v3287 = vmul.f32 %v2839, %v3154
  %v3288 = vmul.f32 %v2840, %v3159
  %v3289 = vmul.f32 %v2841, %v3164
  %v3290 = vmul.f32 %v2842, %v3169
  %v3291 = vmul.f32 %v2843, %v3174
  %v3292 = vmul.f32 %v2844, %v3179
  %v3293 = vmul.f32 %v2845, %v3184
  %v3294 = vmul.f32 %v2846, %v3189
  %v3295 = vmul.f32 %v2847, %v3194
  %v3296 = vmul.f32 %v2848, %v3199
  %v3297 = vmul.f32 %v2849, %v3204
  %v3298 = vmul.f32 %v2850, %v3209
  %v3299 = vmul.f32 %v2851, %v3214
  %v3300 = vmul.f32 %v2852, %v3219
  %v3301 = vmul.f32 %v2853, %v3224
  %v3302 = vmul.f32 %v2854, %v3229
  %v3303 = vmul.f32 %v2855, %v3234
  %v3304 = vmul.f32 %v2856, %v3239
  %3305 = vst [vmem:[#allocation3 + $0x10] sm:$0xff] %v3241
  %3306 = vst [vmem:[#allocation3 + $0x58] sm:$0xff] %v3242
  %3307 = vst [vmem:[#allocation3 + $0xa0] sm:$0xff] %v3243
  %3308 = vst [vmem:[#allocation3 + $0xe8] sm:$0xff] %v3244
  %3309 = vst [vmem:[#allocation3 + $0x130] sm:$0xff] %v3245
  %3310 = vst [vmem:[#allocation3 + $0x178] sm:$0xff] %v3246
  %3311 = vst [vmem:[#allocation3 + $0x1c0] sm:$0xff] %v3247
  %3312 = vst [vmem:[#allocation3 + $0x208] sm:$0xff] %v3248
  %3313 = vst [vmem:[#allocation3 + $0x250] sm:$0xff] %v3249
  %3314 = vst [vmem:[#allocation3 + $0x298] sm:$0xff] %v3250
  %3315 = vst [vmem:[#allocation3 + $0x2e0] sm:$0xff] %v3251
  %3316 = vst [vmem:[#allocation3 + $0x328] sm:$0xff] %v3252
  %3317 = vst [vmem:[#allocation3 + $0x370] sm:$0xff] %v3253
  %3318 = vst [vmem:[#allocation3 + $0x3b8] sm:$0xff] %v3254
  %3319 = vst [vmem:[#allocation3 + $0x400] sm:$0xff] %v3255
  %3320 = vst [vmem:[#allocation3 + $0x448] sm:$0xff] %v3256
  %3321 = vst [vmem:[#allocation3 + $0x490] sm:$0xff] %v3257
  %3322 = vst [vmem:[#allocation3 + $0x4d8] sm:$0xff] %v3258
  %3323 = vst [vmem:[#allocation3 + $0x520] sm:$0xff] %v3259
  %3324 = vst [vmem:[#allocation3 + $0x568] sm:$0xff] %v3260
  %3325 = vst [vmem:[#allocation3 + $0x5b0] sm:$0xff] %v3261
  %3326 = vst [vmem:[#allocation3 + $0x5f8] sm:$0xff] %v3262
  %3327 = vst [vmem:[#allocation3 + $0x640] sm:$0xff] %v3263
  %3328 = vst [vmem:[#allocation3 + $0x688] sm:$0xff] %v3264
  %3329 = vst [vmem:[#allocation3 + $0x6d0] sm:$0xff] %v3265
  %3330 = vst [vmem:[#allocation3 + $0x718] sm:$0xff] %v3266
  %3331 = vst [vmem:[#allocation3 + $0x760] sm:$0xff] %v3267
  %3332 = vst [vmem:[#allocation3 + $0x7a8] sm:$0xff] %v3268
  %3333 = vst [vmem:[#allocation3 + $0x7f0] sm:$0xff] %v3269
  %3334 = vst [vmem:[#allocation3 + $0x838] sm:$0xff] %v3270
  %3335 = vst [vmem:[#allocation3 + $0x880] sm:$0xff] %v3271
  %3336 = vst [vmem:[#allocation3 + $0x8c8] sm:$0xff] %v3272
  %3337 = vst [vmem:[#allocation3 + $0x910] sm:$0xff] %v3273
  %3338 = vst [vmem:[#allocation3 + $0x958] sm:$0xff] %v3274
  %3339 = vst [vmem:[#allocation3 + $0x9a0] sm:$0xff] %v3275
  %3340 = vst [vmem:[#allocation3 + $0x9e8] sm:$0xff] %v3276
  %3341 = vst [vmem:[#allocation3 + $0xa30] sm:$0xff] %v3277
  %3342 = vst [vmem:[#allocation3 + $0xa78] sm:$0xff] %v3278
  %3343 = vst [vmem:[#allocation3 + $0xac0] sm:$0xff] %v3279
  %3344 = vst [vmem:[#allocation3 + $0xb08] sm:$0xff] %v3280
  %3345 = vst [vmem:[#allocation3 + $0xb50] sm:$0xff] %v3281
  %3346 = vst [vmem:[#allocation3 + $0xb98] sm:$0xff] %v3282
  %3347 = vst [vmem:[#allocation3 + $0xbe0] sm:$0xff] %v3283
  %3348 = vst [vmem:[#allocation3 + $0xc28] sm:$0xff] %v3284
  %3349 = vst [vmem:[#allocation3 + $0xc70] sm:$0xff] %v3285
  %3350 = vst [vmem:[#allocation3 + $0xcb8] sm:$0xff] %v3286
  %3351 = vst [vmem:[#allocation3 + $0xd00] sm:$0xff] %v3287
  %3352 = vst [vmem:[#allocation3 + $0xd48] sm:$0xff] %v3288
  %3353 = vst [vmem:[#allocation3 + $0xd90] sm:$0xff] %v3289
  %3354 = vst [vmem:[#allocation3 + $0xdd8] sm:$0xff] %v3290
  %3355 = vst [vmem:[#allocation3 + $0xe20] sm:$0xff] %v3291
  %3356 = vst [vmem:[#allocation3 + $0xe68] sm:$0xff] %v3292
  %3357 = vst [vmem:[#allocation3 + $0xeb0] sm:$0xff] %v3293
  %3358 = vst [vmem:[#allocation3 + $0xef8] sm:$0xff] %v3294
  %3359 = vst [vmem:[#allocation3 + $0xf40] sm:$0xff] %v3295
  %3360 = vst [vmem:[#allocation3 + $0xf88] sm:$0xff] %v3296
  %3361 = vst [vmem:[#allocation3 + $0xfd0] sm:$0xff] %v3297
  %3362 = vst [vmem:[#allocation3 + $0x1018] sm:$0xff] %v3298
  %3363 = vst [vmem:[#allocation3 + $0x1060] sm:$0xff] %v3299
  %3364 = vst [vmem:[#allocation3 + $0x10a8] sm:$0xff] %v3300
  %3365 = vst [vmem:[#allocation3 + $0x10f0] sm:$0xff] %v3301
  %3366 = vst [vmem:[#allocation3 + $0x1138] sm:$0xff] %v3302
  %3367 = vst [vmem:[#allocation3 + $0x1180] sm:$0xff] %v3303
  %3368 = vst [vmem:[#allocation3 + $0x11c8] sm:$0xff] %v3304
  %v3369 = vld [vmem:[#allocation2 + $0x17] sm:$0xff]
  %v3370 = vld [vmem:[#allocation2 + $0x1f] sm:$0xff]
  %v3371 = vld [vmem:[#allocation2 + $0x27] sm:$0xff]
  %v3372 = vld [vmem:[#allocation2 + $0x2f] sm:$0xff]
  %v3373 = vld [vmem:[#allocation2 + $0x37] sm:$0xff]
  %v3374 = vld [vmem:[#allocation2 + $0x3f] sm:$0xff]
  %v3375 = vld [vmem:[#allocation2 + $0x47] sm:$0xff]
  %v3376 = vld [vmem:[#allocation2 + $0x4f] sm:$0xff]
  %v3377 = vld [vmem:[#allocation2 + $0x57] sm:$0xff]
  %v3378 = vld [vmem:[#allocation2 + $0x5f] sm:$0xff]
  %v3379 = vld [vmem:[#allocation2 + $0x67] sm:$0xff]
  %v3380 = vld [vmem:[#allocation2 + $0x6f] sm:$0xff]
  %v3381 = vld [vmem:[#allocation2 + $0x77] sm:$0xff]
  %v3382 = vld [vmem:[#allocation2 + $0x7f] sm:$0xff]
  %v3383 = vld [vmem:[#allocation2 + $0x87] sm:$0xff]
  %v3384 = vld [vmem:[#allocation2 + $0x8f] sm:$0xff]
  %v3385 = vld [vmem:[#allocation2 + $0x97] sm:$0xff]
  %v3386 = vld [vmem:[#allocation2 + $0x9f] sm:$0xff]
  %v3387 = vld [vmem:[#allocation2 + $0xa7] sm:$0xff]
  %v3388 = vld [vmem:[#allocation2 + $0xaf] sm:$0xff]
  %v3389 = vld [vmem:[#allocation2 + $0xb7] sm:$0xff]
  %v3390 = vld [vmem:[#allocation2 + $0xbf] sm:$0xff]
  %v3391 = vld [vmem:[#allocation2 + $0xc7] sm:$0xff]
  %v3392 = vld [vmem:[#allocation2 + $0xcf] sm:$0xff]
  %v3393 = vld [vmem:[#allocation2 + $0xd7] sm:$0xff]
  %v3394 = vld [vmem:[#allocation2 + $0xdf] sm:$0xff]
  %v3395 = vld [vmem:[#allocation2 + $0xe7] sm:$0xff]
  %v3396 = vld [vmem:[#allocation2 + $0xef] sm:$0xff]
  %v3397 = vld [vmem:[#allocation2 + $0xf7] sm:$0xff]
  %v3398 = vld [vmem:[#allocation2 + $0xff] sm:$0xff]
  %v3399 = vld [vmem:[#allocation2 + $0x107] sm:$0xff]
  %v3400 = vld [vmem:[#allocation2 + $0x10f] sm:$0xff]
  %v3401 = vld [vmem:[#allocation2 + $0x117] sm:$0xff]
  %v3402 = vld [vmem:[#allocation2 + $0x11f] sm:$0xff]
  %v3403 = vld [vmem:[#allocation2 + $0x127] sm:$0xff]
  %v3404 = vld [vmem:[#allocation2 + $0x12f] sm:$0xff]
  %v3405 = vld [vmem:[#allocation2 + $0x137] sm:$0xff]
  %v3406 = vld [vmem:[#allocation2 + $0x13f] sm:$0xff]
  %v3407 = vld [vmem:[#allocation2 + $0x147] sm:$0xff]
  %v3408 = vld [vmem:[#allocation2 + $0x14f] sm:$0xff]
  %v3409 = vld [vmem:[#allocation2 + $0x157] sm:$0xff]
  %v3410 = vld [vmem:[#allocation2 + $0x15f] sm:$0xff]
  %v3411 = vld [vmem:[#allocation2 + $0x167] sm:$0xff]
  %v3412 = vld [vmem:[#allocation2 + $0x16f] sm:$0xff]
  %v3413 = vld [vmem:[#allocation2 + $0x177] sm:$0xff]
  %v3414 = vld [vmem:[#allocation2 + $0x17f] sm:$0xff]
  %v3415 = vld [vmem:[#allocation2 + $0x187] sm:$0xff]
  %v3416 = vld [vmem:[#allocation2 + $0x18f] sm:$0xff]
  %v3417 = vld [vmem:[#allocation2 + $0x197] sm:$0xff]
  %v3418 = vld [vmem:[#allocation2 + $0x19f] sm:$0xff]
  %v3419 = vld [vmem:[#allocation2 + $0x1a7] sm:$0xff]
  %v3420 = vld [vmem:[#allocation2 + $0x1af] sm:$0xff]
  %v3421 = vld [vmem:[#allocation2 + $0x1b7] sm:$0xff]
  %v3422 = vld [vmem:[#allocation2 + $0x1bf] sm:$0xff]
  %v3423 = vld [vmem:[#allocation2 + $0x1c7] sm:$0xff]
  %v3424 = vld [vmem:[#allocation2 + $0x1cf] sm:$0xff]
  %v3425 = vld [vmem:[#allocation2 + $0x1d7] sm:$0xff]
  %v3426 = vld [vmem:[#allocation2 + $0x1df] sm:$0xff]
  %v3427 = vld [vmem:[#allocation2 + $0x1e7] sm:$0xff]
  %v3428 = vld [vmem:[#allocation2 + $0x1ef] sm:$0xff]
  %v3429 = vld [vmem:[#allocation2 + $0x1f7] sm:$0xff]
  %v3430 = vld [vmem:[#allocation2 + $0x1ff] sm:$0xff]
  %v3431 = vld [vmem:[#allocation2 + $0x207] sm:$0xff]
  %v3432 = vld [vmem:[#allocation2 + $0x20f] sm:$0xff]
  %v3433 = vld [vmem:[%s1] sm:$0xff]
  %v3434 = vld [vmem:[%s1 + $0x8] sm:$0xff]
  %v3435 = vld [vmem:[%s1 + $0x10] sm:$0xff]
  %v3436 = vld [vmem:[%s1 + $0x18] sm:$0xff]
  %v3437 = vld [vmem:[%s1 + $0x20] sm:$0xff]
  %v3438 = vld [vmem:[%s1 + $0x28] sm:$0xff]
  %v3439 = vld [vmem:[%s1 + $0x30] sm:$0xff]
  %v3440 = vld [vmem:[%s1 + $0x38] sm:$0xff]
  %v3441 = vld [vmem:[%s1 + $0x40] sm:$0xff]
  %v3442 = vld [vmem:[%s1 + $0x48] sm:$0xff]
  %v3443 = vld [vmem:[%s1 + $0x50] sm:$0xff]
  %v3444 = vld [vmem:[%s1 + $0x58] sm:$0xff]
  %v3445 = vld [vmem:[%s1 + $0x60] sm:$0xff]
  %v3446 = vld [vmem:[%s1 + $0x68] sm:$0xff]
  %v3447 = vld [vmem:[%s1 + $0x70] sm:$0xff]
  %v3448 = vld [vmem:[%s1 + $0x78] sm:$0xff]
  %v3449 = vld [vmem:[%s1 + $0x80] sm:$0xff]
  %v3450 = vld [vmem:[%s1 + $0x88] sm:$0xff]
  %v3451 = vld [vmem:[%s1 + $0x90] sm:$0xff]
  %v3452 = vld [vmem:[%s1 + $0x98] sm:$0xff]
  %v3453 = vld [vmem:[%s1 + $0xa0] sm:$0xff]
  %v3454 = vld [vmem:[%s1 + $0xa8] sm:$0xff]
  %v3455 = vld [vmem:[%s1 + $0xb0] sm:$0xff]
  %v3456 = vld [vmem:[%s1 + $0xb8] sm:$0xff]
  %v3457 = vld [vmem:[%s1 + $0xc0] sm:$0xff]
  %v3458 = vld [vmem:[%s1 + $0xc8] sm:$0xff]
  %v3459 = vld [vmem:[%s1 + $0xd0] sm:$0xff]
  %v3460 = vld [vmem:[%s1 + $0xd8] sm:$0xff]
  %v3461 = vld [vmem:[%s1 + $0xe0] sm:$0xff]
  %v3462 = vld [vmem:[%s1 + $0xe8] sm:$0xff]
  %v3463 = vld [vmem:[%s1 + $0xf0] sm:$0xff]
  %v3464 = vld [vmem:[%s1 + $0xf8] sm:$0xff]
  %v3465 = vld [vmem:[%s1 + $0x100] sm:$0xff]
  %v3466 = vld [vmem:[%s1 + $0x108] sm:$0xff]
  %v3467 = vld [vmem:[%s1 + $0x110] sm:$0xff]
  %v3468 = vld [vmem:[%s1 + $0x118] sm:$0xff]
  %v3469 = vld [vmem:[%s1 + $0x120] sm:$0xff]
  %v3470 = vld [vmem:[%s1 + $0x128] sm:$0xff]
  %v3471 = vld [vmem:[%s1 + $0x130] sm:$0xff]
  %v3472 = vld [vmem:[%s1 + $0x138] sm:$0xff]
  %v3473 = vld [vmem:[%s1 + $0x140] sm:$0xff]
  %v3474 = vld [vmem:[%s1 + $0x148] sm:$0xff]
  %v3475 = vld [vmem:[%s1 + $0x150] sm:$0xff]
  %v3476 = vld [vmem:[%s1 + $0x158] sm:$0xff]
  %v3477 = vld [vmem:[%s1 + $0x160] sm:$0xff]
  %v3478 = vld [vmem:[%s1 + $0x168] sm:$0xff]
  %v3479 = vld [vmem:[%s1 + $0x170] sm:$0xff]
  %v3480 = vld [vmem:[%s1 + $0x178] sm:$0xff]
  %v3481 = vld [vmem:[%s1 + $0x180] sm:$0xff]
  %v3482 = vld [vmem:[%s1 + $0x188] sm:$0xff]
  %v3483 = vld [vmem:[%s1 + $0x190] sm:$0xff]
  %v3484 = vld [vmem:[%s1 + $0x198] sm:$0xff]
  %v3485 = vld [vmem:[%s1 + $0x1a0] sm:$0xff]
  %v3486 = vld [vmem:[%s1 + $0x1a8] sm:$0xff]
  %v3487 = vld [vmem:[%s1 + $0x1b0] sm:$0xff]
  %v3488 = vld [vmem:[%s1 + $0x1b8] sm:$0xff]
  %v3489 = vld [vmem:[%s1 + $0x1c0] sm:$0xff]
  %v3490 = vld [vmem:[%s1 + $0x1c8] sm:$0xff]
  %v3491 = vld [vmem:[%s1 + $0x1d0] sm:$0xff]
  %v3492 = vld [vmem:[%s1 + $0x1d8] sm:$0xff]
  %v3493 = vld [vmem:[%s1 + $0x1e0] sm:$0xff]
  %v3494 = vld [vmem:[%s1 + $0x1e8] sm:$0xff]
  %v3495 = vld [vmem:[%s1 + $0x1f0] sm:$0xff]
  %v3496 = vld [vmem:[%s1 + $0x1f8] sm:$0xff]
  %3498 = vset.pattern.permute.xlu0 3
  %3499 = vperm.xlu0 %3498, %v3433
  %v3500 = vpop.permute.xlu0 %3499
  %3503 = vset.pattern.permute.xlu0 3
  %3504 = vperm.xlu0 %3503, %v3434
  %v3505 = vpop.permute.xlu0 %3504
  %3508 = vset.pattern.permute.xlu0 3
  %3509 = vperm.xlu0 %3508, %v3435
  %v3510 = vpop.permute.xlu0 %3509
  %3513 = vset.pattern.permute.xlu0 3
  %3514 = vperm.xlu0 %3513, %v3436
  %v3515 = vpop.permute.xlu0 %3514
  %3518 = vset.pattern.permute.xlu0 3
  %3519 = vperm.xlu0 %3518, %v3437
  %v3520 = vpop.permute.xlu0 %3519
  %3523 = vset.pattern.permute.xlu0 3
  %3524 = vperm.xlu0 %3523, %v3438
  %v3525 = vpop.permute.xlu0 %3524
  %3528 = vset.pattern.permute.xlu0 3
  %3529 = vperm.xlu0 %3528, %v3439
  %v3530 = vpop.permute.xlu0 %3529
  %3533 = vset.pattern.permute.xlu0 3
  %3534 = vperm.xlu0 %3533, %v3440
  %v3535 = vpop.permute.xlu0 %3534
  %3538 = vset.pattern.permute.xlu0 3
  %3539 = vperm.xlu0 %3538, %v3441
  %v3540 = vpop.permute.xlu0 %3539
  %3543 = vset.pattern.permute.xlu0 3
  %3544 = vperm.xlu0 %3543, %v3442
  %v3545 = vpop.permute.xlu0 %3544
  %3548 = vset.pattern.permute.xlu0 3
  %3549 = vperm.xlu0 %3548, %v3443
  %v3550 = vpop.permute.xlu0 %3549
  %3553 = vset.pattern.permute.xlu0 3
  %3554 = vperm.xlu0 %3553, %v3444
  %v3555 = vpop.permute.xlu0 %3554
  %3558 = vset.pattern.permute.xlu0 3
  %3559 = vperm.xlu0 %3558, %v3445
  %v3560 = vpop.permute.xlu0 %3559
  %3563 = vset.pattern.permute.xlu0 3
  %3564 = vperm.xlu0 %3563, %v3446
  %v3565 = vpop.permute.xlu0 %3564
  %3568 = vset.pattern.permute.xlu0 3
  %3569 = vperm.xlu0 %3568, %v3447
  %v3570 = vpop.permute.xlu0 %3569
  %3573 = vset.pattern.permute.xlu0 3
  %3574 = vperm.xlu0 %3573, %v3448
  %v3575 = vpop.permute.xlu0 %3574
  %3578 = vset.pattern.permute.xlu0 3
  %3579 = vperm.xlu0 %3578, %v3449
  %v3580 = vpop.permute.xlu0 %3579
  %3583 = vset.pattern.permute.xlu0 3
  %3584 = vperm.xlu0 %3583, %v3450
  %v3585 = vpop.permute.xlu0 %3584
  %3588 = vset.pattern.permute.xlu0 3
  %3589 = vperm.xlu0 %3588, %v3451
  %v3590 = vpop.permute.xlu0 %3589
  %3593 = vset.pattern.permute.xlu0 3
  %3594 = vperm.xlu0 %3593, %v3452
  %v3595 = vpop.permute.xlu0 %3594
  %3598 = vset.pattern.permute.xlu0 3
  %3599 = vperm.xlu0 %3598, %v3453
  %v3600 = vpop.permute.xlu0 %3599
  %3603 = vset.pattern.permute.xlu0 3
  %3604 = vperm.xlu0 %3603, %v3454
  %v3605 = vpop.permute.xlu0 %3604
  %3608 = vset.pattern.permute.xlu0 3
  %3609 = vperm.xlu0 %3608, %v3455
  %v3610 = vpop.permute.xlu0 %3609
  %3613 = vset.pattern.permute.xlu0 3
  %3614 = vperm.xlu0 %3613, %v3456
  %v3615 = vpop.permute.xlu0 %3614
  %3618 = vset.pattern.permute.xlu0 3
  %3619 = vperm.xlu0 %3618, %v3457
  %v3620 = vpop.permute.xlu0 %3619
  %3623 = vset.pattern.permute.xlu0 3
  %3624 = vperm.xlu0 %3623, %v3458
  %v3625 = vpop.permute.xlu0 %3624
  %3628 = vset.pattern.permute.xlu0 3
  %3629 = vperm.xlu0 %3628, %v3459
  %v3630 = vpop.permute.xlu0 %3629
  %3633 = vset.pattern.permute.xlu0 3
  %3634 = vperm.xlu0 %3633, %v3460
  %v3635 = vpop.permute.xlu0 %3634
  %3638 = vset.pattern.permute.xlu0 3
  %3639 = vperm.xlu0 %3638, %v3461
  %v3640 = vpop.permute.xlu0 %3639
  %3643 = vset.pattern.permute.xlu0 3
  %3644 = vperm.xlu0 %3643, %v3462
  %v3645 = vpop.permute.xlu0 %3644
  %3648 = vset.pattern.permute.xlu0 3
  %3649 = vperm.xlu0 %3648, %v3463
  %v3650 = vpop.permute.xlu0 %3649
  %3653 = vset.pattern.permute.xlu0 3
  %3654 = vperm.xlu0 %3653, %v3464
  %v3655 = vpop.permute.xlu0 %3654
  %3658 = vset.pattern.permute.xlu0 3
  %3659 = vperm.xlu0 %3658, %v3465
  %v3660 = vpop.permute.xlu0 %3659
  %3663 = vset.pattern.permute.xlu0 3
  %3664 = vperm.xlu0 %3663, %v3466
  %v3665 = vpop.permute.xlu0 %3664
  %3668 = vset.pattern.permute.xlu0 3
  %3669 = vperm.xlu0 %3668, %v3467
  %v3670 = vpop.permute.xlu0 %3669
  %3673 = vset.pattern.permute.xlu0 3
  %3674 = vperm.xlu0 %3673, %v3468
  %v3675 = vpop.permute.xlu0 %3674
  %3678 = vset.pattern.permute.xlu0 3
  %3679 = vperm.xlu0 %3678, %v3469
  %v3680 = vpop.permute.xlu0 %3679
  %3683 = vset.pattern.permute.xlu0 3
  %3684 = vperm.xlu0 %3683, %v3470
  %v3685 = vpop.permute.xlu0 %3684
  %3688 = vset.pattern.permute.xlu0 3
  %3689 = vperm.xlu0 %3688, %v3471
  %v3690 = vpop.permute.xlu0 %3689
  %3693 = vset.pattern.permute.xlu0 3
  %3694 = vperm.xlu0 %3693, %v3472
  %v3695 = vpop.permute.xlu0 %3694
  %3698 = vset.pattern.permute.xlu0 3
  %3699 = vperm.xlu0 %3698, %v3473
  %v3700 = vpop.permute.xlu0 %3699
  %3703 = vset.pattern.permute.xlu0 3
  %3704 = vperm.xlu0 %3703, %v3474
  %v3705 = vpop.permute.xlu0 %3704
  %3708 = vset.pattern.permute.xlu0 3
  %3709 = vperm.xlu0 %3708, %v3475
  %v3710 = vpop.permute.xlu0 %3709
  %3713 = vset.pattern.permute.xlu0 3
  %3714 = vperm.xlu0 %3713, %v3476
  %v3715 = vpop.permute.xlu0 %3714
  %3718 = vset.pattern.permute.xlu0 3
  %3719 = vperm.xlu0 %3718, %v3477
  %v3720 = vpop.permute.xlu0 %3719
  %3723 = vset.pattern.permute.xlu0 3
  %3724 = vperm.xlu0 %3723, %v3478
  %v3725 = vpop.permute.xlu0 %3724
  %3728 = vset.pattern.permute.xlu0 3
  %3729 = vperm.xlu0 %3728, %v3479
  %v3730 = vpop.permute.xlu0 %3729
  %3733 = vset.pattern.permute.xlu0 3
  %3734 = vperm.xlu0 %3733, %v3480
  %v3735 = vpop.permute.xlu0 %3734
  %3738 = vset.pattern.permute.xlu0 3
  %3739 = vperm.xlu0 %3738, %v3481
  %v3740 = vpop.permute.xlu0 %3739
  %3743 = vset.pattern.permute.xlu0 3
  %3744 = vperm.xlu0 %3743, %v3482
  %v3745 = vpop.permute.xlu0 %3744
  %3748 = vset.pattern.permute.xlu0 3
  %3749 = vperm.xlu0 %3748, %v3483
  %v3750 = vpop.permute.xlu0 %3749
  %3753 = vset.pattern.permute.xlu0 3
  %3754 = vperm.xlu0 %3753, %v3484
  %v3755 = vpop.permute.xlu0 %3754
  %3758 = vset.pattern.permute.xlu0 3
  %3759 = vperm.xlu0 %3758, %v3485
  %v3760 = vpop.permute.xlu0 %3759
  %3763 = vset.pattern.permute.xlu0 3
  %3764 = vperm.xlu0 %3763, %v3486
  %v3765 = vpop.permute.xlu0 %3764
  %3768 = vset.pattern.permute.xlu0 3
  %3769 = vperm.xlu0 %3768, %v3487
  %v3770 = vpop.permute.xlu0 %3769
  %3773 = vset.pattern.permute.xlu0 3
  %3774 = vperm.xlu0 %3773, %v3488
  %v3775 = vpop.permute.xlu0 %3774
  %3778 = vset.pattern.permute.xlu0 3
  %3779 = vperm.xlu0 %3778, %v3489
  %v3780 = vpop.permute.xlu0 %3779
  %3783 = vset.pattern.permute.xlu0 3
  %3784 = vperm.xlu0 %3783, %v3490
  %v3785 = vpop.permute.xlu0 %3784
  %3788 = vset.pattern.permute.xlu0 3
  %3789 = vperm.xlu0 %3788, %v3491
  %v3790 = vpop.permute.xlu0 %3789
  %3793 = vset.pattern.permute.xlu0 3
  %3794 = vperm.xlu0 %3793, %v3492
  %v3795 = vpop.permute.xlu0 %3794
  %3798 = vset.pattern.permute.xlu0 3
  %3799 = vperm.xlu0 %3798, %v3493
  %v3800 = vpop.permute.xlu0 %3799
  %3803 = vset.pattern.permute.xlu0 3
  %3804 = vperm.xlu0 %3803, %v3494
  %v3805 = vpop.permute.xlu0 %3804
  %3808 = vset.pattern.permute.xlu0 3
  %3809 = vperm.xlu0 %3808, %v3495
  %v3810 = vpop.permute.xlu0 %3809
  %3813 = vset.pattern.permute.xlu0 3
  %3814 = vperm.xlu0 %3813, %v3496
  %v3815 = vpop.permute.xlu0 %3814
  %v3817 = vmul.f32 %v3369, %v3500
  %v3818 = vmul.f32 %v3370, %v3505
  %v3819 = vmul.f32 %v3371, %v3510
  %v3820 = vmul.f32 %v3372, %v3515
  %v3821 = vmul.f32 %v3373, %v3520
  %v3822 = vmul.f32 %v3374, %v3525
  %v3823 = vmul.f32 %v3375, %v3530
  %v3824 = vmul.f32 %v3376, %v3535
  %v3825 = vmul.f32 %v3377, %v3540
  %v3826 = vmul.f32 %v3378, %v3545
  %v3827 = vmul.f32 %v3379, %v3550
  %v3828 = vmul.f32 %v3380, %v3555
  %v3829 = vmul.f32 %v3381, %v3560
  %v3830 = vmul.f32 %v3382, %v3565
  %v3831 = vmul.f32 %v3383, %v3570
  %v3832 = vmul.f32 %v3384, %v3575
  %v3833 = vmul.f32 %v3385, %v3580
  %v3834 = vmul.f32 %v3386, %v3585
  %v3835 = vmul.f32 %v3387, %v3590
  %v3836 = vmul.f32 %v3388, %v3595
  %v3837 = vmul.f32 %v3389, %v3600
  %v3838 = vmul.f32 %v3390, %v3605
  %v3839 = vmul.f32 %v3391, %v3610
  %v3840 = vmul.f32 %v3392, %v3615
  %v3841 = vmul.f32 %v3393, %v3620
  %v3842 = vmul.f32 %v3394, %v3625
  %v3843 = vmul.f32 %v3395, %v3630
  %v3844 = vmul.f32 %v3396, %v3635
  %v3845 = vmul.f32 %v3397, %v3640
  %v3846 = vmul.f32 %v3398, %v3645
  %v3847 = vmul.f32 %v3399, %v3650
  %v3848 = vmul.f32 %v3400, %v3655
  %v3849 = vmul.f32 %v3401, %v3660
  %v3850 = vmul.f32 %v3402, %v3665
  %v3851 = vmul.f32 %v3403, %v3670
  %v3852 = vmul.f32 %v3404, %v3675
  %v3853 = vmul.f32 %v3405, %v3680
  %v3854 = vmul.f32 %v3406, %v3685
  %v3855 = vmul.f32 %v3407, %v3690
  %v3856 = vmul.f32 %v3408, %v3695
  %v3857 = vmul.f32 %v3409, %v3700
  %v3858 = vmul.f32 %v3410, %v3705
  %v3859 = vmul.f32 %v3411, %v3710
  %v3860 = vmul.f32 %v3412, %v3715
  %v3861 = vmul.f32 %v3413, %v3720
  %v3862 = vmul.f32 %v3414, %v3725
  %v3863 = vmul.f32 %v3415, %v3730
  %v3864 = vmul.f32 %v3416, %v3735
  %v3865 = vmul.f32 %v3417, %v3740
  %v3866 = vmul.f32 %v3418, %v3745
  %v3867 = vmul.f32 %v3419, %v3750
  %v3868 = vmul.f32 %v3420, %v3755
  %v3869 = vmul.f32 %v3421, %v3760
  %v3870 = vmul.f32 %v3422, %v3765
  %v3871 = vmul.f32 %v3423, %v3770
  %v3872 = vmul.f32 %v3424, %v3775
  %v3873 = vmul.f32 %v3425, %v3780
  %v3874 = vmul.f32 %v3426, %v3785
  %v3875 = vmul.f32 %v3427, %v3790
  %v3876 = vmul.f32 %v3428, %v3795
  %v3877 = vmul.f32 %v3429, %v3800
  %v3878 = vmul.f32 %v3430, %v3805
  %v3879 = vmul.f32 %v3431, %v3810
  %v3880 = vmul.f32 %v3432, %v3815
  %3881 = vst [vmem:[#allocation3 + $0x18] sm:$0xff] %v3817
  %3882 = vst [vmem:[#allocation3 + $0x60] sm:$0xff] %v3818
  %3883 = vst [vmem:[#allocation3 + $0xa8] sm:$0xff] %v3819
  %3884 = vst [vmem:[#allocation3 + $0xf0] sm:$0xff] %v3820
  %3885 = vst [vmem:[#allocation3 + $0x138] sm:$0xff] %v3821
  %3886 = vst [vmem:[#allocation3 + $0x180] sm:$0xff] %v3822
  %3887 = vst [vmem:[#allocation3 + $0x1c8] sm:$0xff] %v3823
  %3888 = vst [vmem:[#allocation3 + $0x210] sm:$0xff] %v3824
  %3889 = vst [vmem:[#allocation3 + $0x258] sm:$0xff] %v3825
  %3890 = vst [vmem:[#allocation3 + $0x2a0] sm:$0xff] %v3826
  %3891 = vst [vmem:[#allocation3 + $0x2e8] sm:$0xff] %v3827
  %3892 = vst [vmem:[#allocation3 + $0x330] sm:$0xff] %v3828
  %3893 = vst [vmem:[#allocation3 + $0x378] sm:$0xff] %v3829
  %3894 = vst [vmem:[#allocation3 + $0x3c0] sm:$0xff] %v3830
  %3895 = vst [vmem:[#allocation3 + $0x408] sm:$0xff] %v3831
  %3896 = vst [vmem:[#allocation3 + $0x450] sm:$0xff] %v3832
  %3897 = vst [vmem:[#allocation3 + $0x498] sm:$0xff] %v3833
  %3898 = vst [vmem:[#allocation3 + $0x4e0] sm:$0xff] %v3834
  %3899 = vst [vmem:[#allocation3 + $0x528] sm:$0xff] %v3835
  %3900 = vst [vmem:[#allocation3 + $0x570] sm:$0xff] %v3836
  %3901 = vst [vmem:[#allocation3 + $0x5b8] sm:$0xff] %v3837
  %3902 = vst [vmem:[#allocation3 + $0x600] sm:$0xff] %v3838
  %3903 = vst [vmem:[#allocation3 + $0x648] sm:$0xff] %v3839
  %3904 = vst [vmem:[#allocation3 + $0x690] sm:$0xff] %v3840
  %3905 = vst [vmem:[#allocation3 + $0x6d8] sm:$0xff] %v3841
  %3906 = vst [vmem:[#allocation3 + $0x720] sm:$0xff] %v3842
  %3907 = vst [vmem:[#allocation3 + $0x768] sm:$0xff] %v3843
  %3908 = vst [vmem:[#allocation3 + $0x7b0] sm:$0xff] %v3844
  %3909 = vst [vmem:[#allocation3 + $0x7f8] sm:$0xff] %v3845
  %3910 = vst [vmem:[#allocation3 + $0x840] sm:$0xff] %v3846
  %3911 = vst [vmem:[#allocation3 + $0x888] sm:$0xff] %v3847
  %3912 = vst [vmem:[#allocation3 + $0x8d0] sm:$0xff] %v3848
  %3913 = vst [vmem:[#allocation3 + $0x918] sm:$0xff] %v3849
  %3914 = vst [vmem:[#allocation3 + $0x960] sm:$0xff] %v3850
  %3915 = vst [vmem:[#allocation3 + $0x9a8] sm:$0xff] %v3851
  %3916 = vst [vmem:[#allocation3 + $0x9f0] sm:$0xff] %v3852
  %3917 = vst [vmem:[#allocation3 + $0xa38] sm:$0xff] %v3853
  %3918 = vst [vmem:[#allocation3 + $0xa80] sm:$0xff] %v3854
  %3919 = vst [vmem:[#allocation3 + $0xac8] sm:$0xff] %v3855
  %3920 = vst [vmem:[#allocation3 + $0xb10] sm:$0xff] %v3856
  %3921 = vst [vmem:[#allocation3 + $0xb58] sm:$0xff] %v3857
  %3922 = vst [vmem:[#allocation3 + $0xba0] sm:$0xff] %v3858
  %3923 = vst [vmem:[#allocation3 + $0xbe8] sm:$0xff] %v3859
  %3924 = vst [vmem:[#allocation3 + $0xc30] sm:$0xff] %v3860
  %3925 = vst [vmem:[#allocation3 + $0xc78] sm:$0xff] %v3861
  %3926 = vst [vmem:[#allocation3 + $0xcc0] sm:$0xff] %v3862
  %3927 = vst [vmem:[#allocation3 + $0xd08] sm:$0xff] %v3863
  %3928 = vst [vmem:[#allocation3 + $0xd50] sm:$0xff] %v3864
  %3929 = vst [vmem:[#allocation3 + $0xd98] sm:$0xff] %v3865
  %3930 = vst [vmem:[#allocation3 + $0xde0] sm:$0xff] %v3866
  %3931 = vst [vmem:[#allocation3 + $0xe28] sm:$0xff] %v3867
  %3932 = vst [vmem:[#allocation3 + $0xe70] sm:$0xff] %v3868
  %3933 = vst [vmem:[#allocation3 + $0xeb8] sm:$0xff] %v3869
  %3934 = vst [vmem:[#allocation3 + $0xf00] sm:$0xff] %v3870
  %3935 = vst [vmem:[#allocation3 + $0xf48] sm:$0xff] %v3871
  %3936 = vst [vmem:[#allocation3 + $0xf90] sm:$0xff] %v3872
  %3937 = vst [vmem:[#allocation3 + $0xfd8] sm:$0xff] %v3873
  %3938 = vst [vmem:[#allocation3 + $0x1020] sm:$0xff] %v3874
  %3939 = vst [vmem:[#allocation3 + $0x1068] sm:$0xff] %v3875
  %3940 = vst [vmem:[#allocation3 + $0x10b0] sm:$0xff] %v3876
  %3941 = vst [vmem:[#allocation3 + $0x10f8] sm:$0xff] %v3877
  %3942 = vst [vmem:[#allocation3 + $0x1140] sm:$0xff] %v3878
  %3943 = vst [vmem:[#allocation3 + $0x1188] sm:$0xff] %v3879
  %3944 = vst [vmem:[#allocation3 + $0x11d0] sm:$0xff] %v3880
  %v3945 = vld [vmem:[#allocation2 + $0x18] sm:$0xff]
  %v3946 = vld [vmem:[#allocation2 + $0x20] sm:$0xff]
  %v3947 = vld [vmem:[#allocation2 + $0x28] sm:$0xff]
  %v3948 = vld [vmem:[#allocation2 + $0x30] sm:$0xff]
  %v3949 = vld [vmem:[#allocation2 + $0x38] sm:$0xff]
  %v3950 = vld [vmem:[#allocation2 + $0x40] sm:$0xff]
  %v3951 = vld [vmem:[#allocation2 + $0x48] sm:$0xff]
  %v3952 = vld [vmem:[#allocation2 + $0x50] sm:$0xff]
  %v3953 = vld [vmem:[#allocation2 + $0x58] sm:$0xff]
  %v3954 = vld [vmem:[#allocation2 + $0x60] sm:$0xff]
  %v3955 = vld [vmem:[#allocation2 + $0x68] sm:$0xff]
  %v3956 = vld [vmem:[#allocation2 + $0x70] sm:$0xff]
  %v3957 = vld [vmem:[#allocation2 + $0x78] sm:$0xff]
  %v3958 = vld [vmem:[#allocation2 + $0x80] sm:$0xff]
  %v3959 = vld [vmem:[#allocation2 + $0x88] sm:$0xff]
  %v3960 = vld [vmem:[#allocation2 + $0x90] sm:$0xff]
  %v3961 = vld [vmem:[#allocation2 + $0x98] sm:$0xff]
  %v3962 = vld [vmem:[#allocation2 + $0xa0] sm:$0xff]
  %v3963 = vld [vmem:[#allocation2 + $0xa8] sm:$0xff]
  %v3964 = vld [vmem:[#allocation2 + $0xb0] sm:$0xff]
  %v3965 = vld [vmem:[#allocation2 + $0xb8] sm:$0xff]
  %v3966 = vld [vmem:[#allocation2 + $0xc0] sm:$0xff]
  %v3967 = vld [vmem:[#allocation2 + $0xc8] sm:$0xff]
  %v3968 = vld [vmem:[#allocation2 + $0xd0] sm:$0xff]
  %v3969 = vld [vmem:[#allocation2 + $0xd8] sm:$0xff]
  %v3970 = vld [vmem:[#allocation2 + $0xe0] sm:$0xff]
  %v3971 = vld [vmem:[#allocation2 + $0xe8] sm:$0xff]
  %v3972 = vld [vmem:[#allocation2 + $0xf0] sm:$0xff]
  %v3973 = vld [vmem:[#allocation2 + $0xf8] sm:$0xff]
  %v3974 = vld [vmem:[#allocation2 + $0x100] sm:$0xff]
  %v3975 = vld [vmem:[#allocation2 + $0x108] sm:$0xff]
  %v3976 = vld [vmem:[#allocation2 + $0x110] sm:$0xff]
  %v3977 = vld [vmem:[#allocation2 + $0x118] sm:$0xff]
  %v3978 = vld [vmem:[#allocation2 + $0x120] sm:$0xff]
  %v3979 = vld [vmem:[#allocation2 + $0x128] sm:$0xff]
  %v3980 = vld [vmem:[#allocation2 + $0x130] sm:$0xff]
  %v3981 = vld [vmem:[#allocation2 + $0x138] sm:$0xff]
  %v3982 = vld [vmem:[#allocation2 + $0x140] sm:$0xff]
  %v3983 = vld [vmem:[#allocation2 + $0x148] sm:$0xff]
  %v3984 = vld [vmem:[#allocation2 + $0x150] sm:$0xff]
  %v3985 = vld [vmem:[#allocation2 + $0x158] sm:$0xff]
  %v3986 = vld [vmem:[#allocation2 + $0x160] sm:$0xff]
  %v3987 = vld [vmem:[#allocation2 + $0x168] sm:$0xff]
  %v3988 = vld [vmem:[#allocation2 + $0x170] sm:$0xff]
  %v3989 = vld [vmem:[#allocation2 + $0x178] sm:$0xff]
  %v3990 = vld [vmem:[#allocation2 + $0x180] sm:$0xff]
  %v3991 = vld [vmem:[#allocation2 + $0x188] sm:$0xff]
  %v3992 = vld [vmem:[#allocation2 + $0x190] sm:$0xff]
  %v3993 = vld [vmem:[#allocation2 + $0x198] sm:$0xff]
  %v3994 = vld [vmem:[#allocation2 + $0x1a0] sm:$0xff]
  %v3995 = vld [vmem:[#allocation2 + $0x1a8] sm:$0xff]
  %v3996 = vld [vmem:[#allocation2 + $0x1b0] sm:$0xff]
  %v3997 = vld [vmem:[#allocation2 + $0x1b8] sm:$0xff]
  %v3998 = vld [vmem:[#allocation2 + $0x1c0] sm:$0xff]
  %v3999 = vld [vmem:[#allocation2 + $0x1c8] sm:$0xff]
  %v4000 = vld [vmem:[#allocation2 + $0x1d0] sm:$0xff]
  %v4001 = vld [vmem:[#allocation2 + $0x1d8] sm:$0xff]
  %v4002 = vld [vmem:[#allocation2 + $0x1e0] sm:$0xff]
  %v4003 = vld [vmem:[#allocation2 + $0x1e8] sm:$0xff]
  %v4004 = vld [vmem:[#allocation2 + $0x1f0] sm:$0xff]
  %v4005 = vld [vmem:[#allocation2 + $0x1f8] sm:$0xff]
  %v4006 = vld [vmem:[#allocation2 + $0x200] sm:$0xff]
  %v4007 = vld [vmem:[#allocation2 + $0x208] sm:$0xff]
  %v4008 = vld [vmem:[#allocation2 + $0x210] sm:$0xff]
  %v4009 = vld [vmem:[%s1] sm:$0xff]
  %v4010 = vld [vmem:[%s1 + $0x8] sm:$0xff]
  %v4011 = vld [vmem:[%s1 + $0x10] sm:$0xff]
  %v4012 = vld [vmem:[%s1 + $0x18] sm:$0xff]
  %v4013 = vld [vmem:[%s1 + $0x20] sm:$0xff]
  %v4014 = vld [vmem:[%s1 + $0x28] sm:$0xff]
  %v4015 = vld [vmem:[%s1 + $0x30] sm:$0xff]
  %v4016 = vld [vmem:[%s1 + $0x38] sm:$0xff]
  %v4017 = vld [vmem:[%s1 + $0x40] sm:$0xff]
  %v4018 = vld [vmem:[%s1 + $0x48] sm:$0xff]
  %v4019 = vld [vmem:[%s1 + $0x50] sm:$0xff]
  %v4020 = vld [vmem:[%s1 + $0x58] sm:$0xff]
  %v4021 = vld [vmem:[%s1 + $0x60] sm:$0xff]
  %v4022 = vld [vmem:[%s1 + $0x68] sm:$0xff]
  %v4023 = vld [vmem:[%s1 + $0x70] sm:$0xff]
  %v4024 = vld [vmem:[%s1 + $0x78] sm:$0xff]
  %v4025 = vld [vmem:[%s1 + $0x80] sm:$0xff]
  %v4026 = vld [vmem:[%s1 + $0x88] sm:$0xff]
  %v4027 = vld [vmem:[%s1 + $0x90] sm:$0xff]
  %v4028 = vld [vmem:[%s1 + $0x98] sm:$0xff]
  %v4029 = vld [vmem:[%s1 + $0xa0] sm:$0xff]
  %v4030 = vld [vmem:[%s1 + $0xa8] sm:$0xff]
  %v4031 = vld [vmem:[%s1 + $0xb0] sm:$0xff]
  %v4032 = vld [vmem:[%s1 + $0xb8] sm:$0xff]
  %v4033 = vld [vmem:[%s1 + $0xc0] sm:$0xff]
  %v4034 = vld [vmem:[%s1 + $0xc8] sm:$0xff]
  %v4035 = vld [vmem:[%s1 + $0xd0] sm:$0xff]
  %v4036 = vld [vmem:[%s1 + $0xd8] sm:$0xff]
  %v4037 = vld [vmem:[%s1 + $0xe0] sm:$0xff]
  %v4038 = vld [vmem:[%s1 + $0xe8] sm:$0xff]
  %v4039 = vld [vmem:[%s1 + $0xf0] sm:$0xff]
  %v4040 = vld [vmem:[%s1 + $0xf8] sm:$0xff]
  %v4041 = vld [vmem:[%s1 + $0x100] sm:$0xff]
  %v4042 = vld [vmem:[%s1 + $0x108] sm:$0xff]
  %v4043 = vld [vmem:[%s1 + $0x110] sm:$0xff]
  %v4044 = vld [vmem:[%s1 + $0x118] sm:$0xff]
  %v4045 = vld [vmem:[%s1 + $0x120] sm:$0xff]
  %v4046 = vld [vmem:[%s1 + $0x128] sm:$0xff]
  %v4047 = vld [vmem:[%s1 + $0x130] sm:$0xff]
  %v4048 = vld [vmem:[%s1 + $0x138] sm:$0xff]
  %v4049 = vld [vmem:[%s1 + $0x140] sm:$0xff]
  %v4050 = vld [vmem:[%s1 + $0x148] sm:$0xff]
  %v4051 = vld [vmem:[%s1 + $0x150] sm:$0xff]
  %v4052 = vld [vmem:[%s1 + $0x158] sm:$0xff]
  %v4053 = vld [vmem:[%s1 + $0x160] sm:$0xff]
  %v4054 = vld [vmem:[%s1 + $0x168] sm:$0xff]
  %v4055 = vld [vmem:[%s1 + $0x170] sm:$0xff]
  %v4056 = vld [vmem:[%s1 + $0x178] sm:$0xff]
  %v4057 = vld [vmem:[%s1 + $0x180] sm:$0xff]
  %v4058 = vld [vmem:[%s1 + $0x188] sm:$0xff]
  %v4059 = vld [vmem:[%s1 + $0x190] sm:$0xff]
  %v4060 = vld [vmem:[%s1 + $0x198] sm:$0xff]
  %v4061 = vld [vmem:[%s1 + $0x1a0] sm:$0xff]
  %v4062 = vld [vmem:[%s1 + $0x1a8] sm:$0xff]
  %v4063 = vld [vmem:[%s1 + $0x1b0] sm:$0xff]
  %v4064 = vld [vmem:[%s1 + $0x1b8] sm:$0xff]
  %v4065 = vld [vmem:[%s1 + $0x1c0] sm:$0xff]
  %v4066 = vld [vmem:[%s1 + $0x1c8] sm:$0xff]
  %v4067 = vld [vmem:[%s1 + $0x1d0] sm:$0xff]
  %v4068 = vld [vmem:[%s1 + $0x1d8] sm:$0xff]
  %v4069 = vld [vmem:[%s1 + $0x1e0] sm:$0xff]
  %v4070 = vld [vmem:[%s1 + $0x1e8] sm:$0xff]
  %v4071 = vld [vmem:[%s1 + $0x1f0] sm:$0xff]
  %v4072 = vld [vmem:[%s1 + $0x1f8] sm:$0xff]
  %4074 = vset.pattern.permute.xlu0 4
  %4075 = vperm.xlu0 %4074, %v4009
  %v4076 = vpop.permute.xlu0 %4075
  %4079 = vset.pattern.permute.xlu0 4
  %4080 = vperm.xlu0 %4079, %v4010
  %v4081 = vpop.permute.xlu0 %4080
  %4084 = vset.pattern.permute.xlu0 4
  %4085 = vperm.xlu0 %4084, %v4011
  %v4086 = vpop.permute.xlu0 %4085
  %4089 = vset.pattern.permute.xlu0 4
  %4090 = vperm.xlu0 %4089, %v4012
  %v4091 = vpop.permute.xlu0 %4090
  %4094 = vset.pattern.permute.xlu0 4
  %4095 = vperm.xlu0 %4094, %v4013
  %v4096 = vpop.permute.xlu0 %4095
  %4099 = vset.pattern.permute.xlu0 4
  %4100 = vperm.xlu0 %4099, %v4014
  %v4101 = vpop.permute.xlu0 %4100
  %4104 = vset.pattern.permute.xlu0 4
  %4105 = vperm.xlu0 %4104, %v4015
  %v4106 = vpop.permute.xlu0 %4105
  %4109 = vset.pattern.permute.xlu0 4
  %4110 = vperm.xlu0 %4109, %v4016
  %v4111 = vpop.permute.xlu0 %4110
  %4114 = vset.pattern.permute.xlu0 4
  %4115 = vperm.xlu0 %4114, %v4017
  %v4116 = vpop.permute.xlu0 %4115
  %4119 = vset.pattern.permute.xlu0 4
  %4120 = vperm.xlu0 %4119, %v4018
  %v4121 = vpop.permute.xlu0 %4120
  %4124 = vset.pattern.permute.xlu0 4
  %4125 = vperm.xlu0 %4124, %v4019
  %v4126 = vpop.permute.xlu0 %4125
  %4129 = vset.pattern.permute.xlu0 4
  %4130 = vperm.xlu0 %4129, %v4020
  %v4131 = vpop.permute.xlu0 %4130
  %4134 = vset.pattern.permute.xlu0 4
  %4135 = vperm.xlu0 %4134, %v4021
  %v4136 = vpop.permute.xlu0 %4135
  %4139 = vset.pattern.permute.xlu0 4
  %4140 = vperm.xlu0 %4139, %v4022
  %v4141 = vpop.permute.xlu0 %4140
  %4144 = vset.pattern.permute.xlu0 4
  %4145 = vperm.xlu0 %4144, %v4023
  %v4146 = vpop.permute.xlu0 %4145
  %4149 = vset.pattern.permute.xlu0 4
  %4150 = vperm.xlu0 %4149, %v4024
  %v4151 = vpop.permute.xlu0 %4150
  %4154 = vset.pattern.permute.xlu0 4
  %4155 = vperm.xlu0 %4154, %v4025
  %v4156 = vpop.permute.xlu0 %4155
  %4159 = vset.pattern.permute.xlu0 4
  %4160 = vperm.xlu0 %4159, %v4026
  %v4161 = vpop.permute.xlu0 %4160
  %4164 = vset.pattern.permute.xlu0 4
  %4165 = vperm.xlu0 %4164, %v4027
  %v4166 = vpop.permute.xlu0 %4165
  %4169 = vset.pattern.permute.xlu0 4
  %4170 = vperm.xlu0 %4169, %v4028
  %v4171 = vpop.permute.xlu0 %4170
  %4174 = vset.pattern.permute.xlu0 4
  %4175 = vperm.xlu0 %4174, %v4029
  %v4176 = vpop.permute.xlu0 %4175
  %4179 = vset.pattern.permute.xlu0 4
  %4180 = vperm.xlu0 %4179, %v4030
  %v4181 = vpop.permute.xlu0 %4180
  %4184 = vset.pattern.permute.xlu0 4
  %4185 = vperm.xlu0 %4184, %v4031
  %v4186 = vpop.permute.xlu0 %4185
  %4189 = vset.pattern.permute.xlu0 4
  %4190 = vperm.xlu0 %4189, %v4032
  %v4191 = vpop.permute.xlu0 %4190
  %4194 = vset.pattern.permute.xlu0 4
  %4195 = vperm.xlu0 %4194, %v4033
  %v4196 = vpop.permute.xlu0 %4195
  %4199 = vset.pattern.permute.xlu0 4
  %4200 = vperm.xlu0 %4199, %v4034
  %v4201 = vpop.permute.xlu0 %4200
  %4204 = vset.pattern.permute.xlu0 4
  %4205 = vperm.xlu0 %4204, %v4035
  %v4206 = vpop.permute.xlu0 %4205
  %4209 = vset.pattern.permute.xlu0 4
  %4210 = vperm.xlu0 %4209, %v4036
  %v4211 = vpop.permute.xlu0 %4210
  %4214 = vset.pattern.permute.xlu0 4
  %4215 = vperm.xlu0 %4214, %v4037
  %v4216 = vpop.permute.xlu0 %4215
  %4219 = vset.pattern.permute.xlu0 4
  %4220 = vperm.xlu0 %4219, %v4038
  %v4221 = vpop.permute.xlu0 %4220
  %4224 = vset.pattern.permute.xlu0 4
  %4225 = vperm.xlu0 %4224, %v4039
  %v4226 = vpop.permute.xlu0 %4225
  %4229 = vset.pattern.permute.xlu0 4
  %4230 = vperm.xlu0 %4229, %v4040
  %v4231 = vpop.permute.xlu0 %4230
  %4234 = vset.pattern.permute.xlu0 4
  %4235 = vperm.xlu0 %4234, %v4041
  %v4236 = vpop.permute.xlu0 %4235
  %4239 = vset.pattern.permute.xlu0 4
  %4240 = vperm.xlu0 %4239, %v4042
  %v4241 = vpop.permute.xlu0 %4240
  %4244 = vset.pattern.permute.xlu0 4
  %4245 = vperm.xlu0 %4244, %v4043
  %v4246 = vpop.permute.xlu0 %4245
  %4249 = vset.pattern.permute.xlu0 4
  %4250 = vperm.xlu0 %4249, %v4044
  %v4251 = vpop.permute.xlu0 %4250
  %4254 = vset.pattern.permute.xlu0 4
  %4255 = vperm.xlu0 %4254, %v4045
  %v4256 = vpop.permute.xlu0 %4255
  %4259 = vset.pattern.permute.xlu0 4
  %4260 = vperm.xlu0 %4259, %v4046
  %v4261 = vpop.permute.xlu0 %4260
  %4264 = vset.pattern.permute.xlu0 4
  %4265 = vperm.xlu0 %4264, %v4047
  %v4266 = vpop.permute.xlu0 %4265
  %4269 = vset.pattern.permute.xlu0 4
  %4270 = vperm.xlu0 %4269, %v4048
  %v4271 = vpop.permute.xlu0 %4270
  %4274 = vset.pattern.permute.xlu0 4
  %4275 = vperm.xlu0 %4274, %v4049
  %v4276 = vpop.permute.xlu0 %4275
  %4279 = vset.pattern.permute.xlu0 4
  %4280 = vperm.xlu0 %4279, %v4050
  %v4281 = vpop.permute.xlu0 %4280
  %4284 = vset.pattern.permute.xlu0 4
  %4285 = vperm.xlu0 %4284, %v4051
  %v4286 = vpop.permute.xlu0 %4285
  %4289 = vset.pattern.permute.xlu0 4
  %4290 = vperm.xlu0 %4289, %v4052
  %v4291 = vpop.permute.xlu0 %4290
  %4294 = vset.pattern.permute.xlu0 4
  %4295 = vperm.xlu0 %4294, %v4053
  %v4296 = vpop.permute.xlu0 %4295
  %4299 = vset.pattern.permute.xlu0 4
  %4300 = vperm.xlu0 %4299, %v4054
  %v4301 = vpop.permute.xlu0 %4300
  %4304 = vset.pattern.permute.xlu0 4
  %4305 = vperm.xlu0 %4304, %v4055
  %v4306 = vpop.permute.xlu0 %4305
  %4309 = vset.pattern.permute.xlu0 4
  %4310 = vperm.xlu0 %4309, %v4056
  %v4311 = vpop.permute.xlu0 %4310
  %4314 = vset.pattern.permute.xlu0 4
  %4315 = vperm.xlu0 %4314, %v4057
  %v4316 = vpop.permute.xlu0 %4315
  %4319 = vset.pattern.permute.xlu0 4
  %4320 = vperm.xlu0 %4319, %v4058
  %v4321 = vpop.permute.xlu0 %4320
  %4324 = vset.pattern.permute.xlu0 4
  %4325 = vperm.xlu0 %4324, %v4059
  %v4326 = vpop.permute.xlu0 %4325
  %4329 = vset.pattern.permute.xlu0 4
  %4330 = vperm.xlu0 %4329, %v4060
  %v4331 = vpop.permute.xlu0 %4330
  %4334 = vset.pattern.permute.xlu0 4
  %4335 = vperm.xlu0 %4334, %v4061
  %v4336 = vpop.permute.xlu0 %4335
  %4339 = vset.pattern.permute.xlu0 4
  %4340 = vperm.xlu0 %4339, %v4062
  %v4341 = vpop.permute.xlu0 %4340
  %4344 = vset.pattern.permute.xlu0 4
  %4345 = vperm.xlu0 %4344, %v4063
  %v4346 = vpop.permute.xlu0 %4345
  %4349 = vset.pattern.permute.xlu0 4
  %4350 = vperm.xlu0 %4349, %v4064
  %v4351 = vpop.permute.xlu0 %4350
  %4354 = vset.pattern.permute.xlu0 4
  %4355 = vperm.xlu0 %4354, %v4065
  %v4356 = vpop.permute.xlu0 %4355
  %4359 = vset.pattern.permute.xlu0 4
  %4360 = vperm.xlu0 %4359, %v4066
  %v4361 = vpop.permute.xlu0 %4360
  %4364 = vset.pattern.permute.xlu0 4
  %4365 = vperm.xlu0 %4364, %v4067
  %v4366 = vpop.permute.xlu0 %4365
  %4369 = vset.pattern.permute.xlu0 4
  %4370 = vperm.xlu0 %4369, %v4068
  %v4371 = vpop.permute.xlu0 %4370
  %4374 = vset.pattern.permute.xlu0 4
  %4375 = vperm.xlu0 %4374, %v4069
  %v4376 = vpop.permute.xlu0 %4375
  %4379 = vset.pattern.permute.xlu0 4
  %4380 = vperm.xlu0 %4379, %v4070
  %v4381 = vpop.permute.xlu0 %4380
  %4384 = vset.pattern.permute.xlu0 4
  %4385 = vperm.xlu0 %4384, %v4071
  %v4386 = vpop.permute.xlu0 %4385
  %4389 = vset.pattern.permute.xlu0 4
  %4390 = vperm.xlu0 %4389, %v4072
  %v4391 = vpop.permute.xlu0 %4390
  %v4393 = vmul.f32 %v3945, %v4076
  %v4394 = vmul.f32 %v3946, %v4081
  %v4395 = vmul.f32 %v3947, %v4086
  %v4396 = vmul.f32 %v3948, %v4091
  %v4397 = vmul.f32 %v3949, %v4096
  %v4398 = vmul.f32 %v3950, %v4101
  %v4399 = vmul.f32 %v3951, %v4106
  %v4400 = vmul.f32 %v3952, %v4111
  %v4401 = vmul.f32 %v3953, %v4116
  %v4402 = vmul.f32 %v3954, %v4121
  %v4403 = vmul.f32 %v3955, %v4126
  %v4404 = vmul.f32 %v3956, %v4131
  %v4405 = vmul.f32 %v3957, %v4136
  %v4406 = vmul.f32 %v3958, %v4141
  %v4407 = vmul.f32 %v3959, %v4146
  %v4408 = vmul.f32 %v3960, %v4151
  %v4409 = vmul.f32 %v3961, %v4156
  %v4410 = vmul.f32 %v3962, %v4161
  %v4411 = vmul.f32 %v3963, %v4166
  %v4412 = vmul.f32 %v3964, %v4171
  %v4413 = vmul.f32 %v3965, %v4176
  %v4414 = vmul.f32 %v3966, %v4181
  %v4415 = vmul.f32 %v3967, %v4186
  %v4416 = vmul.f32 %v3968, %v4191
  %v4417 = vmul.f32 %v3969, %v4196
  %v4418 = vmul.f32 %v3970, %v4201
  %v4419 = vmul.f32 %v3971, %v4206
  %v4420 = vmul.f32 %v3972, %v4211
  %v4421 = vmul.f32 %v3973, %v4216
  %v4422 = vmul.f32 %v3974, %v4221
  %v4423 = vmul.f32 %v3975, %v4226
  %v4424 = vmul.f32 %v3976, %v4231
  %v4425 = vmul.f32 %v3977, %v4236
  %v4426 = vmul.f32 %v3978, %v4241
  %v4427 = vmul.f32 %v3979, %v4246
  %v4428 = vmul.f32 %v3980, %v4251
  %v4429 = vmul.f32 %v3981, %v4256
  %v4430 = vmul.f32 %v3982, %v4261
  %v4431 = vmul.f32 %v3983, %v4266
  %v4432 = vmul.f32 %v3984, %v4271
  %v4433 = vmul.f32 %v3985, %v4276
  %v4434 = vmul.f32 %v3986, %v4281
  %v4435 = vmul.f32 %v3987, %v4286
  %v4436 = vmul.f32 %v3988, %v4291
  %v4437 = vmul.f32 %v3989, %v4296
  %v4438 = vmul.f32 %v3990, %v4301
  %v4439 = vmul.f32 %v3991, %v4306
  %v4440 = vmul.f32 %v3992, %v4311
  %v4441 = vmul.f32 %v3993, %v4316
  %v4442 = vmul.f32 %v3994, %v4321
  %v4443 = vmul.f32 %v3995, %v4326
  %v4444 = vmul.f32 %v3996, %v4331
  %v4445 = vmul.f32 %v3997, %v4336
  %v4446 = vmul.f32 %v3998, %v4341
  %v4447 = vmul.f32 %v3999, %v4346
  %v4448 = vmul.f32 %v4000, %v4351
  %v4449 = vmul.f32 %v4001, %v4356
  %v4450 = vmul.f32 %v4002, %v4361
  %v4451 = vmul.f32 %v4003, %v4366
  %v4452 = vmul.f32 %v4004, %v4371
  %v4453 = vmul.f32 %v4005, %v4376
  %v4454 = vmul.f32 %v4006, %v4381
  %v4455 = vmul.f32 %v4007, %v4386
  %v4456 = vmul.f32 %v4008, %v4391
  %4457 = vst [vmem:[#allocation3 + $0x20] sm:$0xff] %v4393
  %4458 = vst [vmem:[#allocation3 + $0x68] sm:$0xff] %v4394
  %4459 = vst [vmem:[#allocation3 + $0xb0] sm:$0xff] %v4395
  %4460 = vst [vmem:[#allocation3 + $0xf8] sm:$0xff] %v4396
  %4461 = vst [vmem:[#allocation3 + $0x140] sm:$0xff] %v4397
  %4462 = vst [vmem:[#allocation3 + $0x188] sm:$0xff] %v4398
  %4463 = vst [vmem:[#allocation3 + $0x1d0] sm:$0xff] %v4399
  %4464 = vst [vmem:[#allocation3 + $0x218] sm:$0xff] %v4400
  %4465 = vst [vmem:[#allocation3 + $0x260] sm:$0xff] %v4401
  %4466 = vst [vmem:[#allocation3 + $0x2a8] sm:$0xff] %v4402
  %4467 = vst [vmem:[#allocation3 + $0x2f0] sm:$0xff] %v4403
  %4468 = vst [vmem:[#allocation3 + $0x338] sm:$0xff] %v4404
  %4469 = vst [vmem:[#allocation3 + $0x380] sm:$0xff] %v4405
  %4470 = vst [vmem:[#allocation3 + $0x3c8] sm:$0xff] %v4406
  %4471 = vst [vmem:[#allocation3 + $0x410] sm:$0xff] %v4407
  %4472 = vst [vmem:[#allocation3 + $0x458] sm:$0xff] %v4408
  %4473 = vst [vmem:[#allocation3 + $0x4a0] sm:$0xff] %v4409
  %4474 = vst [vmem:[#allocation3 + $0x4e8] sm:$0xff] %v4410
  %4475 = vst [vmem:[#allocation3 + $0x530] sm:$0xff] %v4411
  %4476 = vst [vmem:[#allocation3 + $0x578] sm:$0xff] %v4412
  %4477 = vst [vmem:[#allocation3 + $0x5c0] sm:$0xff] %v4413
  %4478 = vst [vmem:[#allocation3 + $0x608] sm:$0xff] %v4414
  %4479 = vst [vmem:[#allocation3 + $0x650] sm:$0xff] %v4415
  %4480 = vst [vmem:[#allocation3 + $0x698] sm:$0xff] %v4416
  %4481 = vst [vmem:[#allocation3 + $0x6e0] sm:$0xff] %v4417
  %4482 = vst [vmem:[#allocation3 + $0x728] sm:$0xff] %v4418
  %4483 = vst [vmem:[#allocation3 + $0x770] sm:$0xff] %v4419
  %4484 = vst [vmem:[#allocation3 + $0x7b8] sm:$0xff] %v4420
  %4485 = vst [vmem:[#allocation3 + $0x800] sm:$0xff] %v4421
  %4486 = vst [vmem:[#allocation3 + $0x848] sm:$0xff] %v4422
  %4487 = vst [vmem:[#allocation3 + $0x890] sm:$0xff] %v4423
  %4488 = vst [vmem:[#allocation3 + $0x8d8] sm:$0xff] %v4424
  %4489 = vst [vmem:[#allocation3 + $0x920] sm:$0xff] %v4425
  %4490 = vst [vmem:[#allocation3 + $0x968] sm:$0xff] %v4426
  %4491 = vst [vmem:[#allocation3 + $0x9b0] sm:$0xff] %v4427
  %4492 = vst [vmem:[#allocation3 + $0x9f8] sm:$0xff] %v4428
  %4493 = vst [vmem:[#allocation3 + $0xa40] sm:$0xff] %v4429
  %4494 = vst [vmem:[#allocation3 + $0xa88] sm:$0xff] %v4430
  %4495 = vst [vmem:[#allocation3 + $0xad0] sm:$0xff] %v4431
  %4496 = vst [vmem:[#allocation3 + $0xb18] sm:$0xff] %v4432
  %4497 = vst [vmem:[#allocation3 + $0xb60] sm:$0xff] %v4433
  %4498 = vst [vmem:[#allocation3 + $0xba8] sm:$0xff] %v4434
  %4499 = vst [vmem:[#allocation3 + $0xbf0] sm:$0xff] %v4435
  %4500 = vst [vmem:[#allocation3 + $0xc38] sm:$0xff] %v4436
  %4501 = vst [vmem:[#allocation3 + $0xc80] sm:$0xff] %v4437
  %4502 = vst [vmem:[#allocation3 + $0xcc8] sm:$0xff] %v4438
  %4503 = vst [vmem:[#allocation3 + $0xd10] sm:$0xff] %v4439
  %4504 = vst [vmem:[#allocation3 + $0xd58] sm:$0xff] %v4440
  %4505 = vst [vmem:[#allocation3 + $0xda0] sm:$0xff] %v4441
  %4506 = vst [vmem:[#allocation3 + $0xde8] sm:$0xff] %v4442
  %4507 = vst [vmem:[#allocation3 + $0xe30] sm:$0xff] %v4443
  %4508 = vst [vmem:[#allocation3 + $0xe78] sm:$0xff] %v4444
  %4509 = vst [vmem:[#allocation3 + $0xec0] sm:$0xff] %v4445
  %4510 = vst [vmem:[#allocation3 + $0xf08] sm:$0xff] %v4446
  %4511 = vst [vmem:[#allocation3 + $0xf50] sm:$0xff] %v4447
  %4512 = vst [vmem:[#allocation3 + $0xf98] sm:$0xff] %v4448
  %4513 = vst [vmem:[#allocation3 + $0xfe0] sm:$0xff] %v4449
  %4514 = vst [vmem:[#allocation3 + $0x1028] sm:$0xff] %v4450
  %4515 = vst [vmem:[#allocation3 + $0x1070] sm:$0xff] %v4451
  %4516 = vst [vmem:[#allocation3 + $0x10b8] sm:$0xff] %v4452
  %4517 = vst [vmem:[#allocation3 + $0x1100] sm:$0xff] %v4453
  %4518 = vst [vmem:[#allocation3 + $0x1148] sm:$0xff] %v4454
  %4519 = vst [vmem:[#allocation3 + $0x1190] sm:$0xff] %v4455
  %4520 = vst [vmem:[#allocation3 + $0x11d8] sm:$0xff] %v4456
  %v4521 = vld [vmem:[#allocation2 + $0x19] sm:$0xff]
  %v4522 = vld [vmem:[#allocation2 + $0x21] sm:$0xff]
  %v4523 = vld [vmem:[#allocation2 + $0x29] sm:$0xff]
  %v4524 = vld [vmem:[#allocation2 + $0x31] sm:$0xff]
  %v4525 = vld [vmem:[#allocation2 + $0x39] sm:$0xff]
  %v4526 = vld [vmem:[#allocation2 + $0x41] sm:$0xff]
  %v4527 = vld [vmem:[#allocation2 + $0x49] sm:$0xff]
  %v4528 = vld [vmem:[#allocation2 + $0x51] sm:$0xff]
  %v4529 = vld [vmem:[#allocation2 + $0x59] sm:$0xff]
  %v4530 = vld [vmem:[#allocation2 + $0x61] sm:$0xff]
  %v4531 = vld [vmem:[#allocation2 + $0x69] sm:$0xff]
  %v4532 = vld [vmem:[#allocation2 + $0x71] sm:$0xff]
  %v4533 = vld [vmem:[#allocation2 + $0x79] sm:$0xff]
  %v4534 = vld [vmem:[#allocation2 + $0x81] sm:$0xff]
  %v4535 = vld [vmem:[#allocation2 + $0x89] sm:$0xff]
  %v4536 = vld [vmem:[#allocation2 + $0x91] sm:$0xff]
  %v4537 = vld [vmem:[#allocation2 + $0x99] sm:$0xff]
  %v4538 = vld [vmem:[#allocation2 + $0xa1] sm:$0xff]
  %v4539 = vld [vmem:[#allocation2 + $0xa9] sm:$0xff]
  %v4540 = vld [vmem:[#allocation2 + $0xb1] sm:$0xff]
  %v4541 = vld [vmem:[#allocation2 + $0xb9] sm:$0xff]
  %v4542 = vld [vmem:[#allocation2 + $0xc1] sm:$0xff]
  %v4543 = vld [vmem:[#allocation2 + $0xc9] sm:$0xff]
  %v4544 = vld [vmem:[#allocation2 + $0xd1] sm:$0xff]
  %v4545 = vld [vmem:[#allocation2 + $0xd9] sm:$0xff]
  %v4546 = vld [vmem:[#allocation2 + $0xe1] sm:$0xff]
  %v4547 = vld [vmem:[#allocation2 + $0xe9] sm:$0xff]
  %v4548 = vld [vmem:[#allocation2 + $0xf1] sm:$0xff]
  %v4549 = vld [vmem:[#allocation2 + $0xf9] sm:$0xff]
  %v4550 = vld [vmem:[#allocation2 + $0x101] sm:$0xff]
  %v4551 = vld [vmem:[#allocation2 + $0x109] sm:$0xff]
  %v4552 = vld [vmem:[#allocation2 + $0x111] sm:$0xff]
  %v4553 = vld [vmem:[#allocation2 + $0x119] sm:$0xff]
  %v4554 = vld [vmem:[#allocation2 + $0x121] sm:$0xff]
  %v4555 = vld [vmem:[#allocation2 + $0x129] sm:$0xff]
  %v4556 = vld [vmem:[#allocation2 + $0x131] sm:$0xff]
  %v4557 = vld [vmem:[#allocation2 + $0x139] sm:$0xff]
  %v4558 = vld [vmem:[#allocation2 + $0x141] sm:$0xff]
  %v4559 = vld [vmem:[#allocation2 + $0x149] sm:$0xff]
  %v4560 = vld [vmem:[#allocation2 + $0x151] sm:$0xff]
  %v4561 = vld [vmem:[#allocation2 + $0x159] sm:$0xff]
  %v4562 = vld [vmem:[#allocation2 + $0x161] sm:$0xff]
  %v4563 = vld [vmem:[#allocation2 + $0x169] sm:$0xff]
  %v4564 = vld [vmem:[#allocation2 + $0x171] sm:$0xff]
  %v4565 = vld [vmem:[#allocation2 + $0x179] sm:$0xff]
  %v4566 = vld [vmem:[#allocation2 + $0x181] sm:$0xff]
  %v4567 = vld [vmem:[#allocation2 + $0x189] sm:$0xff]
  %v4568 = vld [vmem:[#allocation2 + $0x191] sm:$0xff]
  %v4569 = vld [vmem:[#allocation2 + $0x199] sm:$0xff]
  %v4570 = vld [vmem:[#allocation2 + $0x1a1] sm:$0xff]
  %v4571 = vld [vmem:[#allocation2 + $0x1a9] sm:$0xff]
  %v4572 = vld [vmem:[#allocation2 + $0x1b1] sm:$0xff]
  %v4573 = vld [vmem:[#allocation2 + $0x1b9] sm:$0xff]
  %v4574 = vld [vmem:[#allocation2 + $0x1c1] sm:$0xff]
  %v4575 = vld [vmem:[#allocation2 + $0x1c9] sm:$0xff]
  %v4576 = vld [vmem:[#allocation2 + $0x1d1] sm:$0xff]
  %v4577 = vld [vmem:[#allocation2 + $0x1d9] sm:$0xff]
  %v4578 = vld [vmem:[#allocation2 + $0x1e1] sm:$0xff]
  %v4579 = vld [vmem:[#allocation2 + $0x1e9] sm:$0xff]
  %v4580 = vld [vmem:[#allocation2 + $0x1f1] sm:$0xff]
  %v4581 = vld [vmem:[#allocation2 + $0x1f9] sm:$0xff]
  %v4582 = vld [vmem:[#allocation2 + $0x201] sm:$0xff]
  %v4583 = vld [vmem:[#allocation2 + $0x209] sm:$0xff]
  %v4584 = vld [vmem:[#allocation2 + $0x211] sm:$0xff]
  %v4585 = vld [vmem:[%s1] sm:$0xff]
  %v4586 = vld [vmem:[%s1 + $0x8] sm:$0xff]
  %v4587 = vld [vmem:[%s1 + $0x10] sm:$0xff]
  %v4588 = vld [vmem:[%s1 + $0x18] sm:$0xff]
  %v4589 = vld [vmem:[%s1 + $0x20] sm:$0xff]
  %v4590 = vld [vmem:[%s1 + $0x28] sm:$0xff]
  %v4591 = vld [vmem:[%s1 + $0x30] sm:$0xff]
  %v4592 = vld [vmem:[%s1 + $0x38] sm:$0xff]
  %v4593 = vld [vmem:[%s1 + $0x40] sm:$0xff]
  %v4594 = vld [vmem:[%s1 + $0x48] sm:$0xff]
  %v4595 = vld [vmem:[%s1 + $0x50] sm:$0xff]
  %v4596 = vld [vmem:[%s1 + $0x58] sm:$0xff]
  %v4597 = vld [vmem:[%s1 + $0x60] sm:$0xff]
  %v4598 = vld [vmem:[%s1 + $0x68] sm:$0xff]
  %v4599 = vld [vmem:[%s1 + $0x70] sm:$0xff]
  %v4600 = vld [vmem:[%s1 + $0x78] sm:$0xff]
  %v4601 = vld [vmem:[%s1 + $0x80] sm:$0xff]
  %v4602 = vld [vmem:[%s1 + $0x88] sm:$0xff]
  %v4603 = vld [vmem:[%s1 + $0x90] sm:$0xff]
  %v4604 = vld [vmem:[%s1 + $0x98] sm:$0xff]
  %v4605 = vld [vmem:[%s1 + $0xa0] sm:$0xff]
  %v4606 = vld [vmem:[%s1 + $0xa8] sm:$0xff]
  %v4607 = vld [vmem:[%s1 + $0xb0] sm:$0xff]
  %v4608 = vld [vmem:[%s1 + $0xb8] sm:$0xff]
  %v4609 = vld [vmem:[%s1 + $0xc0] sm:$0xff]
  %v4610 = vld [vmem:[%s1 + $0xc8] sm:$0xff]
  %v4611 = vld [vmem:[%s1 + $0xd0] sm:$0xff]
  %v4612 = vld [vmem:[%s1 + $0xd8] sm:$0xff]
  %v4613 = vld [vmem:[%s1 + $0xe0] sm:$0xff]
  %v4614 = vld [vmem:[%s1 + $0xe8] sm:$0xff]
  %v4615 = vld [vmem:[%s1 + $0xf0] sm:$0xff]
  %v4616 = vld [vmem:[%s1 + $0xf8] sm:$0xff]
  %v4617 = vld [vmem:[%s1 + $0x100] sm:$0xff]
  %v4618 = vld [vmem:[%s1 + $0x108] sm:$0xff]
  %v4619 = vld [vmem:[%s1 + $0x110] sm:$0xff]
  %v4620 = vld [vmem:[%s1 + $0x118] sm:$0xff]
  %v4621 = vld [vmem:[%s1 + $0x120] sm:$0xff]
  %v4622 = vld [vmem:[%s1 + $0x128] sm:$0xff]
  %v4623 = vld [vmem:[%s1 + $0x130] sm:$0xff]
  %v4624 = vld [vmem:[%s1 + $0x138] sm:$0xff]
  %v4625 = vld [vmem:[%s1 + $0x140] sm:$0xff]
  %v4626 = vld [vmem:[%s1 + $0x148] sm:$0xff]
  %v4627 = vld [vmem:[%s1 + $0x150] sm:$0xff]
  %v4628 = vld [vmem:[%s1 + $0x158] sm:$0xff]
  %v4629 = vld [vmem:[%s1 + $0x160] sm:$0xff]
  %v4630 = vld [vmem:[%s1 + $0x168] sm:$0xff]
  %v4631 = vld [vmem:[%s1 + $0x170] sm:$0xff]
  %v4632 = vld [vmem:[%s1 + $0x178] sm:$0xff]
  %v4633 = vld [vmem:[%s1 + $0x180] sm:$0xff]
  %v4634 = vld [vmem:[%s1 + $0x188] sm:$0xff]
  %v4635 = vld [vmem:[%s1 + $0x190] sm:$0xff]
  %v4636 = vld [vmem:[%s1 + $0x198] sm:$0xff]
  %v4637 = vld [vmem:[%s1 + $0x1a0] sm:$0xff]
  %v4638 = vld [vmem:[%s1 + $0x1a8] sm:$0xff]
  %v4639 = vld [vmem:[%s1 + $0x1b0] sm:$0xff]
  %v4640 = vld [vmem:[%s1 + $0x1b8] sm:$0xff]
  %v4641 = vld [vmem:[%s1 + $0x1c0] sm:$0xff]
  %v4642 = vld [vmem:[%s1 + $0x1c8] sm:$0xff]
  %v4643 = vld [vmem:[%s1 + $0x1d0] sm:$0xff]
  %v4644 = vld [vmem:[%s1 + $0x1d8] sm:$0xff]
  %v4645 = vld [vmem:[%s1 + $0x1e0] sm:$0xff]
  %v4646 = vld [vmem:[%s1 + $0x1e8] sm:$0xff]
  %v4647 = vld [vmem:[%s1 + $0x1f0] sm:$0xff]
  %v4648 = vld [vmem:[%s1 + $0x1f8] sm:$0xff]
  %4650 = vset.pattern.permute.xlu0 5
  %4651 = vperm.xlu0 %4650, %v4585
  %v4652 = vpop.permute.xlu0 %4651
  %4655 = vset.pattern.permute.xlu0 5
  %4656 = vperm.xlu0 %4655, %v4586
  %v4657 = vpop.permute.xlu0 %4656
  %4660 = vset.pattern.permute.xlu0 5
  %4661 = vperm.xlu0 %4660, %v4587
  %v4662 = vpop.permute.xlu0 %4661
  %4665 = vset.pattern.permute.xlu0 5
  %4666 = vperm.xlu0 %4665, %v4588
  %v4667 = vpop.permute.xlu0 %4666
  %4670 = vset.pattern.permute.xlu0 5
  %4671 = vperm.xlu0 %4670, %v4589
  %v4672 = vpop.permute.xlu0 %4671
  %4675 = vset.pattern.permute.xlu0 5
  %4676 = vperm.xlu0 %4675, %v4590
  %v4677 = vpop.permute.xlu0 %4676
  %4680 = vset.pattern.permute.xlu0 5
  %4681 = vperm.xlu0 %4680, %v4591
  %v4682 = vpop.permute.xlu0 %4681
  %4685 = vset.pattern.permute.xlu0 5
  %4686 = vperm.xlu0 %4685, %v4592
  %v4687 = vpop.permute.xlu0 %4686
  %4690 = vset.pattern.permute.xlu0 5
  %4691 = vperm.xlu0 %4690, %v4593
  %v4692 = vpop.permute.xlu0 %4691
  %4695 = vset.pattern.permute.xlu0 5
  %4696 = vperm.xlu0 %4695, %v4594
  %v4697 = vpop.permute.xlu0 %4696
  %4700 = vset.pattern.permute.xlu0 5
  %4701 = vperm.xlu0 %4700, %v4595
  %v4702 = vpop.permute.xlu0 %4701
  %4705 = vset.pattern.permute.xlu0 5
  %4706 = vperm.xlu0 %4705, %v4596
  %v4707 = vpop.permute.xlu0 %4706
  %4710 = vset.pattern.permute.xlu0 5
  %4711 = vperm.xlu0 %4710, %v4597
  %v4712 = vpop.permute.xlu0 %4711
  %4715 = vset.pattern.permute.xlu0 5
  %4716 = vperm.xlu0 %4715, %v4598
  %v4717 = vpop.permute.xlu0 %4716
  %4720 = vset.pattern.permute.xlu0 5
  %4721 = vperm.xlu0 %4720, %v4599
  %v4722 = vpop.permute.xlu0 %4721
  %4725 = vset.pattern.permute.xlu0 5
  %4726 = vperm.xlu0 %4725, %v4600
  %v4727 = vpop.permute.xlu0 %4726
  %4730 = vset.pattern.permute.xlu0 5
  %4731 = vperm.xlu0 %4730, %v4601
  %v4732 = vpop.permute.xlu0 %4731
  %4735 = vset.pattern.permute.xlu0 5
  %4736 = vperm.xlu0 %4735, %v4602
  %v4737 = vpop.permute.xlu0 %4736
  %4740 = vset.pattern.permute.xlu0 5
  %4741 = vperm.xlu0 %4740, %v4603
  %v4742 = vpop.permute.xlu0 %4741
  %4745 = vset.pattern.permute.xlu0 5
  %4746 = vperm.xlu0 %4745, %v4604
  %v4747 = vpop.permute.xlu0 %4746
  %4750 = vset.pattern.permute.xlu0 5
  %4751 = vperm.xlu0 %4750, %v4605
  %v4752 = vpop.permute.xlu0 %4751
  %4755 = vset.pattern.permute.xlu0 5
  %4756 = vperm.xlu0 %4755, %v4606
  %v4757 = vpop.permute.xlu0 %4756
  %4760 = vset.pattern.permute.xlu0 5
  %4761 = vperm.xlu0 %4760, %v4607
  %v4762 = vpop.permute.xlu0 %4761
  %4765 = vset.pattern.permute.xlu0 5
  %4766 = vperm.xlu0 %4765, %v4608
  %v4767 = vpop.permute.xlu0 %4766
  %4770 = vset.pattern.permute.xlu0 5
  %4771 = vperm.xlu0 %4770, %v4609
  %v4772 = vpop.permute.xlu0 %4771
  %4775 = vset.pattern.permute.xlu0 5
  %4776 = vperm.xlu0 %4775, %v4610
  %v4777 = vpop.permute.xlu0 %4776
  %4780 = vset.pattern.permute.xlu0 5
  %4781 = vperm.xlu0 %4780, %v4611
  %v4782 = vpop.permute.xlu0 %4781
  %4785 = vset.pattern.permute.xlu0 5
  %4786 = vperm.xlu0 %4785, %v4612
  %v4787 = vpop.permute.xlu0 %4786
  %4790 = vset.pattern.permute.xlu0 5
  %4791 = vperm.xlu0 %4790, %v4613
  %v4792 = vpop.permute.xlu0 %4791
  %4795 = vset.pattern.permute.xlu0 5
  %4796 = vperm.xlu0 %4795, %v4614
  %v4797 = vpop.permute.xlu0 %4796
  %4800 = vset.pattern.permute.xlu0 5
  %4801 = vperm.xlu0 %4800, %v4615
  %v4802 = vpop.permute.xlu0 %4801
  %4805 = vset.pattern.permute.xlu0 5
  %4806 = vperm.xlu0 %4805, %v4616
  %v4807 = vpop.permute.xlu0 %4806
  %4810 = vset.pattern.permute.xlu0 5
  %4811 = vperm.xlu0 %4810, %v4617
  %v4812 = vpop.permute.xlu0 %4811
  %4815 = vset.pattern.permute.xlu0 5
  %4816 = vperm.xlu0 %4815, %v4618
  %v4817 = vpop.permute.xlu0 %4816
  %4820 = vset.pattern.permute.xlu0 5
  %4821 = vperm.xlu0 %4820, %v4619
  %v4822 = vpop.permute.xlu0 %4821
  %4825 = vset.pattern.permute.xlu0 5
  %4826 = vperm.xlu0 %4825, %v4620
  %v4827 = vpop.permute.xlu0 %4826
  %4830 = vset.pattern.permute.xlu0 5
  %4831 = vperm.xlu0 %4830, %v4621
  %v4832 = vpop.permute.xlu0 %4831
  %4835 = vset.pattern.permute.xlu0 5
  %4836 = vperm.xlu0 %4835, %v4622
  %v4837 = vpop.permute.xlu0 %4836
  %4840 = vset.pattern.permute.xlu0 5
  %4841 = vperm.xlu0 %4840, %v4623
  %v4842 = vpop.permute.xlu0 %4841
  %4845 = vset.pattern.permute.xlu0 5
  %4846 = vperm.xlu0 %4845, %v4624
  %v4847 = vpop.permute.xlu0 %4846
  %4850 = vset.pattern.permute.xlu0 5
  %4851 = vperm.xlu0 %4850, %v4625
  %v4852 = vpop.permute.xlu0 %4851
  %4855 = vset.pattern.permute.xlu0 5
  %4856 = vperm.xlu0 %4855, %v4626
  %v4857 = vpop.permute.xlu0 %4856
  %4860 = vset.pattern.permute.xlu0 5
  %4861 = vperm.xlu0 %4860, %v4627
  %v4862 = vpop.permute.xlu0 %4861
  %4865 = vset.pattern.permute.xlu0 5
  %4866 = vperm.xlu0 %4865, %v4628
  %v4867 = vpop.permute.xlu0 %4866
  %4870 = vset.pattern.permute.xlu0 5
  %4871 = vperm.xlu0 %4870, %v4629
  %v4872 = vpop.permute.xlu0 %4871
  %4875 = vset.pattern.permute.xlu0 5
  %4876 = vperm.xlu0 %4875, %v4630
  %v4877 = vpop.permute.xlu0 %4876
  %4880 = vset.pattern.permute.xlu0 5
  %4881 = vperm.xlu0 %4880, %v4631
  %v4882 = vpop.permute.xlu0 %4881
  %4885 = vset.pattern.permute.xlu0 5
  %4886 = vperm.xlu0 %4885, %v4632
  %v4887 = vpop.permute.xlu0 %4886
  %4890 = vset.pattern.permute.xlu0 5
  %4891 = vperm.xlu0 %4890, %v4633
  %v4892 = vpop.permute.xlu0 %4891
  %4895 = vset.pattern.permute.xlu0 5
  %4896 = vperm.xlu0 %4895, %v4634
  %v4897 = vpop.permute.xlu0 %4896
  %4900 = vset.pattern.permute.xlu0 5
  %4901 = vperm.xlu0 %4900, %v4635
  %v4902 = vpop.permute.xlu0 %4901
  %4905 = vset.pattern.permute.xlu0 5
  %4906 = vperm.xlu0 %4905, %v4636
  %v4907 = vpop.permute.xlu0 %4906
  %4910 = vset.pattern.permute.xlu0 5
  %4911 = vperm.xlu0 %4910, %v4637
  %v4912 = vpop.permute.xlu0 %4911
  %4915 = vset.pattern.permute.xlu0 5
  %4916 = vperm.xlu0 %4915, %v4638
  %v4917 = vpop.permute.xlu0 %4916
  %4920 = vset.pattern.permute.xlu0 5
  %4921 = vperm.xlu0 %4920, %v4639
  %v4922 = vpop.permute.xlu0 %4921
  %4925 = vset.pattern.permute.xlu0 5
  %4926 = vperm.xlu0 %4925, %v4640
  %v4927 = vpop.permute.xlu0 %4926
  %4930 = vset.pattern.permute.xlu0 5
  %4931 = vperm.xlu0 %4930, %v4641
  %v4932 = vpop.permute.xlu0 %4931
  %4935 = vset.pattern.permute.xlu0 5
  %4936 = vperm.xlu0 %4935, %v4642
  %v4937 = vpop.permute.xlu0 %4936
  %4940 = vset.pattern.permute.xlu0 5
  %4941 = vperm.xlu0 %4940, %v4643
  %v4942 = vpop.permute.xlu0 %4941
  %4945 = vset.pattern.permute.xlu0 5
  %4946 = vperm.xlu0 %4945, %v4644
  %v4947 = vpop.permute.xlu0 %4946
  %4950 = vset.pattern.permute.xlu0 5
  %4951 = vperm.xlu0 %4950, %v4645
  %v4952 = vpop.permute.xlu0 %4951
  %4955 = vset.pattern.permute.xlu0 5
  %4956 = vperm.xlu0 %4955, %v4646
  %v4957 = vpop.permute.xlu0 %4956
  %4960 = vset.pattern.permute.xlu0 5
  %4961 = vperm.xlu0 %4960, %v4647
  %v4962 = vpop.permute.xlu0 %4961
  %4965 = vset.pattern.permute.xlu0 5
  %4966 = vperm.xlu0 %4965, %v4648
  %v4967 = vpop.permute.xlu0 %4966
  %v4969 = vmul.f32 %v4521, %v4652
  %v4970 = vmul.f32 %v4522, %v4657
  %v4971 = vmul.f32 %v4523, %v4662
  %v4972 = vmul.f32 %v4524, %v4667
  %v4973 = vmul.f32 %v4525, %v4672
  %v4974 = vmul.f32 %v4526, %v4677
  %v4975 = vmul.f32 %v4527, %v4682
  %v4976 = vmul.f32 %v4528, %v4687
  %v4977 = vmul.f32 %v4529, %v4692
  %v4978 = vmul.f32 %v4530, %v4697
  %v4979 = vmul.f32 %v4531, %v4702
  %v4980 = vmul.f32 %v4532, %v4707
  %v4981 = vmul.f32 %v4533, %v4712
  %v4982 = vmul.f32 %v4534, %v4717
  %v4983 = vmul.f32 %v4535, %v4722
  %v4984 = vmul.f32 %v4536, %v4727
  %v4985 = vmul.f32 %v4537, %v4732
  %v4986 = vmul.f32 %v4538, %v4737
  %v4987 = vmul.f32 %v4539, %v4742
  %v4988 = vmul.f32 %v4540, %v4747
  %v4989 = vmul.f32 %v4541, %v4752
  %v4990 = vmul.f32 %v4542, %v4757
  %v4991 = vmul.f32 %v4543, %v4762
  %v4992 = vmul.f32 %v4544, %v4767
  %v4993 = vmul.f32 %v4545, %v4772
  %v4994 = vmul.f32 %v4546, %v4777
  %v4995 = vmul.f32 %v4547, %v4782
  %v4996 = vmul.f32 %v4548, %v4787
  %v4997 = vmul.f32 %v4549, %v4792
  %v4998 = vmul.f32 %v4550, %v4797
  %v4999 = vmul.f32 %v4551, %v4802
  %v5000 = vmul.f32 %v4552, %v4807
  %v5001 = vmul.f32 %v4553, %v4812
  %v5002 = vmul.f32 %v4554, %v4817
  %v5003 = vmul.f32 %v4555, %v4822
  %v5004 = vmul.f32 %v4556, %v4827
  %v5005 = vmul.f32 %v4557, %v4832
  %v5006 = vmul.f32 %v4558, %v4837
  %v5007 = vmul.f32 %v4559, %v4842
  %v5008 = vmul.f32 %v4560, %v4847
  %v5009 = vmul.f32 %v4561, %v4852
  %v5010 = vmul.f32 %v4562, %v4857
  %v5011 = vmul.f32 %v4563, %v4862
  %v5012 = vmul.f32 %v4564, %v4867
  %v5013 = vmul.f32 %v4565, %v4872
  %v5014 = vmul.f32 %v4566, %v4877
  %v5015 = vmul.f32 %v4567, %v4882
  %v5016 = vmul.f32 %v4568, %v4887
  %v5017 = vmul.f32 %v4569, %v4892
  %v5018 = vmul.f32 %v4570, %v4897
  %v5019 = vmul.f32 %v4571, %v4902
  %v5020 = vmul.f32 %v4572, %v4907
  %v5021 = vmul.f32 %v4573, %v4912
  %v5022 = vmul.f32 %v4574, %v4917
  %v5023 = vmul.f32 %v4575, %v4922
  %v5024 = vmul.f32 %v4576, %v4927
  %v5025 = vmul.f32 %v4577, %v4932
  %v5026 = vmul.f32 %v4578, %v4937
  %v5027 = vmul.f32 %v4579, %v4942
  %v5028 = vmul.f32 %v4580, %v4947
  %v5029 = vmul.f32 %v4581, %v4952
  %v5030 = vmul.f32 %v4582, %v4957
  %v5031 = vmul.f32 %v4583, %v4962
  %v5032 = vmul.f32 %v4584, %v4967
  %5033 = vst [vmem:[#allocation3 + $0x28] sm:$0xff] %v4969
  %5034 = vst [vmem:[#allocation3 + $0x70] sm:$0xff] %v4970
  %5035 = vst [vmem:[#allocation3 + $0xb8] sm:$0xff] %v4971
  %5036 = vst [vmem:[#allocation3 + $0x100] sm:$0xff] %v4972
  %5037 = vst [vmem:[#allocation3 + $0x148] sm:$0xff] %v4973
  %5038 = vst [vmem:[#allocation3 + $0x190] sm:$0xff] %v4974
  %5039 = vst [vmem:[#allocation3 + $0x1d8] sm:$0xff] %v4975
  %5040 = vst [vmem:[#allocation3 + $0x220] sm:$0xff] %v4976
  %5041 = vst [vmem:[#allocation3 + $0x268] sm:$0xff] %v4977
  %5042 = vst [vmem:[#allocation3 + $0x2b0] sm:$0xff] %v4978
  %5043 = vst [vmem:[#allocation3 + $0x2f8] sm:$0xff] %v4979
  %5044 = vst [vmem:[#allocation3 + $0x340] sm:$0xff] %v4980
  %5045 = vst [vmem:[#allocation3 + $0x388] sm:$0xff] %v4981
  %5046 = vst [vmem:[#allocation3 + $0x3d0] sm:$0xff] %v4982
  %5047 = vst [vmem:[#allocation3 + $0x418] sm:$0xff] %v4983
  %5048 = vst [vmem:[#allocation3 + $0x460] sm:$0xff] %v4984
  %5049 = vst [vmem:[#allocation3 + $0x4a8] sm:$0xff] %v4985
  %5050 = vst [vmem:[#allocation3 + $0x4f0] sm:$0xff] %v4986
  %5051 = vst [vmem:[#allocation3 + $0x538] sm:$0xff] %v4987
  %5052 = vst [vmem:[#allocation3 + $0x580] sm:$0xff] %v4988
  %5053 = vst [vmem:[#allocation3 + $0x5c8] sm:$0xff] %v4989
  %5054 = vst [vmem:[#allocation3 + $0x610] sm:$0xff] %v4990
  %5055 = vst [vmem:[#allocation3 + $0x658] sm:$0xff] %v4991
  %5056 = vst [vmem:[#allocation3 + $0x6a0] sm:$0xff] %v4992
  %5057 = vst [vmem:[#allocation3 + $0x6e8] sm:$0xff] %v4993
  %5058 = vst [vmem:[#allocation3 + $0x730] sm:$0xff] %v4994
  %5059 = vst [vmem:[#allocation3 + $0x778] sm:$0xff] %v4995
  %5060 = vst [vmem:[#allocation3 + $0x7c0] sm:$0xff] %v4996
  %5061 = vst [vmem:[#allocation3 + $0x808] sm:$0xff] %v4997
  %5062 = vst [vmem:[#allocation3 + $0x850] sm:$0xff] %v4998
  %5063 = vst [vmem:[#allocation3 + $0x898] sm:$0xff] %v4999
  %5064 = vst [vmem:[#allocation3 + $0x8e0] sm:$0xff] %v5000
  %5065 = vst [vmem:[#allocation3 + $0x928] sm:$0xff] %v5001
  %5066 = vst [vmem:[#allocation3 + $0x970] sm:$0xff] %v5002
  %5067 = vst [vmem:[#allocation3 + $0x9b8] sm:$0xff] %v5003
  %5068 = vst [vmem:[#allocation3 + $0xa00] sm:$0xff] %v5004
  %5069 = vst [vmem:[#allocation3 + $0xa48] sm:$0xff] %v5005
  %5070 = vst [vmem:[#allocation3 + $0xa90] sm:$0xff] %v5006
  %5071 = vst [vmem:[#allocation3 + $0xad8] sm:$0xff] %v5007
  %5072 = vst [vmem:[#allocation3 + $0xb20] sm:$0xff] %v5008
  %5073 = vst [vmem:[#allocation3 + $0xb68] sm:$0xff] %v5009
  %5074 = vst [vmem:[#allocation3 + $0xbb0] sm:$0xff] %v5010
  %5075 = vst [vmem:[#allocation3 + $0xbf8] sm:$0xff] %v5011
  %5076 = vst [vmem:[#allocation3 + $0xc40] sm:$0xff] %v5012
  %5077 = vst [vmem:[#allocation3 + $0xc88] sm:$0xff] %v5013
  %5078 = vst [vmem:[#allocation3 + $0xcd0] sm:$0xff] %v5014
  %5079 = vst [vmem:[#allocation3 + $0xd18] sm:$0xff] %v5015
  %5080 = vst [vmem:[#allocation3 + $0xd60] sm:$0xff] %v5016
  %5081 = vst [vmem:[#allocation3 + $0xda8] sm:$0xff] %v5017
  %5082 = vst [vmem:[#allocation3 + $0xdf0] sm:$0xff] %v5018
  %5083 = vst [vmem:[#allocation3 + $0xe38] sm:$0xff] %v5019
  %5084 = vst [vmem:[#allocation3 + $0xe80] sm:$0xff] %v5020
  %5085 = vst [vmem:[#allocation3 + $0xec8] sm:$0xff] %v5021
  %5086 = vst [vmem:[#allocation3 + $0xf10] sm:$0xff] %v5022
  %5087 = vst [vmem:[#allocation3 + $0xf58] sm:$0xff] %v5023
  %5088 = vst [vmem:[#allocation3 + $0xfa0] sm:$0xff] %v5024
  %5089 = vst [vmem:[#allocation3 + $0xfe8] sm:$0xff] %v5025
  %5090 = vst [vmem:[#allocation3 + $0x1030] sm:$0xff] %v5026
  %5091 = vst [vmem:[#allocation3 + $0x1078] sm:$0xff] %v5027
  %5092 = vst [vmem:[#allocation3 + $0x10c0] sm:$0xff] %v5028
  %5093 = vst [vmem:[#allocation3 + $0x1108] sm:$0xff] %v5029
  %5094 = vst [vmem:[#allocation3 + $0x1150] sm:$0xff] %v5030
  %5095 = vst [vmem:[#allocation3 + $0x1198] sm:$0xff] %v5031
  %5096 = vst [vmem:[#allocation3 + $0x11e0] sm:$0xff] %v5032
  %v5097 = vld [vmem:[#allocation2 + $0x27] sm:$0xff]
  %v5098 = vld [vmem:[#allocation2 + $0x2f] sm:$0xff]
  %v5099 = vld [vmem:[#allocation2 + $0x37] sm:$0xff]
  %v5100 = vld [vmem:[#allocation2 + $0x3f] sm:$0xff]
  %v5101 = vld [vmem:[#allocation2 + $0x47] sm:$0xff]
  %v5102 = vld [vmem:[#allocation2 + $0x4f] sm:$0xff]
  %v5103 = vld [vmem:[#allocation2 + $0x57] sm:$0xff]
  %v5104 = vld [vmem:[#allocation2 + $0x5f] sm:$0xff]
  %v5105 = vld [vmem:[#allocation2 + $0x67] sm:$0xff]
  %v5106 = vld [vmem:[#allocation2 + $0x6f] sm:$0xff]
  %v5107 = vld [vmem:[#allocation2 + $0x77] sm:$0xff]
  %v5108 = vld [vmem:[#allocation2 + $0x7f] sm:$0xff]
  %v5109 = vld [vmem:[#allocation2 + $0x87] sm:$0xff]
  %v5110 = vld [vmem:[#allocation2 + $0x8f] sm:$0xff]
  %v5111 = vld [vmem:[#allocation2 + $0x97] sm:$0xff]
  %v5112 = vld [vmem:[#allocation2 + $0x9f] sm:$0xff]
  %v5113 = vld [vmem:[#allocation2 + $0xa7] sm:$0xff]
  %v5114 = vld [vmem:[#allocation2 + $0xaf] sm:$0xff]
  %v5115 = vld [vmem:[#allocation2 + $0xb7] sm:$0xff]
  %v5116 = vld [vmem:[#allocation2 + $0xbf] sm:$0xff]
  %v5117 = vld [vmem:[#allocation2 + $0xc7] sm:$0xff]
  %v5118 = vld [vmem:[#allocation2 + $0xcf] sm:$0xff]
  %v5119 = vld [vmem:[#allocation2 + $0xd7] sm:$0xff]
  %v5120 = vld [vmem:[#allocation2 + $0xdf] sm:$0xff]
  %v5121 = vld [vmem:[#allocation2 + $0xe7] sm:$0xff]
  %v5122 = vld [vmem:[#allocation2 + $0xef] sm:$0xff]
  %v5123 = vld [vmem:[#allocation2 + $0xf7] sm:$0xff]
  %v5124 = vld [vmem:[#allocation2 + $0xff] sm:$0xff]
  %v5125 = vld [vmem:[#allocation2 + $0x107] sm:$0xff]
  %v5126 = vld [vmem:[#allocation2 + $0x10f] sm:$0xff]
  %v5127 = vld [vmem:[#allocation2 + $0x117] sm:$0xff]
  %v5128 = vld [vmem:[#allocation2 + $0x11f] sm:$0xff]
  %v5129 = vld [vmem:[#allocation2 + $0x127] sm:$0xff]
  %v5130 = vld [vmem:[#allocation2 + $0x12f] sm:$0xff]
  %v5131 = vld [vmem:[#allocation2 + $0x137] sm:$0xff]
  %v5132 = vld [vmem:[#allocation2 + $0x13f] sm:$0xff]
  %v5133 = vld [vmem:[#allocation2 + $0x147] sm:$0xff]
  %v5134 = vld [vmem:[#allocation2 + $0x14f] sm:$0xff]
  %v5135 = vld [vmem:[#allocation2 + $0x157] sm:$0xff]
  %v5136 = vld [vmem:[#allocation2 + $0x15f] sm:$0xff]
  %v5137 = vld [vmem:[#allocation2 + $0x167] sm:$0xff]
  %v5138 = vld [vmem:[#allocation2 + $0x16f] sm:$0xff]
  %v5139 = vld [vmem:[#allocation2 + $0x177] sm:$0xff]
  %v5140 = vld [vmem:[#allocation2 + $0x17f] sm:$0xff]
  %v5141 = vld [vmem:[#allocation2 + $0x187] sm:$0xff]
  %v5142 = vld [vmem:[#allocation2 + $0x18f] sm:$0xff]
  %v5143 = vld [vmem:[#allocation2 + $0x197] sm:$0xff]
  %v5144 = vld [vmem:[#allocation2 + $0x19f] sm:$0xff]
  %v5145 = vld [vmem:[#allocation2 + $0x1a7] sm:$0xff]
  %v5146 = vld [vmem:[#allocation2 + $0x1af] sm:$0xff]
  %v5147 = vld [vmem:[#allocation2 + $0x1b7] sm:$0xff]
  %v5148 = vld [vmem:[#allocation2 + $0x1bf] sm:$0xff]
  %v5149 = vld [vmem:[#allocation2 + $0x1c7] sm:$0xff]
  %v5150 = vld [vmem:[#allocation2 + $0x1cf] sm:$0xff]
  %v5151 = vld [vmem:[#allocation2 + $0x1d7] sm:$0xff]
  %v5152 = vld [vmem:[#allocation2 + $0x1df] sm:$0xff]
  %v5153 = vld [vmem:[#allocation2 + $0x1e7] sm:$0xff]
  %v5154 = vld [vmem:[#allocation2 + $0x1ef] sm:$0xff]
  %v5155 = vld [vmem:[#allocation2 + $0x1f7] sm:$0xff]
  %v5156 = vld [vmem:[#allocation2 + $0x1ff] sm:$0xff]
  %v5157 = vld [vmem:[#allocation2 + $0x207] sm:$0xff]
  %v5158 = vld [vmem:[#allocation2 + $0x20f] sm:$0xff]
  %v5159 = vld [vmem:[#allocation2 + $0x217] sm:$0xff]
  %v5160 = vld [vmem:[#allocation2 + $0x21f] sm:$0xff]
  %v5161 = vld [vmem:[%s1] sm:$0xff]
  %v5162 = vld [vmem:[%s1 + $0x8] sm:$0xff]
  %v5163 = vld [vmem:[%s1 + $0x10] sm:$0xff]
  %v5164 = vld [vmem:[%s1 + $0x18] sm:$0xff]
  %v5165 = vld [vmem:[%s1 + $0x20] sm:$0xff]
  %v5166 = vld [vmem:[%s1 + $0x28] sm:$0xff]
  %v5167 = vld [vmem:[%s1 + $0x30] sm:$0xff]
  %v5168 = vld [vmem:[%s1 + $0x38] sm:$0xff]
  %v5169 = vld [vmem:[%s1 + $0x40] sm:$0xff]
  %v5170 = vld [vmem:[%s1 + $0x48] sm:$0xff]
  %v5171 = vld [vmem:[%s1 + $0x50] sm:$0xff]
  %v5172 = vld [vmem:[%s1 + $0x58] sm:$0xff]
  %v5173 = vld [vmem:[%s1 + $0x60] sm:$0xff]
  %v5174 = vld [vmem:[%s1 + $0x68] sm:$0xff]
  %v5175 = vld [vmem:[%s1 + $0x70] sm:$0xff]
  %v5176 = vld [vmem:[%s1 + $0x78] sm:$0xff]
  %v5177 = vld [vmem:[%s1 + $0x80] sm:$0xff]
  %v5178 = vld [vmem:[%s1 + $0x88] sm:$0xff]
  %v5179 = vld [vmem:[%s1 + $0x90] sm:$0xff]
  %v5180 = vld [vmem:[%s1 + $0x98] sm:$0xff]
  %v5181 = vld [vmem:[%s1 + $0xa0] sm:$0xff]
  %v5182 = vld [vmem:[%s1 + $0xa8] sm:$0xff]
  %v5183 = vld [vmem:[%s1 + $0xb0] sm:$0xff]
  %v5184 = vld [vmem:[%s1 + $0xb8] sm:$0xff]
  %v5185 = vld [vmem:[%s1 + $0xc0] sm:$0xff]
  %v5186 = vld [vmem:[%s1 + $0xc8] sm:$0xff]
  %v5187 = vld [vmem:[%s1 + $0xd0] sm:$0xff]
  %v5188 = vld [vmem:[%s1 + $0xd8] sm:$0xff]
  %v5189 = vld [vmem:[%s1 + $0xe0] sm:$0xff]
  %v5190 = vld [vmem:[%s1 + $0xe8] sm:$0xff]
  %v5191 = vld [vmem:[%s1 + $0xf0] sm:$0xff]
  %v5192 = vld [vmem:[%s1 + $0xf8] sm:$0xff]
  %v5193 = vld [vmem:[%s1 + $0x100] sm:$0xff]
  %v5194 = vld [vmem:[%s1 + $0x108] sm:$0xff]
  %v5195 = vld [vmem:[%s1 + $0x110] sm:$0xff]
  %v5196 = vld [vmem:[%s1 + $0x118] sm:$0xff]
  %v5197 = vld [vmem:[%s1 + $0x120] sm:$0xff]
  %v5198 = vld [vmem:[%s1 + $0x128] sm:$0xff]
  %v5199 = vld [vmem:[%s1 + $0x130] sm:$0xff]
  %v5200 = vld [vmem:[%s1 + $0x138] sm:$0xff]
  %v5201 = vld [vmem:[%s1 + $0x140] sm:$0xff]
  %v5202 = vld [vmem:[%s1 + $0x148] sm:$0xff]
  %v5203 = vld [vmem:[%s1 + $0x150] sm:$0xff]
  %v5204 = vld [vmem:[%s1 + $0x158] sm:$0xff]
  %v5205 = vld [vmem:[%s1 + $0x160] sm:$0xff]
  %v5206 = vld [vmem:[%s1 + $0x168] sm:$0xff]
  %v5207 = vld [vmem:[%s1 + $0x170] sm:$0xff]
  %v5208 = vld [vmem:[%s1 + $0x178] sm:$0xff]
  %v5209 = vld [vmem:[%s1 + $0x180] sm:$0xff]
  %v5210 = vld [vmem:[%s1 + $0x188] sm:$0xff]
  %v5211 = vld [vmem:[%s1 + $0x190] sm:$0xff]
  %v5212 = vld [vmem:[%s1 + $0x198] sm:$0xff]
  %v5213 = vld [vmem:[%s1 + $0x1a0] sm:$0xff]
  %v5214 = vld [vmem:[%s1 + $0x1a8] sm:$0xff]
  %v5215 = vld [vmem:[%s1 + $0x1b0] sm:$0xff]
  %v5216 = vld [vmem:[%s1 + $0x1b8] sm:$0xff]
  %v5217 = vld [vmem:[%s1 + $0x1c0] sm:$0xff]
  %v5218 = vld [vmem:[%s1 + $0x1c8] sm:$0xff]
  %v5219 = vld [vmem:[%s1 + $0x1d0] sm:$0xff]
  %v5220 = vld [vmem:[%s1 + $0x1d8] sm:$0xff]
  %v5221 = vld [vmem:[%s1 + $0x1e0] sm:$0xff]
  %v5222 = vld [vmem:[%s1 + $0x1e8] sm:$0xff]
  %v5223 = vld [vmem:[%s1 + $0x1f0] sm:$0xff]
  %v5224 = vld [vmem:[%s1 + $0x1f8] sm:$0xff]
  %5226 = vset.pattern.permute.xlu0 6
  %5227 = vperm.xlu0 %5226, %v5161
  %v5228 = vpop.permute.xlu0 %5227
  %5231 = vset.pattern.permute.xlu0 6
  %5232 = vperm.xlu0 %5231, %v5162
  %v5233 = vpop.permute.xlu0 %5232
  %5236 = vset.pattern.permute.xlu0 6
  %5237 = vperm.xlu0 %5236, %v5163
  %v5238 = vpop.permute.xlu0 %5237
  %5241 = vset.pattern.permute.xlu0 6
  %5242 = vperm.xlu0 %5241, %v5164
  %v5243 = vpop.permute.xlu0 %5242
  %5246 = vset.pattern.permute.xlu0 6
  %5247 = vperm.xlu0 %5246, %v5165
  %v5248 = vpop.permute.xlu0 %5247
  %5251 = vset.pattern.permute.xlu0 6
  %5252 = vperm.xlu0 %5251, %v5166
  %v5253 = vpop.permute.xlu0 %5252
  %5256 = vset.pattern.permute.xlu0 6
  %5257 = vperm.xlu0 %5256, %v5167
  %v5258 = vpop.permute.xlu0 %5257
  %5261 = vset.pattern.permute.xlu0 6
  %5262 = vperm.xlu0 %5261, %v5168
  %v5263 = vpop.permute.xlu0 %5262
  %5266 = vset.pattern.permute.xlu0 6
  %5267 = vperm.xlu0 %5266, %v5169
  %v5268 = vpop.permute.xlu0 %5267
  %5271 = vset.pattern.permute.xlu0 6
  %5272 = vperm.xlu0 %5271, %v5170
  %v5273 = vpop.permute.xlu0 %5272
  %5276 = vset.pattern.permute.xlu0 6
  %5277 = vperm.xlu0 %5276, %v5171
  %v5278 = vpop.permute.xlu0 %5277
  %5281 = vset.pattern.permute.xlu0 6
  %5282 = vperm.xlu0 %5281, %v5172
  %v5283 = vpop.permute.xlu0 %5282
  %5286 = vset.pattern.permute.xlu0 6
  %5287 = vperm.xlu0 %5286, %v5173
  %v5288 = vpop.permute.xlu0 %5287
  %5291 = vset.pattern.permute.xlu0 6
  %5292 = vperm.xlu0 %5291, %v5174
  %v5293 = vpop.permute.xlu0 %5292
  %5296 = vset.pattern.permute.xlu0 6
  %5297 = vperm.xlu0 %5296, %v5175
  %v5298 = vpop.permute.xlu0 %5297
  %5301 = vset.pattern.permute.xlu0 6
  %5302 = vperm.xlu0 %5301, %v5176
  %v5303 = vpop.permute.xlu0 %5302
  %5306 = vset.pattern.permute.xlu0 6
  %5307 = vperm.xlu0 %5306, %v5177
  %v5308 = vpop.permute.xlu0 %5307
  %5311 = vset.pattern.permute.xlu0 6
  %5312 = vperm.xlu0 %5311, %v5178
  %v5313 = vpop.permute.xlu0 %5312
  %5316 = vset.pattern.permute.xlu0 6
  %5317 = vperm.xlu0 %5316, %v5179
  %v5318 = vpop.permute.xlu0 %5317
  %5321 = vset.pattern.permute.xlu0 6
  %5322 = vperm.xlu0 %5321, %v5180
  %v5323 = vpop.permute.xlu0 %5322
  %5326 = vset.pattern.permute.xlu0 6
  %5327 = vperm.xlu0 %5326, %v5181
  %v5328 = vpop.permute.xlu0 %5327
  %5331 = vset.pattern.permute.xlu0 6
  %5332 = vperm.xlu0 %5331, %v5182
  %v5333 = vpop.permute.xlu0 %5332
  %5336 = vset.pattern.permute.xlu0 6
  %5337 = vperm.xlu0 %5336, %v5183
  %v5338 = vpop.permute.xlu0 %5337
  %5341 = vset.pattern.permute.xlu0 6
  %5342 = vperm.xlu0 %5341, %v5184
  %v5343 = vpop.permute.xlu0 %5342
  %5346 = vset.pattern.permute.xlu0 6
  %5347 = vperm.xlu0 %5346, %v5185
  %v5348 = vpop.permute.xlu0 %5347
  %5351 = vset.pattern.permute.xlu0 6
  %5352 = vperm.xlu0 %5351, %v5186
  %v5353 = vpop.permute.xlu0 %5352
  %5356 = vset.pattern.permute.xlu0 6
  %5357 = vperm.xlu0 %5356, %v5187
  %v5358 = vpop.permute.xlu0 %5357
  %5361 = vset.pattern.permute.xlu0 6
  %5362 = vperm.xlu0 %5361, %v5188
  %v5363 = vpop.permute.xlu0 %5362
  %5366 = vset.pattern.permute.xlu0 6
  %5367 = vperm.xlu0 %5366, %v5189
  %v5368 = vpop.permute.xlu0 %5367
  %5371 = vset.pattern.permute.xlu0 6
  %5372 = vperm.xlu0 %5371, %v5190
  %v5373 = vpop.permute.xlu0 %5372
  %5376 = vset.pattern.permute.xlu0 6
  %5377 = vperm.xlu0 %5376, %v5191
  %v5378 = vpop.permute.xlu0 %5377
  %5381 = vset.pattern.permute.xlu0 6
  %5382 = vperm.xlu0 %5381, %v5192
  %v5383 = vpop.permute.xlu0 %5382
  %5386 = vset.pattern.permute.xlu0 6
  %5387 = vperm.xlu0 %5386, %v5193
  %v5388 = vpop.permute.xlu0 %5387
  %5391 = vset.pattern.permute.xlu0 6
  %5392 = vperm.xlu0 %5391, %v5194
  %v5393 = vpop.permute.xlu0 %5392
  %5396 = vset.pattern.permute.xlu0 6
  %5397 = vperm.xlu0 %5396, %v5195
  %v5398 = vpop.permute.xlu0 %5397
  %5401 = vset.pattern.permute.xlu0 6
  %5402 = vperm.xlu0 %5401, %v5196
  %v5403 = vpop.permute.xlu0 %5402
  %5406 = vset.pattern.permute.xlu0 6
  %5407 = vperm.xlu0 %5406, %v5197
  %v5408 = vpop.permute.xlu0 %5407
  %5411 = vset.pattern.permute.xlu0 6
  %5412 = vperm.xlu0 %5411, %v5198
  %v5413 = vpop.permute.xlu0 %5412
  %5416 = vset.pattern.permute.xlu0 6
  %5417 = vperm.xlu0 %5416, %v5199
  %v5418 = vpop.permute.xlu0 %5417
  %5421 = vset.pattern.permute.xlu0 6
  %5422 = vperm.xlu0 %5421, %v5200
  %v5423 = vpop.permute.xlu0 %5422
  %5426 = vset.pattern.permute.xlu0 6
  %5427 = vperm.xlu0 %5426, %v5201
  %v5428 = vpop.permute.xlu0 %5427
  %5431 = vset.pattern.permute.xlu0 6
  %5432 = vperm.xlu0 %5431, %v5202
  %v5433 = vpop.permute.xlu0 %5432
  %5436 = vset.pattern.permute.xlu0 6
  %5437 = vperm.xlu0 %5436, %v5203
  %v5438 = vpop.permute.xlu0 %5437
  %5441 = vset.pattern.permute.xlu0 6
  %5442 = vperm.xlu0 %5441, %v5204
  %v5443 = vpop.permute.xlu0 %5442
  %5446 = vset.pattern.permute.xlu0 6
  %5447 = vperm.xlu0 %5446, %v5205
  %v5448 = vpop.permute.xlu0 %5447
  %5451 = vset.pattern.permute.xlu0 6
  %5452 = vperm.xlu0 %5451, %v5206
  %v5453 = vpop.permute.xlu0 %5452
  %5456 = vset.pattern.permute.xlu0 6
  %5457 = vperm.xlu0 %5456, %v5207
  %v5458 = vpop.permute.xlu0 %5457
  %5461 = vset.pattern.permute.xlu0 6
  %5462 = vperm.xlu0 %5461, %v5208
  %v5463 = vpop.permute.xlu0 %5462
  %5466 = vset.pattern.permute.xlu0 6
  %5467 = vperm.xlu0 %5466, %v5209
  %v5468 = vpop.permute.xlu0 %5467
  %5471 = vset.pattern.permute.xlu0 6
  %5472 = vperm.xlu0 %5471, %v5210
  %v5473 = vpop.permute.xlu0 %5472
  %5476 = vset.pattern.permute.xlu0 6
  %5477 = vperm.xlu0 %5476, %v5211
  %v5478 = vpop.permute.xlu0 %5477
  %5481 = vset.pattern.permute.xlu0 6
  %5482 = vperm.xlu0 %5481, %v5212
  %v5483 = vpop.permute.xlu0 %5482
  %5486 = vset.pattern.permute.xlu0 6
  %5487 = vperm.xlu0 %5486, %v5213
  %v5488 = vpop.permute.xlu0 %5487
  %5491 = vset.pattern.permute.xlu0 6
  %5492 = vperm.xlu0 %5491, %v5214
  %v5493 = vpop.permute.xlu0 %5492
  %5496 = vset.pattern.permute.xlu0 6
  %5497 = vperm.xlu0 %5496, %v5215
  %v5498 = vpop.permute.xlu0 %5497
  %5501 = vset.pattern.permute.xlu0 6
  %5502 = vperm.xlu0 %5501, %v5216
  %v5503 = vpop.permute.xlu0 %5502
  %5506 = vset.pattern.permute.xlu0 6
  %5507 = vperm.xlu0 %5506, %v5217
  %v5508 = vpop.permute.xlu0 %5507
  %5511 = vset.pattern.permute.xlu0 6
  %5512 = vperm.xlu0 %5511, %v5218
  %v5513 = vpop.permute.xlu0 %5512
  %5516 = vset.pattern.permute.xlu0 6
  %5517 = vperm.xlu0 %5516, %v5219
  %v5518 = vpop.permute.xlu0 %5517
  %5521 = vset.pattern.permute.xlu0 6
  %5522 = vperm.xlu0 %5521, %v5220
  %v5523 = vpop.permute.xlu0 %5522
  %5526 = vset.pattern.permute.xlu0 6
  %5527 = vperm.xlu0 %5526, %v5221
  %v5528 = vpop.permute.xlu0 %5527
  %5531 = vset.pattern.permute.xlu0 6
  %5532 = vperm.xlu0 %5531, %v5222
  %v5533 = vpop.permute.xlu0 %5532
  %5536 = vset.pattern.permute.xlu0 6
  %5537 = vperm.xlu0 %5536, %v5223
  %v5538 = vpop.permute.xlu0 %5537
  %5541 = vset.pattern.permute.xlu0 6
  %5542 = vperm.xlu0 %5541, %v5224
  %v5543 = vpop.permute.xlu0 %5542
  %v5545 = vmul.f32 %v5097, %v5228
  %v5546 = vmul.f32 %v5098, %v5233
  %v5547 = vmul.f32 %v5099, %v5238
  %v5548 = vmul.f32 %v5100, %v5243
  %v5549 = vmul.f32 %v5101, %v5248
  %v5550 = vmul.f32 %v5102, %v5253
  %v5551 = vmul.f32 %v5103, %v5258
  %v5552 = vmul.f32 %v5104, %v5263
  %v5553 = vmul.f32 %v5105, %v5268
  %v5554 = vmul.f32 %v5106, %v5273
  %v5555 = vmul.f32 %v5107, %v5278
  %v5556 = vmul.f32 %v5108, %v5283
  %v5557 = vmul.f32 %v5109, %v5288
  %v5558 = vmul.f32 %v5110, %v5293
  %v5559 = vmul.f32 %v5111, %v5298
  %v5560 = vmul.f32 %v5112, %v5303
  %v5561 = vmul.f32 %v5113, %v5308
  %v5562 = vmul.f32 %v5114, %v5313
  %v5563 = vmul.f32 %v5115, %v5318
  %v5564 = vmul.f32 %v5116, %v5323
  %v5565 = vmul.f32 %v5117, %v5328
  %v5566 = vmul.f32 %v5118, %v5333
  %v5567 = vmul.f32 %v5119, %v5338
  %v5568 = vmul.f32 %v5120, %v5343
  %v5569 = vmul.f32 %v5121, %v5348
  %v5570 = vmul.f32 %v5122, %v5353
  %v5571 = vmul.f32 %v5123, %v5358
  %v5572 = vmul.f32 %v5124, %v5363
  %v5573 = vmul.f32 %v5125, %v5368
  %v5574 = vmul.f32 %v5126, %v5373
  %v5575 = vmul.f32 %v5127, %v5378
  %v5576 = vmul.f32 %v5128, %v5383
  %v5577 = vmul.f32 %v5129, %v5388
  %v5578 = vmul.f32 %v5130, %v5393
  %v5579 = vmul.f32 %v5131, %v5398
  %v5580 = vmul.f32 %v5132, %v5403
  %v5581 = vmul.f32 %v5133, %v5408
  %v5582 = vmul.f32 %v5134, %v5413
  %v5583 = vmul.f32 %v5135, %v5418
  %v5584 = vmul.f32 %v5136, %v5423
  %v5585 = vmul.f32 %v5137, %v5428
  %v5586 = vmul.f32 %v5138, %v5433
  %v5587 = vmul.f32 %v5139, %v5438
  %v5588 = vmul.f32 %v5140, %v5443
  %v5589 = vmul.f32 %v5141, %v5448
  %v5590 = vmul.f32 %v5142, %v5453
  %v5591 = vmul.f32 %v5143, %v5458
  %v5592 = vmul.f32 %v5144, %v5463
  %v5593 = vmul.f32 %v5145, %v5468
  %v5594 = vmul.f32 %v5146, %v5473
  %v5595 = vmul.f32 %v5147, %v5478
  %v5596 = vmul.f32 %v5148, %v5483
  %v5597 = vmul.f32 %v5149, %v5488
  %v5598 = vmul.f32 %v5150, %v5493
  %v5599 = vmul.f32 %v5151, %v5498
  %v5600 = vmul.f32 %v5152, %v5503
  %v5601 = vmul.f32 %v5153, %v5508
  %v5602 = vmul.f32 %v5154, %v5513
  %v5603 = vmul.f32 %v5155, %v5518
  %v5604 = vmul.f32 %v5156, %v5523
  %v5605 = vmul.f32 %v5157, %v5528
  %v5606 = vmul.f32 %v5158, %v5533
  %v5607 = vmul.f32 %v5159, %v5538
  %v5608 = vmul.f32 %v5160, %v5543
  %5609 = vst [vmem:[#allocation3 + $0x30] sm:$0xff] %v5545
  %5610 = vst [vmem:[#allocation3 + $0x78] sm:$0xff] %v5546
  %5611 = vst [vmem:[#allocation3 + $0xc0] sm:$0xff] %v5547
  %5612 = vst [vmem:[#allocation3 + $0x108] sm:$0xff] %v5548
  %5613 = vst [vmem:[#allocation3 + $0x150] sm:$0xff] %v5549
  %5614 = vst [vmem:[#allocation3 + $0x198] sm:$0xff] %v5550
  %5615 = vst [vmem:[#allocation3 + $0x1e0] sm:$0xff] %v5551
  %5616 = vst [vmem:[#allocation3 + $0x228] sm:$0xff] %v5552
  %5617 = vst [vmem:[#allocation3 + $0x270] sm:$0xff] %v5553
  %5618 = vst [vmem:[#allocation3 + $0x2b8] sm:$0xff] %v5554
  %5619 = vst [vmem:[#allocation3 + $0x300] sm:$0xff] %v5555
  %5620 = vst [vmem:[#allocation3 + $0x348] sm:$0xff] %v5556
  %5621 = vst [vmem:[#allocation3 + $0x390] sm:$0xff] %v5557
  %5622 = vst [vmem:[#allocation3 + $0x3d8] sm:$0xff] %v5558
  %5623 = vst [vmem:[#allocation3 + $0x420] sm:$0xff] %v5559
  %5624 = vst [vmem:[#allocation3 + $0x468] sm:$0xff] %v5560
  %5625 = vst [vmem:[#allocation3 + $0x4b0] sm:$0xff] %v5561
  %5626 = vst [vmem:[#allocation3 + $0x4f8] sm:$0xff] %v5562
  %5627 = vst [vmem:[#allocation3 + $0x540] sm:$0xff] %v5563
  %5628 = vst [vmem:[#allocation3 + $0x588] sm:$0xff] %v5564
  %5629 = vst [vmem:[#allocation3 + $0x5d0] sm:$0xff] %v5565
  %5630 = vst [vmem:[#allocation3 + $0x618] sm:$0xff] %v5566
  %5631 = vst [vmem:[#allocation3 + $0x660] sm:$0xff] %v5567
  %5632 = vst [vmem:[#allocation3 + $0x6a8] sm:$0xff] %v5568
  %5633 = vst [vmem:[#allocation3 + $0x6f0] sm:$0xff] %v5569
  %5634 = vst [vmem:[#allocation3 + $0x738] sm:$0xff] %v5570
  %5635 = vst [vmem:[#allocation3 + $0x780] sm:$0xff] %v5571
  %5636 = vst [vmem:[#allocation3 + $0x7c8] sm:$0xff] %v5572
  %5637 = vst [vmem:[#allocation3 + $0x810] sm:$0xff] %v5573
  %5638 = vst [vmem:[#allocation3 + $0x858] sm:$0xff] %v5574
  %5639 = vst [vmem:[#allocation3 + $0x8a0] sm:$0xff] %v5575
  %5640 = vst [vmem:[#allocation3 + $0x8e8] sm:$0xff] %v5576
  %5641 = vst [vmem:[#allocation3 + $0x930] sm:$0xff] %v5577
  %5642 = vst [vmem:[#allocation3 + $0x978] sm:$0xff] %v5578
  %5643 = vst [vmem:[#allocation3 + $0x9c0] sm:$0xff] %v5579
  %5644 = vst [vmem:[#allocation3 + $0xa08] sm:$0xff] %v5580
  %5645 = vst [vmem:[#allocation3 + $0xa50] sm:$0xff] %v5581
  %5646 = vst [vmem:[#allocation3 + $0xa98] sm:$0xff] %v5582
  %5647 = vst [vmem:[#allocation3 + $0xae0] sm:$0xff] %v5583
  %5648 = vst [vmem:[#allocation3 + $0xb28] sm:$0xff] %v5584
  %5649 = vst [vmem:[#allocation3 + $0xb70] sm:$0xff] %v5585
  %5650 = vst [vmem:[#allocation3 + $0xbb8] sm:$0xff] %v5586
  %5651 = vst [vmem:[#allocation3 + $0xc00] sm:$0xff] %v5587
  %5652 = vst [vmem:[#allocation3 + $0xc48] sm:$0xff] %v5588
  %5653 = vst [vmem:[#allocation3 + $0xc90] sm:$0xff] %v5589
  %5654 = vst [vmem:[#allocation3 + $0xcd8] sm:$0xff] %v5590
  %5655 = vst [vmem:[#allocation3 + $0xd20] sm:$0xff] %v5591
  %5656 = vst [vmem:[#allocation3 + $0xd68] sm:$0xff] %v5592
  %5657 = vst [vmem:[#allocation3 + $0xdb0] sm:$0xff] %v5593
  %5658 = vst [vmem:[#allocation3 + $0xdf8] sm:$0xff] %v5594
  %5659 = vst [vmem:[#allocation3 + $0xe40] sm:$0xff] %v5595
  %5660 = vst [vmem:[#allocation3 + $0xe88] sm:$0xff] %v5596
  %5661 = vst [vmem:[#allocation3 + $0xed0] sm:$0xff] %v5597
  %5662 = vst [vmem:[#allocation3 + $0xf18] sm:$0xff] %v5598
  %5663 = vst [vmem:[#allocation3 + $0xf60] sm:$0xff] %v5599
  %5664 = vst [vmem:[#allocation3 + $0xfa8] sm:$0xff] %v5600
  %5665 = vst [vmem:[#allocation3 + $0xff0] sm:$0xff] %v5601
  %5666 = vst [vmem:[#allocation3 + $0x1038] sm:$0xff] %v5602
  %5667 = vst [vmem:[#allocation3 + $0x1080] sm:$0xff] %v5603
  %5668 = vst [vmem:[#allocation3 + $0x10c8] sm:$0xff] %v5604
  %5669 = vst [vmem:[#allocation3 + $0x1110] sm:$0xff] %v5605
  %5670 = vst [vmem:[#allocation3 + $0x1158] sm:$0xff] %v5606
  %5671 = vst [vmem:[#allocation3 + $0x11a0] sm:$0xff] %v5607
  %5672 = vst [vmem:[#allocation3 + $0x11e8] sm:$0xff] %v5608
  %v5673 = vld [vmem:[#allocation2 + $0x28] sm:$0xff]
  %v5674 = vld [vmem:[#allocation2 + $0x30] sm:$0xff]
  %v5675 = vld [vmem:[#allocation2 + $0x38] sm:$0xff]
  %v5676 = vld [vmem:[#allocation2 + $0x40] sm:$0xff]
  %v5677 = vld [vmem:[#allocation2 + $0x48] sm:$0xff]
  %v5678 = vld [vmem:[#allocation2 + $0x50] sm:$0xff]
  %v5679 = vld [vmem:[#allocation2 + $0x58] sm:$0xff]
  %v5680 = vld [vmem:[#allocation2 + $0x60] sm:$0xff]
  %v5681 = vld [vmem:[#allocation2 + $0x68] sm:$0xff]
  %v5682 = vld [vmem:[#allocation2 + $0x70] sm:$0xff]
  %v5683 = vld [vmem:[#allocation2 + $0x78] sm:$0xff]
  %v5684 = vld [vmem:[#allocation2 + $0x80] sm:$0xff]
  %v5685 = vld [vmem:[#allocation2 + $0x88] sm:$0xff]
  %v5686 = vld [vmem:[#allocation2 + $0x90] sm:$0xff]
  %v5687 = vld [vmem:[#allocation2 + $0x98] sm:$0xff]
  %v5688 = vld [vmem:[#allocation2 + $0xa0] sm:$0xff]
  %v5689 = vld [vmem:[#allocation2 + $0xa8] sm:$0xff]
  %v5690 = vld [vmem:[#allocation2 + $0xb0] sm:$0xff]
  %v5691 = vld [vmem:[#allocation2 + $0xb8] sm:$0xff]
  %v5692 = vld [vmem:[#allocation2 + $0xc0] sm:$0xff]
  %v5693 = vld [vmem:[#allocation2 + $0xc8] sm:$0xff]
  %v5694 = vld [vmem:[#allocation2 + $0xd0] sm:$0xff]
  %v5695 = vld [vmem:[#allocation2 + $0xd8] sm:$0xff]
  %v5696 = vld [vmem:[#allocation2 + $0xe0] sm:$0xff]
  %v5697 = vld [vmem:[#allocation2 + $0xe8] sm:$0xff]
  %v5698 = vld [vmem:[#allocation2 + $0xf0] sm:$0xff]
  %v5699 = vld [vmem:[#allocation2 + $0xf8] sm:$0xff]
  %v5700 = vld [vmem:[#allocation2 + $0x100] sm:$0xff]
  %v5701 = vld [vmem:[#allocation2 + $0x108] sm:$0xff]
  %v5702 = vld [vmem:[#allocation2 + $0x110] sm:$0xff]
  %v5703 = vld [vmem:[#allocation2 + $0x118] sm:$0xff]
  %v5704 = vld [vmem:[#allocation2 + $0x120] sm:$0xff]
  %v5705 = vld [vmem:[#allocation2 + $0x128] sm:$0xff]
  %v5706 = vld [vmem:[#allocation2 + $0x130] sm:$0xff]
  %v5707 = vld [vmem:[#allocation2 + $0x138] sm:$0xff]
  %v5708 = vld [vmem:[#allocation2 + $0x140] sm:$0xff]
  %v5709 = vld [vmem:[#allocation2 + $0x148] sm:$0xff]
  %v5710 = vld [vmem:[#allocation2 + $0x150] sm:$0xff]
  %v5711 = vld [vmem:[#allocation2 + $0x158] sm:$0xff]
  %v5712 = vld [vmem:[#allocation2 + $0x160] sm:$0xff]
  %v5713 = vld [vmem:[#allocation2 + $0x168] sm:$0xff]
  %v5714 = vld [vmem:[#allocation2 + $0x170] sm:$0xff]
  %v5715 = vld [vmem:[#allocation2 + $0x178] sm:$0xff]
  %v5716 = vld [vmem:[#allocation2 + $0x180] sm:$0xff]
  %v5717 = vld [vmem:[#allocation2 + $0x188] sm:$0xff]
  %v5718 = vld [vmem:[#allocation2 + $0x190] sm:$0xff]
  %v5719 = vld [vmem:[#allocation2 + $0x198] sm:$0xff]
  %v5720 = vld [vmem:[#allocation2 + $0x1a0] sm:$0xff]
  %v5721 = vld [vmem:[#allocation2 + $0x1a8] sm:$0xff]
  %v5722 = vld [vmem:[#allocation2 + $0x1b0] sm:$0xff]
  %v5723 = vld [vmem:[#allocation2 + $0x1b8] sm:$0xff]
  %v5724 = vld [vmem:[#allocation2 + $0x1c0] sm:$0xff]
  %v5725 = vld [vmem:[#allocation2 + $0x1c8] sm:$0xff]
  %v5726 = vld [vmem:[#allocation2 + $0x1d0] sm:$0xff]
  %v5727 = vld [vmem:[#allocation2 + $0x1d8] sm:$0xff]
  %v5728 = vld [vmem:[#allocation2 + $0x1e0] sm:$0xff]
  %v5729 = vld [vmem:[#allocation2 + $0x1e8] sm:$0xff]
  %v5730 = vld [vmem:[#allocation2 + $0x1f0] sm:$0xff]
  %v5731 = vld [vmem:[#allocation2 + $0x1f8] sm:$0xff]
  %v5732 = vld [vmem:[#allocation2 + $0x200] sm:$0xff]
  %v5733 = vld [vmem:[#allocation2 + $0x208] sm:$0xff]
  %v5734 = vld [vmem:[#allocation2 + $0x210] sm:$0xff]
  %v5735 = vld [vmem:[#allocation2 + $0x218] sm:$0xff]
  %v5736 = vld [vmem:[#allocation2 + $0x220] sm:$0xff]
  %v5737 = vld [vmem:[%s1] sm:$0xff]
  %v5738 = vld [vmem:[%s1 + $0x8] sm:$0xff]
  %v5739 = vld [vmem:[%s1 + $0x10] sm:$0xff]
  %v5740 = vld [vmem:[%s1 + $0x18] sm:$0xff]
  %v5741 = vld [vmem:[%s1 + $0x20] sm:$0xff]
  %v5742 = vld [vmem:[%s1 + $0x28] sm:$0xff]
  %v5743 = vld [vmem:[%s1 + $0x30] sm:$0xff]
  %v5744 = vld [vmem:[%s1 + $0x38] sm:$0xff]
  %v5745 = vld [vmem:[%s1 + $0x40] sm:$0xff]
  %v5746 = vld [vmem:[%s1 + $0x48] sm:$0xff]
  %v5747 = vld [vmem:[%s1 + $0x50] sm:$0xff]
  %v5748 = vld [vmem:[%s1 + $0x58] sm:$0xff]
  %v5749 = vld [vmem:[%s1 + $0x60] sm:$0xff]
  %v5750 = vld [vmem:[%s1 + $0x68] sm:$0xff]
  %v5751 = vld [vmem:[%s1 + $0x70] sm:$0xff]
  %v5752 = vld [vmem:[%s1 + $0x78] sm:$0xff]
  %v5753 = vld [vmem:[%s1 + $0x80] sm:$0xff]
  %v5754 = vld [vmem:[%s1 + $0x88] sm:$0xff]
  %v5755 = vld [vmem:[%s1 + $0x90] sm:$0xff]
  %v5756 = vld [vmem:[%s1 + $0x98] sm:$0xff]
  %v5757 = vld [vmem:[%s1 + $0xa0] sm:$0xff]
  %v5758 = vld [vmem:[%s1 + $0xa8] sm:$0xff]
  %v5759 = vld [vmem:[%s1 + $0xb0] sm:$0xff]
  %v5760 = vld [vmem:[%s1 + $0xb8] sm:$0xff]
  %v5761 = vld [vmem:[%s1 + $0xc0] sm:$0xff]
  %v5762 = vld [vmem:[%s1 + $0xc8] sm:$0xff]
  %v5763 = vld [vmem:[%s1 + $0xd0] sm:$0xff]
  %v5764 = vld [vmem:[%s1 + $0xd8] sm:$0xff]
  %v5765 = vld [vmem:[%s1 + $0xe0] sm:$0xff]
  %v5766 = vld [vmem:[%s1 + $0xe8] sm:$0xff]
  %v5767 = vld [vmem:[%s1 + $0xf0] sm:$0xff]
  %v5768 = vld [vmem:[%s1 + $0xf8] sm:$0xff]
  %v5769 = vld [vmem:[%s1 + $0x100] sm:$0xff]
  %v5770 = vld [vmem:[%s1 + $0x108] sm:$0xff]
  %v5771 = vld [vmem:[%s1 + $0x110] sm:$0xff]
  %v5772 = vld [vmem:[%s1 + $0x118] sm:$0xff]
  %v5773 = vld [vmem:[%s1 + $0x120] sm:$0xff]
  %v5774 = vld [vmem:[%s1 + $0x128] sm:$0xff]
  %v5775 = vld [vmem:[%s1 + $0x130] sm:$0xff]
  %v5776 = vld [vmem:[%s1 + $0x138] sm:$0xff]
  %v5777 = vld [vmem:[%s1 + $0x140] sm:$0xff]
  %v5778 = vld [vmem:[%s1 + $0x148] sm:$0xff]
  %v5779 = vld [vmem:[%s1 + $0x150] sm:$0xff]
  %v5780 = vld [vmem:[%s1 + $0x158] sm:$0xff]
  %v5781 = vld [vmem:[%s1 + $0x160] sm:$0xff]
  %v5782 = vld [vmem:[%s1 + $0x168] sm:$0xff]
  %v5783 = vld [vmem:[%s1 + $0x170] sm:$0xff]
  %v5784 = vld [vmem:[%s1 + $0x178] sm:$0xff]
  %v5785 = vld [vmem:[%s1 + $0x180] sm:$0xff]
  %v5786 = vld [vmem:[%s1 + $0x188] sm:$0xff]
  %v5787 = vld [vmem:[%s1 + $0x190] sm:$0xff]
  %v5788 = vld [vmem:[%s1 + $0x198] sm:$0xff]
  %v5789 = vld [vmem:[%s1 + $0x1a0] sm:$0xff]
  %v5790 = vld [vmem:[%s1 + $0x1a8] sm:$0xff]
  %v5791 = vld [vmem:[%s1 + $0x1b0] sm:$0xff]
  %v5792 = vld [vmem:[%s1 + $0x1b8] sm:$0xff]
  %v5793 = vld [vmem:[%s1 + $0x1c0] sm:$0xff]
  %v5794 = vld [vmem:[%s1 + $0x1c8] sm:$0xff]
  %v5795 = vld [vmem:[%s1 + $0x1d0] sm:$0xff]
  %v5796 = vld [vmem:[%s1 + $0x1d8] sm:$0xff]
  %v5797 = vld [vmem:[%s1 + $0x1e0] sm:$0xff]
  %v5798 = vld [vmem:[%s1 + $0x1e8] sm:$0xff]
  %v5799 = vld [vmem:[%s1 + $0x1f0] sm:$0xff]
  %v5800 = vld [vmem:[%s1 + $0x1f8] sm:$0xff]
  %5802 = vset.pattern.permute.xlu0 7
  %5803 = vperm.xlu0 %5802, %v5737
  %v5804 = vpop.permute.xlu0 %5803
  %5807 = vset.pattern.permute.xlu0 7
  %5808 = vperm.xlu0 %5807, %v5738
  %v5809 = vpop.permute.xlu0 %5808
  %5812 = vset.pattern.permute.xlu0 7
  %5813 = vperm.xlu0 %5812, %v5739
  %v5814 = vpop.permute.xlu0 %5813
  %5817 = vset.pattern.permute.xlu0 7
  %5818 = vperm.xlu0 %5817, %v5740
  %v5819 = vpop.permute.xlu0 %5818
  %5822 = vset.pattern.permute.xlu0 7
  %5823 = vperm.xlu0 %5822, %v5741
  %v5824 = vpop.permute.xlu0 %5823
  %5827 = vset.pattern.permute.xlu0 7
  %5828 = vperm.xlu0 %5827, %v5742
  %v5829 = vpop.permute.xlu0 %5828
  %5832 = vset.pattern.permute.xlu0 7
  %5833 = vperm.xlu0 %5832, %v5743
  %v5834 = vpop.permute.xlu0 %5833
  %5837 = vset.pattern.permute.xlu0 7
  %5838 = vperm.xlu0 %5837, %v5744
  %v5839 = vpop.permute.xlu0 %5838
  %5842 = vset.pattern.permute.xlu0 7
  %5843 = vperm.xlu0 %5842, %v5745
  %v5844 = vpop.permute.xlu0 %5843
  %5847 = vset.pattern.permute.xlu0 7
  %5848 = vperm.xlu0 %5847, %v5746
  %v5849 = vpop.permute.xlu0 %5848
  %5852 = vset.pattern.permute.xlu0 7
  %5853 = vperm.xlu0 %5852, %v5747
  %v5854 = vpop.permute.xlu0 %5853
  %5857 = vset.pattern.permute.xlu0 7
  %5858 = vperm.xlu0 %5857, %v5748
  %v5859 = vpop.permute.xlu0 %5858
  %5862 = vset.pattern.permute.xlu0 7
  %5863 = vperm.xlu0 %5862, %v5749
  %v5864 = vpop.permute.xlu0 %5863
  %5867 = vset.pattern.permute.xlu0 7
  %5868 = vperm.xlu0 %5867, %v5750
  %v5869 = vpop.permute.xlu0 %5868
  %5872 = vset.pattern.permute.xlu0 7
  %5873 = vperm.xlu0 %5872, %v5751
  %v5874 = vpop.permute.xlu0 %5873
  %5877 = vset.pattern.permute.xlu0 7
  %5878 = vperm.xlu0 %5877, %v5752
  %v5879 = vpop.permute.xlu0 %5878
  %5882 = vset.pattern.permute.xlu0 7
  %5883 = vperm.xlu0 %5882, %v5753
  %v5884 = vpop.permute.xlu0 %5883
  %5887 = vset.pattern.permute.xlu0 7
  %5888 = vperm.xlu0 %5887, %v5754
  %v5889 = vpop.permute.xlu0 %5888
  %5892 = vset.pattern.permute.xlu0 7
  %5893 = vperm.xlu0 %5892, %v5755
  %v5894 = vpop.permute.xlu0 %5893
  %5897 = vset.pattern.permute.xlu0 7
  %5898 = vperm.xlu0 %5897, %v5756
  %v5899 = vpop.permute.xlu0 %5898
  %5902 = vset.pattern.permute.xlu0 7
  %5903 = vperm.xlu0 %5902, %v5757
  %v5904 = vpop.permute.xlu0 %5903
  %5907 = vset.pattern.permute.xlu0 7
  %5908 = vperm.xlu0 %5907, %v5758
  %v5909 = vpop.permute.xlu0 %5908
  %5912 = vset.pattern.permute.xlu0 7
  %5913 = vperm.xlu0 %5912, %v5759
  %v5914 = vpop.permute.xlu0 %5913
  %5917 = vset.pattern.permute.xlu0 7
  %5918 = vperm.xlu0 %5917, %v5760
  %v5919 = vpop.permute.xlu0 %5918
  %5922 = vset.pattern.permute.xlu0 7
  %5923 = vperm.xlu0 %5922, %v5761
  %v5924 = vpop.permute.xlu0 %5923
  %5927 = vset.pattern.permute.xlu0 7
  %5928 = vperm.xlu0 %5927, %v5762
  %v5929 = vpop.permute.xlu0 %5928
  %5932 = vset.pattern.permute.xlu0 7
  %5933 = vperm.xlu0 %5932, %v5763
  %v5934 = vpop.permute.xlu0 %5933
  %5937 = vset.pattern.permute.xlu0 7
  %5938 = vperm.xlu0 %5937, %v5764
  %v5939 = vpop.permute.xlu0 %5938
  %5942 = vset.pattern.permute.xlu0 7
  %5943 = vperm.xlu0 %5942, %v5765
  %v5944 = vpop.permute.xlu0 %5943
  %5947 = vset.pattern.permute.xlu0 7
  %5948 = vperm.xlu0 %5947, %v5766
  %v5949 = vpop.permute.xlu0 %5948
  %5952 = vset.pattern.permute.xlu0 7
  %5953 = vperm.xlu0 %5952, %v5767
  %v5954 = vpop.permute.xlu0 %5953
  %5957 = vset.pattern.permute.xlu0 7
  %5958 = vperm.xlu0 %5957, %v5768
  %v5959 = vpop.permute.xlu0 %5958
  %5962 = vset.pattern.permute.xlu0 7
  %5963 = vperm.xlu0 %5962, %v5769
  %v5964 = vpop.permute.xlu0 %5963
  %5967 = vset.pattern.permute.xlu0 7
  %5968 = vperm.xlu0 %5967, %v5770
  %v5969 = vpop.permute.xlu0 %5968
  %5972 = vset.pattern.permute.xlu0 7
  %5973 = vperm.xlu0 %5972, %v5771
  %v5974 = vpop.permute.xlu0 %5973
  %5977 = vset.pattern.permute.xlu0 7
  %5978 = vperm.xlu0 %5977, %v5772
  %v5979 = vpop.permute.xlu0 %5978
  %5982 = vset.pattern.permute.xlu0 7
  %5983 = vperm.xlu0 %5982, %v5773
  %v5984 = vpop.permute.xlu0 %5983
  %5987 = vset.pattern.permute.xlu0 7
  %5988 = vperm.xlu0 %5987, %v5774
  %v5989 = vpop.permute.xlu0 %5988
  %5992 = vset.pattern.permute.xlu0 7
  %5993 = vperm.xlu0 %5992, %v5775
  %v5994 = vpop.permute.xlu0 %5993
  %5997 = vset.pattern.permute.xlu0 7
  %5998 = vperm.xlu0 %5997, %v5776
  %v5999 = vpop.permute.xlu0 %5998
  %6002 = vset.pattern.permute.xlu0 7
  %6003 = vperm.xlu0 %6002, %v5777
  %v6004 = vpop.permute.xlu0 %6003
  %6007 = vset.pattern.permute.xlu0 7
  %6008 = vperm.xlu0 %6007, %v5778
  %v6009 = vpop.permute.xlu0 %6008
  %6012 = vset.pattern.permute.xlu0 7
  %6013 = vperm.xlu0 %6012, %v5779
  %v6014 = vpop.permute.xlu0 %6013
  %6017 = vset.pattern.permute.xlu0 7
  %6018 = vperm.xlu0 %6017, %v5780
  %v6019 = vpop.permute.xlu0 %6018
  %6022 = vset.pattern.permute.xlu0 7
  %6023 = vperm.xlu0 %6022, %v5781
  %v6024 = vpop.permute.xlu0 %6023
  %6027 = vset.pattern.permute.xlu0 7
  %6028 = vperm.xlu0 %6027, %v5782
  %v6029 = vpop.permute.xlu0 %6028
  %6032 = vset.pattern.permute.xlu0 7
  %6033 = vperm.xlu0 %6032, %v5783
  %v6034 = vpop.permute.xlu0 %6033
  %6037 = vset.pattern.permute.xlu0 7
  %6038 = vperm.xlu0 %6037, %v5784
  %v6039 = vpop.permute.xlu0 %6038
  %6042 = vset.pattern.permute.xlu0 7
  %6043 = vperm.xlu0 %6042, %v5785
  %v6044 = vpop.permute.xlu0 %6043
  %6047 = vset.pattern.permute.xlu0 7
  %6048 = vperm.xlu0 %6047, %v5786
  %v6049 = vpop.permute.xlu0 %6048
  %6052 = vset.pattern.permute.xlu0 7
  %6053 = vperm.xlu0 %6052, %v5787
  %v6054 = vpop.permute.xlu0 %6053
  %6057 = vset.pattern.permute.xlu0 7
  %6058 = vperm.xlu0 %6057, %v5788
  %v6059 = vpop.permute.xlu0 %6058
  %6062 = vset.pattern.permute.xlu0 7
  %6063 = vperm.xlu0 %6062, %v5789
  %v6064 = vpop.permute.xlu0 %6063
  %6067 = vset.pattern.permute.xlu0 7
  %6068 = vperm.xlu0 %6067, %v5790
  %v6069 = vpop.permute.xlu0 %6068
  %6072 = vset.pattern.permute.xlu0 7
  %6073 = vperm.xlu0 %6072, %v5791
  %v6074 = vpop.permute.xlu0 %6073
  %6077 = vset.pattern.permute.xlu0 7
  %6078 = vperm.xlu0 %6077, %v5792
  %v6079 = vpop.permute.xlu0 %6078
  %6082 = vset.pattern.permute.xlu0 7
  %6083 = vperm.xlu0 %6082, %v5793
  %v6084 = vpop.permute.xlu0 %6083
  %6087 = vset.pattern.permute.xlu0 7
  %6088 = vperm.xlu0 %6087, %v5794
  %v6089 = vpop.permute.xlu0 %6088
  %6092 = vset.pattern.permute.xlu0 7
  %6093 = vperm.xlu0 %6092, %v5795
  %v6094 = vpop.permute.xlu0 %6093
  %6097 = vset.pattern.permute.xlu0 7
  %6098 = vperm.xlu0 %6097, %v5796
  %v6099 = vpop.permute.xlu0 %6098
  %6102 = vset.pattern.permute.xlu0 7
  %6103 = vperm.xlu0 %6102, %v5797
  %v6104 = vpop.permute.xlu0 %6103
  %6107 = vset.pattern.permute.xlu0 7
  %6108 = vperm.xlu0 %6107, %v5798
  %v6109 = vpop.permute.xlu0 %6108
  %6112 = vset.pattern.permute.xlu0 7
  %6113 = vperm.xlu0 %6112, %v5799
  %v6114 = vpop.permute.xlu0 %6113
  %6117 = vset.pattern.permute.xlu0 7
  %6118 = vperm.xlu0 %6117, %v5800
  %v6119 = vpop.permute.xlu0 %6118
  %v6121 = vmul.f32 %v5673, %v5804
  %v6122 = vmul.f32 %v5674, %v5809
  %v6123 = vmul.f32 %v5675, %v5814
  %v6124 = vmul.f32 %v5676, %v5819
  %v6125 = vmul.f32 %v5677, %v5824
  %v6126 = vmul.f32 %v5678, %v5829
  %v6127 = vmul.f32 %v5679, %v5834
  %v6128 = vmul.f32 %v5680, %v5839
  %v6129 = vmul.f32 %v5681, %v5844
  %v6130 = vmul.f32 %v5682, %v5849
  %v6131 = vmul.f32 %v5683, %v5854
  %v6132 = vmul.f32 %v5684, %v5859
  %v6133 = vmul.f32 %v5685, %v5864
  %v6134 = vmul.f32 %v5686, %v5869
  %v6135 = vmul.f32 %v5687, %v5874
  %v6136 = vmul.f32 %v5688, %v5879
  %v6137 = vmul.f32 %v5689, %v5884
  %v6138 = vmul.f32 %v5690, %v5889
  %v6139 = vmul.f32 %v5691, %v5894
  %v6140 = vmul.f32 %v5692, %v5899
  %v6141 = vmul.f32 %v5693, %v5904
  %v6142 = vmul.f32 %v5694, %v5909
  %v6143 = vmul.f32 %v5695, %v5914
  %v6144 = vmul.f32 %v5696, %v5919
  %v6145 = vmul.f32 %v5697, %v5924
  %v6146 = vmul.f32 %v5698, %v5929
  %v6147 = vmul.f32 %v5699, %v5934
  %v6148 = vmul.f32 %v5700, %v5939
  %v6149 = vmul.f32 %v5701, %v5944
  %v6150 = vmul.f32 %v5702, %v5949
  %v6151 = vmul.f32 %v5703, %v5954
  %v6152 = vmul.f32 %v5704, %v5959
  %v6153 = vmul.f32 %v5705, %v5964
  %v6154 = vmul.f32 %v5706, %v5969
  %v6155 = vmul.f32 %v5707, %v5974
  %v6156 = vmul.f32 %v5708, %v5979
  %v6157 = vmul.f32 %v5709, %v5984
  %v6158 = vmul.f32 %v5710, %v5989
  %v6159 = vmul.f32 %v5711, %v5994
  %v6160 = vmul.f32 %v5712, %v5999
  %v6161 = vmul.f32 %v5713, %v6004
  %v6162 = vmul.f32 %v5714, %v6009
  %v6163 = vmul.f32 %v5715, %v6014
  %v6164 = vmul.f32 %v5716, %v6019
  %v6165 = vmul.f32 %v5717, %v6024
  %v6166 = vmul.f32 %v5718, %v6029
  %v6167 = vmul.f32 %v5719, %v6034
  %v6168 = vmul.f32 %v5720, %v6039
  %v6169 = vmul.f32 %v5721, %v6044
  %v6170 = vmul.f32 %v5722, %v6049
  %v6171 = vmul.f32 %v5723, %v6054
  %v6172 = vmul.f32 %v5724, %v6059
  %v6173 = vmul.f32 %v5725, %v6064
  %v6174 = vmul.f32 %v5726, %v6069
  %v6175 = vmul.f32 %v5727, %v6074
  %v6176 = vmul.f32 %v5728, %v6079
  %v6177 = vmul.f32 %v5729, %v6084
  %v6178 = vmul.f32 %v5730, %v6089
  %v6179 = vmul.f32 %v5731, %v6094
  %v6180 = vmul.f32 %v5732, %v6099
  %v6181 = vmul.f32 %v5733, %v6104
  %v6182 = vmul.f32 %v5734, %v6109
  %v6183 = vmul.f32 %v5735, %v6114
  %v6184 = vmul.f32 %v5736, %v6119
  %6185 = vst [vmem:[#allocation3 + $0x38] sm:$0xff] %v6121
  %6186 = vst [vmem:[#allocation3 + $0x80] sm:$0xff] %v6122
  %6187 = vst [vmem:[#allocation3 + $0xc8] sm:$0xff] %v6123
  %6188 = vst [vmem:[#allocation3 + $0x110] sm:$0xff] %v6124
  %6189 = vst [vmem:[#allocation3 + $0x158] sm:$0xff] %v6125
  %6190 = vst [vmem:[#allocation3 + $0x1a0] sm:$0xff] %v6126
  %6191 = vst [vmem:[#allocation3 + $0x1e8] sm:$0xff] %v6127
  %6192 = vst [vmem:[#allocation3 + $0x230] sm:$0xff] %v6128
  %6193 = vst [vmem:[#allocation3 + $0x278] sm:$0xff] %v6129
  %6194 = vst [vmem:[#allocation3 + $0x2c0] sm:$0xff] %v6130
  %6195 = vst [vmem:[#allocation3 + $0x308] sm:$0xff] %v6131
  %6196 = vst [vmem:[#allocation3 + $0x350] sm:$0xff] %v6132
  %6197 = vst [vmem:[#allocation3 + $0x398] sm:$0xff] %v6133
  %6198 = vst [vmem:[#allocation3 + $0x3e0] sm:$0xff] %v6134
  %6199 = vst [vmem:[#allocation3 + $0x428] sm:$0xff] %v6135
  %6200 = vst [vmem:[#allocation3 + $0x470] sm:$0xff] %v6136
  %6201 = vst [vmem:[#allocation3 + $0x4b8] sm:$0xff] %v6137
  %6202 = vst [vmem:[#allocation3 + $0x500] sm:$0xff] %v6138
  %6203 = vst [vmem:[#allocation3 + $0x548] sm:$0xff] %v6139
  %6204 = vst [vmem:[#allocation3 + $0x590] sm:$0xff] %v6140
  %6205 = vst [vmem:[#allocation3 + $0x5d8] sm:$0xff] %v6141
  %6206 = vst [vmem:[#allocation3 + $0x620] sm:$0xff] %v6142
  %6207 = vst [vmem:[#allocation3 + $0x668] sm:$0xff] %v6143
  %6208 = vst [vmem:[#allocation3 + $0x6b0] sm:$0xff] %v6144
  %6209 = vst [vmem:[#allocation3 + $0x6f8] sm:$0xff] %v6145
  %6210 = vst [vmem:[#allocation3 + $0x740] sm:$0xff] %v6146
  %6211 = vst [vmem:[#allocation3 + $0x788] sm:$0xff] %v6147
  %6212 = vst [vmem:[#allocation3 + $0x7d0] sm:$0xff] %v6148
  %6213 = vst [vmem:[#allocation3 + $0x818] sm:$0xff] %v6149
  %6214 = vst [vmem:[#allocation3 + $0x860] sm:$0xff] %v6150
  %6215 = vst [vmem:[#allocation3 + $0x8a8] sm:$0xff] %v6151
  %6216 = vst [vmem:[#allocation3 + $0x8f0] sm:$0xff] %v6152
  %6217 = vst [vmem:[#allocation3 + $0x938] sm:$0xff] %v6153
  %6218 = vst [vmem:[#allocation3 + $0x980] sm:$0xff] %v6154
  %6219 = vst [vmem:[#allocation3 + $0x9c8] sm:$0xff] %v6155
  %6220 = vst [vmem:[#allocation3 + $0xa10] sm:$0xff] %v6156
  %6221 = vst [vmem:[#allocation3 + $0xa58] sm:$0xff] %v6157
  %6222 = vst [vmem:[#allocation3 + $0xaa0] sm:$0xff] %v6158
  %6223 = vst [vmem:[#allocation3 + $0xae8] sm:$0xff] %v6159
  %6224 = vst [vmem:[#allocation3 + $0xb30] sm:$0xff] %v6160
  %6225 = vst [vmem:[#allocation3 + $0xb78] sm:$0xff] %v6161
  %6226 = vst [vmem:[#allocation3 + $0xbc0] sm:$0xff] %v6162
  %6227 = vst [vmem:[#allocation3 + $0xc08] sm:$0xff] %v6163
  %6228 = vst [vmem:[#allocation3 + $0xc50] sm:$0xff] %v6164
  %6229 = vst [vmem:[#allocation3 + $0xc98] sm:$0xff] %v6165
  %6230 = vst [vmem:[#allocation3 + $0xce0] sm:$0xff] %v6166
  %6231 = vst [vmem:[#allocation3 + $0xd28] sm:$0xff] %v6167
  %6232 = vst [vmem:[#allocation3 + $0xd70] sm:$0xff] %v6168
  %6233 = vst [vmem:[#allocation3 + $0xdb8] sm:$0xff] %v6169
  %6234 = vst [vmem:[#allocation3 + $0xe00] sm:$0xff] %v6170
  %6235 = vst [vmem:[#allocation3 + $0xe48] sm:$0xff] %v6171
  %6236 = vst [vmem:[#allocation3 + $0xe90] sm:$0xff] %v6172
  %6237 = vst [vmem:[#allocation3 + $0xed8] sm:$0xff] %v6173
  %6238 = vst [vmem:[#allocation3 + $0xf20] sm:$0xff] %v6174
  %6239 = vst [vmem:[#allocation3 + $0xf68] sm:$0xff] %v6175
  %6240 = vst [vmem:[#allocation3 + $0xfb0] sm:$0xff] %v6176
  %6241 = vst [vmem:[#allocation3 + $0xff8] sm:$0xff] %v6177
  %6242 = vst [vmem:[#allocation3 + $0x1040] sm:$0xff] %v6178
  %6243 = vst [vmem:[#allocation3 + $0x1088] sm:$0xff] %v6179
  %6244 = vst [vmem:[#allocation3 + $0x10d0] sm:$0xff] %v6180
  %6245 = vst [vmem:[#allocation3 + $0x1118] sm:$0xff] %v6181
  %6246 = vst [vmem:[#allocation3 + $0x1160] sm:$0xff] %v6182
  %6247 = vst [vmem:[#allocation3 + $0x11a8] sm:$0xff] %v6183
  %6248 = vst [vmem:[#allocation3 + $0x11f0] sm:$0xff] %v6184
  %v6249 = vld [vmem:[#allocation2 + $0x29] sm:$0xff]
  %v6250 = vld [vmem:[#allocation2 + $0x31] sm:$0xff]
  %v6251 = vld [vmem:[#allocation2 + $0x39] sm:$0xff]
  %v6252 = vld [vmem:[#allocation2 + $0x41] sm:$0xff]
  %v6253 = vld [vmem:[#allocation2 + $0x49] sm:$0xff]
  %v6254 = vld [vmem:[#allocation2 + $0x51] sm:$0xff]
  %v6255 = vld [vmem:[#allocation2 + $0x59] sm:$0xff]
  %v6256 = vld [vmem:[#allocation2 + $0x61] sm:$0xff]
  %v6257 = vld [vmem:[#allocation2 + $0x69] sm:$0xff]
  %v6258 = vld [vmem:[#allocation2 + $0x71] sm:$0xff]
  %v6259 = vld [vmem:[#allocation2 + $0x79] sm:$0xff]
  %v6260 = vld [vmem:[#allocation2 + $0x81] sm:$0xff]
  %v6261 = vld [vmem:[#allocation2 + $0x89] sm:$0xff]
  %v6262 = vld [vmem:[#allocation2 + $0x91] sm:$0xff]
  %v6263 = vld [vmem:[#allocation2 + $0x99] sm:$0xff]
  %v6264 = vld [vmem:[#allocation2 + $0xa1] sm:$0xff]
  %v6265 = vld [vmem:[#allocation2 + $0xa9] sm:$0xff]
  %v6266 = vld [vmem:[#allocation2 + $0xb1] sm:$0xff]
  %v6267 = vld [vmem:[#allocation2 + $0xb9] sm:$0xff]
  %v6268 = vld [vmem:[#allocation2 + $0xc1] sm:$0xff]
  %v6269 = vld [vmem:[#allocation2 + $0xc9] sm:$0xff]
  %v6270 = vld [vmem:[#allocation2 + $0xd1] sm:$0xff]
  %v6271 = vld [vmem:[#allocation2 + $0xd9] sm:$0xff]
  %v6272 = vld [vmem:[#allocation2 + $0xe1] sm:$0xff]
  %v6273 = vld [vmem:[#allocation2 + $0xe9] sm:$0xff]
  %v6274 = vld [vmem:[#allocation2 + $0xf1] sm:$0xff]
  %v6275 = vld [vmem:[#allocation2 + $0xf9] sm:$0xff]
  %v6276 = vld [vmem:[#allocation2 + $0x101] sm:$0xff]
  %v6277 = vld [vmem:[#allocation2 + $0x109] sm:$0xff]
  %v6278 = vld [vmem:[#allocation2 + $0x111] sm:$0xff]
  %v6279 = vld [vmem:[#allocation2 + $0x119] sm:$0xff]
  %v6280 = vld [vmem:[#allocation2 + $0x121] sm:$0xff]
  %v6281 = vld [vmem:[#allocation2 + $0x129] sm:$0xff]
  %v6282 = vld [vmem:[#allocation2 + $0x131] sm:$0xff]
  %v6283 = vld [vmem:[#allocation2 + $0x139] sm:$0xff]
  %v6284 = vld [vmem:[#allocation2 + $0x141] sm:$0xff]
  %v6285 = vld [vmem:[#allocation2 + $0x149] sm:$0xff]
  %v6286 = vld [vmem:[#allocation2 + $0x151] sm:$0xff]
  %v6287 = vld [vmem:[#allocation2 + $0x159] sm:$0xff]
  %v6288 = vld [vmem:[#allocation2 + $0x161] sm:$0xff]
  %v6289 = vld [vmem:[#allocation2 + $0x169] sm:$0xff]
  %v6290 = vld [vmem:[#allocation2 + $0x171] sm:$0xff]
  %v6291 = vld [vmem:[#allocation2 + $0x179] sm:$0xff]
  %v6292 = vld [vmem:[#allocation2 + $0x181] sm:$0xff]
  %v6293 = vld [vmem:[#allocation2 + $0x189] sm:$0xff]
  %v6294 = vld [vmem:[#allocation2 + $0x191] sm:$0xff]
  %v6295 = vld [vmem:[#allocation2 + $0x199] sm:$0xff]
  %v6296 = vld [vmem:[#allocation2 + $0x1a1] sm:$0xff]
  %v6297 = vld [vmem:[#allocation2 + $0x1a9] sm:$0xff]
  %v6298 = vld [vmem:[#allocation2 + $0x1b1] sm:$0xff]
  %v6299 = vld [vmem:[#allocation2 + $0x1b9] sm:$0xff]
  %v6300 = vld [vmem:[#allocation2 + $0x1c1] sm:$0xff]
  %v6301 = vld [vmem:[#allocation2 + $0x1c9] sm:$0xff]
  %v6302 = vld [vmem:[#allocation2 + $0x1d1] sm:$0xff]
  %v6303 = vld [vmem:[#allocation2 + $0x1d9] sm:$0xff]
  %v6304 = vld [vmem:[#allocation2 + $0x1e1] sm:$0xff]
  %v6305 = vld [vmem:[#allocation2 + $0x1e9] sm:$0xff]
  %v6306 = vld [vmem:[#allocation2 + $0x1f1] sm:$0xff]
  %v6307 = vld [vmem:[#allocation2 + $0x1f9] sm:$0xff]
  %v6308 = vld [vmem:[#allocation2 + $0x201] sm:$0xff]
  %v6309 = vld [vmem:[#allocation2 + $0x209] sm:$0xff]
  %v6310 = vld [vmem:[#allocation2 + $0x211] sm:$0xff]
  %v6311 = vld [vmem:[#allocation2 + $0x219] sm:$0xff]
  %v6312 = vld [vmem:[#allocation2 + $0x221] sm:$0xff]
  %v6313 = vld [vmem:[%s1] sm:$0xff]
  %v6314 = vld [vmem:[%s1 + $0x8] sm:$0xff]
  %v6315 = vld [vmem:[%s1 + $0x10] sm:$0xff]
  %v6316 = vld [vmem:[%s1 + $0x18] sm:$0xff]
  %v6317 = vld [vmem:[%s1 + $0x20] sm:$0xff]
  %v6318 = vld [vmem:[%s1 + $0x28] sm:$0xff]
  %v6319 = vld [vmem:[%s1 + $0x30] sm:$0xff]
  %v6320 = vld [vmem:[%s1 + $0x38] sm:$0xff]
  %v6321 = vld [vmem:[%s1 + $0x40] sm:$0xff]
  %v6322 = vld [vmem:[%s1 + $0x48] sm:$0xff]
  %v6323 = vld [vmem:[%s1 + $0x50] sm:$0xff]
  %v6324 = vld [vmem:[%s1 + $0x58] sm:$0xff]
  %v6325 = vld [vmem:[%s1 + $0x60] sm:$0xff]
  %v6326 = vld [vmem:[%s1 + $0x68] sm:$0xff]
  %v6327 = vld [vmem:[%s1 + $0x70] sm:$0xff]
  %v6328 = vld [vmem:[%s1 + $0x78] sm:$0xff]
  %v6329 = vld [vmem:[%s1 + $0x80] sm:$0xff]
  %v6330 = vld [vmem:[%s1 + $0x88] sm:$0xff]
  %v6331 = vld [vmem:[%s1 + $0x90] sm:$0xff]
  %v6332 = vld [vmem:[%s1 + $0x98] sm:$0xff]
  %v6333 = vld [vmem:[%s1 + $0xa0] sm:$0xff]
  %v6334 = vld [vmem:[%s1 + $0xa8] sm:$0xff]
  %v6335 = vld [vmem:[%s1 + $0xb0] sm:$0xff]
  %v6336 = vld [vmem:[%s1 + $0xb8] sm:$0xff]
  %v6337 = vld [vmem:[%s1 + $0xc0] sm:$0xff]
  %v6338 = vld [vmem:[%s1 + $0xc8] sm:$0xff]
  %v6339 = vld [vmem:[%s1 + $0xd0] sm:$0xff]
  %v6340 = vld [vmem:[%s1 + $0xd8] sm:$0xff]
  %v6341 = vld [vmem:[%s1 + $0xe0] sm:$0xff]
  %v6342 = vld [vmem:[%s1 + $0xe8] sm:$0xff]
  %v6343 = vld [vmem:[%s1 + $0xf0] sm:$0xff]
  %v6344 = vld [vmem:[%s1 + $0xf8] sm:$0xff]
  %v6345 = vld [vmem:[%s1 + $0x100] sm:$0xff]
  %v6346 = vld [vmem:[%s1 + $0x108] sm:$0xff]
  %v6347 = vld [vmem:[%s1 + $0x110] sm:$0xff]
  %v6348 = vld [vmem:[%s1 + $0x118] sm:$0xff]
  %v6349 = vld [vmem:[%s1 + $0x120] sm:$0xff]
  %v6350 = vld [vmem:[%s1 + $0x128] sm:$0xff]
  %v6351 = vld [vmem:[%s1 + $0x130] sm:$0xff]
  %v6352 = vld [vmem:[%s1 + $0x138] sm:$0xff]
  %v6353 = vld [vmem:[%s1 + $0x140] sm:$0xff]
  %v6354 = vld [vmem:[%s1 + $0x148] sm:$0xff]
  %v6355 = vld [vmem:[%s1 + $0x150] sm:$0xff]
  %v6356 = vld [vmem:[%s1 + $0x158] sm:$0xff]
  %v6357 = vld [vmem:[%s1 + $0x160] sm:$0xff]
  %v6358 = vld [vmem:[%s1 + $0x168] sm:$0xff]
  %v6359 = vld [vmem:[%s1 + $0x170] sm:$0xff]
  %v6360 = vld [vmem:[%s1 + $0x178] sm:$0xff]
  %v6361 = vld [vmem:[%s1 + $0x180] sm:$0xff]
  %v6362 = vld [vmem:[%s1 + $0x188] sm:$0xff]
  %v6363 = vld [vmem:[%s1 + $0x190] sm:$0xff]
  %v6364 = vld [vmem:[%s1 + $0x198] sm:$0xff]
  %v6365 = vld [vmem:[%s1 + $0x1a0] sm:$0xff]
  %v6366 = vld [vmem:[%s1 + $0x1a8] sm:$0xff]
  %v6367 = vld [vmem:[%s1 + $0x1b0] sm:$0xff]
  %v6368 = vld [vmem:[%s1 + $0x1b8] sm:$0xff]
  %v6369 = vld [vmem:[%s1 + $0x1c0] sm:$0xff]
  %v6370 = vld [vmem:[%s1 + $0x1c8] sm:$0xff]
  %v6371 = vld [vmem:[%s1 + $0x1d0] sm:$0xff]
  %v6372 = vld [vmem:[%s1 + $0x1d8] sm:$0xff]
  %v6373 = vld [vmem:[%s1 + $0x1e0] sm:$0xff]
  %v6374 = vld [vmem:[%s1 + $0x1e8] sm:$0xff]
  %v6375 = vld [vmem:[%s1 + $0x1f0] sm:$0xff]
  %v6376 = vld [vmem:[%s1 + $0x1f8] sm:$0xff]
  %6378 = vset.pattern.permute.xlu0 8
  %6379 = vperm.xlu0 %6378, %v6313
  %v6380 = vpop.permute.xlu0 %6379
  %6383 = vset.pattern.permute.xlu0 8
  %6384 = vperm.xlu0 %6383, %v6314
  %v6385 = vpop.permute.xlu0 %6384
  %6388 = vset.pattern.permute.xlu0 8
  %6389 = vperm.xlu0 %6388, %v6315
  %v6390 = vpop.permute.xlu0 %6389
  %6393 = vset.pattern.permute.xlu0 8
  %6394 = vperm.xlu0 %6393, %v6316
  %v6395 = vpop.permute.xlu0 %6394
  %6398 = vset.pattern.permute.xlu0 8
  %6399 = vperm.xlu0 %6398, %v6317
  %v6400 = vpop.permute.xlu0 %6399
  %6403 = vset.pattern.permute.xlu0 8
  %6404 = vperm.xlu0 %6403, %v6318
  %v6405 = vpop.permute.xlu0 %6404
  %6408 = vset.pattern.permute.xlu0 8
  %6409 = vperm.xlu0 %6408, %v6319
  %v6410 = vpop.permute.xlu0 %6409
  %6413 = vset.pattern.permute.xlu0 8
  %6414 = vperm.xlu0 %6413, %v6320
  %v6415 = vpop.permute.xlu0 %6414
  %6418 = vset.pattern.permute.xlu0 8
  %6419 = vperm.xlu0 %6418, %v6321
  %v6420 = vpop.permute.xlu0 %6419
  %6423 = vset.pattern.permute.xlu0 8
  %6424 = vperm.xlu0 %6423, %v6322
  %v6425 = vpop.permute.xlu0 %6424
  %6428 = vset.pattern.permute.xlu0 8
  %6429 = vperm.xlu0 %6428, %v6323
  %v6430 = vpop.permute.xlu0 %6429
  %6433 = vset.pattern.permute.xlu0 8
  %6434 = vperm.xlu0 %6433, %v6324
  %v6435 = vpop.permute.xlu0 %6434
  %6438 = vset.pattern.permute.xlu0 8
  %6439 = vperm.xlu0 %6438, %v6325
  %v6440 = vpop.permute.xlu0 %6439
  %6443 = vset.pattern.permute.xlu0 8
  %6444 = vperm.xlu0 %6443, %v6326
  %v6445 = vpop.permute.xlu0 %6444
  %6448 = vset.pattern.permute.xlu0 8
  %6449 = vperm.xlu0 %6448, %v6327
  %v6450 = vpop.permute.xlu0 %6449
  %6453 = vset.pattern.permute.xlu0 8
  %6454 = vperm.xlu0 %6453, %v6328
  %v6455 = vpop.permute.xlu0 %6454
  %6458 = vset.pattern.permute.xlu0 8
  %6459 = vperm.xlu0 %6458, %v6329
  %v6460 = vpop.permute.xlu0 %6459
  %6463 = vset.pattern.permute.xlu0 8
  %6464 = vperm.xlu0 %6463, %v6330
  %v6465 = vpop.permute.xlu0 %6464
  %6468 = vset.pattern.permute.xlu0 8
  %6469 = vperm.xlu0 %6468, %v6331
  %v6470 = vpop.permute.xlu0 %6469
  %6473 = vset.pattern.permute.xlu0 8
  %6474 = vperm.xlu0 %6473, %v6332
  %v6475 = vpop.permute.xlu0 %6474
  %6478 = vset.pattern.permute.xlu0 8
  %6479 = vperm.xlu0 %6478, %v6333
  %v6480 = vpop.permute.xlu0 %6479
  %6483 = vset.pattern.permute.xlu0 8
  %6484 = vperm.xlu0 %6483, %v6334
  %v6485 = vpop.permute.xlu0 %6484
  %6488 = vset.pattern.permute.xlu0 8
  %6489 = vperm.xlu0 %6488, %v6335
  %v6490 = vpop.permute.xlu0 %6489
  %6493 = vset.pattern.permute.xlu0 8
  %6494 = vperm.xlu0 %6493, %v6336
  %v6495 = vpop.permute.xlu0 %6494
  %6498 = vset.pattern.permute.xlu0 8
  %6499 = vperm.xlu0 %6498, %v6337
  %v6500 = vpop.permute.xlu0 %6499
  %6503 = vset.pattern.permute.xlu0 8
  %6504 = vperm.xlu0 %6503, %v6338
  %v6505 = vpop.permute.xlu0 %6504
  %6508 = vset.pattern.permute.xlu0 8
  %6509 = vperm.xlu0 %6508, %v6339
  %v6510 = vpop.permute.xlu0 %6509
  %6513 = vset.pattern.permute.xlu0 8
  %6514 = vperm.xlu0 %6513, %v6340
  %v6515 = vpop.permute.xlu0 %6514
  %6518 = vset.pattern.permute.xlu0 8
  %6519 = vperm.xlu0 %6518, %v6341
  %v6520 = vpop.permute.xlu0 %6519
  %6523 = vset.pattern.permute.xlu0 8
  %6524 = vperm.xlu0 %6523, %v6342
  %v6525 = vpop.permute.xlu0 %6524
  %6528 = vset.pattern.permute.xlu0 8
  %6529 = vperm.xlu0 %6528, %v6343
  %v6530 = vpop.permute.xlu0 %6529
  %6533 = vset.pattern.permute.xlu0 8
  %6534 = vperm.xlu0 %6533, %v6344
  %v6535 = vpop.permute.xlu0 %6534
  %6538 = vset.pattern.permute.xlu0 8
  %6539 = vperm.xlu0 %6538, %v6345
  %v6540 = vpop.permute.xlu0 %6539
  %6543 = vset.pattern.permute.xlu0 8
  %6544 = vperm.xlu0 %6543, %v6346
  %v6545 = vpop.permute.xlu0 %6544
  %6548 = vset.pattern.permute.xlu0 8
  %6549 = vperm.xlu0 %6548, %v6347
  %v6550 = vpop.permute.xlu0 %6549
  %6553 = vset.pattern.permute.xlu0 8
  %6554 = vperm.xlu0 %6553, %v6348
  %v6555 = vpop.permute.xlu0 %6554
  %6558 = vset.pattern.permute.xlu0 8
  %6559 = vperm.xlu0 %6558, %v6349
  %v6560 = vpop.permute.xlu0 %6559
  %6563 = vset.pattern.permute.xlu0 8
  %6564 = vperm.xlu0 %6563, %v6350
  %v6565 = vpop.permute.xlu0 %6564
  %6568 = vset.pattern.permute.xlu0 8
  %6569 = vperm.xlu0 %6568, %v6351
  %v6570 = vpop.permute.xlu0 %6569
  %6573 = vset.pattern.permute.xlu0 8
  %6574 = vperm.xlu0 %6573, %v6352
  %v6575 = vpop.permute.xlu0 %6574
  %6578 = vset.pattern.permute.xlu0 8
  %6579 = vperm.xlu0 %6578, %v6353
  %v6580 = vpop.permute.xlu0 %6579
  %6583 = vset.pattern.permute.xlu0 8
  %6584 = vperm.xlu0 %6583, %v6354
  %v6585 = vpop.permute.xlu0 %6584
  %6588 = vset.pattern.permute.xlu0 8
  %6589 = vperm.xlu0 %6588, %v6355
  %v6590 = vpop.permute.xlu0 %6589
  %6593 = vset.pattern.permute.xlu0 8
  %6594 = vperm.xlu0 %6593, %v6356
  %v6595 = vpop.permute.xlu0 %6594
  %6598 = vset.pattern.permute.xlu0 8
  %6599 = vperm.xlu0 %6598, %v6357
  %v6600 = vpop.permute.xlu0 %6599
  %6603 = vset.pattern.permute.xlu0 8
  %6604 = vperm.xlu0 %6603, %v6358
  %v6605 = vpop.permute.xlu0 %6604
  %6608 = vset.pattern.permute.xlu0 8
  %6609 = vperm.xlu0 %6608, %v6359
  %v6610 = vpop.permute.xlu0 %6609
  %6613 = vset.pattern.permute.xlu0 8
  %6614 = vperm.xlu0 %6613, %v6360
  %v6615 = vpop.permute.xlu0 %6614
  %6618 = vset.pattern.permute.xlu0 8
  %6619 = vperm.xlu0 %6618, %v6361
  %v6620 = vpop.permute.xlu0 %6619
  %6623 = vset.pattern.permute.xlu0 8
  %6624 = vperm.xlu0 %6623, %v6362
  %v6625 = vpop.permute.xlu0 %6624
  %6628 = vset.pattern.permute.xlu0 8
  %6629 = vperm.xlu0 %6628, %v6363
  %v6630 = vpop.permute.xlu0 %6629
  %6633 = vset.pattern.permute.xlu0 8
  %6634 = vperm.xlu0 %6633, %v6364
  %v6635 = vpop.permute.xlu0 %6634
  %6638 = vset.pattern.permute.xlu0 8
  %6639 = vperm.xlu0 %6638, %v6365
  %v6640 = vpop.permute.xlu0 %6639
  %6643 = vset.pattern.permute.xlu0 8
  %6644 = vperm.xlu0 %6643, %v6366
  %v6645 = vpop.permute.xlu0 %6644
  %6648 = vset.pattern.permute.xlu0 8
  %6649 = vperm.xlu0 %6648, %v6367
  %v6650 = vpop.permute.xlu0 %6649
  %6653 = vset.pattern.permute.xlu0 8
  %6654 = vperm.xlu0 %6653, %v6368
  %v6655 = vpop.permute.xlu0 %6654
  %6658 = vset.pattern.permute.xlu0 8
  %6659 = vperm.xlu0 %6658, %v6369
  %v6660 = vpop.permute.xlu0 %6659
  %6663 = vset.pattern.permute.xlu0 8
  %6664 = vperm.xlu0 %6663, %v6370
  %v6665 = vpop.permute.xlu0 %6664
  %6668 = vset.pattern.permute.xlu0 8
  %6669 = vperm.xlu0 %6668, %v6371
  %v6670 = vpop.permute.xlu0 %6669
  %6673 = vset.pattern.permute.xlu0 8
  %6674 = vperm.xlu0 %6673, %v6372
  %v6675 = vpop.permute.xlu0 %6674
  %6678 = vset.pattern.permute.xlu0 8
  %6679 = vperm.xlu0 %6678, %v6373
  %v6680 = vpop.permute.xlu0 %6679
  %6683 = vset.pattern.permute.xlu0 8
  %6684 = vperm.xlu0 %6683, %v6374
  %v6685 = vpop.permute.xlu0 %6684
  %6688 = vset.pattern.permute.xlu0 8
  %6689 = vperm.xlu0 %6688, %v6375
  %v6690 = vpop.permute.xlu0 %6689
  %6693 = vset.pattern.permute.xlu0 8
  %6694 = vperm.xlu0 %6693, %v6376
  %v6695 = vpop.permute.xlu0 %6694
  %v6697 = vmul.f32 %v6249, %v6380
  %v6698 = vmul.f32 %v6250, %v6385
  %v6699 = vmul.f32 %v6251, %v6390
  %v6700 = vmul.f32 %v6252, %v6395
  %v6701 = vmul.f32 %v6253, %v6400
  %v6702 = vmul.f32 %v6254, %v6405
  %v6703 = vmul.f32 %v6255, %v6410
  %v6704 = vmul.f32 %v6256, %v6415
  %v6705 = vmul.f32 %v6257, %v6420
  %v6706 = vmul.f32 %v6258, %v6425
  %v6707 = vmul.f32 %v6259, %v6430
  %v6708 = vmul.f32 %v6260, %v6435
  %v6709 = vmul.f32 %v6261, %v6440
  %v6710 = vmul.f32 %v6262, %v6445
  %v6711 = vmul.f32 %v6263, %v6450
  %v6712 = vmul.f32 %v6264, %v6455
  %v6713 = vmul.f32 %v6265, %v6460
  %v6714 = vmul.f32 %v6266, %v6465
  %v6715 = vmul.f32 %v6267, %v6470
  %v6716 = vmul.f32 %v6268, %v6475
  %v6717 = vmul.f32 %v6269, %v6480
  %v6718 = vmul.f32 %v6270, %v6485
  %v6719 = vmul.f32 %v6271, %v6490
  %v6720 = vmul.f32 %v6272, %v6495
  %v6721 = vmul.f32 %v6273, %v6500
  %v6722 = vmul.f32 %v6274, %v6505
  %v6723 = vmul.f32 %v6275, %v6510
  %v6724 = vmul.f32 %v6276, %v6515
  %v6725 = vmul.f32 %v6277, %v6520
  %v6726 = vmul.f32 %v6278, %v6525
  %v6727 = vmul.f32 %v6279, %v6530
  %v6728 = vmul.f32 %v6280, %v6535
  %v6729 = vmul.f32 %v6281, %v6540
  %v6730 = vmul.f32 %v6282, %v6545
  %v6731 = vmul.f32 %v6283, %v6550
  %v6732 = vmul.f32 %v6284, %v6555
  %v6733 = vmul.f32 %v6285, %v6560
  %v6734 = vmul.f32 %v6286, %v6565
  %v6735 = vmul.f32 %v6287, %v6570
  %v6736 = vmul.f32 %v6288, %v6575
  %v6737 = vmul.f32 %v6289, %v6580
  %v6738 = vmul.f32 %v6290, %v6585
  %v6739 = vmul.f32 %v6291, %v6590
  %v6740 = vmul.f32 %v6292, %v6595
  %v6741 = vmul.f32 %v6293, %v6600
  %v6742 = vmul.f32 %v6294, %v6605
  %v6743 = vmul.f32 %v6295, %v6610
  %v6744 = vmul.f32 %v6296, %v6615
  %v6745 = vmul.f32 %v6297, %v6620
  %v6746 = vmul.f32 %v6298, %v6625
  %v6747 = vmul.f32 %v6299, %v6630
  %v6748 = vmul.f32 %v6300, %v6635
  %v6749 = vmul.f32 %v6301, %v6640
  %v6750 = vmul.f32 %v6302, %v6645
  %v6751 = vmul.f32 %v6303, %v6650
  %v6752 = vmul.f32 %v6304, %v6655
  %v6753 = vmul.f32 %v6305, %v6660
  %v6754 = vmul.f32 %v6306, %v6665
  %v6755 = vmul.f32 %v6307, %v6670
  %v6756 = vmul.f32 %v6308, %v6675
  %v6757 = vmul.f32 %v6309, %v6680
  %v6758 = vmul.f32 %v6310, %v6685
  %v6759 = vmul.f32 %v6311, %v6690
  %v6760 = vmul.f32 %v6312, %v6695
  %6761 = vst [vmem:[#allocation3 + $0x40] sm:$0xff] %v6697
  %6762 = vst [vmem:[#allocation3 + $0x88] sm:$0xff] %v6698
  %6763 = vst [vmem:[#allocation3 + $0xd0] sm:$0xff] %v6699
  %6764 = vst [vmem:[#allocation3 + $0x118] sm:$0xff] %v6700
  %6765 = vst [vmem:[#allocation3 + $0x160] sm:$0xff] %v6701
  %6766 = vst [vmem:[#allocation3 + $0x1a8] sm:$0xff] %v6702
  %6767 = vst [vmem:[#allocation3 + $0x1f0] sm:$0xff] %v6703
  %6768 = vst [vmem:[#allocation3 + $0x238] sm:$0xff] %v6704
  %6769 = vst [vmem:[#allocation3 + $0x280] sm:$0xff] %v6705
  %6770 = vst [vmem:[#allocation3 + $0x2c8] sm:$0xff] %v6706
  %6771 = vst [vmem:[#allocation3 + $0x310] sm:$0xff] %v6707
  %6772 = vst [vmem:[#allocation3 + $0x358] sm:$0xff] %v6708
  %6773 = vst [vmem:[#allocation3 + $0x3a0] sm:$0xff] %v6709
  %6774 = vst [vmem:[#allocation3 + $0x3e8] sm:$0xff] %v6710
  %6775 = vst [vmem:[#allocation3 + $0x430] sm:$0xff] %v6711
  %6776 = vst [vmem:[#allocation3 + $0x478] sm:$0xff] %v6712
  %6777 = vst [vmem:[#allocation3 + $0x4c0] sm:$0xff] %v6713
  %6778 = vst [vmem:[#allocation3 + $0x508] sm:$0xff] %v6714
  %6779 = vst [vmem:[#allocation3 + $0x550] sm:$0xff] %v6715
  %6780 = vst [vmem:[#allocation3 + $0x598] sm:$0xff] %v6716
  %6781 = vst [vmem:[#allocation3 + $0x5e0] sm:$0xff] %v6717
  %6782 = vst [vmem:[#allocation3 + $0x628] sm:$0xff] %v6718
  %6783 = vst [vmem:[#allocation3 + $0x670] sm:$0xff] %v6719
  %6784 = vst [vmem:[#allocation3 + $0x6b8] sm:$0xff] %v6720
  %6785 = vst [vmem:[#allocation3 + $0x700] sm:$0xff] %v6721
  %6786 = vst [vmem:[#allocation3 + $0x748] sm:$0xff] %v6722
  %6787 = vst [vmem:[#allocation3 + $0x790] sm:$0xff] %v6723
  %6788 = vst [vmem:[#allocation3 + $0x7d8] sm:$0xff] %v6724
  %6789 = vst [vmem:[#allocation3 + $0x820] sm:$0xff] %v6725
  %6790 = vst [vmem:[#allocation3 + $0x868] sm:$0xff] %v6726
  %6791 = vst [vmem:[#allocation3 + $0x8b0] sm:$0xff] %v6727
  %6792 = vst [vmem:[#allocation3 + $0x8f8] sm:$0xff] %v6728
  %6793 = vst [vmem:[#allocation3 + $0x940] sm:$0xff] %v6729
  %6794 = vst [vmem:[#allocation3 + $0x988] sm:$0xff] %v6730
  %6795 = vst [vmem:[#allocation3 + $0x9d0] sm:$0xff] %v6731
  %6796 = vst [vmem:[#allocation3 + $0xa18] sm:$0xff] %v6732
  %6797 = vst [vmem:[#allocation3 + $0xa60] sm:$0xff] %v6733
  %6798 = vst [vmem:[#allocation3 + $0xaa8] sm:$0xff] %v6734
  %6799 = vst [vmem:[#allocation3 + $0xaf0] sm:$0xff] %v6735
  %6800 = vst [vmem:[#allocation3 + $0xb38] sm:$0xff] %v6736
  %6801 = vst [vmem:[#allocation3 + $0xb80] sm:$0xff] %v6737
  %6802 = vst [vmem:[#allocation3 + $0xbc8] sm:$0xff] %v6738
  %6803 = vst [vmem:[#allocation3 + $0xc10] sm:$0xff] %v6739
  %6804 = vst [vmem:[#allocation3 + $0xc58] sm:$0xff] %v6740
  %6805 = vst [vmem:[#allocation3 + $0xca0] sm:$0xff] %v6741
  %6806 = vst [vmem:[#allocation3 + $0xce8] sm:$0xff] %v6742
  %6807 = vst [vmem:[#allocation3 + $0xd30] sm:$0xff] %v6743
  %6808 = vst [vmem:[#allocation3 + $0xd78] sm:$0xff] %v6744
  %6809 = vst [vmem:[#allocation3 + $0xdc0] sm:$0xff] %v6745
  %6810 = vst [vmem:[#allocation3 + $0xe08] sm:$0xff] %v6746
  %6811 = vst [vmem:[#allocation3 + $0xe50] sm:$0xff] %v6747
  %6812 = vst [vmem:[#allocation3 + $0xe98] sm:$0xff] %v6748
  %6813 = vst [vmem:[#allocation3 + $0xee0] sm:$0xff] %v6749
  %6814 = vst [vmem:[#allocation3 + $0xf28] sm:$0xff] %v6750
  %6815 = vst [vmem:[#allocation3 + $0xf70] sm:$0xff] %v6751
  %6816 = vst [vmem:[#allocation3 + $0xfb8] sm:$0xff] %v6752
  %6817 = vst [vmem:[#allocation3 + $0x1000] sm:$0xff] %v6753
  %6818 = vst [vmem:[#allocation3 + $0x1048] sm:$0xff] %v6754
  %6819 = vst [vmem:[#allocation3 + $0x1090] sm:$0xff] %v6755
  %6820 = vst [vmem:[#allocation3 + $0x10d8] sm:$0xff] %v6756
  %6821 = vst [vmem:[#allocation3 + $0x1120] sm:$0xff] %v6757
  %6822 = vst [vmem:[#allocation3 + $0x1168] sm:$0xff] %v6758
  %6823 = vst [vmem:[#allocation3 + $0x11b0] sm:$0xff] %v6759
  %6824 = vst [vmem:[#allocation3 + $0x11f8] sm:$0xff] %v6760
  %v6825 = vld [vmem:[#allocation3] sm:$0xff]
  %v6826 = vld [vmem:[#allocation3 + $0x8] sm:$0xff]
  %v6827 = vld [vmem:[#allocation3 + $0x10] sm:$0xff]
  %v6828 = vld [vmem:[#allocation3 + $0x18] sm:$0xff]
  %v6829 = vld [vmem:[#allocation3 + $0x20] sm:$0xff]
  %v6830 = vld [vmem:[#allocation3 + $0x28] sm:$0xff]
  %v6831 = vld [vmem:[#allocation3 + $0x30] sm:$0xff]
  %v6832 = vld [vmem:[#allocation3 + $0x38] sm:$0xff]
  %v6833 = vld [vmem:[#allocation3 + $0x40] sm:$0xff]
  %v6834 = vld [vmem:[#allocation3 + $0x48] sm:$0xff]
  %v6835 = vld [vmem:[#allocation3 + $0x50] sm:$0xff]
  %v6836 = vld [vmem:[#allocation3 + $0x58] sm:$0xff]
  %v6837 = vld [vmem:[#allocation3 + $0x60] sm:$0xff]
  %v6838 = vld [vmem:[#allocation3 + $0x68] sm:$0xff]
  %v6839 = vld [vmem:[#allocation3 + $0x70] sm:$0xff]
  %v6840 = vld [vmem:[#allocation3 + $0x78] sm:$0xff]
  %v6841 = vld [vmem:[#allocation3 + $0x80] sm:$0xff]
  %v6842 = vld [vmem:[#allocation3 + $0x88] sm:$0xff]
  %v6843 = vld [vmem:[#allocation3 + $0x90] sm:$0xff]
  %v6844 = vld [vmem:[#allocation3 + $0x98] sm:$0xff]
  %v6845 = vld [vmem:[#allocation3 + $0xa0] sm:$0xff]
  %v6846 = vld [vmem:[#allocation3 + $0xa8] sm:$0xff]
  %v6847 = vld [vmem:[#allocation3 + $0xb0] sm:$0xff]
  %v6848 = vld [vmem:[#allocation3 + $0xb8] sm:$0xff]
  %v6849 = vld [vmem:[#allocation3 + $0xc0] sm:$0xff]
  %v6850 = vld [vmem:[#allocation3 + $0xc8] sm:$0xff]
  %v6851 = vld [vmem:[#allocation3 + $0xd0] sm:$0xff]
  %v6852 = vld [vmem:[#allocation3 + $0xd8] sm:$0xff]
  %v6853 = vld [vmem:[#allocation3 + $0xe0] sm:$0xff]
  %v6854 = vld [vmem:[#allocation3 + $0xe8] sm:$0xff]
  %v6855 = vld [vmem:[#allocation3 + $0xf0] sm:$0xff]
  %v6856 = vld [vmem:[#allocation3 + $0xf8] sm:$0xff]
  %v6857 = vld [vmem:[#allocation3 + $0x100] sm:$0xff]
  %v6858 = vld [vmem:[#allocation3 + $0x108] sm:$0xff]
  %v6859 = vld [vmem:[#allocation3 + $0x110] sm:$0xff]
  %v6860 = vld [vmem:[#allocation3 + $0x118] sm:$0xff]
  %v6861 = vld [vmem:[#allocation3 + $0x120] sm:$0xff]
  %v6862 = vld [vmem:[#allocation3 + $0x128] sm:$0xff]
  %v6863 = vld [vmem:[#allocation3 + $0x130] sm:$0xff]
  %v6864 = vld [vmem:[#allocation3 + $0x138] sm:$0xff]
  %v6865 = vld [vmem:[#allocation3 + $0x140] sm:$0xff]
  %v6866 = vld [vmem:[#allocation3 + $0x148] sm:$0xff]
  %v6867 = vld [vmem:[#allocation3 + $0x150] sm:$0xff]
  %v6868 = vld [vmem:[#allocation3 + $0x158] sm:$0xff]
  %v6869 = vld [vmem:[#allocation3 + $0x160] sm:$0xff]
  %v6870 = vld [vmem:[#allocation3 + $0x168] sm:$0xff]
  %v6871 = vld [vmem:[#allocation3 + $0x170] sm:$0xff]
  %v6872 = vld [vmem:[#allocation3 + $0x178] sm:$0xff]
  %v6873 = vld [vmem:[#allocation3 + $0x180] sm:$0xff]
  %v6874 = vld [vmem:[#allocation3 + $0x188] sm:$0xff]
  %v6875 = vld [vmem:[#allocation3 + $0x190] sm:$0xff]
  %v6876 = vld [vmem:[#allocation3 + $0x198] sm:$0xff]
  %v6877 = vld [vmem:[#allocation3 + $0x1a0] sm:$0xff]
  %v6878 = vld [vmem:[#allocation3 + $0x1a8] sm:$0xff]
  %v6879 = vld [vmem:[#allocation3 + $0x1b0] sm:$0xff]
  %v6880 = vld [vmem:[#allocation3 + $0x1b8] sm:$0xff]
  %v6881 = vld [vmem:[#allocation3 + $0x1c0] sm:$0xff]
  %v6882 = vld [vmem:[#allocation3 + $0x1c8] sm:$0xff]
  %v6883 = vld [vmem:[#allocation3 + $0x1d0] sm:$0xff]
  %v6884 = vld [vmem:[#allocation3 + $0x1d8] sm:$0xff]
  %v6885 = vld [vmem:[#allocation3 + $0x1e0] sm:$0xff]
  %v6886 = vld [vmem:[#allocation3 + $0x1e8] sm:$0xff]
  %v6887 = vld [vmem:[#allocation3 + $0x1f0] sm:$0xff]
  %v6888 = vld [vmem:[#allocation3 + $0x1f8] sm:$0xff]
  %v6889 = vld [vmem:[#allocation3 + $0x200] sm:$0xff]
  %v6890 = vld [vmem:[#allocation3 + $0x208] sm:$0xff]
  %v6891 = vld [vmem:[#allocation3 + $0x210] sm:$0xff]
  %v6892 = vld [vmem:[#allocation3 + $0x218] sm:$0xff]
  %v6893 = vld [vmem:[#allocation3 + $0x220] sm:$0xff]
  %v6894 = vld [vmem:[#allocation3 + $0x228] sm:$0xff]
  %v6895 = vld [vmem:[#allocation3 + $0x230] sm:$0xff]
  %v6896 = vld [vmem:[#allocation3 + $0x238] sm:$0xff]
  %v6897 = vld [vmem:[#allocation3 + $0x240] sm:$0xff]
  %v6898 = vld [vmem:[#allocation3 + $0x248] sm:$0xff]
  %v6899 = vld [vmem:[#allocation3 + $0x250] sm:$0xff]
  %v6900 = vld [vmem:[#allocation3 + $0x258] sm:$0xff]
  %v6901 = vld [vmem:[#allocation3 + $0x260] sm:$0xff]
  %v6902 = vld [vmem:[#allocation3 + $0x268] sm:$0xff]
  %v6903 = vld [vmem:[#allocation3 + $0x270] sm:$0xff]
  %v6904 = vld [vmem:[#allocation3 + $0x278] sm:$0xff]
  %v6905 = vld [vmem:[#allocation3 + $0x280] sm:$0xff]
  %v6906 = vld [vmem:[#allocation3 + $0x288] sm:$0xff]
  %v6907 = vld [vmem:[#allocation3 + $0x290] sm:$0xff]
  %v6908 = vld [vmem:[#allocation3 + $0x298] sm:$0xff]
  %v6909 = vld [vmem:[#allocation3 + $0x2a0] sm:$0xff]
  %v6910 = vld [vmem:[#allocation3 + $0x2a8] sm:$0xff]
  %v6911 = vld [vmem:[#allocation3 + $0x2b0] sm:$0xff]
  %v6912 = vld [vmem:[#allocation3 + $0x2b8] sm:$0xff]
  %v6913 = vld [vmem:[#allocation3 + $0x2c0] sm:$0xff]
  %v6914 = vld [vmem:[#allocation3 + $0x2c8] sm:$0xff]
  %v6915 = vld [vmem:[#allocation3 + $0x2d0] sm:$0xff]
  %v6916 = vld [vmem:[#allocation3 + $0x2d8] sm:$0xff]
  %v6917 = vld [vmem:[#allocation3 + $0x2e0] sm:$0xff]
  %v6918 = vld [vmem:[#allocation3 + $0x2e8] sm:$0xff]
  %v6919 = vld [vmem:[#allocation3 + $0x2f0] sm:$0xff]
  %v6920 = vld [vmem:[#allocation3 + $0x2f8] sm:$0xff]
  %v6921 = vld [vmem:[#allocation3 + $0x300] sm:$0xff]
  %v6922 = vld [vmem:[#allocation3 + $0x308] sm:$0xff]
  %v6923 = vld [vmem:[#allocation3 + $0x310] sm:$0xff]
  %v6924 = vld [vmem:[#allocation3 + $0x318] sm:$0xff]
  %v6925 = vld [vmem:[#allocation3 + $0x320] sm:$0xff]
  %v6926 = vld [vmem:[#allocation3 + $0x328] sm:$0xff]
  %v6927 = vld [vmem:[#allocation3 + $0x330] sm:$0xff]
  %v6928 = vld [vmem:[#allocation3 + $0x338] sm:$0xff]
  %v6929 = vld [vmem:[#allocation3 + $0x340] sm:$0xff]
  %v6930 = vld [vmem:[#allocation3 + $0x348] sm:$0xff]
  %v6931 = vld [vmem:[#allocation3 + $0x350] sm:$0xff]
  %v6932 = vld [vmem:[#allocation3 + $0x358] sm:$0xff]
  %v6933 = vld [vmem:[#allocation3 + $0x360] sm:$0xff]
  %v6934 = vld [vmem:[#allocation3 + $0x368] sm:$0xff]
  %v6935 = vld [vmem:[#allocation3 + $0x370] sm:$0xff]
  %v6936 = vld [vmem:[#allocation3 + $0x378] sm:$0xff]
  %v6937 = vld [vmem:[#allocation3 + $0x380] sm:$0xff]
  %v6938 = vld [vmem:[#allocation3 + $0x388] sm:$0xff]
  %v6939 = vld [vmem:[#allocation3 + $0x390] sm:$0xff]
  %v6940 = vld [vmem:[#allocation3 + $0x398] sm:$0xff]
  %v6941 = vld [vmem:[#allocation3 + $0x3a0] sm:$0xff]
  %v6942 = vld [vmem:[#allocation3 + $0x3a8] sm:$0xff]
  %v6943 = vld [vmem:[#allocation3 + $0x3b0] sm:$0xff]
  %v6944 = vld [vmem:[#allocation3 + $0x3b8] sm:$0xff]
  %v6945 = vld [vmem:[#allocation3 + $0x3c0] sm:$0xff]
  %v6946 = vld [vmem:[#allocation3 + $0x3c8] sm:$0xff]
  %v6947 = vld [vmem:[#allocation3 + $0x3d0] sm:$0xff]
  %v6948 = vld [vmem:[#allocation3 + $0x3d8] sm:$0xff]
  %v6949 = vld [vmem:[#allocation3 + $0x3e0] sm:$0xff]
  %v6950 = vld [vmem:[#allocation3 + $0x3e8] sm:$0xff]
  %v6951 = vld [vmem:[#allocation3 + $0x3f0] sm:$0xff]
  %v6952 = vld [vmem:[#allocation3 + $0x3f8] sm:$0xff]
  %v6953 = vld [vmem:[#allocation3 + $0x400] sm:$0xff]
  %v6954 = vld [vmem:[#allocation3 + $0x408] sm:$0xff]
  %v6955 = vld [vmem:[#allocation3 + $0x410] sm:$0xff]
  %v6956 = vld [vmem:[#allocation3 + $0x418] sm:$0xff]
  %v6957 = vld [vmem:[#allocation3 + $0x420] sm:$0xff]
  %v6958 = vld [vmem:[#allocation3 + $0x428] sm:$0xff]
  %v6959 = vld [vmem:[#allocation3 + $0x430] sm:$0xff]
  %v6960 = vld [vmem:[#allocation3 + $0x438] sm:$0xff]
  %v6961 = vld [vmem:[#allocation3 + $0x440] sm:$0xff]
  %v6962 = vld [vmem:[#allocation3 + $0x448] sm:$0xff]
  %v6963 = vld [vmem:[#allocation3 + $0x450] sm:$0xff]
  %v6964 = vld [vmem:[#allocation3 + $0x458] sm:$0xff]
  %v6965 = vld [vmem:[#allocation3 + $0x460] sm:$0xff]
  %v6966 = vld [vmem:[#allocation3 + $0x468] sm:$0xff]
  %v6967 = vld [vmem:[#allocation3 + $0x470] sm:$0xff]
  %v6968 = vld [vmem:[#allocation3 + $0x478] sm:$0xff]
  %v6969 = vld [vmem:[#allocation3 + $0x480] sm:$0xff]
  %v6970 = vld [vmem:[#allocation3 + $0x488] sm:$0xff]
  %v6971 = vld [vmem:[#allocation3 + $0x490] sm:$0xff]
  %v6972 = vld [vmem:[#allocation3 + $0x498] sm:$0xff]
  %v6973 = vld [vmem:[#allocation3 + $0x4a0] sm:$0xff]
  %v6974 = vld [vmem:[#allocation3 + $0x4a8] sm:$0xff]
  %v6975 = vld [vmem:[#allocation3 + $0x4b0] sm:$0xff]
  %v6976 = vld [vmem:[#allocation3 + $0x4b8] sm:$0xff]
  %v6977 = vld [vmem:[#allocation3 + $0x4c0] sm:$0xff]
  %v6978 = vld [vmem:[#allocation3 + $0x4c8] sm:$0xff]
  %v6979 = vld [vmem:[#allocation3 + $0x4d0] sm:$0xff]
  %v6980 = vld [vmem:[#allocation3 + $0x4d8] sm:$0xff]
  %v6981 = vld [vmem:[#allocation3 + $0x4e0] sm:$0xff]
  %v6982 = vld [vmem:[#allocation3 + $0x4e8] sm:$0xff]
  %v6983 = vld [vmem:[#allocation3 + $0x4f0] sm:$0xff]
  %v6984 = vld [vmem:[#allocation3 + $0x4f8] sm:$0xff]
  %v6985 = vld [vmem:[#allocation3 + $0x500] sm:$0xff]
  %v6986 = vld [vmem:[#allocation3 + $0x508] sm:$0xff]
  %v6987 = vld [vmem:[#allocation3 + $0x510] sm:$0xff]
  %v6988 = vld [vmem:[#allocation3 + $0x518] sm:$0xff]
  %v6989 = vld [vmem:[#allocation3 + $0x520] sm:$0xff]
  %v6990 = vld [vmem:[#allocation3 + $0x528] sm:$0xff]
  %v6991 = vld [vmem:[#allocation3 + $0x530] sm:$0xff]
  %v6992 = vld [vmem:[#allocation3 + $0x538] sm:$0xff]
  %v6993 = vld [vmem:[#allocation3 + $0x540] sm:$0xff]
  %v6994 = vld [vmem:[#allocation3 + $0x548] sm:$0xff]
  %v6995 = vld [vmem:[#allocation3 + $0x550] sm:$0xff]
  %v6996 = vld [vmem:[#allocation3 + $0x558] sm:$0xff]
  %v6997 = vld [vmem:[#allocation3 + $0x560] sm:$0xff]
  %v6998 = vld [vmem:[#allocation3 + $0x568] sm:$0xff]
  %v6999 = vld [vmem:[#allocation3 + $0x570] sm:$0xff]
  %v7000 = vld [vmem:[#allocation3 + $0x578] sm:$0xff]
  %v7001 = vld [vmem:[#allocation3 + $0x580] sm:$0xff]
  %v7002 = vld [vmem:[#allocation3 + $0x588] sm:$0xff]
  %v7003 = vld [vmem:[#allocation3 + $0x590] sm:$0xff]
  %v7004 = vld [vmem:[#allocation3 + $0x598] sm:$0xff]
  %v7005 = vld [vmem:[#allocation3 + $0x5a0] sm:$0xff]
  %v7006 = vld [vmem:[#allocation3 + $0x5a8] sm:$0xff]
  %v7007 = vld [vmem:[#allocation3 + $0x5b0] sm:$0xff]
  %v7008 = vld [vmem:[#allocation3 + $0x5b8] sm:$0xff]
  %v7009 = vld [vmem:[#allocation3 + $0x5c0] sm:$0xff]
  %v7010 = vld [vmem:[#allocation3 + $0x5c8] sm:$0xff]
  %v7011 = vld [vmem:[#allocation3 + $0x5d0] sm:$0xff]
  %v7012 = vld [vmem:[#allocation3 + $0x5d8] sm:$0xff]
  %v7013 = vld [vmem:[#allocation3 + $0x5e0] sm:$0xff]
  %v7014 = vld [vmem:[#allocation3 + $0x5e8] sm:$0xff]
  %v7015 = vld [vmem:[#allocation3 + $0x5f0] sm:$0xff]
  %v7016 = vld [vmem:[#allocation3 + $0x5f8] sm:$0xff]
  %v7017 = vld [vmem:[#allocation3 + $0x600] sm:$0xff]
  %v7018 = vld [vmem:[#allocation3 + $0x608] sm:$0xff]
  %v7019 = vld [vmem:[#allocation3 + $0x610] sm:$0xff]
  %v7020 = vld [vmem:[#allocation3 + $0x618] sm:$0xff]
  %v7021 = vld [vmem:[#allocation3 + $0x620] sm:$0xff]
  %v7022 = vld [vmem:[#allocation3 + $0x628] sm:$0xff]
  %v7023 = vld [vmem:[#allocation3 + $0x630] sm:$0xff]
  %v7024 = vld [vmem:[#allocation3 + $0x638] sm:$0xff]
  %v7025 = vld [vmem:[#allocation3 + $0x640] sm:$0xff]
  %v7026 = vld [vmem:[#allocation3 + $0x648] sm:$0xff]
  %v7027 = vld [vmem:[#allocation3 + $0x650] sm:$0xff]
  %v7028 = vld [vmem:[#allocation3 + $0x658] sm:$0xff]
  %v7029 = vld [vmem:[#allocation3 + $0x660] sm:$0xff]
  %v7030 = vld [vmem:[#allocation3 + $0x668] sm:$0xff]
  %v7031 = vld [vmem:[#allocation3 + $0x670] sm:$0xff]
  %v7032 = vld [vmem:[#allocation3 + $0x678] sm:$0xff]
  %v7033 = vld [vmem:[#allocation3 + $0x680] sm:$0xff]
  %v7034 = vld [vmem:[#allocation3 + $0x688] sm:$0xff]
  %v7035 = vld [vmem:[#allocation3 + $0x690] sm:$0xff]
  %v7036 = vld [vmem:[#allocation3 + $0x698] sm:$0xff]
  %v7037 = vld [vmem:[#allocation3 + $0x6a0] sm:$0xff]
  %v7038 = vld [vmem:[#allocation3 + $0x6a8] sm:$0xff]
  %v7039 = vld [vmem:[#allocation3 + $0x6b0] sm:$0xff]
  %v7040 = vld [vmem:[#allocation3 + $0x6b8] sm:$0xff]
  %v7041 = vld [vmem:[#allocation3 + $0x6c0] sm:$0xff]
  %v7042 = vld [vmem:[#allocation3 + $0x6c8] sm:$0xff]
  %v7043 = vld [vmem:[#allocation3 + $0x6d0] sm:$0xff]
  %v7044 = vld [vmem:[#allocation3 + $0x6d8] sm:$0xff]
  %v7045 = vld [vmem:[#allocation3 + $0x6e0] sm:$0xff]
  %v7046 = vld [vmem:[#allocation3 + $0x6e8] sm:$0xff]
  %v7047 = vld [vmem:[#allocation3 + $0x6f0] sm:$0xff]
  %v7048 = vld [vmem:[#allocation3 + $0x6f8] sm:$0xff]
  %v7049 = vld [vmem:[#allocation3 + $0x700] sm:$0xff]
  %v7050 = vld [vmem:[#allocation3 + $0x708] sm:$0xff]
  %v7051 = vld [vmem:[#allocation3 + $0x710] sm:$0xff]
  %v7052 = vld [vmem:[#allocation3 + $0x718] sm:$0xff]
  %v7053 = vld [vmem:[#allocation3 + $0x720] sm:$0xff]
  %v7054 = vld [vmem:[#allocation3 + $0x728] sm:$0xff]
  %v7055 = vld [vmem:[#allocation3 + $0x730] sm:$0xff]
  %v7056 = vld [vmem:[#allocation3 + $0x738] sm:$0xff]
  %v7057 = vld [vmem:[#allocation3 + $0x740] sm:$0xff]
  %v7058 = vld [vmem:[#allocation3 + $0x748] sm:$0xff]
  %v7059 = vld [vmem:[#allocation3 + $0x750] sm:$0xff]
  %v7060 = vld [vmem:[#allocation3 + $0x758] sm:$0xff]
  %v7061 = vld [vmem:[#allocation3 + $0x760] sm:$0xff]
  %v7062 = vld [vmem:[#allocation3 + $0x768] sm:$0xff]
  %v7063 = vld [vmem:[#allocation3 + $0x770] sm:$0xff]
  %v7064 = vld [vmem:[#allocation3 + $0x778] sm:$0xff]
  %v7065 = vld [vmem:[#allocation3 + $0x780] sm:$0xff]
  %v7066 = vld [vmem:[#allocation3 + $0x788] sm:$0xff]
  %v7067 = vld [vmem:[#allocation3 + $0x790] sm:$0xff]
  %v7068 = vld [vmem:[#allocation3 + $0x798] sm:$0xff]
  %v7069 = vld [vmem:[#allocation3 + $0x7a0] sm:$0xff]
  %v7070 = vld [vmem:[#allocation3 + $0x7a8] sm:$0xff]
  %v7071 = vld [vmem:[#allocation3 + $0x7b0] sm:$0xff]
  %v7072 = vld [vmem:[#allocation3 + $0x7b8] sm:$0xff]
  %v7073 = vld [vmem:[#allocation3 + $0x7c0] sm:$0xff]
  %v7074 = vld [vmem:[#allocation3 + $0x7c8] sm:$0xff]
  %v7075 = vld [vmem:[#allocation3 + $0x7d0] sm:$0xff]
  %v7076 = vld [vmem:[#allocation3 + $0x7d8] sm:$0xff]
  %v7077 = vld [vmem:[#allocation3 + $0x7e0] sm:$0xff]
  %v7078 = vld [vmem:[#allocation3 + $0x7e8] sm:$0xff]
  %v7079 = vld [vmem:[#allocation3 + $0x7f0] sm:$0xff]
  %v7080 = vld [vmem:[#allocation3 + $0x7f8] sm:$0xff]
  %v7081 = vld [vmem:[#allocation3 + $0x800] sm:$0xff]
  %v7082 = vld [vmem:[#allocation3 + $0x808] sm:$0xff]
  %v7083 = vld [vmem:[#allocation3 + $0x810] sm:$0xff]
  %v7084 = vld [vmem:[#allocation3 + $0x818] sm:$0xff]
  %v7085 = vld [vmem:[#allocation3 + $0x820] sm:$0xff]
  %v7086 = vld [vmem:[#allocation3 + $0x828] sm:$0xff]
  %v7087 = vld [vmem:[#allocation3 + $0x830] sm:$0xff]
  %v7088 = vld [vmem:[#allocation3 + $0x838] sm:$0xff]
  %v7089 = vld [vmem:[#allocation3 + $0x840] sm:$0xff]
  %v7090 = vld [vmem:[#allocation3 + $0x848] sm:$0xff]
  %v7091 = vld [vmem:[#allocation3 + $0x850] sm:$0xff]
  %v7092 = vld [vmem:[#allocation3 + $0x858] sm:$0xff]
  %v7093 = vld [vmem:[#allocation3 + $0x860] sm:$0xff]
  %v7094 = vld [vmem:[#allocation3 + $0x868] sm:$0xff]
  %v7095 = vld [vmem:[#allocation3 + $0x870] sm:$0xff]
  %v7096 = vld [vmem:[#allocation3 + $0x878] sm:$0xff]
  %v7097 = vld [vmem:[#allocation3 + $0x880] sm:$0xff]
  %v7098 = vld [vmem:[#allocation3 + $0x888] sm:$0xff]
  %v7099 = vld [vmem:[#allocation3 + $0x890] sm:$0xff]
  %v7100 = vld [vmem:[#allocation3 + $0x898] sm:$0xff]
  %v7101 = vld [vmem:[#allocation3 + $0x8a0] sm:$0xff]
  %v7102 = vld [vmem:[#allocation3 + $0x8a8] sm:$0xff]
  %v7103 = vld [vmem:[#allocation3 + $0x8b0] sm:$0xff]
  %v7104 = vld [vmem:[#allocation3 + $0x8b8] sm:$0xff]
  %v7105 = vld [vmem:[#allocation3 + $0x8c0] sm:$0xff]
  %v7106 = vld [vmem:[#allocation3 + $0x8c8] sm:$0xff]
  %v7107 = vld [vmem:[#allocation3 + $0x8d0] sm:$0xff]
  %v7108 = vld [vmem:[#allocation3 + $0x8d8] sm:$0xff]
  %v7109 = vld [vmem:[#allocation3 + $0x8e0] sm:$0xff]
  %v7110 = vld [vmem:[#allocation3 + $0x8e8] sm:$0xff]
  %v7111 = vld [vmem:[#allocation3 + $0x8f0] sm:$0xff]
  %v7112 = vld [vmem:[#allocation3 + $0x8f8] sm:$0xff]
  %v7113 = vld [vmem:[#allocation3 + $0x900] sm:$0xff]
  %v7114 = vld [vmem:[#allocation3 + $0x908] sm:$0xff]
  %v7115 = vld [vmem:[#allocation3 + $0x910] sm:$0xff]
  %v7116 = vld [vmem:[#allocation3 + $0x918] sm:$0xff]
  %v7117 = vld [vmem:[#allocation3 + $0x920] sm:$0xff]
  %v7118 = vld [vmem:[#allocation3 + $0x928] sm:$0xff]
  %v7119 = vld [vmem:[#allocation3 + $0x930] sm:$0xff]
  %v7120 = vld [vmem:[#allocation3 + $0x938] sm:$0xff]
  %v7121 = vld [vmem:[#allocation3 + $0x940] sm:$0xff]
  %v7122 = vld [vmem:[#allocation3 + $0x948] sm:$0xff]
  %v7123 = vld [vmem:[#allocation3 + $0x950] sm:$0xff]
  %v7124 = vld [vmem:[#allocation3 + $0x958] sm:$0xff]
  %v7125 = vld [vmem:[#allocation3 + $0x960] sm:$0xff]
  %v7126 = vld [vmem:[#allocation3 + $0x968] sm:$0xff]
  %v7127 = vld [vmem:[#allocation3 + $0x970] sm:$0xff]
  %v7128 = vld [vmem:[#allocation3 + $0x978] sm:$0xff]
  %v7129 = vld [vmem:[#allocation3 + $0x980] sm:$0xff]
  %v7130 = vld [vmem:[#allocation3 + $0x988] sm:$0xff]
  %v7131 = vld [vmem:[#allocation3 + $0x990] sm:$0xff]
  %v7132 = vld [vmem:[#allocation3 + $0x998] sm:$0xff]
  %v7133 = vld [vmem:[#allocation3 + $0x9a0] sm:$0xff]
  %v7134 = vld [vmem:[#allocation3 + $0x9a8] sm:$0xff]
  %v7135 = vld [vmem:[#allocation3 + $0x9b0] sm:$0xff]
  %v7136 = vld [vmem:[#allocation3 + $0x9b8] sm:$0xff]
  %v7137 = vld [vmem:[#allocation3 + $0x9c0] sm:$0xff]
  %v7138 = vld [vmem:[#allocation3 + $0x9c8] sm:$0xff]
  %v7139 = vld [vmem:[#allocation3 + $0x9d0] sm:$0xff]
  %v7140 = vld [vmem:[#allocation3 + $0x9d8] sm:$0xff]
  %v7141 = vld [vmem:[#allocation3 + $0x9e0] sm:$0xff]
  %v7142 = vld [vmem:[#allocation3 + $0x9e8] sm:$0xff]
  %v7143 = vld [vmem:[#allocation3 + $0x9f0] sm:$0xff]
  %v7144 = vld [vmem:[#allocation3 + $0x9f8] sm:$0xff]
  %v7145 = vld [vmem:[#allocation3 + $0xa00] sm:$0xff]
  %v7146 = vld [vmem:[#allocation3 + $0xa08] sm:$0xff]
  %v7147 = vld [vmem:[#allocation3 + $0xa10] sm:$0xff]
  %v7148 = vld [vmem:[#allocation3 + $0xa18] sm:$0xff]
  %v7149 = vld [vmem:[#allocation3 + $0xa20] sm:$0xff]
  %v7150 = vld [vmem:[#allocation3 + $0xa28] sm:$0xff]
  %v7151 = vld [vmem:[#allocation3 + $0xa30] sm:$0xff]
  %v7152 = vld [vmem:[#allocation3 + $0xa38] sm:$0xff]
  %v7153 = vld [vmem:[#allocation3 + $0xa40] sm:$0xff]
  %v7154 = vld [vmem:[#allocation3 + $0xa48] sm:$0xff]
  %v7155 = vld [vmem:[#allocation3 + $0xa50] sm:$0xff]
  %v7156 = vld [vmem:[#allocation3 + $0xa58] sm:$0xff]
  %v7157 = vld [vmem:[#allocation3 + $0xa60] sm:$0xff]
  %v7158 = vld [vmem:[#allocation3 + $0xa68] sm:$0xff]
  %v7159 = vld [vmem:[#allocation3 + $0xa70] sm:$0xff]
  %v7160 = vld [vmem:[#allocation3 + $0xa78] sm:$0xff]
  %v7161 = vld [vmem:[#allocation3 + $0xa80] sm:$0xff]
  %v7162 = vld [vmem:[#allocation3 + $0xa88] sm:$0xff]
  %v7163 = vld [vmem:[#allocation3 + $0xa90] sm:$0xff]
  %v7164 = vld [vmem:[#allocation3 + $0xa98] sm:$0xff]
  %v7165 = vld [vmem:[#allocation3 + $0xaa0] sm:$0xff]
  %v7166 = vld [vmem:[#allocation3 + $0xaa8] sm:$0xff]
  %v7167 = vld [vmem:[#allocation3 + $0xab0] sm:$0xff]
  %v7168 = vld [vmem:[#allocation3 + $0xab8] sm:$0xff]
  %v7169 = vld [vmem:[#allocation3 + $0xac0] sm:$0xff]
  %v7170 = vld [vmem:[#allocation3 + $0xac8] sm:$0xff]
  %v7171 = vld [vmem:[#allocation3 + $0xad0] sm:$0xff]
  %v7172 = vld [vmem:[#allocation3 + $0xad8] sm:$0xff]
  %v7173 = vld [vmem:[#allocation3 + $0xae0] sm:$0xff]
  %v7174 = vld [vmem:[#allocation3 + $0xae8] sm:$0xff]
  %v7175 = vld [vmem:[#allocation3 + $0xaf0] sm:$0xff]
  %v7176 = vld [vmem:[#allocation3 + $0xaf8] sm:$0xff]
  %v7177 = vld [vmem:[#allocation3 + $0xb00] sm:$0xff]
  %v7178 = vld [vmem:[#allocation3 + $0xb08] sm:$0xff]
  %v7179 = vld [vmem:[#allocation3 + $0xb10] sm:$0xff]
  %v7180 = vld [vmem:[#allocation3 + $0xb18] sm:$0xff]
  %v7181 = vld [vmem:[#allocation3 + $0xb20] sm:$0xff]
  %v7182 = vld [vmem:[#allocation3 + $0xb28] sm:$0xff]
  %v7183 = vld [vmem:[#allocation3 + $0xb30] sm:$0xff]
  %v7184 = vld [vmem:[#allocation3 + $0xb38] sm:$0xff]
  %v7185 = vld [vmem:[#allocation3 + $0xb40] sm:$0xff]
  %v7186 = vld [vmem:[#allocation3 + $0xb48] sm:$0xff]
  %v7187 = vld [vmem:[#allocation3 + $0xb50] sm:$0xff]
  %v7188 = vld [vmem:[#allocation3 + $0xb58] sm:$0xff]
  %v7189 = vld [vmem:[#allocation3 + $0xb60] sm:$0xff]
  %v7190 = vld [vmem:[#allocation3 + $0xb68] sm:$0xff]
  %v7191 = vld [vmem:[#allocation3 + $0xb70] sm:$0xff]
  %v7192 = vld [vmem:[#allocation3 + $0xb78] sm:$0xff]
  %v7193 = vld [vmem:[#allocation3 + $0xb80] sm:$0xff]
  %v7194 = vld [vmem:[#allocation3 + $0xb88] sm:$0xff]
  %v7195 = vld [vmem:[#allocation3 + $0xb90] sm:$0xff]
  %v7196 = vld [vmem:[#allocation3 + $0xb98] sm:$0xff]
  %v7197 = vld [vmem:[#allocation3 + $0xba0] sm:$0xff]
  %v7198 = vld [vmem:[#allocation3 + $0xba8] sm:$0xff]
  %v7199 = vld [vmem:[#allocation3 + $0xbb0] sm:$0xff]
  %v7200 = vld [vmem:[#allocation3 + $0xbb8] sm:$0xff]
  %v7201 = vld [vmem:[#allocation3 + $0xbc0] sm:$0xff]
  %v7202 = vld [vmem:[#allocation3 + $0xbc8] sm:$0xff]
  %v7203 = vld [vmem:[#allocation3 + $0xbd0] sm:$0xff]
  %v7204 = vld [vmem:[#allocation3 + $0xbd8] sm:$0xff]
  %v7205 = vld [vmem:[#allocation3 + $0xbe0] sm:$0xff]
  %v7206 = vld [vmem:[#allocation3 + $0xbe8] sm:$0xff]
  %v7207 = vld [vmem:[#allocation3 + $0xbf0] sm:$0xff]
  %v7208 = vld [vmem:[#allocation3 + $0xbf8] sm:$0xff]
  %v7209 = vld [vmem:[#allocation3 + $0xc00] sm:$0xff]
  %v7210 = vld [vmem:[#allocation3 + $0xc08] sm:$0xff]
  %v7211 = vld [vmem:[#allocation3 + $0xc10] sm:$0xff]
  %v7212 = vld [vmem:[#allocation3 + $0xc18] sm:$0xff]
  %v7213 = vld [vmem:[#allocation3 + $0xc20] sm:$0xff]
  %v7214 = vld [vmem:[#allocation3 + $0xc28] sm:$0xff]
  %v7215 = vld [vmem:[#allocation3 + $0xc30] sm:$0xff]
  %v7216 = vld [vmem:[#allocation3 + $0xc38] sm:$0xff]
  %v7217 = vld [vmem:[#allocation3 + $0xc40] sm:$0xff]
  %v7218 = vld [vmem:[#allocation3 + $0xc48] sm:$0xff]
  %v7219 = vld [vmem:[#allocation3 + $0xc50] sm:$0xff]
  %v7220 = vld [vmem:[#allocation3 + $0xc58] sm:$0xff]
  %v7221 = vld [vmem:[#allocation3 + $0xc60] sm:$0xff]
  %v7222 = vld [vmem:[#allocation3 + $0xc68] sm:$0xff]
  %v7223 = vld [vmem:[#allocation3 + $0xc70] sm:$0xff]
  %v7224 = vld [vmem:[#allocation3 + $0xc78] sm:$0xff]
  %v7225 = vld [vmem:[#allocation3 + $0xc80] sm:$0xff]
  %v7226 = vld [vmem:[#allocation3 + $0xc88] sm:$0xff]
  %v7227 = vld [vmem:[#allocation3 + $0xc90] sm:$0xff]
  %v7228 = vld [vmem:[#allocation3 + $0xc98] sm:$0xff]
  %v7229 = vld [vmem:[#allocation3 + $0xca0] sm:$0xff]
  %v7230 = vld [vmem:[#allocation3 + $0xca8] sm:$0xff]
  %v7231 = vld [vmem:[#allocation3 + $0xcb0] sm:$0xff]
  %v7232 = vld [vmem:[#allocation3 + $0xcb8] sm:$0xff]
  %v7233 = vld [vmem:[#allocation3 + $0xcc0] sm:$0xff]
  %v7234 = vld [vmem:[#allocation3 + $0xcc8] sm:$0xff]
  %v7235 = vld [vmem:[#allocation3 + $0xcd0] sm:$0xff]
  %v7236 = vld [vmem:[#allocation3 + $0xcd8] sm:$0xff]
  %v7237 = vld [vmem:[#allocation3 + $0xce0] sm:$0xff]
  %v7238 = vld [vmem:[#allocation3 + $0xce8] sm:$0xff]
  %v7239 = vld [vmem:[#allocation3 + $0xcf0] sm:$0xff]
  %v7240 = vld [vmem:[#allocation3 + $0xcf8] sm:$0xff]
  %v7241 = vld [vmem:[#allocation3 + $0xd00] sm:$0xff]
  %v7242 = vld [vmem:[#allocation3 + $0xd08] sm:$0xff]
  %v7243 = vld [vmem:[#allocation3 + $0xd10] sm:$0xff]
  %v7244 = vld [vmem:[#allocation3 + $0xd18] sm:$0xff]
  %v7245 = vld [vmem:[#allocation3 + $0xd20] sm:$0xff]
  %v7246 = vld [vmem:[#allocation3 + $0xd28] sm:$0xff]
  %v7247 = vld [vmem:[#allocation3 + $0xd30] sm:$0xff]
  %v7248 = vld [vmem:[#allocation3 + $0xd38] sm:$0xff]
  %v7249 = vld [vmem:[#allocation3 + $0xd40] sm:$0xff]
  %v7250 = vld [vmem:[#allocation3 + $0xd48] sm:$0xff]
  %v7251 = vld [vmem:[#allocation3 + $0xd50] sm:$0xff]
  %v7252 = vld [vmem:[#allocation3 + $0xd58] sm:$0xff]
  %v7253 = vld [vmem:[#allocation3 + $0xd60] sm:$0xff]
  %v7254 = vld [vmem:[#allocation3 + $0xd68] sm:$0xff]
  %v7255 = vld [vmem:[#allocation3 + $0xd70] sm:$0xff]
  %v7256 = vld [vmem:[#allocation3 + $0xd78] sm:$0xff]
  %v7257 = vld [vmem:[#allocation3 + $0xd80] sm:$0xff]
  %v7258 = vld [vmem:[#allocation3 + $0xd88] sm:$0xff]
  %v7259 = vld [vmem:[#allocation3 + $0xd90] sm:$0xff]
  %v7260 = vld [vmem:[#allocation3 + $0xd98] sm:$0xff]
  %v7261 = vld [vmem:[#allocation3 + $0xda0] sm:$0xff]
  %v7262 = vld [vmem:[#allocation3 + $0xda8] sm:$0xff]
  %v7263 = vld [vmem:[#allocation3 + $0xdb0] sm:$0xff]
  %v7264 = vld [vmem:[#allocation3 + $0xdb8] sm:$0xff]
  %v7265 = vld [vmem:[#allocation3 + $0xdc0] sm:$0xff]
  %v7266 = vld [vmem:[#allocation3 + $0xdc8] sm:$0xff]
  %v7267 = vld [vmem:[#allocation3 + $0xdd0] sm:$0xff]
  %v7268 = vld [vmem:[#allocation3 + $0xdd8] sm:$0xff]
  %v7269 = vld [vmem:[#allocation3 + $0xde0] sm:$0xff]
  %v7270 = vld [vmem:[#allocation3 + $0xde8] sm:$0xff]
  %v7271 = vld [vmem:[#allocation3 + $0xdf0] sm:$0xff]
  %v7272 = vld [vmem:[#allocation3 + $0xdf8] sm:$0xff]
  %v7273 = vld [vmem:[#allocation3 + $0xe00] sm:$0xff]
  %v7274 = vld [vmem:[#allocation3 + $0xe08] sm:$0xff]
  %v7275 = vld [vmem:[#allocation3 + $0xe10] sm:$0xff]
  %v7276 = vld [vmem:[#allocation3 + $0xe18] sm:$0xff]
  %v7277 = vld [vmem:[#allocation3 + $0xe20] sm:$0xff]
  %v7278 = vld [vmem:[#allocation3 + $0xe28] sm:$0xff]
  %v7279 = vld [vmem:[#allocation3 + $0xe30] sm:$0xff]
  %v7280 = vld [vmem:[#allocation3 + $0xe38] sm:$0xff]
  %v7281 = vld [vmem:[#allocation3 + $0xe40] sm:$0xff]
  %v7282 = vld [vmem:[#allocation3 + $0xe48] sm:$0xff]
  %v7283 = vld [vmem:[#allocation3 + $0xe50] sm:$0xff]
  %v7284 = vld [vmem:[#allocation3 + $0xe58] sm:$0xff]
  %v7285 = vld [vmem:[#allocation3 + $0xe60] sm:$0xff]
  %v7286 = vld [vmem:[#allocation3 + $0xe68] sm:$0xff]
  %v7287 = vld [vmem:[#allocation3 + $0xe70] sm:$0xff]
  %v7288 = vld [vmem:[#allocation3 + $0xe78] sm:$0xff]
  %v7289 = vld [vmem:[#allocation3 + $0xe80] sm:$0xff]
  %v7290 = vld [vmem:[#allocation3 + $0xe88] sm:$0xff]
  %v7291 = vld [vmem:[#allocation3 + $0xe90] sm:$0xff]
  %v7292 = vld [vmem:[#allocation3 + $0xe98] sm:$0xff]
  %v7293 = vld [vmem:[#allocation3 + $0xea0] sm:$0xff]
  %v7294 = vld [vmem:[#allocation3 + $0xea8] sm:$0xff]
  %v7295 = vld [vmem:[#allocation3 + $0xeb0] sm:$0xff]
  %v7296 = vld [vmem:[#allocation3 + $0xeb8] sm:$0xff]
  %v7297 = vld [vmem:[#allocation3 + $0xec0] sm:$0xff]
  %v7298 = vld [vmem:[#allocation3 + $0xec8] sm:$0xff]
  %v7299 = vld [vmem:[#allocation3 + $0xed0] sm:$0xff]
  %v7300 = vld [vmem:[#allocation3 + $0xed8] sm:$0xff]
  %v7301 = vld [vmem:[#allocation3 + $0xee0] sm:$0xff]
  %v7302 = vld [vmem:[#allocation3 + $0xee8] sm:$0xff]
  %v7303 = vld [vmem:[#allocation3 + $0xef0] sm:$0xff]
  %v7304 = vld [vmem:[#allocation3 + $0xef8] sm:$0xff]
  %v7305 = vld [vmem:[#allocation3 + $0xf00] sm:$0xff]
  %v7306 = vld [vmem:[#allocation3 + $0xf08] sm:$0xff]
  %v7307 = vld [vmem:[#allocation3 + $0xf10] sm:$0xff]
  %v7308 = vld [vmem:[#allocation3 + $0xf18] sm:$0xff]
  %v7309 = vld [vmem:[#allocation3 + $0xf20] sm:$0xff]
  %v7310 = vld [vmem:[#allocation3 + $0xf28] sm:$0xff]
  %v7311 = vld [vmem:[#allocation3 + $0xf30] sm:$0xff]
  %v7312 = vld [vmem:[#allocation3 + $0xf38] sm:$0xff]
  %v7313 = vld [vmem:[#allocation3 + $0xf40] sm:$0xff]
  %v7314 = vld [vmem:[#allocation3 + $0xf48] sm:$0xff]
  %v7315 = vld [vmem:[#allocation3 + $0xf50] sm:$0xff]
  %v7316 = vld [vmem:[#allocation3 + $0xf58] sm:$0xff]
  %v7317 = vld [vmem:[#allocation3 + $0xf60] sm:$0xff]
  %v7318 = vld [vmem:[#allocation3 + $0xf68] sm:$0xff]
  %v7319 = vld [vmem:[#allocation3 + $0xf70] sm:$0xff]
  %v7320 = vld [vmem:[#allocation3 + $0xf78] sm:$0xff]
  %v7321 = vld [vmem:[#allocation3 + $0xf80] sm:$0xff]
  %v7322 = vld [vmem:[#allocation3 + $0xf88] sm:$0xff]
  %v7323 = vld [vmem:[#allocation3 + $0xf90] sm:$0xff]
  %v7324 = vld [vmem:[#allocation3 + $0xf98] sm:$0xff]
  %v7325 = vld [vmem:[#allocation3 + $0xfa0] sm:$0xff]
  %v7326 = vld [vmem:[#allocation3 + $0xfa8] sm:$0xff]
  %v7327 = vld [vmem:[#allocation3 + $0xfb0] sm:$0xff]
  %v7328 = vld [vmem:[#allocation3 + $0xfb8] sm:$0xff]
  %v7329 = vld [vmem:[#allocation3 + $0xfc0] sm:$0xff]
  %v7330 = vld [vmem:[#allocation3 + $0xfc8] sm:$0xff]
  %v7331 = vld [vmem:[#allocation3 + $0xfd0] sm:$0xff]
  %v7332 = vld [vmem:[#allocation3 + $0xfd8] sm:$0xff]
  %v7333 = vld [vmem:[#allocation3 + $0xfe0] sm:$0xff]
  %v7334 = vld [vmem:[#allocation3 + $0xfe8] sm:$0xff]
  %v7335 = vld [vmem:[#allocation3 + $0xff0] sm:$0xff]
  %v7336 = vld [vmem:[#allocation3 + $0xff8] sm:$0xff]
  %v7337 = vld [vmem:[#allocation3 + $0x1000] sm:$0xff]
  %v7338 = vld [vmem:[#allocation3 + $0x1008] sm:$0xff]
  %v7339 = vld [vmem:[#allocation3 + $0x1010] sm:$0xff]
  %v7340 = vld [vmem:[#allocation3 + $0x1018] sm:$0xff]
  %v7341 = vld [vmem:[#allocation3 + $0x1020] sm:$0xff]
  %v7342 = vld [vmem:[#allocation3 + $0x1028] sm:$0xff]
  %v7343 = vld [vmem:[#allocation3 + $0x1030] sm:$0xff]
  %v7344 = vld [vmem:[#allocation3 + $0x1038] sm:$0xff]
  %v7345 = vld [vmem:[#allocation3 + $0x1040] sm:$0xff]
  %v7346 = vld [vmem:[#allocation3 + $0x1048] sm:$0xff]
  %v7347 = vld [vmem:[#allocation3 + $0x1050] sm:$0xff]
  %v7348 = vld [vmem:[#allocation3 + $0x1058] sm:$0xff]
  %v7349 = vld [vmem:[#allocation3 + $0x1060] sm:$0xff]
  %v7350 = vld [vmem:[#allocation3 + $0x1068] sm:$0xff]
  %v7351 = vld [vmem:[#allocation3 + $0x1070] sm:$0xff]
  %v7352 = vld [vmem:[#allocation3 + $0x1078] sm:$0xff]
  %v7353 = vld [vmem:[#allocation3 + $0x1080] sm:$0xff]
  %v7354 = vld [vmem:[#allocation3 + $0x1088] sm:$0xff]
  %v7355 = vld [vmem:[#allocation3 + $0x1090] sm:$0xff]
  %v7356 = vld [vmem:[#allocation3 + $0x1098] sm:$0xff]
  %v7357 = vld [vmem:[#allocation3 + $0x10a0] sm:$0xff]
  %v7358 = vld [vmem:[#allocation3 + $0x10a8] sm:$0xff]
  %v7359 = vld [vmem:[#allocation3 + $0x10b0] sm:$0xff]
  %v7360 = vld [vmem:[#allocation3 + $0x10b8] sm:$0xff]
  %v7361 = vld [vmem:[#allocation3 + $0x10c0] sm:$0xff]
  %v7362 = vld [vmem:[#allocation3 + $0x10c8] sm:$0xff]
  %v7363 = vld [vmem:[#allocation3 + $0x10d0] sm:$0xff]
  %v7364 = vld [vmem:[#allocation3 + $0x10d8] sm:$0xff]
  %v7365 = vld [vmem:[#allocation3 + $0x10e0] sm:$0xff]
  %v7366 = vld [vmem:[#allocation3 + $0x10e8] sm:$0xff]
  %v7367 = vld [vmem:[#allocation3 + $0x10f0] sm:$0xff]
  %v7368 = vld [vmem:[#allocation3 + $0x10f8] sm:$0xff]
  %v7369 = vld [vmem:[#allocation3 + $0x1100] sm:$0xff]
  %v7370 = vld [vmem:[#allocation3 + $0x1108] sm:$0xff]
  %v7371 = vld [vmem:[#allocation3 + $0x1110] sm:$0xff]
  %v7372 = vld [vmem:[#allocation3 + $0x1118] sm:$0xff]
  %v7373 = vld [vmem:[#allocation3 + $0x1120] sm:$0xff]
  %v7374 = vld [vmem:[#allocation3 + $0x1128] sm:$0xff]
  %v7375 = vld [vmem:[#allocation3 + $0x1130] sm:$0xff]
  %v7376 = vld [vmem:[#allocation3 + $0x1138] sm:$0xff]
  %v7377 = vld [vmem:[#allocation3 + $0x1140] sm:$0xff]
  %v7378 = vld [vmem:[#allocation3 + $0x1148] sm:$0xff]
  %v7379 = vld [vmem:[#allocation3 + $0x1150] sm:$0xff]
  %v7380 = vld [vmem:[#allocation3 + $0x1158] sm:$0xff]
  %v7381 = vld [vmem:[#allocation3 + $0x1160] sm:$0xff]
  %v7382 = vld [vmem:[#allocation3 + $0x1168] sm:$0xff]
  %v7383 = vld [vmem:[#allocation3 + $0x1170] sm:$0xff]
  %v7384 = vld [vmem:[#allocation3 + $0x1178] sm:$0xff]
  %v7385 = vld [vmem:[#allocation3 + $0x1180] sm:$0xff]
  %v7386 = vld [vmem:[#allocation3 + $0x1188] sm:$0xff]
  %v7387 = vld [vmem:[#allocation3 + $0x1190] sm:$0xff]
  %v7388 = vld [vmem:[#allocation3 + $0x1198] sm:$0xff]
  %v7389 = vld [vmem:[#allocation3 + $0x11a0] sm:$0xff]
  %v7390 = vld [vmem:[#allocation3 + $0x11a8] sm:$0xff]
  %v7391 = vld [vmem:[#allocation3 + $0x11b0] sm:$0xff]
  %v7392 = vld [vmem:[#allocation3 + $0x11b8] sm:$0xff]
  %v7393 = vld [vmem:[#allocation3 + $0x11c0] sm:$0xff]
  %v7394 = vld [vmem:[#allocation3 + $0x11c8] sm:$0xff]
  %v7395 = vld [vmem:[#allocation3 + $0x11d0] sm:$0xff]
  %v7396 = vld [vmem:[#allocation3 + $0x11d8] sm:$0xff]
  %v7397 = vld [vmem:[#allocation3 + $0x11e0] sm:$0xff]
  %v7398 = vld [vmem:[#allocation3 + $0x11e8] sm:$0xff]
  %v7399 = vld [vmem:[#allocation3 + $0x11f0] sm:$0xff]
  %v7400 = vld [vmem:[#allocation3 + $0x11f8] sm:$0xff]
  %v7401 = vld [vmem:[%s5] sm:$0xff]
  %v7402 = vld [vmem:[%s5 + $0x8] sm:$0xff]
  %v7403 = vld [vmem:[%s5 + $0x10] sm:$0xff]
  %v7404 = vld [vmem:[%s5 + $0x18] sm:$0xff]
  %v7405 = vld [vmem:[%s5 + $0x20] sm:$0xff]
  %v7406 = vld [vmem:[%s5 + $0x28] sm:$0xff]
  %v7407 = vld [vmem:[%s5 + $0x30] sm:$0xff]
  %v7408 = vld [vmem:[%s5 + $0x38] sm:$0xff]
  %v7409 = vld [vmem:[%s5 + $0x40] sm:$0xff]
  %v7410 = vld [vmem:[%s5 + $0x48] sm:$0xff]
  %v7411 = vld [vmem:[%s5 + $0x50] sm:$0xff]
  %v7412 = vld [vmem:[%s5 + $0x58] sm:$0xff]
  %v7413 = vld [vmem:[%s5 + $0x60] sm:$0xff]
  %v7414 = vld [vmem:[%s5 + $0x68] sm:$0xff]
  %v7415 = vld [vmem:[%s5 + $0x70] sm:$0xff]
  %v7416 = vld [vmem:[%s5 + $0x78] sm:$0xff]
  %v7417 = vld [vmem:[%s5 + $0x80] sm:$0xff]
  %v7418 = vld [vmem:[%s5 + $0x88] sm:$0xff]
  %v7419 = vld [vmem:[%s5 + $0x90] sm:$0xff]
  %v7420 = vld [vmem:[%s5 + $0x98] sm:$0xff]
  %v7421 = vld [vmem:[%s5 + $0xa0] sm:$0xff]
  %v7422 = vld [vmem:[%s5 + $0xa8] sm:$0xff]
  %v7423 = vld [vmem:[%s5 + $0xb0] sm:$0xff]
  %v7424 = vld [vmem:[%s5 + $0xb8] sm:$0xff]
  %v7425 = vld [vmem:[%s5 + $0xc0] sm:$0xff]
  %v7426 = vld [vmem:[%s5 + $0xc8] sm:$0xff]
  %v7427 = vld [vmem:[%s5 + $0xd0] sm:$0xff]
  %v7428 = vld [vmem:[%s5 + $0xd8] sm:$0xff]
  %v7429 = vld [vmem:[%s5 + $0xe0] sm:$0xff]
  %v7430 = vld [vmem:[%s5 + $0xe8] sm:$0xff]
  %v7431 = vld [vmem:[%s5 + $0xf0] sm:$0xff]
  %v7432 = vld [vmem:[%s5 + $0xf8] sm:$0xff]
  %v7433 = vld [vmem:[%s5 + $0x100] sm:$0xff]
  %v7434 = vld [vmem:[%s5 + $0x108] sm:$0xff]
  %v7435 = vld [vmem:[%s5 + $0x110] sm:$0xff]
  %v7436 = vld [vmem:[%s5 + $0x118] sm:$0xff]
  %v7437 = vld [vmem:[%s5 + $0x120] sm:$0xff]
  %v7438 = vld [vmem:[%s5 + $0x128] sm:$0xff]
  %v7439 = vld [vmem:[%s5 + $0x130] sm:$0xff]
  %v7440 = vld [vmem:[%s5 + $0x138] sm:$0xff]
  %v7441 = vld [vmem:[%s5 + $0x140] sm:$0xff]
  %v7442 = vld [vmem:[%s5 + $0x148] sm:$0xff]
  %v7443 = vld [vmem:[%s5 + $0x150] sm:$0xff]
  %v7444 = vld [vmem:[%s5 + $0x158] sm:$0xff]
  %v7445 = vld [vmem:[%s5 + $0x160] sm:$0xff]
  %v7446 = vld [vmem:[%s5 + $0x168] sm:$0xff]
  %v7447 = vld [vmem:[%s5 + $0x170] sm:$0xff]
  %v7448 = vld [vmem:[%s5 + $0x178] sm:$0xff]
  %v7449 = vld [vmem:[%s5 + $0x180] sm:$0xff]
  %v7450 = vld [vmem:[%s5 + $0x188] sm:$0xff]
  %v7451 = vld [vmem:[%s5 + $0x190] sm:$0xff]
  %v7452 = vld [vmem:[%s5 + $0x198] sm:$0xff]
  %v7453 = vld [vmem:[%s5 + $0x1a0] sm:$0xff]
  %v7454 = vld [vmem:[%s5 + $0x1a8] sm:$0xff]
  %v7455 = vld [vmem:[%s5 + $0x1b0] sm:$0xff]
  %v7456 = vld [vmem:[%s5 + $0x1b8] sm:$0xff]
  %v7457 = vld [vmem:[%s5 + $0x1c0] sm:$0xff]
  %v7458 = vld [vmem:[%s5 + $0x1c8] sm:$0xff]
  %v7459 = vld [vmem:[%s5 + $0x1d0] sm:$0xff]
  %v7460 = vld [vmem:[%s5 + $0x1d8] sm:$0xff]
  %v7461 = vld [vmem:[%s5 + $0x1e0] sm:$0xff]
  %v7462 = vld [vmem:[%s5 + $0x1e8] sm:$0xff]
  %v7463 = vld [vmem:[%s5 + $0x1f0] sm:$0xff]
  %v7464 = vld [vmem:[%s5 + $0x1f8] sm:$0xff]
  %v7465 = vld [vmem:[%s5 + $0x200] sm:$0xff]
  %v7466 = vld [vmem:[%s5 + $0x208] sm:$0xff]
  %v7467 = vld [vmem:[%s5 + $0x210] sm:$0xff]
  %v7468 = vld [vmem:[%s5 + $0x218] sm:$0xff]
  %v7469 = vld [vmem:[%s5 + $0x220] sm:$0xff]
  %v7470 = vld [vmem:[%s5 + $0x228] sm:$0xff]
  %v7471 = vld [vmem:[%s5 + $0x230] sm:$0xff]
  %v7472 = vld [vmem:[%s5 + $0x238] sm:$0xff]
  %v7473 = vld [vmem:[%s5 + $0x240] sm:$0xff]
  %v7474 = vld [vmem:[%s5 + $0x248] sm:$0xff]
  %v7475 = vld [vmem:[%s5 + $0x250] sm:$0xff]
  %v7476 = vld [vmem:[%s5 + $0x258] sm:$0xff]
  %v7477 = vld [vmem:[%s5 + $0x260] sm:$0xff]
  %v7478 = vld [vmem:[%s5 + $0x268] sm:$0xff]
  %v7479 = vld [vmem:[%s5 + $0x270] sm:$0xff]
  %v7480 = vld [vmem:[%s5 + $0x278] sm:$0xff]
  %v7481 = vld [vmem:[%s5 + $0x280] sm:$0xff]
  %v7482 = vld [vmem:[%s5 + $0x288] sm:$0xff]
  %v7483 = vld [vmem:[%s5 + $0x290] sm:$0xff]
  %v7484 = vld [vmem:[%s5 + $0x298] sm:$0xff]
  %v7485 = vld [vmem:[%s5 + $0x2a0] sm:$0xff]
  %v7486 = vld [vmem:[%s5 + $0x2a8] sm:$0xff]
  %v7487 = vld [vmem:[%s5 + $0x2b0] sm:$0xff]
  %v7488 = vld [vmem:[%s5 + $0x2b8] sm:$0xff]
  %v7489 = vld [vmem:[%s5 + $0x2c0] sm:$0xff]
  %v7490 = vld [vmem:[%s5 + $0x2c8] sm:$0xff]
  %v7491 = vld [vmem:[%s5 + $0x2d0] sm:$0xff]
  %v7492 = vld [vmem:[%s5 + $0x2d8] sm:$0xff]
  %v7493 = vld [vmem:[%s5 + $0x2e0] sm:$0xff]
  %v7494 = vld [vmem:[%s5 + $0x2e8] sm:$0xff]
  %v7495 = vld [vmem:[%s5 + $0x2f0] sm:$0xff]
  %v7496 = vld [vmem:[%s5 + $0x2f8] sm:$0xff]
  %v7497 = vld [vmem:[%s5 + $0x300] sm:$0xff]
  %v7498 = vld [vmem:[%s5 + $0x308] sm:$0xff]
  %v7499 = vld [vmem:[%s5 + $0x310] sm:$0xff]
  %v7500 = vld [vmem:[%s5 + $0x318] sm:$0xff]
  %v7501 = vld [vmem:[%s5 + $0x320] sm:$0xff]
  %v7502 = vld [vmem:[%s5 + $0x328] sm:$0xff]
  %v7503 = vld [vmem:[%s5 + $0x330] sm:$0xff]
  %v7504 = vld [vmem:[%s5 + $0x338] sm:$0xff]
  %v7505 = vld [vmem:[%s5 + $0x340] sm:$0xff]
  %v7506 = vld [vmem:[%s5 + $0x348] sm:$0xff]
  %v7507 = vld [vmem:[%s5 + $0x350] sm:$0xff]
  %v7508 = vld [vmem:[%s5 + $0x358] sm:$0xff]
  %v7509 = vld [vmem:[%s5 + $0x360] sm:$0xff]
  %v7510 = vld [vmem:[%s5 + $0x368] sm:$0xff]
  %v7511 = vld [vmem:[%s5 + $0x370] sm:$0xff]
  %v7512 = vld [vmem:[%s5 + $0x378] sm:$0xff]
  %v7513 = vld [vmem:[%s5 + $0x380] sm:$0xff]
  %v7514 = vld [vmem:[%s5 + $0x388] sm:$0xff]
  %v7515 = vld [vmem:[%s5 + $0x390] sm:$0xff]
  %v7516 = vld [vmem:[%s5 + $0x398] sm:$0xff]
  %v7517 = vld [vmem:[%s5 + $0x3a0] sm:$0xff]
  %v7518 = vld [vmem:[%s5 + $0x3a8] sm:$0xff]
  %v7519 = vld [vmem:[%s5 + $0x3b0] sm:$0xff]
  %v7520 = vld [vmem:[%s5 + $0x3b8] sm:$0xff]
  %v7521 = vld [vmem:[%s5 + $0x3c0] sm:$0xff]
  %v7522 = vld [vmem:[%s5 + $0x3c8] sm:$0xff]
  %v7523 = vld [vmem:[%s5 + $0x3d0] sm:$0xff]
  %v7524 = vld [vmem:[%s5 + $0x3d8] sm:$0xff]
  %v7525 = vld [vmem:[%s5 + $0x3e0] sm:$0xff]
  %v7526 = vld [vmem:[%s5 + $0x3e8] sm:$0xff]
  %v7527 = vld [vmem:[%s5 + $0x3f0] sm:$0xff]
  %v7528 = vld [vmem:[%s5 + $0x3f8] sm:$0xff]
  %v7529 = vld [vmem:[%s5 + $0x400] sm:$0xff]
  %v7530 = vld [vmem:[%s5 + $0x408] sm:$0xff]
  %v7531 = vld [vmem:[%s5 + $0x410] sm:$0xff]
  %v7532 = vld [vmem:[%s5 + $0x418] sm:$0xff]
  %v7533 = vld [vmem:[%s5 + $0x420] sm:$0xff]
  %v7534 = vld [vmem:[%s5 + $0x428] sm:$0xff]
  %v7535 = vld [vmem:[%s5 + $0x430] sm:$0xff]
  %v7536 = vld [vmem:[%s5 + $0x438] sm:$0xff]
  %v7537 = vld [vmem:[%s5 + $0x440] sm:$0xff]
  %v7538 = vld [vmem:[%s5 + $0x448] sm:$0xff]
  %v7539 = vld [vmem:[%s5 + $0x450] sm:$0xff]
  %v7540 = vld [vmem:[%s5 + $0x458] sm:$0xff]
  %v7541 = vld [vmem:[%s5 + $0x460] sm:$0xff]
  %v7542 = vld [vmem:[%s5 + $0x468] sm:$0xff]
  %v7543 = vld [vmem:[%s5 + $0x470] sm:$0xff]
  %v7544 = vld [vmem:[%s5 + $0x478] sm:$0xff]
  %7545 = vmatprep.subr.mxu0 0.0
  %7546 = vmatpush1.msra.mxu0 %v7416
  %7547 = vmatprep.subr.mxu0 0.0
  %7548 = vmatpush1.msra.mxu0 %v7415
  %7549 = vmatprep.subr.mxu0 0.0
  %7550 = vmatpush1.msra.mxu0 %v7414
  %7551 = vmatprep.subr.mxu0 0.0
  %7552 = vmatpush1.msra.mxu0 %v7413
  %7553 = vmatprep.subr.mxu0 0.0
  %7554 = vmatpush1.msra.mxu0 %v7412
  %7555 = vmatprep.subr.mxu0 0.0
  %7556 = vmatpush1.msra.mxu0 %v7411
  %7557 = vmatprep.subr.mxu0 0.0
  %7558 = vmatpush1.msra.mxu0 %v7410
  %7559 = vmatprep.subr.mxu0 0.0
  %7560 = vmatpush1.msra.mxu0 %v7409
  %7561 = vmatprep.subr.mxu0 0.0
  %7562 = vmatpush1.msra.mxu0 %v7408
  %7563 = vmatprep.subr.mxu0 0.0
  %7564 = vmatpush1.msra.mxu0 %v7407
  %7565 = vmatprep.subr.mxu0 0.0
  %7566 = vmatpush1.msra.mxu0 %v7406
  %7567 = vmatprep.subr.mxu0 0.0
  %7568 = vmatpush1.msra.mxu0 %v7405
  %7569 = vmatprep.subr.mxu0 0.0
  %7570 = vmatpush1.msra.mxu0 %v7404
  %7571 = vmatprep.subr.mxu0 0.0
  %7572 = vmatpush1.msra.mxu0 %v7403
  %7573 = vmatprep.subr.mxu0 0.0
  %7574 = vmatpush1.msra.mxu0 %v7402
  %7575 = vmatprep.subr.mxu0 0.0
  %7576 = vmatpush1.msra.mxu0 %v7401
  %7577 = vmatprep.subr.mxu0 0.0
  %7578 = vmatpush2.msra.mxu0 %v7432
  %7579 = vmatprep.subr.mxu0 0.0
  %7580 = vmatpush2.msra.mxu0 %v7431
  %7581 = vmatprep.subr.mxu0 0.0
  %7582 = vmatpush2.msra.mxu0 %v7430
  %7583 = vmatprep.subr.mxu0 0.0
  %7584 = vmatpush2.msra.mxu0 %v7429
  %7585 = vmatprep.subr.mxu0 0.0
  %7586 = vmatpush2.msra.mxu0 %v7428
  %7587 = vmatprep.subr.mxu0 0.0
  %7588 = vmatpush2.msra.mxu0 %v7427
  %7589 = vmatprep.subr.mxu0 0.0
  %7590 = vmatpush2.msra.mxu0 %v7426
  %7591 = vmatprep.subr.mxu0 0.0
  %7592 = vmatpush2.msra.mxu0 %v7425
  %7593 = vmatprep.subr.mxu0 0.0
  %7594 = vmatpush2.msra.mxu0 %v7424
  %7595 = vmatprep.subr.mxu0 0.0
  %7596 = vmatpush2.msra.mxu0 %v7423
  %7597 = vmatprep.subr.mxu0 0.0
  %7598 = vmatpush2.msra.mxu0 %v7422
  %7599 = vmatprep.subr.mxu0 0.0
  %7600 = vmatpush2.msra.mxu0 %v7421
  %7601 = vmatprep.subr.mxu0 0.0
  %7602 = vmatpush2.msra.mxu0 %v7420
  %7603 = vmatprep.subr.mxu0 0.0
  %7604 = vmatpush2.msra.mxu0 %v7419
  %7605 = vmatprep.subr.mxu0 0.0
  %7606 = vmatpush2.msra.mxu0 %v7418
  %7607 = vmatprep.subr.mxu0 0.0
  %7608 = vmatpush2.msra.mxu0 %v7417
  %7609 = vmatprep.mubr.f32.mxu0 %v6826
  %7610 = vmatmul.mubr.f32.gmra.mxu0 %v6825
  %v7611 = vpop.f32.mrf.mxu0
  %v7612 = vadd.f32 0.0, %v7611
  %v7613 = vpop.f32.mrf.mxu0
  %7614 = vmatprep.mubr.f32.mxu0 %v6835
  %7615 = vmatmul.mubr.f32.gmra.mxu0 %v6834
  %v7616 = vpop.f32.mrf.mxu0
  %v7617 = vadd.f32 0.0, %v7616
  %v7618 = vpop.f32.mrf.mxu0
  %7619 = vmatprep.mubr.f32.mxu0 %v6844
  %7620 = vmatmul.mubr.f32.gmra.mxu0 %v6843
  %v7621 = vpop.f32.mrf.mxu0
  %v7622 = vadd.f32 0.0, %v7621
  %v7623 = vpop.f32.mrf.mxu0
  %7624 = vmatprep.mubr.f32.mxu0 %v6853
  %7625 = vmatmul.mubr.f32.gmra.mxu0 %v6852
  %v7626 = vpop.f32.mrf.mxu0
  %v7627 = vadd.f32 0.0, %v7626
  %v7628 = vpop.f32.mrf.mxu0
  %7629 = vmatprep.mubr.f32.mxu0 %v6862
  %7630 = vmatmul.mubr.f32.gmra.mxu0 %v6861
  %v7631 = vpop.f32.mrf.mxu0
  %v7632 = vadd.f32 0.0, %v7631
  %v7633 = vpop.f32.mrf.mxu0
  %7634 = vmatprep.mubr.f32.mxu0 %v6871
  %7635 = vmatmul.mubr.f32.gmra.mxu0 %v6870
  %v7636 = vpop.f32.mrf.mxu0
  %v7637 = vadd.f32 0.0, %v7636
  %v7638 = vpop.f32.mrf.mxu0
  %7639 = vmatprep.mubr.f32.mxu0 %v6880
  %7640 = vmatmul.mubr.f32.gmra.mxu0 %v6879
  %v7641 = vpop.f32.mrf.mxu0
  %v7642 = vadd.f32 0.0, %v7641
  %v7643 = vpop.f32.mrf.mxu0
  %7644 = vmatprep.mubr.f32.mxu0 %v6889
  %7645 = vmatmul.mubr.f32.gmra.mxu0 %v6888
  %v7646 = vpop.f32.mrf.mxu0
  %v7647 = vadd.f32 0.0, %v7646
  %v7648 = vpop.f32.mrf.mxu0
  %7649 = vmatprep.mubr.f32.mxu0 %v6898
  %7650 = vmatmul.mubr.f32.gmra.mxu0 %v6897
  %v7651 = vpop.f32.mrf.mxu0
  %v7652 = vadd.f32 0.0, %v7651
  %v7653 = vpop.f32.mrf.mxu0
  %7654 = vmatprep.mubr.f32.mxu0 %v6907
  %7655 = vmatmul.mubr.f32.gmra.mxu0 %v6906
  %v7656 = vpop.f32.mrf.mxu0
  %v7657 = vadd.f32 0.0, %v7656
  %v7658 = vpop.f32.mrf.mxu0
  %7659 = vmatprep.mubr.f32.mxu0 %v6916
  %7660 = vmatmul.mubr.f32.gmra.mxu0 %v6915
  %v7661 = vpop.f32.mrf.mxu0
  %v7662 = vadd.f32 0.0, %v7661
  %v7663 = vpop.f32.mrf.mxu0
  %7664 = vmatprep.mubr.f32.mxu0 %v6925
  %7665 = vmatmul.mubr.f32.gmra.mxu0 %v6924
  %v7666 = vpop.f32.mrf.mxu0
  %v7667 = vadd.f32 0.0, %v7666
  %v7668 = vpop.f32.mrf.mxu0
  %7669 = vmatprep.mubr.f32.mxu0 %v6934
  %7670 = vmatmul.mubr.f32.gmra.mxu0 %v6933
  %v7671 = vpop.f32.mrf.mxu0
  %v7672 = vadd.f32 0.0, %v7671
  %v7673 = vpop.f32.mrf.mxu0
  %7674 = vmatprep.mubr.f32.mxu0 %v6943
  %7675 = vmatmul.mubr.f32.gmra.mxu0 %v6942
  %v7676 = vpop.f32.mrf.mxu0
  %v7677 = vadd.f32 0.0, %v7676
  %v7678 = vpop.f32.mrf.mxu0
  %7679 = vmatprep.mubr.f32.mxu0 %v6952
  %7680 = vmatmul.mubr.f32.gmra.mxu0 %v6951
  %v7681 = vpop.f32.mrf.mxu0
  %v7682 = vadd.f32 0.0, %v7681
  %v7683 = vpop.f32.mrf.mxu0
  %7684 = vmatprep.mubr.f32.mxu0 %v6961
  %7685 = vmatmul.mubr.f32.gmra.mxu0 %v6960
  %v7686 = vpop.f32.mrf.mxu0
  %v7687 = vadd.f32 0.0, %v7686
  %v7688 = vpop.f32.mrf.mxu0
  %7689 = vmatprep.mubr.f32.mxu0 %v6970
  %7690 = vmatmul.mubr.f32.gmra.mxu0 %v6969
  %v7691 = vpop.f32.mrf.mxu0
  %v7692 = vadd.f32 0.0, %v7691
  %v7693 = vpop.f32.mrf.mxu0
  %7694 = vmatprep.mubr.f32.mxu0 %v6979
  %7695 = vmatmul.mubr.f32.gmra.mxu0 %v6978
  %v7696 = vpop.f32.mrf.mxu0
  %v7697 = vadd.f32 0.0, %v7696
  %v7698 = vpop.f32.mrf.mxu0
  %7699 = vmatprep.mubr.f32.mxu0 %v6988
  %7700 = vmatmul.mubr.f32.gmra.mxu0 %v6987
  %v7701 = vpop.f32.mrf.mxu0
  %v7702 = vadd.f32 0.0, %v7701
  %v7703 = vpop.f32.mrf.mxu0
  %7704 = vmatprep.mubr.f32.mxu0 %v6997
  %7705 = vmatmul.mubr.f32.gmra.mxu0 %v6996
  %v7706 = vpop.f32.mrf.mxu0
  %v7707 = vadd.f32 0.0, %v7706
  %v7708 = vpop.f32.mrf.mxu0
  %7709 = vmatprep.mubr.f32.mxu0 %v7006
  %7710 = vmatmul.mubr.f32.gmra.mxu0 %v7005
  %v7711 = vpop.f32.mrf.mxu0
  %v7712 = vadd.f32 0.0, %v7711
  %v7713 = vpop.f32.mrf.mxu0
  %7714 = vmatprep.mubr.f32.mxu0 %v7015
  %7715 = vmatmul.mubr.f32.gmra.mxu0 %v7014
  %v7716 = vpop.f32.mrf.mxu0
  %v7717 = vadd.f32 0.0, %v7716
  %v7718 = vpop.f32.mrf.mxu0
  %7719 = vmatprep.mubr.f32.mxu0 %v7024
  %7720 = vmatmul.mubr.f32.gmra.mxu0 %v7023
  %v7721 = vpop.f32.mrf.mxu0
  %v7722 = vadd.f32 0.0, %v7721
  %v7723 = vpop.f32.mrf.mxu0
  %7724 = vmatprep.mubr.f32.mxu0 %v7033
  %7725 = vmatmul.mubr.f32.gmra.mxu0 %v7032
  %v7726 = vpop.f32.mrf.mxu0
  %v7727 = vadd.f32 0.0, %v7726
  %v7728 = vpop.f32.mrf.mxu0
  %7729 = vmatprep.mubr.f32.mxu0 %v7042
  %7730 = vmatmul.mubr.f32.gmra.mxu0 %v7041
  %v7731 = vpop.f32.mrf.mxu0
  %v7732 = vadd.f32 0.0, %v7731
  %v7733 = vpop.f32.mrf.mxu0
  %7734 = vmatprep.mubr.f32.mxu0 %v7051
  %7735 = vmatmul.mubr.f32.gmra.mxu0 %v7050
  %v7736 = vpop.f32.mrf.mxu0
  %v7737 = vadd.f32 0.0, %v7736
  %v7738 = vpop.f32.mrf.mxu0
  %7739 = vmatprep.mubr.f32.mxu0 %v7060
  %7740 = vmatmul.mubr.f32.gmra.mxu0 %v7059
  %v7741 = vpop.f32.mrf.mxu0
  %v7742 = vadd.f32 0.0, %v7741
  %v7743 = vpop.f32.mrf.mxu0
  %7744 = vmatprep.mubr.f32.mxu0 %v7069
  %7745 = vmatmul.mubr.f32.gmra.mxu0 %v7068
  %v7746 = vpop.f32.mrf.mxu0
  %v7747 = vadd.f32 0.0, %v7746
  %v7748 = vpop.f32.mrf.mxu0
  %7749 = vmatprep.mubr.f32.mxu0 %v7078
  %7750 = vmatmul.mubr.f32.gmra.mxu0 %v7077
  %v7751 = vpop.f32.mrf.mxu0
  %v7752 = vadd.f32 0.0, %v7751
  %v7753 = vpop.f32.mrf.mxu0
  %7754 = vmatprep.mubr.f32.mxu0 %v7087
  %7755 = vmatmul.mubr.f32.gmra.mxu0 %v7086
  %v7756 = vpop.f32.mrf.mxu0
  %v7757 = vadd.f32 0.0, %v7756
  %v7758 = vpop.f32.mrf.mxu0
  %7759 = vmatprep.mubr.f32.mxu0 %v7096
  %7760 = vmatmul.mubr.f32.gmra.mxu0 %v7095
  %v7761 = vpop.f32.mrf.mxu0
  %v7762 = vadd.f32 0.0, %v7761
  %v7763 = vpop.f32.mrf.mxu0
  %7764 = vmatprep.mubr.f32.mxu0 %v7105
  %7765 = vmatmul.mubr.f32.gmra.mxu0 %v7104
  %v7766 = vpop.f32.mrf.mxu0
  %v7767 = vadd.f32 0.0, %v7766
  %v7768 = vpop.f32.mrf.mxu0
  %7769 = vmatprep.mubr.f32.mxu0 %v7114
  %7770 = vmatmul.mubr.f32.gmra.mxu0 %v7113
  %v7771 = vpop.f32.mrf.mxu0
  %v7772 = vadd.f32 0.0, %v7771
  %v7773 = vpop.f32.mrf.mxu0
  %7774 = vmatprep.mubr.f32.mxu0 %v7123
  %7775 = vmatmul.mubr.f32.gmra.mxu0 %v7122
  %v7776 = vpop.f32.mrf.mxu0
  %v7777 = vadd.f32 0.0, %v7776
  %v7778 = vpop.f32.mrf.mxu0
  %7779 = vmatprep.mubr.f32.mxu0 %v7132
  %7780 = vmatmul.mubr.f32.gmra.mxu0 %v7131
  %v7781 = vpop.f32.mrf.mxu0
  %v7782 = vadd.f32 0.0, %v7781
  %v7783 = vpop.f32.mrf.mxu0
  %7784 = vmatprep.mubr.f32.mxu0 %v7141
  %7785 = vmatmul.mubr.f32.gmra.mxu0 %v7140
  %v7786 = vpop.f32.mrf.mxu0
  %v7787 = vadd.f32 0.0, %v7786
  %v7788 = vpop.f32.mrf.mxu0
  %7789 = vmatprep.mubr.f32.mxu0 %v7150
  %7790 = vmatmul.mubr.f32.gmra.mxu0 %v7149
  %v7791 = vpop.f32.mrf.mxu0
  %v7792 = vadd.f32 0.0, %v7791
  %v7793 = vpop.f32.mrf.mxu0
  %7794 = vmatprep.mubr.f32.mxu0 %v7159
  %7795 = vmatmul.mubr.f32.gmra.mxu0 %v7158
  %v7796 = vpop.f32.mrf.mxu0
  %v7797 = vadd.f32 0.0, %v7796
  %v7798 = vpop.f32.mrf.mxu0
  %7799 = vmatprep.mubr.f32.mxu0 %v7168
  %7800 = vmatmul.mubr.f32.gmra.mxu0 %v7167
  %v7801 = vpop.f32.mrf.mxu0
  %v7802 = vadd.f32 0.0, %v7801
  %v7803 = vpop.f32.mrf.mxu0
  %7804 = vmatprep.mubr.f32.mxu0 %v7177
  %7805 = vmatmul.mubr.f32.gmra.mxu0 %v7176
  %v7806 = vpop.f32.mrf.mxu0
  %v7807 = vadd.f32 0.0, %v7806
  %v7808 = vpop.f32.mrf.mxu0
  %7809 = vmatprep.mubr.f32.mxu0 %v7186
  %7810 = vmatmul.mubr.f32.gmra.mxu0 %v7185
  %v7811 = vpop.f32.mrf.mxu0
  %v7812 = vadd.f32 0.0, %v7811
  %v7813 = vpop.f32.mrf.mxu0
  %7814 = vmatprep.mubr.f32.mxu0 %v7195
  %7815 = vmatmul.mubr.f32.gmra.mxu0 %v7194
  %v7816 = vpop.f32.mrf.mxu0
  %v7817 = vadd.f32 0.0, %v7816
  %v7818 = vpop.f32.mrf.mxu0
  %7819 = vmatprep.mubr.f32.mxu0 %v7204
  %7820 = vmatmul.mubr.f32.gmra.mxu0 %v7203
  %v7821 = vpop.f32.mrf.mxu0
  %v7822 = vadd.f32 0.0, %v7821
  %v7823 = vpop.f32.mrf.mxu0
  %7824 = vmatprep.mubr.f32.mxu0 %v7213
  %7825 = vmatmul.mubr.f32.gmra.mxu0 %v7212
  %v7826 = vpop.f32.mrf.mxu0
  %v7827 = vadd.f32 0.0, %v7826
  %v7828 = vpop.f32.mrf.mxu0
  %7829 = vmatprep.mubr.f32.mxu0 %v7222
  %7830 = vmatmul.mubr.f32.gmra.mxu0 %v7221
  %v7831 = vpop.f32.mrf.mxu0
  %v7832 = vadd.f32 0.0, %v7831
  %v7833 = vpop.f32.mrf.mxu0
  %7834 = vmatprep.mubr.f32.mxu0 %v7231
  %7835 = vmatmul.mubr.f32.gmra.mxu0 %v7230
  %v7836 = vpop.f32.mrf.mxu0
  %v7837 = vadd.f32 0.0, %v7836
  %v7838 = vpop.f32.mrf.mxu0
  %7839 = vmatprep.mubr.f32.mxu0 %v7240
  %7840 = vmatmul.mubr.f32.gmra.mxu0 %v7239
  %v7841 = vpop.f32.mrf.mxu0
  %v7842 = vadd.f32 0.0, %v7841
  %v7843 = vpop.f32.mrf.mxu0
  %7844 = vmatprep.mubr.f32.mxu0 %v7249
  %7845 = vmatmul.mubr.f32.gmra.mxu0 %v7248
  %v7846 = vpop.f32.mrf.mxu0
  %v7847 = vadd.f32 0.0, %v7846
  %v7848 = vpop.f32.mrf.mxu0
  %7849 = vmatprep.mubr.f32.mxu0 %v7258
  %7850 = vmatmul.mubr.f32.gmra.mxu0 %v7257
  %v7851 = vpop.f32.mrf.mxu0
  %v7852 = vadd.f32 0.0, %v7851
  %v7853 = vpop.f32.mrf.mxu0
  %7854 = vmatprep.mubr.f32.mxu0 %v7267
  %7855 = vmatmul.mubr.f32.gmra.mxu0 %v7266
  %v7856 = vpop.f32.mrf.mxu0
  %v7857 = vadd.f32 0.0, %v7856
  %v7858 = vpop.f32.mrf.mxu0
  %7859 = vmatprep.mubr.f32.mxu0 %v7276
  %7860 = vmatmul.mubr.f32.gmra.mxu0 %v7275
  %v7861 = vpop.f32.mrf.mxu0
  %v7862 = vadd.f32 0.0, %v7861
  %v7863 = vpop.f32.mrf.mxu0
  %7864 = vmatprep.mubr.f32.mxu0 %v7285
  %7865 = vmatmul.mubr.f32.gmra.mxu0 %v7284
  %v7866 = vpop.f32.mrf.mxu0
  %v7867 = vadd.f32 0.0, %v7866
  %v7868 = vpop.f32.mrf.mxu0
  %7869 = vmatprep.mubr.f32.mxu0 %v7294
  %7870 = vmatmul.mubr.f32.gmra.mxu0 %v7293
  %v7871 = vpop.f32.mrf.mxu0
  %v7872 = vadd.f32 0.0, %v7871
  %v7873 = vpop.f32.mrf.mxu0
  %7874 = vmatprep.mubr.f32.mxu0 %v7303
  %7875 = vmatmul.mubr.f32.gmra.mxu0 %v7302
  %v7876 = vpop.f32.mrf.mxu0
  %v7877 = vadd.f32 0.0, %v7876
  %v7878 = vpop.f32.mrf.mxu0
  %7879 = vmatprep.mubr.f32.mxu0 %v7312
  %7880 = vmatmul.mubr.f32.gmra.mxu0 %v7311
  %v7881 = vpop.f32.mrf.mxu0
  %v7882 = vadd.f32 0.0, %v7881
  %v7883 = vpop.f32.mrf.mxu0
  %7884 = vmatprep.mubr.f32.mxu0 %v7321
  %7885 = vmatmul.mubr.f32.gmra.mxu0 %v7320
  %v7886 = vpop.f32.mrf.mxu0
  %v7887 = vadd.f32 0.0, %v7886
  %v7888 = vpop.f32.mrf.mxu0
  %7889 = vmatprep.mubr.f32.mxu0 %v7330
  %7890 = vmatmul.mubr.f32.gmra.mxu0 %v7329
  %v7891 = vpop.f32.mrf.mxu0
  %v7892 = vadd.f32 0.0, %v7891
  %v7893 = vpop.f32.mrf.mxu0
  %7894 = vmatprep.mubr.f32.mxu0 %v7339
  %7895 = vmatmul.mubr.f32.gmra.mxu0 %v7338
  %v7896 = vpop.f32.mrf.mxu0
  %v7897 = vadd.f32 0.0, %v7896
  %v7898 = vpop.f32.mrf.mxu0
  %7899 = vmatprep.mubr.f32.mxu0 %v7348
  %7900 = vmatmul.mubr.f32.gmra.mxu0 %v7347
  %v7901 = vpop.f32.mrf.mxu0
  %v7902 = vadd.f32 0.0, %v7901
  %v7903 = vpop.f32.mrf.mxu0
  %7904 = vmatprep.mubr.f32.mxu0 %v7357
  %7905 = vmatmul.mubr.f32.gmra.mxu0 %v7356
  %v7906 = vpop.f32.mrf.mxu0
  %v7907 = vadd.f32 0.0, %v7906
  %v7908 = vpop.f32.mrf.mxu0
  %7909 = vmatprep.mubr.f32.mxu0 %v7366
  %7910 = vmatmul.mubr.f32.gmra.mxu0 %v7365
  %v7911 = vpop.f32.mrf.mxu0
  %v7912 = vadd.f32 0.0, %v7911
  %v7913 = vpop.f32.mrf.mxu0
  %7914 = vmatprep.mubr.f32.mxu0 %v7375
  %7915 = vmatmul.mubr.f32.gmra.mxu0 %v7374
  %v7916 = vpop.f32.mrf.mxu0
  %v7917 = vadd.f32 0.0, %v7916
  %v7918 = vpop.f32.mrf.mxu0
  %7919 = vmatprep.mubr.f32.mxu0 %v7384
  %7920 = vmatmul.mubr.f32.gmra.mxu0 %v7383
  %v7921 = vpop.f32.mrf.mxu0
  %v7922 = vadd.f32 0.0, %v7921
  %v7923 = vpop.f32.mrf.mxu0
  %7924 = vmatprep.mubr.f32.mxu0 %v7393
  %7925 = vmatmul.mubr.f32.gmra.mxu0 %v7392
  %v7926 = vpop.f32.mrf.mxu0
  %v7927 = vadd.f32 0.0, %v7926
  %v7928 = vpop.f32.mrf.mxu0
  %7929 = vdwg.mxu0
  %7930 = vmatprep.subr.mxu0 0.0
  %7931 = vmatpush1.msra.mxu0 %v7448
  %7932 = vmatprep.subr.mxu0 0.0
  %7933 = vmatpush1.msra.mxu0 %v7447
  %7934 = vmatprep.subr.mxu0 0.0
  %7935 = vmatpush1.msra.mxu0 %v7446
  %7936 = vmatprep.subr.mxu0 0.0
  %7937 = vmatpush1.msra.mxu0 %v7445
  %7938 = vmatprep.subr.mxu0 0.0
  %7939 = vmatpush1.msra.mxu0 %v7444
  %7940 = vmatprep.subr.mxu0 0.0
  %7941 = vmatpush1.msra.mxu0 %v7443
  %7942 = vmatprep.subr.mxu0 0.0
  %7943 = vmatpush1.msra.mxu0 %v7442
  %7944 = vmatprep.subr.mxu0 0.0
  %7945 = vmatpush1.msra.mxu0 %v7441
  %7946 = vmatprep.subr.mxu0 0.0
  %7947 = vmatpush1.msra.mxu0 %v7440
  %7948 = vmatprep.subr.mxu0 0.0
  %7949 = vmatpush1.msra.mxu0 %v7439
  %7950 = vmatprep.subr.mxu0 0.0
  %7951 = vmatpush1.msra.mxu0 %v7438
  %7952 = vmatprep.subr.mxu0 0.0
  %7953 = vmatpush1.msra.mxu0 %v7437
  %7954 = vmatprep.subr.mxu0 0.0
  %7955 = vmatpush1.msra.mxu0 %v7436
  %7956 = vmatprep.subr.mxu0 0.0
  %7957 = vmatpush1.msra.mxu0 %v7435
  %7958 = vmatprep.subr.mxu0 0.0
  %7959 = vmatpush1.msra.mxu0 %v7434
  %7960 = vmatprep.subr.mxu0 0.0
  %7961 = vmatpush1.msra.mxu0 %v7433
  %7962 = vmatprep.subr.mxu0 0.0
  %7963 = vmatpush2.msra.mxu0 %v7464
  %7964 = vmatprep.subr.mxu0 0.0
  %7965 = vmatpush2.msra.mxu0 %v7463
  %7966 = vmatprep.subr.mxu0 0.0
  %7967 = vmatpush2.msra.mxu0 %v7462
  %7968 = vmatprep.subr.mxu0 0.0
  %7969 = vmatpush2.msra.mxu0 %v7461
  %7970 = vmatprep.subr.mxu0 0.0
  %7971 = vmatpush2.msra.mxu0 %v7460
  %7972 = vmatprep.subr.mxu0 0.0
  %7973 = vmatpush2.msra.mxu0 %v7459
  %7974 = vmatprep.subr.mxu0 0.0
  %7975 = vmatpush2.msra.mxu0 %v7458
  %7976 = vmatprep.subr.mxu0 0.0
  %7977 = vmatpush2.msra.mxu0 %v7457
  %7978 = vmatprep.subr.mxu0 0.0
  %7979 = vmatpush2.msra.mxu0 %v7456
  %7980 = vmatprep.subr.mxu0 0.0
  %7981 = vmatpush2.msra.mxu0 %v7455
  %7982 = vmatprep.subr.mxu0 0.0
  %7983 = vmatpush2.msra.mxu0 %v7454
  %7984 = vmatprep.subr.mxu0 0.0
  %7985 = vmatpush2.msra.mxu0 %v7453
  %7986 = vmatprep.subr.mxu0 0.0
  %7987 = vmatpush2.msra.mxu0 %v7452
  %7988 = vmatprep.subr.mxu0 0.0
  %7989 = vmatpush2.msra.mxu0 %v7451
  %7990 = vmatprep.subr.mxu0 0.0
  %7991 = vmatpush2.msra.mxu0 %v7450
  %7992 = vmatprep.subr.mxu0 0.0
  %7993 = vmatpush2.msra.mxu0 %v7449
  %7994 = vmatprep.mubr.f32.mxu0 %v6828
  %7995 = vmatmul.mubr.f32.gmra.mxu0 %v6827
  %v7996 = vpop.f32.mrf.mxu0
  %v7997 = vadd.f32 %v7612, %v7996
  %v7998 = vpop.f32.mrf.mxu0
  %7999 = vmatprep.mubr.f32.mxu0 %v6837
  %8000 = vmatmul.mubr.f32.gmra.mxu0 %v6836
  %v8001 = vpop.f32.mrf.mxu0
  %v8002 = vadd.f32 %v7617, %v8001
  %v8003 = vpop.f32.mrf.mxu0
  %8004 = vmatprep.mubr.f32.mxu0 %v6846
  %8005 = vmatmul.mubr.f32.gmra.mxu0 %v6845
  %v8006 = vpop.f32.mrf.mxu0
  %v8007 = vadd.f32 %v7622, %v8006
  %v8008 = vpop.f32.mrf.mxu0
  %8009 = vmatprep.mubr.f32.mxu0 %v6855
  %8010 = vmatmul.mubr.f32.gmra.mxu0 %v6854
  %v8011 = vpop.f32.mrf.mxu0
  %v8012 = vadd.f32 %v7627, %v8011
  %v8013 = vpop.f32.mrf.mxu0
  %8014 = vmatprep.mubr.f32.mxu0 %v6864
  %8015 = vmatmul.mubr.f32.gmra.mxu0 %v6863
  %v8016 = vpop.f32.mrf.mxu0
  %v8017 = vadd.f32 %v7632, %v8016
  %v8018 = vpop.f32.mrf.mxu0
  %8019 = vmatprep.mubr.f32.mxu0 %v6873
  %8020 = vmatmul.mubr.f32.gmra.mxu0 %v6872
  %v8021 = vpop.f32.mrf.mxu0
  %v8022 = vadd.f32 %v7637, %v8021
  %v8023 = vpop.f32.mrf.mxu0
  %8024 = vmatprep.mubr.f32.mxu0 %v6882
  %8025 = vmatmul.mubr.f32.gmra.mxu0 %v6881
  %v8026 = vpop.f32.mrf.mxu0
  %v8027 = vadd.f32 %v7642, %v8026
  %v8028 = vpop.f32.mrf.mxu0
  %8029 = vmatprep.mubr.f32.mxu0 %v6891
  %8030 = vmatmul.mubr.f32.gmra.mxu0 %v6890
  %v8031 = vpop.f32.mrf.mxu0
  %v8032 = vadd.f32 %v7647, %v8031
  %v8033 = vpop.f32.mrf.mxu0
  %8034 = vmatprep.mubr.f32.mxu0 %v6900
  %8035 = vmatmul.mubr.f32.gmra.mxu0 %v6899
  %v8036 = vpop.f32.mrf.mxu0
  %v8037 = vadd.f32 %v7652, %v8036
  %v8038 = vpop.f32.mrf.mxu0
  %8039 = vmatprep.mubr.f32.mxu0 %v6909
  %8040 = vmatmul.mubr.f32.gmra.mxu0 %v6908
  %v8041 = vpop.f32.mrf.mxu0
  %v8042 = vadd.f32 %v7657, %v8041
  %v8043 = vpop.f32.mrf.mxu0
  %8044 = vmatprep.mubr.f32.mxu0 %v6918
  %8045 = vmatmul.mubr.f32.gmra.mxu0 %v6917
  %v8046 = vpop.f32.mrf.mxu0
  %v8047 = vadd.f32 %v7662, %v8046
  %v8048 = vpop.f32.mrf.mxu0
  %8049 = vmatprep.mubr.f32.mxu0 %v6927
  %8050 = vmatmul.mubr.f32.gmra.mxu0 %v6926
  %v8051 = vpop.f32.mrf.mxu0
  %v8052 = vadd.f32 %v7667, %v8051
  %v8053 = vpop.f32.mrf.mxu0
  %8054 = vmatprep.mubr.f32.mxu0 %v6936
  %8055 = vmatmul.mubr.f32.gmra.mxu0 %v6935
  %v8056 = vpop.f32.mrf.mxu0
  %v8057 = vadd.f32 %v7672, %v8056
  %v8058 = vpop.f32.mrf.mxu0
  %8059 = vmatprep.mubr.f32.mxu0 %v6945
  %8060 = vmatmul.mubr.f32.gmra.mxu0 %v6944
  %v8061 = vpop.f32.mrf.mxu0
  %v8062 = vadd.f32 %v7677, %v8061
  %v8063 = vpop.f32.mrf.mxu0
  %8064 = vmatprep.mubr.f32.mxu0 %v6954
  %8065 = vmatmul.mubr.f32.gmra.mxu0 %v6953
  %v8066 = vpop.f32.mrf.mxu0
  %v8067 = vadd.f32 %v7682, %v8066
  %v8068 = vpop.f32.mrf.mxu0
  %8069 = vmatprep.mubr.f32.mxu0 %v6963
  %8070 = vmatmul.mubr.f32.gmra.mxu0 %v6962
  %v8071 = vpop.f32.mrf.mxu0
  %v8072 = vadd.f32 %v7687, %v8071
  %v8073 = vpop.f32.mrf.mxu0
  %8074 = vmatprep.mubr.f32.mxu0 %v6972
  %8075 = vmatmul.mubr.f32.gmra.mxu0 %v6971
  %v8076 = vpop.f32.mrf.mxu0
  %v8077 = vadd.f32 %v7692, %v8076
  %v8078 = vpop.f32.mrf.mxu0
  %8079 = vmatprep.mubr.f32.mxu0 %v6981
  %8080 = vmatmul.mubr.f32.gmra.mxu0 %v6980
  %v8081 = vpop.f32.mrf.mxu0
  %v8082 = vadd.f32 %v7697, %v8081
  %v8083 = vpop.f32.mrf.mxu0
  %8084 = vmatprep.mubr.f32.mxu0 %v6990
  %8085 = vmatmul.mubr.f32.gmra.mxu0 %v6989
  %v8086 = vpop.f32.mrf.mxu0
  %v8087 = vadd.f32 %v7702, %v8086
  %v8088 = vpop.f32.mrf.mxu0
  %8089 = vmatprep.mubr.f32.mxu0 %v6999
  %8090 = vmatmul.mubr.f32.gmra.mxu0 %v6998
  %v8091 = vpop.f32.mrf.mxu0
  %v8092 = vadd.f32 %v7707, %v8091
  %v8093 = vpop.f32.mrf.mxu0
  %8094 = vmatprep.mubr.f32.mxu0 %v7008
  %8095 = vmatmul.mubr.f32.gmra.mxu0 %v7007
  %v8096 = vpop.f32.mrf.mxu0
  %v8097 = vadd.f32 %v7712, %v8096
  %v8098 = vpop.f32.mrf.mxu0
  %8099 = vmatprep.mubr.f32.mxu0 %v7017
  %8100 = vmatmul.mubr.f32.gmra.mxu0 %v7016
  %v8101 = vpop.f32.mrf.mxu0
  %v8102 = vadd.f32 %v7717, %v8101
  %v8103 = vpop.f32.mrf.mxu0
  %8104 = vmatprep.mubr.f32.mxu0 %v7026
  %8105 = vmatmul.mubr.f32.gmra.mxu0 %v7025
  %v8106 = vpop.f32.mrf.mxu0
  %v8107 = vadd.f32 %v7722, %v8106
  %v8108 = vpop.f32.mrf.mxu0
  %8109 = vmatprep.mubr.f32.mxu0 %v7035
  %8110 = vmatmul.mubr.f32.gmra.mxu0 %v7034
  %v8111 = vpop.f32.mrf.mxu0
  %v8112 = vadd.f32 %v7727, %v8111
  %v8113 = vpop.f32.mrf.mxu0
  %8114 = vmatprep.mubr.f32.mxu0 %v7044
  %8115 = vmatmul.mubr.f32.gmra.mxu0 %v7043
  %v8116 = vpop.f32.mrf.mxu0
  %v8117 = vadd.f32 %v7732, %v8116
  %v8118 = vpop.f32.mrf.mxu0
  %8119 = vmatprep.mubr.f32.mxu0 %v7053
  %8120 = vmatmul.mubr.f32.gmra.mxu0 %v7052
  %v8121 = vpop.f32.mrf.mxu0
  %v8122 = vadd.f32 %v7737, %v8121
  %v8123 = vpop.f32.mrf.mxu0
  %8124 = vmatprep.mubr.f32.mxu0 %v7062
  %8125 = vmatmul.mubr.f32.gmra.mxu0 %v7061
  %v8126 = vpop.f32.mrf.mxu0
  %v8127 = vadd.f32 %v7742, %v8126
  %v8128 = vpop.f32.mrf.mxu0
  %8129 = vmatprep.mubr.f32.mxu0 %v7071
  %8130 = vmatmul.mubr.f32.gmra.mxu0 %v7070
  %v8131 = vpop.f32.mrf.mxu0
  %v8132 = vadd.f32 %v7747, %v8131
  %v8133 = vpop.f32.mrf.mxu0
  %8134 = vmatprep.mubr.f32.mxu0 %v7080
  %8135 = vmatmul.mubr.f32.gmra.mxu0 %v7079
  %v8136 = vpop.f32.mrf.mxu0
  %v8137 = vadd.f32 %v7752, %v8136
  %v8138 = vpop.f32.mrf.mxu0
  %8139 = vmatprep.mubr.f32.mxu0 %v7089
  %8140 = vmatmul.mubr.f32.gmra.mxu0 %v7088
  %v8141 = vpop.f32.mrf.mxu0
  %v8142 = vadd.f32 %v7757, %v8141
  %v8143 = vpop.f32.mrf.mxu0
  %8144 = vmatprep.mubr.f32.mxu0 %v7098
  %8145 = vmatmul.mubr.f32.gmra.mxu0 %v7097
  %v8146 = vpop.f32.mrf.mxu0
  %v8147 = vadd.f32 %v7762, %v8146
  %v8148 = vpop.f32.mrf.mxu0
  %8149 = vmatprep.mubr.f32.mxu0 %v7107
  %8150 = vmatmul.mubr.f32.gmra.mxu0 %v7106
  %v8151 = vpop.f32.mrf.mxu0
  %v8152 = vadd.f32 %v7767, %v8151
  %v8153 = vpop.f32.mrf.mxu0
  %8154 = vmatprep.mubr.f32.mxu0 %v7116
  %8155 = vmatmul.mubr.f32.gmra.mxu0 %v7115
  %v8156 = vpop.f32.mrf.mxu0
  %v8157 = vadd.f32 %v7772, %v8156
  %v8158 = vpop.f32.mrf.mxu0
  %8159 = vmatprep.mubr.f32.mxu0 %v7125
  %8160 = vmatmul.mubr.f32.gmra.mxu0 %v7124
  %v8161 = vpop.f32.mrf.mxu0
  %v8162 = vadd.f32 %v7777, %v8161
  %v8163 = vpop.f32.mrf.mxu0
  %8164 = vmatprep.mubr.f32.mxu0 %v7134
  %8165 = vmatmul.mubr.f32.gmra.mxu0 %v7133
  %v8166 = vpop.f32.mrf.mxu0
  %v8167 = vadd.f32 %v7782, %v8166
  %v8168 = vpop.f32.mrf.mxu0
  %8169 = vmatprep.mubr.f32.mxu0 %v7143
  %8170 = vmatmul.mubr.f32.gmra.mxu0 %v7142
  %v8171 = vpop.f32.mrf.mxu0
  %v8172 = vadd.f32 %v7787, %v8171
  %v8173 = vpop.f32.mrf.mxu0
  %8174 = vmatprep.mubr.f32.mxu0 %v7152
  %8175 = vmatmul.mubr.f32.gmra.mxu0 %v7151
  %v8176 = vpop.f32.mrf.mxu0
  %v8177 = vadd.f32 %v7792, %v8176
  %v8178 = vpop.f32.mrf.mxu0
  %8179 = vmatprep.mubr.f32.mxu0 %v7161
  %8180 = vmatmul.mubr.f32.gmra.mxu0 %v7160
  %v8181 = vpop.f32.mrf.mxu0
  %v8182 = vadd.f32 %v7797, %v8181
  %v8183 = vpop.f32.mrf.mxu0
  %8184 = vmatprep.mubr.f32.mxu0 %v7170
  %8185 = vmatmul.mubr.f32.gmra.mxu0 %v7169
  %v8186 = vpop.f32.mrf.mxu0
  %v8187 = vadd.f32 %v7802, %v8186
  %v8188 = vpop.f32.mrf.mxu0
  %8189 = vmatprep.mubr.f32.mxu0 %v7179
  %8190 = vmatmul.mubr.f32.gmra.mxu0 %v7178
  %v8191 = vpop.f32.mrf.mxu0
  %v8192 = vadd.f32 %v7807, %v8191
  %v8193 = vpop.f32.mrf.mxu0
  %8194 = vmatprep.mubr.f32.mxu0 %v7188
  %8195 = vmatmul.mubr.f32.gmra.mxu0 %v7187
  %v8196 = vpop.f32.mrf.mxu0
  %v8197 = vadd.f32 %v7812, %v8196
  %v8198 = vpop.f32.mrf.mxu0
  %8199 = vmatprep.mubr.f32.mxu0 %v7197
  %8200 = vmatmul.mubr.f32.gmra.mxu0 %v7196
  %v8201 = vpop.f32.mrf.mxu0
  %v8202 = vadd.f32 %v7817, %v8201
  %v8203 = vpop.f32.mrf.mxu0
  %8204 = vmatprep.mubr.f32.mxu0 %v7206
  %8205 = vmatmul.mubr.f32.gmra.mxu0 %v7205
  %v8206 = vpop.f32.mrf.mxu0
  %v8207 = vadd.f32 %v7822, %v8206
  %v8208 = vpop.f32.mrf.mxu0
  %8209 = vmatprep.mubr.f32.mxu0 %v7215
  %8210 = vmatmul.mubr.f32.gmra.mxu0 %v7214
  %v8211 = vpop.f32.mrf.mxu0
  %v8212 = vadd.f32 %v7827, %v8211
  %v8213 = vpop.f32.mrf.mxu0
  %8214 = vmatprep.mubr.f32.mxu0 %v7224
  %8215 = vmatmul.mubr.f32.gmra.mxu0 %v7223
  %v8216 = vpop.f32.mrf.mxu0
  %v8217 = vadd.f32 %v7832, %v8216
  %v8218 = vpop.f32.mrf.mxu0
  %8219 = vmatprep.mubr.f32.mxu0 %v7233
  %8220 = vmatmul.mubr.f32.gmra.mxu0 %v7232
  %v8221 = vpop.f32.mrf.mxu0
  %v8222 = vadd.f32 %v7837, %v8221
  %v8223 = vpop.f32.mrf.mxu0
  %8224 = vmatprep.mubr.f32.mxu0 %v7242
  %8225 = vmatmul.mubr.f32.gmra.mxu0 %v7241
  %v8226 = vpop.f32.mrf.mxu0
  %v8227 = vadd.f32 %v7842, %v8226
  %v8228 = vpop.f32.mrf.mxu0
  %8229 = vmatprep.mubr.f32.mxu0 %v7251
  %8230 = vmatmul.mubr.f32.gmra.mxu0 %v7250
  %v8231 = vpop.f32.mrf.mxu0
  %v8232 = vadd.f32 %v7847, %v8231
  %v8233 = vpop.f32.mrf.mxu0
  %8234 = vmatprep.mubr.f32.mxu0 %v7260
  %8235 = vmatmul.mubr.f32.gmra.mxu0 %v7259
  %v8236 = vpop.f32.mrf.mxu0
  %v8237 = vadd.f32 %v7852, %v8236
  %v8238 = vpop.f32.mrf.mxu0
  %8239 = vmatprep.mubr.f32.mxu0 %v7269
  %8240 = vmatmul.mubr.f32.gmra.mxu0 %v7268
  %v8241 = vpop.f32.mrf.mxu0
  %v8242 = vadd.f32 %v7857, %v8241
  %v8243 = vpop.f32.mrf.mxu0
  %8244 = vmatprep.mubr.f32.mxu0 %v7278
  %8245 = vmatmul.mubr.f32.gmra.mxu0 %v7277
  %v8246 = vpop.f32.mrf.mxu0
  %v8247 = vadd.f32 %v7862, %v8246
  %v8248 = vpop.f32.mrf.mxu0
  %8249 = vmatprep.mubr.f32.mxu0 %v7287
  %8250 = vmatmul.mubr.f32.gmra.mxu0 %v7286
  %v8251 = vpop.f32.mrf.mxu0
  %v8252 = vadd.f32 %v7867, %v8251
  %v8253 = vpop.f32.mrf.mxu0
  %8254 = vmatprep.mubr.f32.mxu0 %v7296
  %8255 = vmatmul.mubr.f32.gmra.mxu0 %v7295
  %v8256 = vpop.f32.mrf.mxu0
  %v8257 = vadd.f32 %v7872, %v8256
  %v8258 = vpop.f32.mrf.mxu0
  %8259 = vmatprep.mubr.f32.mxu0 %v7305
  %8260 = vmatmul.mubr.f32.gmra.mxu0 %v7304
  %v8261 = vpop.f32.mrf.mxu0
  %v8262 = vadd.f32 %v7877, %v8261
  %v8263 = vpop.f32.mrf.mxu0
  %8264 = vmatprep.mubr.f32.mxu0 %v7314
  %8265 = vmatmul.mubr.f32.gmra.mxu0 %v7313
  %v8266 = vpop.f32.mrf.mxu0
  %v8267 = vadd.f32 %v7882, %v8266
  %v8268 = vpop.f32.mrf.mxu0
  %8269 = vmatprep.mubr.f32.mxu0 %v7323
  %8270 = vmatmul.mubr.f32.gmra.mxu0 %v7322
  %v8271 = vpop.f32.mrf.mxu0
  %v8272 = vadd.f32 %v7887, %v8271
  %v8273 = vpop.f32.mrf.mxu0
  %8274 = vmatprep.mubr.f32.mxu0 %v7332
  %8275 = vmatmul.mubr.f32.gmra.mxu0 %v7331
  %v8276 = vpop.f32.mrf.mxu0
  %v8277 = vadd.f32 %v7892, %v8276
  %v8278 = vpop.f32.mrf.mxu0
  %8279 = vmatprep.mubr.f32.mxu0 %v7341
  %8280 = vmatmul.mubr.f32.gmra.mxu0 %v7340
  %v8281 = vpop.f32.mrf.mxu0
  %v8282 = vadd.f32 %v7897, %v8281
  %v8283 = vpop.f32.mrf.mxu0
  %8284 = vmatprep.mubr.f32.mxu0 %v7350
  %8285 = vmatmul.mubr.f32.gmra.mxu0 %v7349
  %v8286 = vpop.f32.mrf.mxu0
  %v8287 = vadd.f32 %v7902, %v8286
  %v8288 = vpop.f32.mrf.mxu0
  %8289 = vmatprep.mubr.f32.mxu0 %v7359
  %8290 = vmatmul.mubr.f32.gmra.mxu0 %v7358
  %v8291 = vpop.f32.mrf.mxu0
  %v8292 = vadd.f32 %v7907, %v8291
  %v8293 = vpop.f32.mrf.mxu0
  %8294 = vmatprep.mubr.f32.mxu0 %v7368
  %8295 = vmatmul.mubr.f32.gmra.mxu0 %v7367
  %v8296 = vpop.f32.mrf.mxu0
  %v8297 = vadd.f32 %v7912, %v8296
  %v8298 = vpop.f32.mrf.mxu0
  %8299 = vmatprep.mubr.f32.mxu0 %v7377
  %8300 = vmatmul.mubr.f32.gmra.mxu0 %v7376
  %v8301 = vpop.f32.mrf.mxu0
  %v8302 = vadd.f32 %v7917, %v8301
  %v8303 = vpop.f32.mrf.mxu0
  %8304 = vmatprep.mubr.f32.mxu0 %v7386
  %8305 = vmatmul.mubr.f32.gmra.mxu0 %v7385
  %v8306 = vpop.f32.mrf.mxu0
  %v8307 = vadd.f32 %v7922, %v8306
  %v8308 = vpop.f32.mrf.mxu0
  %8309 = vmatprep.mubr.f32.mxu0 %v7395
  %8310 = vmatmul.mubr.f32.gmra.mxu0 %v7394
  %v8311 = vpop.f32.mrf.mxu0
  %v8312 = vadd.f32 %v7927, %v8311
  %v8313 = vpop.f32.mrf.mxu0
  %8314 = vdwg.mxu0
  %8315 = vmatprep.subr.mxu0 0.0
  %8316 = vmatpush1.msra.mxu0 %v7480
  %8317 = vmatprep.subr.mxu0 0.0
  %8318 = vmatpush1.msra.mxu0 %v7479
  %8319 = vmatprep.subr.mxu0 0.0
  %8320 = vmatpush1.msra.mxu0 %v7478
  %8321 = vmatprep.subr.mxu0 0.0
  %8322 = vmatpush1.msra.mxu0 %v7477
  %8323 = vmatprep.subr.mxu0 0.0
  %8324 = vmatpush1.msra.mxu0 %v7476
  %8325 = vmatprep.subr.mxu0 0.0
  %8326 = vmatpush1.msra.mxu0 %v7475
  %8327 = vmatprep.subr.mxu0 0.0
  %8328 = vmatpush1.msra.mxu0 %v7474
  %8329 = vmatprep.subr.mxu0 0.0
  %8330 = vmatpush1.msra.mxu0 %v7473
  %8331 = vmatprep.subr.mxu0 0.0
  %8332 = vmatpush1.msra.mxu0 %v7472
  %8333 = vmatprep.subr.mxu0 0.0
  %8334 = vmatpush1.msra.mxu0 %v7471
  %8335 = vmatprep.subr.mxu0 0.0
  %8336 = vmatpush1.msra.mxu0 %v7470
  %8337 = vmatprep.subr.mxu0 0.0
  %8338 = vmatpush1.msra.mxu0 %v7469
  %8339 = vmatprep.subr.mxu0 0.0
  %8340 = vmatpush1.msra.mxu0 %v7468
  %8341 = vmatprep.subr.mxu0 0.0
  %8342 = vmatpush1.msra.mxu0 %v7467
  %8343 = vmatprep.subr.mxu0 0.0
  %8344 = vmatpush1.msra.mxu0 %v7466
  %8345 = vmatprep.subr.mxu0 0.0
  %8346 = vmatpush1.msra.mxu0 %v7465
  %8347 = vmatprep.subr.mxu0 0.0
  %8348 = vmatpush2.msra.mxu0 %v7496
  %8349 = vmatprep.subr.mxu0 0.0
  %8350 = vmatpush2.msra.mxu0 %v7495
  %8351 = vmatprep.subr.mxu0 0.0
  %8352 = vmatpush2.msra.mxu0 %v7494
  %8353 = vmatprep.subr.mxu0 0.0
  %8354 = vmatpush2.msra.mxu0 %v7493
  %8355 = vmatprep.subr.mxu0 0.0
  %8356 = vmatpush2.msra.mxu0 %v7492
  %8357 = vmatprep.subr.mxu0 0.0
  %8358 = vmatpush2.msra.mxu0 %v7491
  %8359 = vmatprep.subr.mxu0 0.0
  %8360 = vmatpush2.msra.mxu0 %v7490
  %8361 = vmatprep.subr.mxu0 0.0
  %8362 = vmatpush2.msra.mxu0 %v7489
  %8363 = vmatprep.subr.mxu0 0.0
  %8364 = vmatpush2.msra.mxu0 %v7488
  %8365 = vmatprep.subr.mxu0 0.0
  %8366 = vmatpush2.msra.mxu0 %v7487
  %8367 = vmatprep.subr.mxu0 0.0
  %8368 = vmatpush2.msra.mxu0 %v7486
  %8369 = vmatprep.subr.mxu0 0.0
  %8370 = vmatpush2.msra.mxu0 %v7485
  %8371 = vmatprep.subr.mxu0 0.0
  %8372 = vmatpush2.msra.mxu0 %v7484
  %8373 = vmatprep.subr.mxu0 0.0
  %8374 = vmatpush2.msra.mxu0 %v7483
  %8375 = vmatprep.subr.mxu0 0.0
  %8376 = vmatpush2.msra.mxu0 %v7482
  %8377 = vmatprep.subr.mxu0 0.0
  %8378 = vmatpush2.msra.mxu0 %v7481
  %8379 = vmatprep.mubr.f32.mxu0 %v6830
  %8380 = vmatmul.mubr.f32.gmra.mxu0 %v6829
  %v8381 = vpop.f32.mrf.mxu0
  %v8382 = vadd.f32 %v7997, %v8381
  %v8383 = vpop.f32.mrf.mxu0
  %8384 = vmatprep.mubr.f32.mxu0 %v6839
  %8385 = vmatmul.mubr.f32.gmra.mxu0 %v6838
  %v8386 = vpop.f32.mrf.mxu0
  %v8387 = vadd.f32 %v8002, %v8386
  %v8388 = vpop.f32.mrf.mxu0
  %8389 = vmatprep.mubr.f32.mxu0 %v6848
  %8390 = vmatmul.mubr.f32.gmra.mxu0 %v6847
  %v8391 = vpop.f32.mrf.mxu0
  %v8392 = vadd.f32 %v8007, %v8391
  %v8393 = vpop.f32.mrf.mxu0
  %8394 = vmatprep.mubr.f32.mxu0 %v6857
  %8395 = vmatmul.mubr.f32.gmra.mxu0 %v6856
  %v8396 = vpop.f32.mrf.mxu0
  %v8397 = vadd.f32 %v8012, %v8396
  %v8398 = vpop.f32.mrf.mxu0
  %8399 = vmatprep.mubr.f32.mxu0 %v6866
  %8400 = vmatmul.mubr.f32.gmra.mxu0 %v6865
  %v8401 = vpop.f32.mrf.mxu0
  %v8402 = vadd.f32 %v8017, %v8401
  %v8403 = vpop.f32.mrf.mxu0
  %8404 = vmatprep.mubr.f32.mxu0 %v6875
  %8405 = vmatmul.mubr.f32.gmra.mxu0 %v6874
  %v8406 = vpop.f32.mrf.mxu0
  %v8407 = vadd.f32 %v8022, %v8406
  %v8408 = vpop.f32.mrf.mxu0
  %8409 = vmatprep.mubr.f32.mxu0 %v6884
  %8410 = vmatmul.mubr.f32.gmra.mxu0 %v6883
  %v8411 = vpop.f32.mrf.mxu0
  %v8412 = vadd.f32 %v8027, %v8411
  %v8413 = vpop.f32.mrf.mxu0
  %8414 = vmatprep.mubr.f32.mxu0 %v6893
  %8415 = vmatmul.mubr.f32.gmra.mxu0 %v6892
  %v8416 = vpop.f32.mrf.mxu0
  %v8417 = vadd.f32 %v8032, %v8416
  %v8418 = vpop.f32.mrf.mxu0
  %8419 = vmatprep.mubr.f32.mxu0 %v6902
  %8420 = vmatmul.mubr.f32.gmra.mxu0 %v6901
  %v8421 = vpop.f32.mrf.mxu0
  %v8422 = vadd.f32 %v8037, %v8421
  %v8423 = vpop.f32.mrf.mxu0
  %8424 = vmatprep.mubr.f32.mxu0 %v6911
  %8425 = vmatmul.mubr.f32.gmra.mxu0 %v6910
  %v8426 = vpop.f32.mrf.mxu0
  %v8427 = vadd.f32 %v8042, %v8426
  %v8428 = vpop.f32.mrf.mxu0
  %8429 = vmatprep.mubr.f32.mxu0 %v6920
  %8430 = vmatmul.mubr.f32.gmra.mxu0 %v6919
  %v8431 = vpop.f32.mrf.mxu0
  %v8432 = vadd.f32 %v8047, %v8431
  %v8433 = vpop.f32.mrf.mxu0
  %8434 = vmatprep.mubr.f32.mxu0 %v6929
  %8435 = vmatmul.mubr.f32.gmra.mxu0 %v6928
  %v8436 = vpop.f32.mrf.mxu0
  %v8437 = vadd.f32 %v8052, %v8436
  %v8438 = vpop.f32.mrf.mxu0
  %8439 = vmatprep.mubr.f32.mxu0 %v6938
  %8440 = vmatmul.mubr.f32.gmra.mxu0 %v6937
  %v8441 = vpop.f32.mrf.mxu0
  %v8442 = vadd.f32 %v8057, %v8441
  %v8443 = vpop.f32.mrf.mxu0
  %8444 = vmatprep.mubr.f32.mxu0 %v6947
  %8445 = vmatmul.mubr.f32.gmra.mxu0 %v6946
  %v8446 = vpop.f32.mrf.mxu0
  %v8447 = vadd.f32 %v8062, %v8446
  %v8448 = vpop.f32.mrf.mxu0
  %8449 = vmatprep.mubr.f32.mxu0 %v6956
  %8450 = vmatmul.mubr.f32.gmra.mxu0 %v6955
  %v8451 = vpop.f32.mrf.mxu0
  %v8452 = vadd.f32 %v8067, %v8451
  %v8453 = vpop.f32.mrf.mxu0
  %8454 = vmatprep.mubr.f32.mxu0 %v6965
  %8455 = vmatmul.mubr.f32.gmra.mxu0 %v6964
  %v8456 = vpop.f32.mrf.mxu0
  %v8457 = vadd.f32 %v8072, %v8456
  %v8458 = vpop.f32.mrf.mxu0
  %8459 = vmatprep.mubr.f32.mxu0 %v6974
  %8460 = vmatmul.mubr.f32.gmra.mxu0 %v6973
  %v8461 = vpop.f32.mrf.mxu0
  %v8462 = vadd.f32 %v8077, %v8461
  %v8463 = vpop.f32.mrf.mxu0
  %8464 = vmatprep.mubr.f32.mxu0 %v6983
  %8465 = vmatmul.mubr.f32.gmra.mxu0 %v6982
  %v8466 = vpop.f32.mrf.mxu0
  %v8467 = vadd.f32 %v8082, %v8466
  %v8468 = vpop.f32.mrf.mxu0
  %8469 = vmatprep.mubr.f32.mxu0 %v6992
  %8470 = vmatmul.mubr.f32.gmra.mxu0 %v6991
  %v8471 = vpop.f32.mrf.mxu0
  %v8472 = vadd.f32 %v8087, %v8471
  %v8473 = vpop.f32.mrf.mxu0
  %8474 = vmatprep.mubr.f32.mxu0 %v7001
  %8475 = vmatmul.mubr.f32.gmra.mxu0 %v7000
  %v8476 = vpop.f32.mrf.mxu0
  %v8477 = vadd.f32 %v8092, %v8476
  %v8478 = vpop.f32.mrf.mxu0
  %8479 = vmatprep.mubr.f32.mxu0 %v7010
  %8480 = vmatmul.mubr.f32.gmra.mxu0 %v7009
  %v8481 = vpop.f32.mrf.mxu0
  %v8482 = vadd.f32 %v8097, %v8481
  %v8483 = vpop.f32.mrf.mxu0
  %8484 = vmatprep.mubr.f32.mxu0 %v7019
  %8485 = vmatmul.mubr.f32.gmra.mxu0 %v7018
  %v8486 = vpop.f32.mrf.mxu0
  %v8487 = vadd.f32 %v8102, %v8486
  %v8488 = vpop.f32.mrf.mxu0
  %8489 = vmatprep.mubr.f32.mxu0 %v7028
  %8490 = vmatmul.mubr.f32.gmra.mxu0 %v7027
  %v8491 = vpop.f32.mrf.mxu0
  %v8492 = vadd.f32 %v8107, %v8491
  %v8493 = vpop.f32.mrf.mxu0
  %8494 = vmatprep.mubr.f32.mxu0 %v7037
  %8495 = vmatmul.mubr.f32.gmra.mxu0 %v7036
  %v8496 = vpop.f32.mrf.mxu0
  %v8497 = vadd.f32 %v8112, %v8496
  %v8498 = vpop.f32.mrf.mxu0
  %8499 = vmatprep.mubr.f32.mxu0 %v7046
  %8500 = vmatmul.mubr.f32.gmra.mxu0 %v7045
  %v8501 = vpop.f32.mrf.mxu0
  %v8502 = vadd.f32 %v8117, %v8501
  %v8503 = vpop.f32.mrf.mxu0
  %8504 = vmatprep.mubr.f32.mxu0 %v7055
  %8505 = vmatmul.mubr.f32.gmra.mxu0 %v7054
  %v8506 = vpop.f32.mrf.mxu0
  %v8507 = vadd.f32 %v8122, %v8506
  %v8508 = vpop.f32.mrf.mxu0
  %8509 = vmatprep.mubr.f32.mxu0 %v7064
  %8510 = vmatmul.mubr.f32.gmra.mxu0 %v7063
  %v8511 = vpop.f32.mrf.mxu0
  %v8512 = vadd.f32 %v8127, %v8511
  %v8513 = vpop.f32.mrf.mxu0
  %8514 = vmatprep.mubr.f32.mxu0 %v7073
  %8515 = vmatmul.mubr.f32.gmra.mxu0 %v7072
  %v8516 = vpop.f32.mrf.mxu0
  %v8517 = vadd.f32 %v8132, %v8516
  %v8518 = vpop.f32.mrf.mxu0
  %8519 = vmatprep.mubr.f32.mxu0 %v7082
  %8520 = vmatmul.mubr.f32.gmra.mxu0 %v7081
  %v8521 = vpop.f32.mrf.mxu0
  %v8522 = vadd.f32 %v8137, %v8521
  %v8523 = vpop.f32.mrf.mxu0
  %8524 = vmatprep.mubr.f32.mxu0 %v7091
  %8525 = vmatmul.mubr.f32.gmra.mxu0 %v7090
  %v8526 = vpop.f32.mrf.mxu0
  %v8527 = vadd.f32 %v8142, %v8526
  %v8528 = vpop.f32.mrf.mxu0
  %8529 = vmatprep.mubr.f32.mxu0 %v7100
  %8530 = vmatmul.mubr.f32.gmra.mxu0 %v7099
  %v8531 = vpop.f32.mrf.mxu0
  %v8532 = vadd.f32 %v8147, %v8531
  %v8533 = vpop.f32.mrf.mxu0
  %8534 = vmatprep.mubr.f32.mxu0 %v7109
  %8535 = vmatmul.mubr.f32.gmra.mxu0 %v7108
  %v8536 = vpop.f32.mrf.mxu0
  %v8537 = vadd.f32 %v8152, %v8536
  %v8538 = vpop.f32.mrf.mxu0
  %8539 = vmatprep.mubr.f32.mxu0 %v7118
  %8540 = vmatmul.mubr.f32.gmra.mxu0 %v7117
  %v8541 = vpop.f32.mrf.mxu0
  %v8542 = vadd.f32 %v8157, %v8541
  %v8543 = vpop.f32.mrf.mxu0
  %8544 = vmatprep.mubr.f32.mxu0 %v7127
  %8545 = vmatmul.mubr.f32.gmra.mxu0 %v7126
  %v8546 = vpop.f32.mrf.mxu0
  %v8547 = vadd.f32 %v8162, %v8546
  %v8548 = vpop.f32.mrf.mxu0
  %8549 = vmatprep.mubr.f32.mxu0 %v7136
  %8550 = vmatmul.mubr.f32.gmra.mxu0 %v7135
  %v8551 = vpop.f32.mrf.mxu0
  %v8552 = vadd.f32 %v8167, %v8551
  %v8553 = vpop.f32.mrf.mxu0
  %8554 = vmatprep.mubr.f32.mxu0 %v7145
  %8555 = vmatmul.mubr.f32.gmra.mxu0 %v7144
  %v8556 = vpop.f32.mrf.mxu0
  %v8557 = vadd.f32 %v8172, %v8556
  %v8558 = vpop.f32.mrf.mxu0
  %8559 = vmatprep.mubr.f32.mxu0 %v7154
  %8560 = vmatmul.mubr.f32.gmra.mxu0 %v7153
  %v8561 = vpop.f32.mrf.mxu0
  %v8562 = vadd.f32 %v8177, %v8561
  %v8563 = vpop.f32.mrf.mxu0
  %8564 = vmatprep.mubr.f32.mxu0 %v7163
  %8565 = vmatmul.mubr.f32.gmra.mxu0 %v7162
  %v8566 = vpop.f32.mrf.mxu0
  %v8567 = vadd.f32 %v8182, %v8566
  %v8568 = vpop.f32.mrf.mxu0
  %8569 = vmatprep.mubr.f32.mxu0 %v7172
  %8570 = vmatmul.mubr.f32.gmra.mxu0 %v7171
  %v8571 = vpop.f32.mrf.mxu0
  %v8572 = vadd.f32 %v8187, %v8571
  %v8573 = vpop.f32.mrf.mxu0
  %8574 = vmatprep.mubr.f32.mxu0 %v7181
  %8575 = vmatmul.mubr.f32.gmra.mxu0 %v7180
  %v8576 = vpop.f32.mrf.mxu0
  %v8577 = vadd.f32 %v8192, %v8576
  %v8578 = vpop.f32.mrf.mxu0
  %8579 = vmatprep.mubr.f32.mxu0 %v7190
  %8580 = vmatmul.mubr.f32.gmra.mxu0 %v7189
  %v8581 = vpop.f32.mrf.mxu0
  %v8582 = vadd.f32 %v8197, %v8581
  %v8583 = vpop.f32.mrf.mxu0
  %8584 = vmatprep.mubr.f32.mxu0 %v7199
  %8585 = vmatmul.mubr.f32.gmra.mxu0 %v7198
  %v8586 = vpop.f32.mrf.mxu0
  %v8587 = vadd.f32 %v8202, %v8586
  %v8588 = vpop.f32.mrf.mxu0
  %8589 = vmatprep.mubr.f32.mxu0 %v7208
  %8590 = vmatmul.mubr.f32.gmra.mxu0 %v7207
  %v8591 = vpop.f32.mrf.mxu0
  %v8592 = vadd.f32 %v8207, %v8591
  %v8593 = vpop.f32.mrf.mxu0
  %8594 = vmatprep.mubr.f32.mxu0 %v7217
  %8595 = vmatmul.mubr.f32.gmra.mxu0 %v7216
  %v8596 = vpop.f32.mrf.mxu0
  %v8597 = vadd.f32 %v8212, %v8596
  %v8598 = vpop.f32.mrf.mxu0
  %8599 = vmatprep.mubr.f32.mxu0 %v7226
  %8600 = vmatmul.mubr.f32.gmra.mxu0 %v7225
  %v8601 = vpop.f32.mrf.mxu0
  %v8602 = vadd.f32 %v8217, %v8601
  %v8603 = vpop.f32.mrf.mxu0
  %8604 = vmatprep.mubr.f32.mxu0 %v7235
  %8605 = vmatmul.mubr.f32.gmra.mxu0 %v7234
  %v8606 = vpop.f32.mrf.mxu0
  %v8607 = vadd.f32 %v8222, %v8606
  %v8608 = vpop.f32.mrf.mxu0
  %8609 = vmatprep.mubr.f32.mxu0 %v7244
  %8610 = vmatmul.mubr.f32.gmra.mxu0 %v7243
  %v8611 = vpop.f32.mrf.mxu0
  %v8612 = vadd.f32 %v8227, %v8611
  %v8613 = vpop.f32.mrf.mxu0
  %8614 = vmatprep.mubr.f32.mxu0 %v7253
  %8615 = vmatmul.mubr.f32.gmra.mxu0 %v7252
  %v8616 = vpop.f32.mrf.mxu0
  %v8617 = vadd.f32 %v8232, %v8616
  %v8618 = vpop.f32.mrf.mxu0
  %8619 = vmatprep.mubr.f32.mxu0 %v7262
  %8620 = vmatmul.mubr.f32.gmra.mxu0 %v7261
  %v8621 = vpop.f32.mrf.mxu0
  %v8622 = vadd.f32 %v8237, %v8621
  %v8623 = vpop.f32.mrf.mxu0
  %8624 = vmatprep.mubr.f32.mxu0 %v7271
  %8625 = vmatmul.mubr.f32.gmra.mxu0 %v7270
  %v8626 = vpop.f32.mrf.mxu0
  %v8627 = vadd.f32 %v8242, %v8626
  %v8628 = vpop.f32.mrf.mxu0
  %8629 = vmatprep.mubr.f32.mxu0 %v7280
  %8630 = vmatmul.mubr.f32.gmra.mxu0 %v7279
  %v8631 = vpop.f32.mrf.mxu0
  %v8632 = vadd.f32 %v8247, %v8631
  %v8633 = vpop.f32.mrf.mxu0
  %8634 = vmatprep.mubr.f32.mxu0 %v7289
  %8635 = vmatmul.mubr.f32.gmra.mxu0 %v7288
  %v8636 = vpop.f32.mrf.mxu0
  %v8637 = vadd.f32 %v8252, %v8636
  %v8638 = vpop.f32.mrf.mxu0
  %8639 = vmatprep.mubr.f32.mxu0 %v7298
  %8640 = vmatmul.mubr.f32.gmra.mxu0 %v7297
  %v8641 = vpop.f32.mrf.mxu0
  %v8642 = vadd.f32 %v8257, %v8641
  %v8643 = vpop.f32.mrf.mxu0
  %8644 = vmatprep.mubr.f32.mxu0 %v7307
  %8645 = vmatmul.mubr.f32.gmra.mxu0 %v7306
  %v8646 = vpop.f32.mrf.mxu0
  %v8647 = vadd.f32 %v8262, %v8646
  %v8648 = vpop.f32.mrf.mxu0
  %8649 = vmatprep.mubr.f32.mxu0 %v7316
  %8650 = vmatmul.mubr.f32.gmra.mxu0 %v7315
  %v8651 = vpop.f32.mrf.mxu0
  %v8652 = vadd.f32 %v8267, %v8651
  %v8653 = vpop.f32.mrf.mxu0
  %8654 = vmatprep.mubr.f32.mxu0 %v7325
  %8655 = vmatmul.mubr.f32.gmra.mxu0 %v7324
  %v8656 = vpop.f32.mrf.mxu0
  %v8657 = vadd.f32 %v8272, %v8656
  %v8658 = vpop.f32.mrf.mxu0
  %8659 = vmatprep.mubr.f32.mxu0 %v7334
  %8660 = vmatmul.mubr.f32.gmra.mxu0 %v7333
  %v8661 = vpop.f32.mrf.mxu0
  %v8662 = vadd.f32 %v8277, %v8661
  %v8663 = vpop.f32.mrf.mxu0
  %8664 = vmatprep.mubr.f32.mxu0 %v7343
  %8665 = vmatmul.mubr.f32.gmra.mxu0 %v7342
  %v8666 = vpop.f32.mrf.mxu0
  %v8667 = vadd.f32 %v8282, %v8666
  %v8668 = vpop.f32.mrf.mxu0
  %8669 = vmatprep.mubr.f32.mxu0 %v7352
  %8670 = vmatmul.mubr.f32.gmra.mxu0 %v7351
  %v8671 = vpop.f32.mrf.mxu0
  %v8672 = vadd.f32 %v8287, %v8671
  %v8673 = vpop.f32.mrf.mxu0
  %8674 = vmatprep.mubr.f32.mxu0 %v7361
  %8675 = vmatmul.mubr.f32.gmra.mxu0 %v7360
  %v8676 = vpop.f32.mrf.mxu0
  %v8677 = vadd.f32 %v8292, %v8676
  %v8678 = vpop.f32.mrf.mxu0
  %8679 = vmatprep.mubr.f32.mxu0 %v7370
  %8680 = vmatmul.mubr.f32.gmra.mxu0 %v7369
  %v8681 = vpop.f32.mrf.mxu0
  %v8682 = vadd.f32 %v8297, %v8681
  %v8683 = vpop.f32.mrf.mxu0
  %8684 = vmatprep.mubr.f32.mxu0 %v7379
  %8685 = vmatmul.mubr.f32.gmra.mxu0 %v7378
  %v8686 = vpop.f32.mrf.mxu0
  %v8687 = vadd.f32 %v8302, %v8686
  %v8688 = vpop.f32.mrf.mxu0
  %8689 = vmatprep.mubr.f32.mxu0 %v7388
  %8690 = vmatmul.mubr.f32.gmra.mxu0 %v7387
  %v8691 = vpop.f32.mrf.mxu0
  %v8692 = vadd.f32 %v8307, %v8691
  %v8693 = vpop.f32.mrf.mxu0
  %8694 = vmatprep.mubr.f32.mxu0 %v7397
  %8695 = vmatmul.mubr.f32.gmra.mxu0 %v7396
  %v8696 = vpop.f32.mrf.mxu0
  %v8697 = vadd.f32 %v8312, %v8696
  %v8698 = vpop.f32.mrf.mxu0
  %8699 = vdwg.mxu0
  %8700 = vmatprep.subr.mxu0 0.0
  %8701 = vmatpush1.msra.mxu0 %v7512
  %8702 = vmatprep.subr.mxu0 0.0
  %8703 = vmatpush1.msra.mxu0 %v7511
  %8704 = vmatprep.subr.mxu0 0.0
  %8705 = vmatpush1.msra.mxu0 %v7510
  %8706 = vmatprep.subr.mxu0 0.0
  %8707 = vmatpush1.msra.mxu0 %v7509
  %8708 = vmatprep.subr.mxu0 0.0
  %8709 = vmatpush1.msra.mxu0 %v7508
  %8710 = vmatprep.subr.mxu0 0.0
  %8711 = vmatpush1.msra.mxu0 %v7507
  %8712 = vmatprep.subr.mxu0 0.0
  %8713 = vmatpush1.msra.mxu0 %v7506
  %8714 = vmatprep.subr.mxu0 0.0
  %8715 = vmatpush1.msra.mxu0 %v7505
  %8716 = vmatprep.subr.mxu0 0.0
  %8717 = vmatpush1.msra.mxu0 %v7504
  %8718 = vmatprep.subr.mxu0 0.0
  %8719 = vmatpush1.msra.mxu0 %v7503
  %8720 = vmatprep.subr.mxu0 0.0
  %8721 = vmatpush1.msra.mxu0 %v7502
  %8722 = vmatprep.subr.mxu0 0.0
  %8723 = vmatpush1.msra.mxu0 %v7501
  %8724 = vmatprep.subr.mxu0 0.0
  %8725 = vmatpush1.msra.mxu0 %v7500
  %8726 = vmatprep.subr.mxu0 0.0
  %8727 = vmatpush1.msra.mxu0 %v7499
  %8728 = vmatprep.subr.mxu0 0.0
  %8729 = vmatpush1.msra.mxu0 %v7498
  %8730 = vmatprep.subr.mxu0 0.0
  %8731 = vmatpush1.msra.mxu0 %v7497
  %8732 = vmatprep.subr.mxu0 0.0
  %8733 = vmatpush2.msra.mxu0 %v7528
  %8734 = vmatprep.subr.mxu0 0.0
  %8735 = vmatpush2.msra.mxu0 %v7527
  %8736 = vmatprep.subr.mxu0 0.0
  %8737 = vmatpush2.msra.mxu0 %v7526
  %8738 = vmatprep.subr.mxu0 0.0
  %8739 = vmatpush2.msra.mxu0 %v7525
  %8740 = vmatprep.subr.mxu0 0.0
  %8741 = vmatpush2.msra.mxu0 %v7524
  %8742 = vmatprep.subr.mxu0 0.0
  %8743 = vmatpush2.msra.mxu0 %v7523
  %8744 = vmatprep.subr.mxu0 0.0
  %8745 = vmatpush2.msra.mxu0 %v7522
  %8746 = vmatprep.subr.mxu0 0.0
  %8747 = vmatpush2.msra.mxu0 %v7521
  %8748 = vmatprep.subr.mxu0 0.0
  %8749 = vmatpush2.msra.mxu0 %v7520
  %8750 = vmatprep.subr.mxu0 0.0
  %8751 = vmatpush2.msra.mxu0 %v7519
  %8752 = vmatprep.subr.mxu0 0.0
  %8753 = vmatpush2.msra.mxu0 %v7518
  %8754 = vmatprep.subr.mxu0 0.0
  %8755 = vmatpush2.msra.mxu0 %v7517
  %8756 = vmatprep.subr.mxu0 0.0
  %8757 = vmatpush2.msra.mxu0 %v7516
  %8758 = vmatprep.subr.mxu0 0.0
  %8759 = vmatpush2.msra.mxu0 %v7515
  %8760 = vmatprep.subr.mxu0 0.0
  %8761 = vmatpush2.msra.mxu0 %v7514
  %8762 = vmatprep.subr.mxu0 0.0
  %8763 = vmatpush2.msra.mxu0 %v7513
  %8764 = vmatprep.mubr.f32.mxu0 %v6832
  %8765 = vmatmul.mubr.f32.gmra.mxu0 %v6831
  %v8766 = vpop.f32.mrf.mxu0
  %v8767 = vadd.f32 %v8382, %v8766
  %v8768 = vpop.f32.mrf.mxu0
  %8769 = vmatprep.mubr.f32.mxu0 %v6841
  %8770 = vmatmul.mubr.f32.gmra.mxu0 %v6840
  %v8771 = vpop.f32.mrf.mxu0
  %v8772 = vadd.f32 %v8387, %v8771
  %v8773 = vpop.f32.mrf.mxu0
  %8774 = vmatprep.mubr.f32.mxu0 %v6850
  %8775 = vmatmul.mubr.f32.gmra.mxu0 %v6849
  %v8776 = vpop.f32.mrf.mxu0
  %v8777 = vadd.f32 %v8392, %v8776
  %v8778 = vpop.f32.mrf.mxu0
  %8779 = vmatprep.mubr.f32.mxu0 %v6859
  %8780 = vmatmul.mubr.f32.gmra.mxu0 %v6858
  %v8781 = vpop.f32.mrf.mxu0
  %v8782 = vadd.f32 %v8397, %v8781
  %v8783 = vpop.f32.mrf.mxu0
  %8784 = vmatprep.mubr.f32.mxu0 %v6868
  %8785 = vmatmul.mubr.f32.gmra.mxu0 %v6867
  %v8786 = vpop.f32.mrf.mxu0
  %v8787 = vadd.f32 %v8402, %v8786
  %v8788 = vpop.f32.mrf.mxu0
  %8789 = vmatprep.mubr.f32.mxu0 %v6877
  %8790 = vmatmul.mubr.f32.gmra.mxu0 %v6876
  %v8791 = vpop.f32.mrf.mxu0
  %v8792 = vadd.f32 %v8407, %v8791
  %v8793 = vpop.f32.mrf.mxu0
  %8794 = vmatprep.mubr.f32.mxu0 %v6886
  %8795 = vmatmul.mubr.f32.gmra.mxu0 %v6885
  %v8796 = vpop.f32.mrf.mxu0
  %v8797 = vadd.f32 %v8412, %v8796
  %v8798 = vpop.f32.mrf.mxu0
  %8799 = vmatprep.mubr.f32.mxu0 %v6895
  %8800 = vmatmul.mubr.f32.gmra.mxu0 %v6894
  %v8801 = vpop.f32.mrf.mxu0
  %v8802 = vadd.f32 %v8417, %v8801
  %v8803 = vpop.f32.mrf.mxu0
  %8804 = vmatprep.mubr.f32.mxu0 %v6904
  %8805 = vmatmul.mubr.f32.gmra.mxu0 %v6903
  %v8806 = vpop.f32.mrf.mxu0
  %v8807 = vadd.f32 %v8422, %v8806
  %v8808 = vpop.f32.mrf.mxu0
  %8809 = vmatprep.mubr.f32.mxu0 %v6913
  %8810 = vmatmul.mubr.f32.gmra.mxu0 %v6912
  %v8811 = vpop.f32.mrf.mxu0
  %v8812 = vadd.f32 %v8427, %v8811
  %v8813 = vpop.f32.mrf.mxu0
  %8814 = vmatprep.mubr.f32.mxu0 %v6922
  %8815 = vmatmul.mubr.f32.gmra.mxu0 %v6921
  %v8816 = vpop.f32.mrf.mxu0
  %v8817 = vadd.f32 %v8432, %v8816
  %v8818 = vpop.f32.mrf.mxu0
  %8819 = vmatprep.mubr.f32.mxu0 %v6931
  %8820 = vmatmul.mubr.f32.gmra.mxu0 %v6930
  %v8821 = vpop.f32.mrf.mxu0
  %v8822 = vadd.f32 %v8437, %v8821
  %v8823 = vpop.f32.mrf.mxu0
  %8824 = vmatprep.mubr.f32.mxu0 %v6940
  %8825 = vmatmul.mubr.f32.gmra.mxu0 %v6939
  %v8826 = vpop.f32.mrf.mxu0
  %v8827 = vadd.f32 %v8442, %v8826
  %v8828 = vpop.f32.mrf.mxu0
  %8829 = vmatprep.mubr.f32.mxu0 %v6949
  %8830 = vmatmul.mubr.f32.gmra.mxu0 %v6948
  %v8831 = vpop.f32.mrf.mxu0
  %v8832 = vadd.f32 %v8447, %v8831
  %v8833 = vpop.f32.mrf.mxu0
  %8834 = vmatprep.mubr.f32.mxu0 %v6958
  %8835 = vmatmul.mubr.f32.gmra.mxu0 %v6957
  %v8836 = vpop.f32.mrf.mxu0
  %v8837 = vadd.f32 %v8452, %v8836
  %v8838 = vpop.f32.mrf.mxu0
  %8839 = vmatprep.mubr.f32.mxu0 %v6967
  %8840 = vmatmul.mubr.f32.gmra.mxu0 %v6966
  %v8841 = vpop.f32.mrf.mxu0
  %v8842 = vadd.f32 %v8457, %v8841
  %v8843 = vpop.f32.mrf.mxu0
  %8844 = vmatprep.mubr.f32.mxu0 %v6976
  %8845 = vmatmul.mubr.f32.gmra.mxu0 %v6975
  %v8846 = vpop.f32.mrf.mxu0
  %v8847 = vadd.f32 %v8462, %v8846
  %v8848 = vpop.f32.mrf.mxu0
  %8849 = vmatprep.mubr.f32.mxu0 %v6985
  %8850 = vmatmul.mubr.f32.gmra.mxu0 %v6984
  %v8851 = vpop.f32.mrf.mxu0
  %v8852 = vadd.f32 %v8467, %v8851
  %v8853 = vpop.f32.mrf.mxu0
  %8854 = vmatprep.mubr.f32.mxu0 %v6994
  %8855 = vmatmul.mubr.f32.gmra.mxu0 %v6993
  %v8856 = vpop.f32.mrf.mxu0
  %v8857 = vadd.f32 %v8472, %v8856
  %v8858 = vpop.f32.mrf.mxu0
  %8859 = vmatprep.mubr.f32.mxu0 %v7003
  %8860 = vmatmul.mubr.f32.gmra.mxu0 %v7002
  %v8861 = vpop.f32.mrf.mxu0
  %v8862 = vadd.f32 %v8477, %v8861
  %v8863 = vpop.f32.mrf.mxu0
  %8864 = vmatprep.mubr.f32.mxu0 %v7012
  %8865 = vmatmul.mubr.f32.gmra.mxu0 %v7011
  %v8866 = vpop.f32.mrf.mxu0
  %v8867 = vadd.f32 %v8482, %v8866
  %v8868 = vpop.f32.mrf.mxu0
  %8869 = vmatprep.mubr.f32.mxu0 %v7021
  %8870 = vmatmul.mubr.f32.gmra.mxu0 %v7020
  %v8871 = vpop.f32.mrf.mxu0
  %v8872 = vadd.f32 %v8487, %v8871
  %v8873 = vpop.f32.mrf.mxu0
  %8874 = vmatprep.mubr.f32.mxu0 %v7030
  %8875 = vmatmul.mubr.f32.gmra.mxu0 %v7029
  %v8876 = vpop.f32.mrf.mxu0
  %v8877 = vadd.f32 %v8492, %v8876
  %v8878 = vpop.f32.mrf.mxu0
  %8879 = vmatprep.mubr.f32.mxu0 %v7039
  %8880 = vmatmul.mubr.f32.gmra.mxu0 %v7038
  %v8881 = vpop.f32.mrf.mxu0
  %v8882 = vadd.f32 %v8497, %v8881
  %v8883 = vpop.f32.mrf.mxu0
  %8884 = vmatprep.mubr.f32.mxu0 %v7048
  %8885 = vmatmul.mubr.f32.gmra.mxu0 %v7047
  %v8886 = vpop.f32.mrf.mxu0
  %v8887 = vadd.f32 %v8502, %v8886
  %v8888 = vpop.f32.mrf.mxu0
  %8889 = vmatprep.mubr.f32.mxu0 %v7057
  %8890 = vmatmul.mubr.f32.gmra.mxu0 %v7056
  %v8891 = vpop.f32.mrf.mxu0
  %v8892 = vadd.f32 %v8507, %v8891
  %v8893 = vpop.f32.mrf.mxu0
  %8894 = vmatprep.mubr.f32.mxu0 %v7066
  %8895 = vmatmul.mubr.f32.gmra.mxu0 %v7065
  %v8896 = vpop.f32.mrf.mxu0
  %v8897 = vadd.f32 %v8512, %v8896
  %v8898 = vpop.f32.mrf.mxu0
  %8899 = vmatprep.mubr.f32.mxu0 %v7075
  %8900 = vmatmul.mubr.f32.gmra.mxu0 %v7074
  %v8901 = vpop.f32.mrf.mxu0
  %v8902 = vadd.f32 %v8517, %v8901
  %v8903 = vpop.f32.mrf.mxu0
  %8904 = vmatprep.mubr.f32.mxu0 %v7084
  %8905 = vmatmul.mubr.f32.gmra.mxu0 %v7083
  %v8906 = vpop.f32.mrf.mxu0
  %v8907 = vadd.f32 %v8522, %v8906
  %v8908 = vpop.f32.mrf.mxu0
  %8909 = vmatprep.mubr.f32.mxu0 %v7093
  %8910 = vmatmul.mubr.f32.gmra.mxu0 %v7092
  %v8911 = vpop.f32.mrf.mxu0
  %v8912 = vadd.f32 %v8527, %v8911
  %v8913 = vpop.f32.mrf.mxu0
  %8914 = vmatprep.mubr.f32.mxu0 %v7102
  %8915 = vmatmul.mubr.f32.gmra.mxu0 %v7101
  %v8916 = vpop.f32.mrf.mxu0
  %v8917 = vadd.f32 %v8532, %v8916
  %v8918 = vpop.f32.mrf.mxu0
  %8919 = vmatprep.mubr.f32.mxu0 %v7111
  %8920 = vmatmul.mubr.f32.gmra.mxu0 %v7110
  %v8921 = vpop.f32.mrf.mxu0
  %v8922 = vadd.f32 %v8537, %v8921
  %v8923 = vpop.f32.mrf.mxu0
  %8924 = vmatprep.mubr.f32.mxu0 %v7120
  %8925 = vmatmul.mubr.f32.gmra.mxu0 %v7119
  %v8926 = vpop.f32.mrf.mxu0
  %v8927 = vadd.f32 %v8542, %v8926
  %v8928 = vpop.f32.mrf.mxu0
  %8929 = vmatprep.mubr.f32.mxu0 %v7129
  %8930 = vmatmul.mubr.f32.gmra.mxu0 %v7128
  %v8931 = vpop.f32.mrf.mxu0
  %v8932 = vadd.f32 %v8547, %v8931
  %v8933 = vpop.f32.mrf.mxu0
  %8934 = vmatprep.mubr.f32.mxu0 %v7138
  %8935 = vmatmul.mubr.f32.gmra.mxu0 %v7137
  %v8936 = vpop.f32.mrf.mxu0
  %v8937 = vadd.f32 %v8552, %v8936
  %v8938 = vpop.f32.mrf.mxu0
  %8939 = vmatprep.mubr.f32.mxu0 %v7147
  %8940 = vmatmul.mubr.f32.gmra.mxu0 %v7146
  %v8941 = vpop.f32.mrf.mxu0
  %v8942 = vadd.f32 %v8557, %v8941
  %v8943 = vpop.f32.mrf.mxu0
  %8944 = vmatprep.mubr.f32.mxu0 %v7156
  %8945 = vmatmul.mubr.f32.gmra.mxu0 %v7155
  %v8946 = vpop.f32.mrf.mxu0
  %v8947 = vadd.f32 %v8562, %v8946
  %v8948 = vpop.f32.mrf.mxu0
  %8949 = vmatprep.mubr.f32.mxu0 %v7165
  %8950 = vmatmul.mubr.f32.gmra.mxu0 %v7164
  %v8951 = vpop.f32.mrf.mxu0
  %v8952 = vadd.f32 %v8567, %v8951
  %v8953 = vpop.f32.mrf.mxu0
  %8954 = vmatprep.mubr.f32.mxu0 %v7174
  %8955 = vmatmul.mubr.f32.gmra.mxu0 %v7173
  %v8956 = vpop.f32.mrf.mxu0
  %v8957 = vadd.f32 %v8572, %v8956
  %v8958 = vpop.f32.mrf.mxu0
  %8959 = vmatprep.mubr.f32.mxu0 %v7183
  %8960 = vmatmul.mubr.f32.gmra.mxu0 %v7182
  %v8961 = vpop.f32.mrf.mxu0
  %v8962 = vadd.f32 %v8577, %v8961
  %v8963 = vpop.f32.mrf.mxu0
  %8964 = vmatprep.mubr.f32.mxu0 %v7192
  %8965 = vmatmul.mubr.f32.gmra.mxu0 %v7191
  %v8966 = vpop.f32.mrf.mxu0
  %v8967 = vadd.f32 %v8582, %v8966
  %v8968 = vpop.f32.mrf.mxu0
  %8969 = vmatprep.mubr.f32.mxu0 %v7201
  %8970 = vmatmul.mubr.f32.gmra.mxu0 %v7200
  %v8971 = vpop.f32.mrf.mxu0
  %v8972 = vadd.f32 %v8587, %v8971
  %v8973 = vpop.f32.mrf.mxu0
  %8974 = vmatprep.mubr.f32.mxu0 %v7210
  %8975 = vmatmul.mubr.f32.gmra.mxu0 %v7209
  %v8976 = vpop.f32.mrf.mxu0
  %v8977 = vadd.f32 %v8592, %v8976
  %v8978 = vpop.f32.mrf.mxu0
  %8979 = vmatprep.mubr.f32.mxu0 %v7219
  %8980 = vmatmul.mubr.f32.gmra.mxu0 %v7218
  %v8981 = vpop.f32.mrf.mxu0
  %v8982 = vadd.f32 %v8597, %v8981
  %v8983 = vpop.f32.mrf.mxu0
  %8984 = vmatprep.mubr.f32.mxu0 %v7228
  %8985 = vmatmul.mubr.f32.gmra.mxu0 %v7227
  %v8986 = vpop.f32.mrf.mxu0
  %v8987 = vadd.f32 %v8602, %v8986
  %v8988 = vpop.f32.mrf.mxu0
  %8989 = vmatprep.mubr.f32.mxu0 %v7237
  %8990 = vmatmul.mubr.f32.gmra.mxu0 %v7236
  %v8991 = vpop.f32.mrf.mxu0
  %v8992 = vadd.f32 %v8607, %v8991
  %v8993 = vpop.f32.mrf.mxu0
  %8994 = vmatprep.mubr.f32.mxu0 %v7246
  %8995 = vmatmul.mubr.f32.gmra.mxu0 %v7245
  %v8996 = vpop.f32.mrf.mxu0
  %v8997 = vadd.f32 %v8612, %v8996
  %v8998 = vpop.f32.mrf.mxu0
  %8999 = vmatprep.mubr.f32.mxu0 %v7255
  %9000 = vmatmul.mubr.f32.gmra.mxu0 %v7254
  %v9001 = vpop.f32.mrf.mxu0
  %v9002 = vadd.f32 %v8617, %v9001
  %v9003 = vpop.f32.mrf.mxu0
  %9004 = vmatprep.mubr.f32.mxu0 %v7264
  %9005 = vmatmul.mubr.f32.gmra.mxu0 %v7263
  %v9006 = vpop.f32.mrf.mxu0
  %v9007 = vadd.f32 %v8622, %v9006
  %v9008 = vpop.f32.mrf.mxu0
  %9009 = vmatprep.mubr.f32.mxu0 %v7273
  %9010 = vmatmul.mubr.f32.gmra.mxu0 %v7272
  %v9011 = vpop.f32.mrf.mxu0
  %v9012 = vadd.f32 %v8627, %v9011
  %v9013 = vpop.f32.mrf.mxu0
  %9014 = vmatprep.mubr.f32.mxu0 %v7282
  %9015 = vmatmul.mubr.f32.gmra.mxu0 %v7281
  %v9016 = vpop.f32.mrf.mxu0
  %v9017 = vadd.f32 %v8632, %v9016
  %v9018 = vpop.f32.mrf.mxu0
  %9019 = vmatprep.mubr.f32.mxu0 %v7291
  %9020 = vmatmul.mubr.f32.gmra.mxu0 %v7290
  %v9021 = vpop.f32.mrf.mxu0
  %v9022 = vadd.f32 %v8637, %v9021
  %v9023 = vpop.f32.mrf.mxu0
  %9024 = vmatprep.mubr.f32.mxu0 %v7300
  %9025 = vmatmul.mubr.f32.gmra.mxu0 %v7299
  %v9026 = vpop.f32.mrf.mxu0
  %v9027 = vadd.f32 %v8642, %v9026
  %v9028 = vpop.f32.mrf.mxu0
  %9029 = vmatprep.mubr.f32.mxu0 %v7309
  %9030 = vmatmul.mubr.f32.gmra.mxu0 %v7308
  %v9031 = vpop.f32.mrf.mxu0
  %v9032 = vadd.f32 %v8647, %v9031
  %v9033 = vpop.f32.mrf.mxu0
  %9034 = vmatprep.mubr.f32.mxu0 %v7318
  %9035 = vmatmul.mubr.f32.gmra.mxu0 %v7317
  %v9036 = vpop.f32.mrf.mxu0
  %v9037 = vadd.f32 %v8652, %v9036
  %v9038 = vpop.f32.mrf.mxu0
  %9039 = vmatprep.mubr.f32.mxu0 %v7327
  %9040 = vmatmul.mubr.f32.gmra.mxu0 %v7326
  %v9041 = vpop.f32.mrf.mxu0
  %v9042 = vadd.f32 %v8657, %v9041
  %v9043 = vpop.f32.mrf.mxu0
  %9044 = vmatprep.mubr.f32.mxu0 %v7336
  %9045 = vmatmul.mubr.f32.gmra.mxu0 %v7335
  %v9046 = vpop.f32.mrf.mxu0
  %v9047 = vadd.f32 %v8662, %v9046
  %v9048 = vpop.f32.mrf.mxu0
  %9049 = vmatprep.mubr.f32.mxu0 %v7345
  %9050 = vmatmul.mubr.f32.gmra.mxu0 %v7344
  %v9051 = vpop.f32.mrf.mxu0
  %v9052 = vadd.f32 %v8667, %v9051
  %v9053 = vpop.f32.mrf.mxu0
  %9054 = vmatprep.mubr.f32.mxu0 %v7354
  %9055 = vmatmul.mubr.f32.gmra.mxu0 %v7353
  %v9056 = vpop.f32.mrf.mxu0
  %v9057 = vadd.f32 %v8672, %v9056
  %v9058 = vpop.f32.mrf.mxu0
  %9059 = vmatprep.mubr.f32.mxu0 %v7363
  %9060 = vmatmul.mubr.f32.gmra.mxu0 %v7362
  %v9061 = vpop.f32.mrf.mxu0
  %v9062 = vadd.f32 %v8677, %v9061
  %v9063 = vpop.f32.mrf.mxu0
  %9064 = vmatprep.mubr.f32.mxu0 %v7372
  %9065 = vmatmul.mubr.f32.gmra.mxu0 %v7371
  %v9066 = vpop.f32.mrf.mxu0
  %v9067 = vadd.f32 %v8682, %v9066
  %v9068 = vpop.f32.mrf.mxu0
  %9069 = vmatprep.mubr.f32.mxu0 %v7381
  %9070 = vmatmul.mubr.f32.gmra.mxu0 %v7380
  %v9071 = vpop.f32.mrf.mxu0
  %v9072 = vadd.f32 %v8687, %v9071
  %v9073 = vpop.f32.mrf.mxu0
  %9074 = vmatprep.mubr.f32.mxu0 %v7390
  %9075 = vmatmul.mubr.f32.gmra.mxu0 %v7389
  %v9076 = vpop.f32.mrf.mxu0
  %v9077 = vadd.f32 %v8692, %v9076
  %v9078 = vpop.f32.mrf.mxu0
  %9079 = vmatprep.mubr.f32.mxu0 %v7399
  %9080 = vmatmul.mubr.f32.gmra.mxu0 %v7398
  %v9081 = vpop.f32.mrf.mxu0
  %v9082 = vadd.f32 %v8697, %v9081
  %v9083 = vpop.f32.mrf.mxu0
  %9084 = vdwg.mxu0
  %9085 = vmatprep.subr.mxu0 0.0
  %9086 = vmatpush1.msra.mxu0 %v7544
  %9087 = vmatprep.subr.mxu0 0.0
  %9088 = vmatpush1.msra.mxu0 %v7543
  %9089 = vmatprep.subr.mxu0 0.0
  %9090 = vmatpush1.msra.mxu0 %v7542
  %9091 = vmatprep.subr.mxu0 0.0
  %9092 = vmatpush1.msra.mxu0 %v7541
  %9093 = vmatprep.subr.mxu0 0.0
  %9094 = vmatpush1.msra.mxu0 %v7540
  %9095 = vmatprep.subr.mxu0 0.0
  %9096 = vmatpush1.msra.mxu0 %v7539
  %9097 = vmatprep.subr.mxu0 0.0
  %9098 = vmatpush1.msra.mxu0 %v7538
  %9099 = vmatprep.subr.mxu0 0.0
  %9100 = vmatpush1.msra.mxu0 %v7537
  %9101 = vmatprep.subr.mxu0 0.0
  %9102 = vmatpush1.msra.mxu0 %v7536
  %9103 = vmatprep.subr.mxu0 0.0
  %9104 = vmatpush1.msra.mxu0 %v7535
  %9105 = vmatprep.subr.mxu0 0.0
  %9106 = vmatpush1.msra.mxu0 %v7534
  %9107 = vmatprep.subr.mxu0 0.0
  %9108 = vmatpush1.msra.mxu0 %v7533
  %9109 = vmatprep.subr.mxu0 0.0
  %9110 = vmatpush1.msra.mxu0 %v7532
  %9111 = vmatprep.subr.mxu0 0.0
  %9112 = vmatpush1.msra.mxu0 %v7531
  %9113 = vmatprep.subr.mxu0 0.0
  %9114 = vmatpush1.msra.mxu0 %v7530
  %9115 = vmatprep.subr.mxu0 0.0
  %9116 = vmatpush1.msra.mxu0 %v7529
  %9117 = vmatprep.subr.mxu0 0.0
  %9118 = vmatpush2.msra.mxu0 0.0
  %9119 = vmatprep.subr.mxu0 0.0
  %9120 = vmatpush2.msra.mxu0 0.0
  %9121 = vmatprep.subr.mxu0 0.0
  %9122 = vmatpush2.msra.mxu0 0.0
  %9123 = vmatprep.subr.mxu0 0.0
  %9124 = vmatpush2.msra.mxu0 0.0
  %9125 = vmatprep.subr.mxu0 0.0
  %9126 = vmatpush2.msra.mxu0 0.0
  %9127 = vmatprep.subr.mxu0 0.0
  %9128 = vmatpush2.msra.mxu0 0.0
  %9129 = vmatprep.subr.mxu0 0.0
  %9130 = vmatpush2.msra.mxu0 0.0
  %9131 = vmatprep.subr.mxu0 0.0
  %9132 = vmatpush2.msra.mxu0 0.0
  %9133 = vmatprep.subr.mxu0 0.0
  %9134 = vmatpush2.msra.mxu0 0.0
  %9135 = vmatprep.subr.mxu0 0.0
  %9136 = vmatpush2.msra.mxu0 0.0
  %9137 = vmatprep.subr.mxu0 0.0
  %9138 = vmatpush2.msra.mxu0 0.0
  %9139 = vmatprep.subr.mxu0 0.0
  %9140 = vmatpush2.msra.mxu0 0.0
  %9141 = vmatprep.subr.mxu0 0.0
  %9142 = vmatpush2.msra.mxu0 0.0
  %9143 = vmatprep.subr.mxu0 0.0
  %9144 = vmatpush2.msra.mxu0 0.0
  %9145 = vmatprep.subr.mxu0 0.0
  %9146 = vmatpush2.msra.mxu0 0.0
  %9147 = vmatprep.subr.mxu0 0.0
  %9148 = vmatpush2.msra.mxu0 0.0
  %9149 = vmatprep.mubr.f32.mxu0 0.0
  %9150 = vmatmul.mubr.f32.gmra.mxu0 %v6833
  %v9151 = vpop.f32.mrf.mxu0
  %v9152 = vadd.f32 %v8767, %v9151
  %v9153 = vpop.f32.mrf.mxu0
  %9154 = vmatprep.mubr.f32.mxu0 0.0
  %9155 = vmatmul.mubr.f32.gmra.mxu0 %v6842
  %v9156 = vpop.f32.mrf.mxu0
  %v9157 = vadd.f32 %v8772, %v9156
  %v9158 = vpop.f32.mrf.mxu0
  %9159 = vmatprep.mubr.f32.mxu0 0.0
  %9160 = vmatmul.mubr.f32.gmra.mxu0 %v6851
  %v9161 = vpop.f32.mrf.mxu0
  %v9162 = vadd.f32 %v8777, %v9161
  %v9163 = vpop.f32.mrf.mxu0
  %9164 = vmatprep.mubr.f32.mxu0 0.0
  %9165 = vmatmul.mubr.f32.gmra.mxu0 %v6860
  %v9166 = vpop.f32.mrf.mxu0
  %v9167 = vadd.f32 %v8782, %v9166
  %v9168 = vpop.f32.mrf.mxu0
  %9169 = vmatprep.mubr.f32.mxu0 0.0
  %9170 = vmatmul.mubr.f32.gmra.mxu0 %v6869
  %v9171 = vpop.f32.mrf.mxu0
  %v9172 = vadd.f32 %v8787, %v9171
  %v9173 = vpop.f32.mrf.mxu0
  %9174 = vmatprep.mubr.f32.mxu0 0.0
  %9175 = vmatmul.mubr.f32.gmra.mxu0 %v6878
  %v9176 = vpop.f32.mrf.mxu0
  %v9177 = vadd.f32 %v8792, %v9176
  %v9178 = vpop.f32.mrf.mxu0
  %9179 = vmatprep.mubr.f32.mxu0 0.0
  %9180 = vmatmul.mubr.f32.gmra.mxu0 %v6887
  %v9181 = vpop.f32.mrf.mxu0
  %v9182 = vadd.f32 %v8797, %v9181
  %v9183 = vpop.f32.mrf.mxu0
  %9184 = vmatprep.mubr.f32.mxu0 0.0
  %9185 = vmatmul.mubr.f32.gmra.mxu0 %v6896
  %v9186 = vpop.f32.mrf.mxu0
  %v9187 = vadd.f32 %v8802, %v9186
  %v9188 = vpop.f32.mrf.mxu0
  %9189 = vmatprep.mubr.f32.mxu0 0.0
  %9190 = vmatmul.mubr.f32.gmra.mxu0 %v6905
  %v9191 = vpop.f32.mrf.mxu0
  %v9192 = vadd.f32 %v8807, %v9191
  %v9193 = vpop.f32.mrf.mxu0
  %9194 = vmatprep.mubr.f32.mxu0 0.0
  %9195 = vmatmul.mubr.f32.gmra.mxu0 %v6914
  %v9196 = vpop.f32.mrf.mxu0
  %v9197 = vadd.f32 %v8812, %v9196
  %v9198 = vpop.f32.mrf.mxu0
  %9199 = vmatprep.mubr.f32.mxu0 0.0
  %9200 = vmatmul.mubr.f32.gmra.mxu0 %v6923
  %v9201 = vpop.f32.mrf.mxu0
  %v9202 = vadd.f32 %v8817, %v9201
  %v9203 = vpop.f32.mrf.mxu0
  %9204 = vmatprep.mubr.f32.mxu0 0.0
  %9205 = vmatmul.mubr.f32.gmra.mxu0 %v6932
  %v9206 = vpop.f32.mrf.mxu0
  %v9207 = vadd.f32 %v8822, %v9206
  %v9208 = vpop.f32.mrf.mxu0
  %9209 = vmatprep.mubr.f32.mxu0 0.0
  %9210 = vmatmul.mubr.f32.gmra.mxu0 %v6941
  %v9211 = vpop.f32.mrf.mxu0
  %v9212 = vadd.f32 %v8827, %v9211
  %v9213 = vpop.f32.mrf.mxu0
  %9214 = vmatprep.mubr.f32.mxu0 0.0
  %9215 = vmatmul.mubr.f32.gmra.mxu0 %v6950
  %v9216 = vpop.f32.mrf.mxu0
  %v9217 = vadd.f32 %v8832, %v9216
  %v9218 = vpop.f32.mrf.mxu0
  %9219 = vmatprep.mubr.f32.mxu0 0.0
  %9220 = vmatmul.mubr.f32.gmra.mxu0 %v6959
  %v9221 = vpop.f32.mrf.mxu0
  %v9222 = vadd.f32 %v8837, %v9221
  %v9223 = vpop.f32.mrf.mxu0
  %9224 = vmatprep.mubr.f32.mxu0 0.0
  %9225 = vmatmul.mubr.f32.gmra.mxu0 %v6968
  %v9226 = vpop.f32.mrf.mxu0
  %v9227 = vadd.f32 %v8842, %v9226
  %v9228 = vpop.f32.mrf.mxu0
  %9229 = vmatprep.mubr.f32.mxu0 0.0
  %9230 = vmatmul.mubr.f32.gmra.mxu0 %v6977
  %v9231 = vpop.f32.mrf.mxu0
  %v9232 = vadd.f32 %v8847, %v9231
  %v9233 = vpop.f32.mrf.mxu0
  %9234 = vmatprep.mubr.f32.mxu0 0.0
  %9235 = vmatmul.mubr.f32.gmra.mxu0 %v6986
  %v9236 = vpop.f32.mrf.mxu0
  %v9237 = vadd.f32 %v8852, %v9236
  %v9238 = vpop.f32.mrf.mxu0
  %9239 = vmatprep.mubr.f32.mxu0 0.0
  %9240 = vmatmul.mubr.f32.gmra.mxu0 %v6995
  %v9241 = vpop.f32.mrf.mxu0
  %v9242 = vadd.f32 %v8857, %v9241
  %v9243 = vpop.f32.mrf.mxu0
  %9244 = vmatprep.mubr.f32.mxu0 0.0
  %9245 = vmatmul.mubr.f32.gmra.mxu0 %v7004
  %v9246 = vpop.f32.mrf.mxu0
  %v9247 = vadd.f32 %v8862, %v9246
  %v9248 = vpop.f32.mrf.mxu0
  %9249 = vmatprep.mubr.f32.mxu0 0.0
  %9250 = vmatmul.mubr.f32.gmra.mxu0 %v7013
  %v9251 = vpop.f32.mrf.mxu0
  %v9252 = vadd.f32 %v8867, %v9251
  %v9253 = vpop.f32.mrf.mxu0
  %9254 = vmatprep.mubr.f32.mxu0 0.0
  %9255 = vmatmul.mubr.f32.gmra.mxu0 %v7022
  %v9256 = vpop.f32.mrf.mxu0
  %v9257 = vadd.f32 %v8872, %v9256
  %v9258 = vpop.f32.mrf.mxu0
  %9259 = vmatprep.mubr.f32.mxu0 0.0
  %9260 = vmatmul.mubr.f32.gmra.mxu0 %v7031
  %v9261 = vpop.f32.mrf.mxu0
  %v9262 = vadd.f32 %v8877, %v9261
  %v9263 = vpop.f32.mrf.mxu0
  %9264 = vmatprep.mubr.f32.mxu0 0.0
  %9265 = vmatmul.mubr.f32.gmra.mxu0 %v7040
  %v9266 = vpop.f32.mrf.mxu0
  %v9267 = vadd.f32 %v8882, %v9266
  %v9268 = vpop.f32.mrf.mxu0
  %9269 = vmatprep.mubr.f32.mxu0 0.0
  %9270 = vmatmul.mubr.f32.gmra.mxu0 %v7049
  %v9271 = vpop.f32.mrf.mxu0
  %v9272 = vadd.f32 %v8887, %v9271
  %v9273 = vpop.f32.mrf.mxu0
  %9274 = vmatprep.mubr.f32.mxu0 0.0
  %9275 = vmatmul.mubr.f32.gmra.mxu0 %v7058
  %v9276 = vpop.f32.mrf.mxu0
  %v9277 = vadd.f32 %v8892, %v9276
  %v9278 = vpop.f32.mrf.mxu0
  %9279 = vmatprep.mubr.f32.mxu0 0.0
  %9280 = vmatmul.mubr.f32.gmra.mxu0 %v7067
  %v9281 = vpop.f32.mrf.mxu0
  %v9282 = vadd.f32 %v8897, %v9281
  %v9283 = vpop.f32.mrf.mxu0
  %9284 = vmatprep.mubr.f32.mxu0 0.0
  %9285 = vmatmul.mubr.f32.gmra.mxu0 %v7076
  %v9286 = vpop.f32.mrf.mxu0
  %v9287 = vadd.f32 %v8902, %v9286
  %v9288 = vpop.f32.mrf.mxu0
  %9289 = vmatprep.mubr.f32.mxu0 0.0
  %9290 = vmatmul.mubr.f32.gmra.mxu0 %v7085
  %v9291 = vpop.f32.mrf.mxu0
  %v9292 = vadd.f32 %v8907, %v9291
  %v9293 = vpop.f32.mrf.mxu0
  %9294 = vmatprep.mubr.f32.mxu0 0.0
  %9295 = vmatmul.mubr.f32.gmra.mxu0 %v7094
  %v9296 = vpop.f32.mrf.mxu0
  %v9297 = vadd.f32 %v8912, %v9296
  %v9298 = vpop.f32.mrf.mxu0
  %9299 = vmatprep.mubr.f32.mxu0 0.0
  %9300 = vmatmul.mubr.f32.gmra.mxu0 %v7103
  %v9301 = vpop.f32.mrf.mxu0
  %v9302 = vadd.f32 %v8917, %v9301
  %v9303 = vpop.f32.mrf.mxu0
  %9304 = vmatprep.mubr.f32.mxu0 0.0
  %9305 = vmatmul.mubr.f32.gmra.mxu0 %v7112
  %v9306 = vpop.f32.mrf.mxu0
  %v9307 = vadd.f32 %v8922, %v9306
  %v9308 = vpop.f32.mrf.mxu0
  %9309 = vmatprep.mubr.f32.mxu0 0.0
  %9310 = vmatmul.mubr.f32.gmra.mxu0 %v7121
  %v9311 = vpop.f32.mrf.mxu0
  %v9312 = vadd.f32 %v8927, %v9311
  %v9313 = vpop.f32.mrf.mxu0
  %9314 = vmatprep.mubr.f32.mxu0 0.0
  %9315 = vmatmul.mubr.f32.gmra.mxu0 %v7130
  %v9316 = vpop.f32.mrf.mxu0
  %v9317 = vadd.f32 %v8932, %v9316
  %v9318 = vpop.f32.mrf.mxu0
  %9319 = vmatprep.mubr.f32.mxu0 0.0
  %9320 = vmatmul.mubr.f32.gmra.mxu0 %v7139
  %v9321 = vpop.f32.mrf.mxu0
  %v9322 = vadd.f32 %v8937, %v9321
  %v9323 = vpop.f32.mrf.mxu0
  %9324 = vmatprep.mubr.f32.mxu0 0.0
  %9325 = vmatmul.mubr.f32.gmra.mxu0 %v7148
  %v9326 = vpop.f32.mrf.mxu0
  %v9327 = vadd.f32 %v8942, %v9326
  %v9328 = vpop.f32.mrf.mxu0
  %9329 = vmatprep.mubr.f32.mxu0 0.0
  %9330 = vmatmul.mubr.f32.gmra.mxu0 %v7157
  %v9331 = vpop.f32.mrf.mxu0
  %v9332 = vadd.f32 %v8947, %v9331
  %v9333 = vpop.f32.mrf.mxu0
  %9334 = vmatprep.mubr.f32.mxu0 0.0
  %9335 = vmatmul.mubr.f32.gmra.mxu0 %v7166
  %v9336 = vpop.f32.mrf.mxu0
  %v9337 = vadd.f32 %v8952, %v9336
  %v9338 = vpop.f32.mrf.mxu0
  %9339 = vmatprep.mubr.f32.mxu0 0.0
  %9340 = vmatmul.mubr.f32.gmra.mxu0 %v7175
  %v9341 = vpop.f32.mrf.mxu0
  %v9342 = vadd.f32 %v8957, %v9341
  %v9343 = vpop.f32.mrf.mxu0
  %9344 = vmatprep.mubr.f32.mxu0 0.0
  %9345 = vmatmul.mubr.f32.gmra.mxu0 %v7184
  %v9346 = vpop.f32.mrf.mxu0
  %v9347 = vadd.f32 %v8962, %v9346
  %v9348 = vpop.f32.mrf.mxu0
  %9349 = vmatprep.mubr.f32.mxu0 0.0
  %9350 = vmatmul.mubr.f32.gmra.mxu0 %v7193
  %v9351 = vpop.f32.mrf.mxu0
  %v9352 = vadd.f32 %v8967, %v9351
  %v9353 = vpop.f32.mrf.mxu0
  %9354 = vmatprep.mubr.f32.mxu0 0.0
  %9355 = vmatmul.mubr.f32.gmra.mxu0 %v7202
  %v9356 = vpop.f32.mrf.mxu0
  %v9357 = vadd.f32 %v8972, %v9356
  %v9358 = vpop.f32.mrf.mxu0
  %9359 = vmatprep.mubr.f32.mxu0 0.0
  %9360 = vmatmul.mubr.f32.gmra.mxu0 %v7211
  %v9361 = vpop.f32.mrf.mxu0
  %v9362 = vadd.f32 %v8977, %v9361
  %v9363 = vpop.f32.mrf.mxu0
  %9364 = vmatprep.mubr.f32.mxu0 0.0
  %9365 = vmatmul.mubr.f32.gmra.mxu0 %v7220
  %v9366 = vpop.f32.mrf.mxu0
  %v9367 = vadd.f32 %v8982, %v9366
  %v9368 = vpop.f32.mrf.mxu0
  %9369 = vmatprep.mubr.f32.mxu0 0.0
  %9370 = vmatmul.mubr.f32.gmra.mxu0 %v7229
  %v9371 = vpop.f32.mrf.mxu0
  %v9372 = vadd.f32 %v8987, %v9371
  %v9373 = vpop.f32.mrf.mxu0
  %9374 = vmatprep.mubr.f32.mxu0 0.0
  %9375 = vmatmul.mubr.f32.gmra.mxu0 %v7238
  %v9376 = vpop.f32.mrf.mxu0
  %v9377 = vadd.f32 %v8992, %v9376
  %v9378 = vpop.f32.mrf.mxu0
  %9379 = vmatprep.mubr.f32.mxu0 0.0
  %9380 = vmatmul.mubr.f32.gmra.mxu0 %v7247
  %v9381 = vpop.f32.mrf.mxu0
  %v9382 = vadd.f32 %v8997, %v9381
  %v9383 = vpop.f32.mrf.mxu0
  %9384 = vmatprep.mubr.f32.mxu0 0.0
  %9385 = vmatmul.mubr.f32.gmra.mxu0 %v7256
  %v9386 = vpop.f32.mrf.mxu0
  %v9387 = vadd.f32 %v9002, %v9386
  %v9388 = vpop.f32.mrf.mxu0
  %9389 = vmatprep.mubr.f32.mxu0 0.0
  %9390 = vmatmul.mubr.f32.gmra.mxu0 %v7265
  %v9391 = vpop.f32.mrf.mxu0
  %v9392 = vadd.f32 %v9007, %v9391
  %v9393 = vpop.f32.mrf.mxu0
  %9394 = vmatprep.mubr.f32.mxu0 0.0
  %9395 = vmatmul.mubr.f32.gmra.mxu0 %v7274
  %v9396 = vpop.f32.mrf.mxu0
  %v9397 = vadd.f32 %v9012, %v9396
  %v9398 = vpop.f32.mrf.mxu0
  %9399 = vmatprep.mubr.f32.mxu0 0.0
  %9400 = vmatmul.mubr.f32.gmra.mxu0 %v7283
  %v9401 = vpop.f32.mrf.mxu0
  %v9402 = vadd.f32 %v9017, %v9401
  %v9403 = vpop.f32.mrf.mxu0
  %9404 = vmatprep.mubr.f32.mxu0 0.0
  %9405 = vmatmul.mubr.f32.gmra.mxu0 %v7292
  %v9406 = vpop.f32.mrf.mxu0
  %v9407 = vadd.f32 %v9022, %v9406
  %v9408 = vpop.f32.mrf.mxu0
  %9409 = vmatprep.mubr.f32.mxu0 0.0
  %9410 = vmatmul.mubr.f32.gmra.mxu0 %v7301
  %v9411 = vpop.f32.mrf.mxu0
  %v9412 = vadd.f32 %v9027, %v9411
  %v9413 = vpop.f32.mrf.mxu0
  %9414 = vmatprep.mubr.f32.mxu0 0.0
  %9415 = vmatmul.mubr.f32.gmra.mxu0 %v7310
  %v9416 = vpop.f32.mrf.mxu0
  %v9417 = vadd.f32 %v9032, %v9416
  %v9418 = vpop.f32.mrf.mxu0
  %9419 = vmatprep.mubr.f32.mxu0 0.0
  %9420 = vmatmul.mubr.f32.gmra.mxu0 %v7319
  %v9421 = vpop.f32.mrf.mxu0
  %v9422 = vadd.f32 %v9037, %v9421
  %v9423 = vpop.f32.mrf.mxu0
  %9424 = vmatprep.mubr.f32.mxu0 0.0
  %9425 = vmatmul.mubr.f32.gmra.mxu0 %v7328
  %v9426 = vpop.f32.mrf.mxu0
  %v9427 = vadd.f32 %v9042, %v9426
  %v9428 = vpop.f32.mrf.mxu0
  %9429 = vmatprep.mubr.f32.mxu0 0.0
  %9430 = vmatmul.mubr.f32.gmra.mxu0 %v7337
  %v9431 = vpop.f32.mrf.mxu0
  %v9432 = vadd.f32 %v9047, %v9431
  %v9433 = vpop.f32.mrf.mxu0
  %9434 = vmatprep.mubr.f32.mxu0 0.0
  %9435 = vmatmul.mubr.f32.gmra.mxu0 %v7346
  %v9436 = vpop.f32.mrf.mxu0
  %v9437 = vadd.f32 %v9052, %v9436
  %v9438 = vpop.f32.mrf.mxu0
  %9439 = vmatprep.mubr.f32.mxu0 0.0
  %9440 = vmatmul.mubr.f32.gmra.mxu0 %v7355
  %v9441 = vpop.f32.mrf.mxu0
  %v9442 = vadd.f32 %v9057, %v9441
  %v9443 = vpop.f32.mrf.mxu0
  %9444 = vmatprep.mubr.f32.mxu0 0.0
  %9445 = vmatmul.mubr.f32.gmra.mxu0 %v7364
  %v9446 = vpop.f32.mrf.mxu0
  %v9447 = vadd.f32 %v9062, %v9446
  %v9448 = vpop.f32.mrf.mxu0
  %9449 = vmatprep.mubr.f32.mxu0 0.0
  %9450 = vmatmul.mubr.f32.gmra.mxu0 %v7373
  %v9451 = vpop.f32.mrf.mxu0
  %v9452 = vadd.f32 %v9067, %v9451
  %v9453 = vpop.f32.mrf.mxu0
  %9454 = vmatprep.mubr.f32.mxu0 0.0
  %9455 = vmatmul.mubr.f32.gmra.mxu0 %v7382
  %v9456 = vpop.f32.mrf.mxu0
  %v9457 = vadd.f32 %v9072, %v9456
  %v9458 = vpop.f32.mrf.mxu0
  %9459 = vmatprep.mubr.f32.mxu0 0.0
  %9460 = vmatmul.mubr.f32.gmra.mxu0 %v7391
  %v9461 = vpop.f32.mrf.mxu0
  %v9462 = vadd.f32 %v9077, %v9461
  %v9463 = vpop.f32.mrf.mxu0
  %9464 = vmatprep.mubr.f32.mxu0 0.0
  %9465 = vmatmul.mubr.f32.gmra.mxu0 %v7400
  %v9466 = vpop.f32.mrf.mxu0
  %v9467 = vadd.f32 %v9082, %v9466
  %v9468 = vpop.f32.mrf.mxu0
  %9469 = vdwg.mxu0
  %v9470 = vld [vmem:[%s6] sm:$0x1]
  %v9471 = vld [vmem:[%s7] sm:$0x1]
  %v9472 = vadd.f32 %v9152, %v9157
  %v9473 = vadd.f32 %v9472, %v9162
  %v9474 = vadd.f32 %v9473, %v9167
  %v9475 = vadd.f32 %v9474, %v9172
  %v9476 = vadd.f32 %v9475, %v9177
  %v9477 = vadd.f32 %v9476, %v9182
  %v9478 = vadd.f32 %v9477, %v9187
  %v9479 = vadd.f32 %v9478, %v9192
  %v9480 = vadd.f32 %v9479, %v9197
  %v9481 = vadd.f32 %v9480, %v9202
  %v9482 = vadd.f32 %v9481, %v9207
  %v9483 = vadd.f32 %v9482, %v9212
  %v9484 = vadd.f32 %v9483, %v9217
  %v9485 = vadd.f32 %v9484, %v9222
  %v9486 = vadd.f32 %v9485, %v9227
  %v9487 = vadd.f32 %v9486, %v9232
  %v9488 = vadd.f32 %v9487, %v9237
  %v9489 = vadd.f32 %v9488, %v9242
  %v9490 = vadd.f32 %v9489, %v9247
  %v9491 = vadd.f32 %v9490, %v9252
  %v9492 = vadd.f32 %v9491, %v9257
  %v9493 = vadd.f32 %v9492, %v9262
  %v9494 = vadd.f32 %v9493, %v9267
  %v9495 = vadd.f32 %v9494, %v9272
  %v9496 = vadd.f32 %v9495, %v9277
  %v9497 = vadd.f32 %v9496, %v9282
  %v9498 = vadd.f32 %v9497, %v9287
  %v9499 = vadd.f32 %v9498, %v9292
  %v9500 = vadd.f32 %v9499, %v9297
  %v9501 = vadd.f32 %v9500, %v9302
  %v9502 = vadd.f32 %v9501, %v9307
  %v9503 = vadd.f32 %v9502, %v9312
  %v9504 = vadd.f32 %v9503, %v9317
  %v9505 = vadd.f32 %v9504, %v9322
  %v9506 = vadd.f32 %v9505, %v9327
  %v9507 = vadd.f32 %v9506, %v9332
  %v9508 = vadd.f32 %v9507, %v9337
  %v9509 = vadd.f32 %v9508, %v9342
  %v9510 = vadd.f32 %v9509, %v9347
  %v9511 = vadd.f32 %v9510, %v9352
  %v9512 = vadd.f32 %v9511, %v9357
  %v9513 = vadd.f32 %v9512, %v9362
  %v9514 = vadd.f32 %v9513, %v9367
  %v9515 = vadd.f32 %v9514, %v9372
  %v9516 = vadd.f32 %v9515, %v9377
  %v9517 = vadd.f32 %v9516, %v9382
  %v9518 = vadd.f32 %v9517, %v9387
  %v9519 = vadd.f32 %v9518, %v9392
  %v9520 = vadd.f32 %v9519, %v9397
  %v9521 = vadd.f32 %v9520, %v9402
  %v9522 = vadd.f32 %v9521, %v9407
  %v9523 = vadd.f32 %v9522, %v9412
  %v9524 = vadd.f32 %v9523, %v9417
  %v9525 = vadd.f32 %v9524, %v9422
  %v9526 = vadd.f32 %v9525, %v9427
  %v9527 = vadd.f32 %v9526, %v9432
  %v9528 = vadd.f32 %v9527, %v9437
  %v9529 = vadd.f32 %v9528, %v9442
  %v9530 = vadd.f32 %v9529, %v9447
  %v9531 = vadd.f32 %v9530, %v9452
  %v9532 = vadd.f32 %v9531, %v9457
  %v9533 = vadd.f32 %v9532, %v9462
  %v9534 = vadd.f32 %v9533, %v9467
  %v9535 = vrot.slane %v9534, 4
  %v9536 = vadd.f32 %v9534, %v9535
  %v9537 = vrot.slane %v9536, 2
  %v9538 = vadd.f32 %v9536, %v9537
  %v9539 = vrot.slane %v9538, 1
  %v9540 = vadd.f32 %v9538, %v9539
  %v9541 = vmul.f32 %v9540, 0.001953125
  %v9542 = vsub.f32 %v9152, %v9541
  %v9543 = vsub.f32 %v9157, %v9541
  %v9544 = vsub.f32 %v9162, %v9541
  %v9545 = vsub.f32 %v9167, %v9541
  %v9546 = vsub.f32 %v9172, %v9541
  %v9547 = vsub.f32 %v9177, %v9541
  %v9548 = vsub.f32 %v9182, %v9541
  %v9549 = vsub.f32 %v9187, %v9541
  %v9550 = vsub.f32 %v9192, %v9541
  %v9551 = vsub.f32 %v9197, %v9541
  %v9552 = vsub.f32 %v9202, %v9541
  %v9553 = vsub.f32 %v9207, %v9541
  %v9554 = vsub.f32 %v9212, %v9541
  %v9555 = vsub.f32 %v9217, %v9541
  %v9556 = vsub.f32 %v9222, %v9541
  %v9557 = vsub.f32 %v9227, %v9541
  %v9558 = vsub.f32 %v9232, %v9541
  %v9559 = vsub.f32 %v9237, %v9541
  %v9560 = vsub.f32 %v9242, %v9541
  %v9561 = vsub.f32 %v9247, %v9541
  %v9562 = vsub.f32 %v9252, %v9541
  %v9563 = vsub.f32 %v9257, %v9541
  %v9564 = vsub.f32 %v9262, %v9541
  %v9565 = vsub.f32 %v9267, %v9541
  %v9566 = vsub.f32 %v9272, %v9541
  %v9567 = vsub.f32 %v9277, %v9541
  %v9568 = vsub.f32 %v9282, %v9541
  %v9569 = vsub.f32 %v9287, %v9541
  %v9570 = vsub.f32 %v9292, %v9541
  %v9571 = vsub.f32 %v9297, %v9541
  %v9572 = vsub.f32 %v9302, %v9541
  %v9573 = vsub.f32 %v9307, %v9541
  %v9574 = vsub.f32 %v9312, %v9541
  %v9575 = vsub.f32 %v9317, %v9541
  %v9576 = vsub.f32 %v9322, %v9541
  %v9577 = vsub.f32 %v9327, %v9541
  %v9578 = vsub.f32 %v9332, %v9541
  %v9579 = vsub.f32 %v9337, %v9541
  %v9580 = vsub.f32 %v9342, %v9541
  %v9581 = vsub.f32 %v9347, %v9541
  %v9582 = vsub.f32 %v9352, %v9541
  %v9583 = vsub.f32 %v9357, %v9541
  %v9584 = vsub.f32 %v9362, %v9541
  %v9585 = vsub.f32 %v9367, %v9541
  %v9586 = vsub.f32 %v9372, %v9541
  %v9587 = vsub.f32 %v9377, %v9541
  %v9588 = vsub.f32 %v9382, %v9541
  %v9589 = vsub.f32 %v9387, %v9541
  %v9590 = vsub.f32 %v9392, %v9541
  %v9591 = vsub.f32 %v9397, %v9541
  %v9592 = vsub.f32 %v9402, %v9541
  %v9593 = vsub.f32 %v9407, %v9541
  %v9594 = vsub.f32 %v9412, %v9541
  %v9595 = vsub.f32 %v9417, %v9541
  %v9596 = vsub.f32 %v9422, %v9541
  %v9597 = vsub.f32 %v9427, %v9541
  %v9598 = vsub.f32 %v9432, %v9541
  %v9599 = vsub.f32 %v9437, %v9541
  %v9600 = vsub.f32 %v9442, %v9541
  %v9601 = vsub.f32 %v9447, %v9541
  %v9602 = vsub.f32 %v9452, %v9541
  %v9603 = vsub.f32 %v9457, %v9541
  %v9604 = vsub.f32 %v9462, %v9541
  %v9605 = vsub.f32 %v9467, %v9541
  %v9606 = vmul.f32 %v9542, %v9542
  %v9607 = vmul.f32 %v9543, %v9543
  %v9608 = vmul.f32 %v9544, %v9544
  %v9609 = vmul.f32 %v9545, %v9545
  %v9610 = vmul.f32 %v9546, %v9546
  %v9611 = vmul.f32 %v9547, %v9547
  %v9612 = vmul.f32 %v9548, %v9548
  %v9613 = vmul.f32 %v9549, %v9549
  %v9614 = vmul.f32 %v9550, %v9550
  %v9615 = vmul.f32 %v9551, %v9551
  %v9616 = vmul.f32 %v9552, %v9552
  %v9617 = vmul.f32 %v9553, %v9553
  %v9618 = vmul.f32 %v9554, %v9554
  %v9619 = vmul.f32 %v9555, %v9555
  %v9620 = vmul.f32 %v9556, %v9556
  %v9621 = vmul.f32 %v9557, %v9557
  %v9622 = vmul.f32 %v9558, %v9558
  %v9623 = vmul.f32 %v9559, %v9559
  %v9624 = vmul.f32 %v9560, %v9560
  %v9625 = vmul.f32 %v9561, %v9561
  %v9626 = vmul.f32 %v9562, %v9562
  %v9627 = vmul.f32 %v9563, %v9563
  %v9628 = vmul.f32 %v9564, %v9564
  %v9629 = vmul.f32 %v9565, %v9565
  %v9630 = vmul.f32 %v9566, %v9566
  %v9631 = vmul.f32 %v9567, %v9567
  %v9632 = vmul.f32 %v9568, %v9568
  %v9633 = vmul.f32 %v9569, %v9569
  %v9634 = vmul.f32 %v9570, %v9570
  %v9635 = vmul.f32 %v9571, %v9571
  %v9636 = vmul.f32 %v9572, %v9572
  %v9637 = vmul.f32 %v9573, %v9573
  %v9638 = vmul.f32 %v9574, %v9574
  %v9639 = vmul.f32 %v9575, %v9575
  %v9640 = vmul.f32 %v9576, %v9576
  %v9641 = vmul.f32 %v9577, %v9577
  %v9642 = vmul.f32 %v9578, %v9578
  %v9643 = vmul.f32 %v9579, %v9579
  %v9644 = vmul.f32 %v9580, %v9580
  %v9645 = vmul.f32 %v9581, %v9581
  %v9646 = vmul.f32 %v9582, %v9582
  %v9647 = vmul.f32 %v9583, %v9583
  %v9648 = vmul.f32 %v9584, %v9584
  %v9649 = vmul.f32 %v9585, %v9585
  %v9650 = vmul.f32 %v9586, %v9586
  %v9651 = vmul.f32 %v9587, %v9587
  %v9652 = vmul.f32 %v9588, %v9588
  %v9653 = vmul.f32 %v9589, %v9589
  %v9654 = vmul.f32 %v9590, %v9590
  %v9655 = vmul.f32 %v9591, %v9591
  %v9656 = vmul.f32 %v9592, %v9592
  %v9657 = vmul.f32 %v9593, %v9593
  %v9658 = vmul.f32 %v9594, %v9594
  %v9659 = vmul.f32 %v9595, %v9595
  %v9660 = vmul.f32 %v9596, %v9596
  %v9661 = vmul.f32 %v9597, %v9597
  %v9662 = vmul.f32 %v9598, %v9598
  %v9663 = vmul.f32 %v9599, %v9599
  %v9664 = vmul.f32 %v9600, %v9600
  %v9665 = vmul.f32 %v9601, %v9601
  %v9666 = vmul.f32 %v9602, %v9602
  %v9667 = vmul.f32 %v9603, %v9603
  %v9668 = vmul.f32 %v9604, %v9604
  %v9669 = vmul.f32 %v9605, %v9605
  %v9670 = vadd.f32 %v9606, %v9607
  %v9671 = vadd.f32 %v9670, %v9608
  %v9672 = vadd.f32 %v9671, %v9609
  %v9673 = vadd.f32 %v9672, %v9610
  %v9674 = vadd.f32 %v9673, %v9611
  %v9675 = vadd.f32 %v9674, %v9612
  %v9676 = vadd.f32 %v9675, %v9613
  %v9677 = vadd.f32 %v9676, %v9614
  %v9678 = vadd.f32 %v9677, %v9615
  %v9679 = vadd.f32 %v9678, %v9616
  %v9680 = vadd.f32 %v9679, %v9617
  %v9681 = vadd.f32 %v9680, %v9618
  %v9682 = vadd.f32 %v9681, %v9619
  %v9683 = vadd.f32 %v9682, %v9620
  %v9684 = vadd.f32 %v9683, %v9621
  %v9685 = vadd.f32 %v9684, %v9622
  %v9686 = vadd.f32 %v9685, %v9623
  %v9687 = vadd.f32 %v9686, %v9624
  %v9688 = vadd.f32 %v9687, %v9625
  %v9689 = vadd.f32 %v9688, %v9626
  %v9690 = vadd.f32 %v9689, %v9627
  %v9691 = vadd.f32 %v9690, %v9628
  %v9692 = vadd.f32 %v9691, %v9629
  %v9693 = vadd.f32 %v9692, %v9630
  %v9694 = vadd.f32 %v9693, %v9631
  %v9695 = vadd.f32 %v9694, %v9632
  %v9696 = vadd.f32 %v9695, %v9633
  %v9697 = vadd.f32 %v9696, %v9634
  %v9698 = vadd.f32 %v9697, %v9635
  %v9699 = vadd.f32 %v9698, %v9636
  %v9700 = vadd.f32 %v9699, %v9637
  %v9701 = vadd.f32 %v9700, %v9638
  %v9702 = vadd.f32 %v9701, %v9639
  %v9703 = vadd.f32 %v9702, %v9640
  %v9704 = vadd.f32 %v9703, %v9641
  %v9705 = vadd.f32 %v9704, %v9642
  %v9706 = vadd.f32 %v9705, %v9643
  %v9707 = vadd.f32 %v9706, %v9644
  %v9708 = vadd.f32 %v9707, %v9645
  %v9709 = vadd.f32 %v9708, %v9646
  %v9710 = vadd.f32 %v9709, %v9647
  %v9711 = vadd.f32 %v9710, %v9648
  %v9712 = vadd.f32 %v9711, %v9649
  %v9713 = vadd.f32 %v9712, %v9650
  %v9714 = vadd.f32 %v9713, %v9651
  %v9715 = vadd.f32 %v9714, %v9652
  %v9716 = vadd.f32 %v9715, %v9653
  %v9717 = vadd.f32 %v9716, %v9654
  %v9718 = vadd.f32 %v9717, %v9655
  %v9719 = vadd.f32 %v9718, %v9656
  %v9720 = vadd.f32 %v9719, %v9657
  %v9721 = vadd.f32 %v9720, %v9658
  %v9722 = vadd.f32 %v9721, %v9659
  %v9723 = vadd.f32 %v9722, %v9660
  %v9724 = vadd.f32 %v9723, %v9661
  %v9725 = vadd.f32 %v9724, %v9662
  %v9726 = vadd.f32 %v9725, %v9663
  %v9727 = vadd.f32 %v9726, %v9664
  %v9728 = vadd.f32 %v9727, %v9665
  %v9729 = vadd.f32 %v9728, %v9666
  %v9730 = vadd.f32 %v9729, %v9667
  %v9731 = vadd.f32 %v9730, %v9668
  %v9732 = vadd.f32 %v9731, %v9669
  %v9733 = vrot.slane %v9732, 4
  %v9734 = vadd.f32 %v9732, %v9733
  %v9735 = vrot.slane %v9734, 2
  %v9736 = vadd.f32 %v9734, %v9735
  %v9737 = vrot.slane %v9736, 1
  %v9738 = vadd.f32 %v9736, %v9737
  %v9739 = vmul.f32 %v9738, 0.001953125
  %v9740 = vadd.f32 %v9739, 1e-05
  %v9741 = vrsqrt.pop %v9740
  %v9742 = vmul.f32 %v9470, %v9741
  %v9743 = vmul.f32 %v9541, %v9742
  %v9744 = vsub.f32 %v9471, %v9743
  %v9746 = vlaneseq
  %v9747 = vshrl.u32 %v9746, 7
  %v9748 = vsub.s32 0, %v9747
  %v9749 = vrot.slane %v9742, %v9748
  %v9751 = vmul.f32 %v9152, %v9749
  %v9752 = vmul.f32 %v9157, %v9749
  %v9753 = vmul.f32 %v9162, %v9749
  %v9754 = vmul.f32 %v9167, %v9749
  %v9755 = vmul.f32 %v9172, %v9749
  %v9756 = vmul.f32 %v9177, %v9749
  %v9757 = vmul.f32 %v9182, %v9749
  %v9758 = vmul.f32 %v9187, %v9749
  %v9759 = vmul.f32 %v9192, %v9749
  %v9760 = vmul.f32 %v9197, %v9749
  %v9761 = vmul.f32 %v9202, %v9749
  %v9762 = vmul.f32 %v9207, %v9749
  %v9763 = vmul.f32 %v9212, %v9749
  %v9764 = vmul.f32 %v9217, %v9749
  %v9765 = vmul.f32 %v9222, %v9749
  %v9766 = vmul.f32 %v9227, %v9749
  %v9767 = vmul.f32 %v9232, %v9749
  %v9768 = vmul.f32 %v9237, %v9749
  %v9769 = vmul.f32 %v9242, %v9749
  %v9770 = vmul.f32 %v9247, %v9749
  %v9771 = vmul.f32 %v9252, %v9749
  %v9772 = vmul.f32 %v9257, %v9749
  %v9773 = vmul.f32 %v9262, %v9749
  %v9774 = vmul.f32 %v9267, %v9749
  %v9775 = vmul.f32 %v9272, %v9749
  %v9776 = vmul.f32 %v9277, %v9749
  %v9777 = vmul.f32 %v9282, %v9749
  %v9778 = vmul.f32 %v9287, %v9749
  %v9779 = vmul.f32 %v9292, %v9749
  %v9780 = vmul.f32 %v9297, %v9749
  %v9781 = vmul.f32 %v9302, %v9749
  %v9782 = vmul.f32 %v9307, %v9749
  %v9783 = vmul.f32 %v9312, %v9749
  %v9784 = vmul.f32 %v9317, %v9749
  %v9785 = vmul.f32 %v9322, %v9749
  %v9786 = vmul.f32 %v9327, %v9749
  %v9787 = vmul.f32 %v9332, %v9749
  %v9788 = vmul.f32 %v9337, %v9749
  %v9789 = vmul.f32 %v9342, %v9749
  %v9790 = vmul.f32 %v9347, %v9749
  %v9791 = vmul.f32 %v9352, %v9749
  %v9792 = vmul.f32 %v9357, %v9749
  %v9793 = vmul.f32 %v9362, %v9749
  %v9794 = vmul.f32 %v9367, %v9749
  %v9795 = vmul.f32 %v9372, %v9749
  %v9796 = vmul.f32 %v9377, %v9749
  %v9797 = vmul.f32 %v9382, %v9749
  %v9798 = vmul.f32 %v9387, %v9749
  %v9799 = vmul.f32 %v9392, %v9749
  %v9800 = vmul.f32 %v9397, %v9749
  %v9801 = vmul.f32 %v9402, %v9749
  %v9802 = vmul.f32 %v9407, %v9749
  %v9803 = vmul.f32 %v9412, %v9749
  %v9804 = vmul.f32 %v9417, %v9749
  %v9805 = vmul.f32 %v9422, %v9749
  %v9806 = vmul.f32 %v9427, %v9749
  %v9807 = vmul.f32 %v9432, %v9749
  %v9808 = vmul.f32 %v9437, %v9749
  %v9809 = vmul.f32 %v9442, %v9749
  %v9810 = vmul.f32 %v9447, %v9749
  %v9811 = vmul.f32 %v9452, %v9749
  %v9812 = vmul.f32 %v9457, %v9749
  %v9813 = vmul.f32 %v9462, %v9749
  %v9814 = vmul.f32 %v9467, %v9749
  %v9816 = vlaneseq
  %v9817 = vshrl.u32 %v9816, 7
  %v9818 = vsub.s32 0, %v9817
  %v9819 = vrot.slane %v9744, %v9818
  %v9821 = vadd.f32 %v9751, %v9819
  %v9822 = vadd.f32 %v9752, %v9819
  %v9823 = vadd.f32 %v9753, %v9819
  %v9824 = vadd.f32 %v9754, %v9819
  %v9825 = vadd.f32 %v9755, %v9819
  %v9826 = vadd.f32 %v9756, %v9819
  %v9827 = vadd.f32 %v9757, %v9819
  %v9828 = vadd.f32 %v9758, %v9819
  %v9829 = vadd.f32 %v9759, %v9819
  %v9830 = vadd.f32 %v9760, %v9819
  %v9831 = vadd.f32 %v9761, %v9819
  %v9832 = vadd.f32 %v9762, %v9819
  %v9833 = vadd.f32 %v9763, %v9819
  %v9834 = vadd.f32 %v9764, %v9819
  %v9835 = vadd.f32 %v9765, %v9819
  %v9836 = vadd.f32 %v9766, %v9819
  %v9837 = vadd.f32 %v9767, %v9819
  %v9838 = vadd.f32 %v9768, %v9819
  %v9839 = vadd.f32 %v9769, %v9819
  %v9840 = vadd.f32 %v9770, %v9819
  %v9841 = vadd.f32 %v9771, %v9819
  %v9842 = vadd.f32 %v9772, %v9819
  %v9843 = vadd.f32 %v9773, %v9819
  %v9844 = vadd.f32 %v9774, %v9819
  %v9845 = vadd.f32 %v9775, %v9819
  %v9846 = vadd.f32 %v9776, %v9819
  %v9847 = vadd.f32 %v9777, %v9819
  %v9848 = vadd.f32 %v9778, %v9819
  %v9849 = vadd.f32 %v9779, %v9819
  %v9850 = vadd.f32 %v9780, %v9819
  %v9851 = vadd.f32 %v9781, %v9819
  %v9852 = vadd.f32 %v9782, %v9819
  %v9853 = vadd.f32 %v9783, %v9819
  %v9854 = vadd.f32 %v9784, %v9819
  %v9855 = vadd.f32 %v9785, %v9819
  %v9856 = vadd.f32 %v9786, %v9819
  %v9857 = vadd.f32 %v9787, %v9819
  %v9858 = vadd.f32 %v9788, %v9819
  %v9859 = vadd.f32 %v9789, %v9819
  %v9860 = vadd.f32 %v9790, %v9819
  %v9861 = vadd.f32 %v9791, %v9819
  %v9862 = vadd.f32 %v9792, %v9819
  %v9863 = vadd.f32 %v9793, %v9819
  %v9864 = vadd.f32 %v9794, %v9819
  %v9865 = vadd.f32 %v9795, %v9819
  %v9866 = vadd.f32 %v9796, %v9819
  %v9867 = vadd.f32 %v9797, %v9819
  %v9868 = vadd.f32 %v9798, %v9819
  %v9869 = vadd.f32 %v9799, %v9819
  %v9870 = vadd.f32 %v9800, %v9819
  %v9871 = vadd.f32 %v9801, %v9819
  %v9872 = vadd.f32 %v9802, %v9819
  %v9873 = vadd.f32 %v9803, %v9819
  %v9874 = vadd.f32 %v9804, %v9819
  %v9875 = vadd.f32 %v9805, %v9819
  %v9876 = vadd.f32 %v9806, %v9819
  %v9877 = vadd.f32 %v9807, %v9819
  %v9878 = vadd.f32 %v9808, %v9819
  %v9879 = vadd.f32 %v9809, %v9819
  %v9880 = vadd.f32 %v9810, %v9819
  %v9881 = vadd.f32 %v9811, %v9819
  %v9882 = vadd.f32 %v9812, %v9819
  %v9883 = vadd.f32 %v9813, %v9819
  %v9884 = vadd.f32 %v9814, %v9819
  %v9885 = vmax.f32 %v9821, 0.0
  %v9886 = vmax.f32 %v9822, 0.0
  %v9887 = vmax.f32 %v9823, 0.0
  %v9888 = vmax.f32 %v9824, 0.0
  %v9889 = vmax.f32 %v9825, 0.0
  %v9890 = vmax.f32 %v9826, 0.0
  %v9891 = vmax.f32 %v9827, 0.0
  %v9892 = vmax.f32 %v9828, 0.0
  %v9893 = vmax.f32 %v9829, 0.0
  %v9894 = vmax.f32 %v9830, 0.0
  %v9895 = vmax.f32 %v9831, 0.0
  %v9896 = vmax.f32 %v9832, 0.0
  %v9897 = vmax.f32 %v9833, 0.0
  %v9898 = vmax.f32 %v9834, 0.0
  %v9899 = vmax.f32 %v9835, 0.0
  %v9900 = vmax.f32 %v9836, 0.0
  %v9901 = vmax.f32 %v9837, 0.0
  %v9902 = vmax.f32 %v9838, 0.0
  %v9903 = vmax.f32 %v9839, 0.0
  %v9904 = vmax.f32 %v9840, 0.0
  %v9905 = vmax.f32 %v9841, 0.0
  %v9906 = vmax.f32 %v9842, 0.0
  %v9907 = vmax.f32 %v9843, 0.0
  %v9908 = vmax.f32 %v9844, 0.0
  %v9909 = vmax.f32 %v9845, 0.0
  %v9910 = vmax.f32 %v9846, 0.0
  %v9911 = vmax.f32 %v9847, 0.0
  %v9912 = vmax.f32 %v9848, 0.0
  %v9913 = vmax.f32 %v9849, 0.0
  %v9914 = vmax.f32 %v9850, 0.0
  %v9915 = vmax.f32 %v9851, 0.0
  %v9916 = vmax.f32 %v9852, 0.0
  %v9917 = vmax.f32 %v9853, 0.0
  %v9918 = vmax.f32 %v9854, 0.0
  %v9919 = vmax.f32 %v9855, 0.0
  %v9920 = vmax.f32 %v9856, 0.0
  %v9921 = vmax.f32 %v9857, 0.0
  %v9922 = vmax.f32 %v9858, 0.0
  %v9923 = vmax.f32 %v9859, 0.0
  %v9924 = vmax.f32 %v9860, 0.0
  %v9925 = vmax.f32 %v9861, 0.0
  %v9926 = vmax.f32 %v9862, 0.0
  %v9927 = vmax.f32 %v9863, 0.0
  %v9928 = vmax.f32 %v9864, 0.0
  %v9929 = vmax.f32 %v9865, 0.0
  %v9930 = vmax.f32 %v9866, 0.0
  %v9931 = vmax.f32 %v9867, 0.0
  %v9932 = vmax.f32 %v9868, 0.0
  %v9933 = vmax.f32 %v9869, 0.0
  %v9934 = vmax.f32 %v9870, 0.0
  %v9935 = vmax.f32 %v9871, 0.0
  %v9936 = vmax.f32 %v9872, 0.0
  %v9937 = vmax.f32 %v9873, 0.0
  %v9938 = vmax.f32 %v9874, 0.0
  %v9939 = vmax.f32 %v9875, 0.0
  %v9940 = vmax.f32 %v9876, 0.0
  %v9941 = vmax.f32 %v9877, 0.0
  %v9942 = vmax.f32 %v9878, 0.0
  %v9943 = vmax.f32 %v9879, 0.0
  %v9944 = vmax.f32 %v9880, 0.0
  %v9945 = vmax.f32 %v9881, 0.0
  %v9946 = vmax.f32 %v9882, 0.0
  %v9947 = vmax.f32 %v9883, 0.0
  %v9948 = vmax.f32 %v9884, 0.0
  %v9949 = vld [vmem:[%s8] sm:$0xff]
  %v9950 = vld [vmem:[%s8 + $0x8] sm:$0xff]
  %v9951 = vld [vmem:[%s8 + $0x10] sm:$0xff]
  %v9952 = vld [vmem:[%s8 + $0x18] sm:$0xff]
  %v9953 = vld [vmem:[%s8 + $0x20] sm:$0xff]
  %v9954 = vld [vmem:[%s8 + $0x28] sm:$0xff]
  %v9955 = vld [vmem:[%s8 + $0x30] sm:$0xff]
  %v9956 = vld [vmem:[%s8 + $0x38] sm:$0xff]
  %v9957 = vld [vmem:[%s8 + $0x40] sm:$0xff]
  %v9958 = vld [vmem:[%s8 + $0x48] sm:$0xff]
  %v9959 = vld [vmem:[%s8 + $0x50] sm:$0xff]
  %v9960 = vld [vmem:[%s8 + $0x58] sm:$0xff]
  %v9961 = vld [vmem:[%s8 + $0x60] sm:$0xff]
  %v9962 = vld [vmem:[%s8 + $0x68] sm:$0xff]
  %v9963 = vld [vmem:[%s8 + $0x70] sm:$0xff]
  %v9964 = vld [vmem:[%s8 + $0x78] sm:$0xff]
  %9965 = vmatprep.subr.mxu0 0.0
  %9966 = vmatpush1.msra.mxu0 %v9964
  %9967 = vmatprep.subr.mxu0 0.0
  %9968 = vmatpush1.msra.mxu0 %v9963
  %9969 = vmatprep.subr.mxu0 0.0
  %9970 = vmatpush1.msra.mxu0 %v9962
  %9971 = vmatprep.subr.mxu0 0.0
  %9972 = vmatpush1.msra.mxu0 %v9961
  %9973 = vmatprep.subr.mxu0 0.0
  %9974 = vmatpush1.msra.mxu0 %v9960
  %9975 = vmatprep.subr.mxu0 0.0
  %9976 = vmatpush1.msra.mxu0 %v9959
  %9977 = vmatprep.subr.mxu0 0.0
  %9978 = vmatpush1.msra.mxu0 %v9958
  %9979 = vmatprep.subr.mxu0 0.0
  %9980 = vmatpush1.msra.mxu0 %v9957
  %9981 = vmatprep.subr.mxu0 0.0
  %9982 = vmatpush1.msra.mxu0 %v9956
  %9983 = vmatprep.subr.mxu0 0.0
  %9984 = vmatpush1.msra.mxu0 %v9955
  %9985 = vmatprep.subr.mxu0 0.0
  %9986 = vmatpush1.msra.mxu0 %v9954
  %9987 = vmatprep.subr.mxu0 0.0
  %9988 = vmatpush1.msra.mxu0 %v9953
  %9989 = vmatprep.subr.mxu0 0.0
  %9990 = vmatpush1.msra.mxu0 %v9952
  %9991 = vmatprep.subr.mxu0 0.0
  %9992 = vmatpush1.msra.mxu0 %v9951
  %9993 = vmatprep.subr.mxu0 0.0
  %9994 = vmatpush1.msra.mxu0 %v9950
  %9995 = vmatprep.subr.mxu0 0.0
  %9996 = vmatpush1.msra.mxu0 %v9949
  %9997 = vmatprep.subr.mxu0 0.0
  %9998 = vmatpush2.msra.mxu0 0.0
  %9999 = vmatprep.subr.mxu0 0.0
  %10000 = vmatpush2.msra.mxu0 0.0
  %10001 = vmatprep.subr.mxu0 0.0
  %10002 = vmatpush2.msra.mxu0 0.0
  %10003 = vmatprep.subr.mxu0 0.0
  %10004 = vmatpush2.msra.mxu0 0.0
  %10005 = vmatprep.subr.mxu0 0.0
  %10006 = vmatpush2.msra.mxu0 0.0
  %10007 = vmatprep.subr.mxu0 0.0
  %10008 = vmatpush2.msra.mxu0 0.0
  %10009 = vmatprep.subr.mxu0 0.0
  %10010 = vmatpush2.msra.mxu0 0.0
  %10011 = vmatprep.subr.mxu0 0.0
  %10012 = vmatpush2.msra.mxu0 0.0
  %10013 = vmatprep.subr.mxu0 0.0
  %10014 = vmatpush2.msra.mxu0 0.0
  %10015 = vmatprep.subr.mxu0 0.0
  %10016 = vmatpush2.msra.mxu0 0.0
  %10017 = vmatprep.subr.mxu0 0.0
  %10018 = vmatpush2.msra.mxu0 0.0
  %10019 = vmatprep.subr.mxu0 0.0
  %10020 = vmatpush2.msra.mxu0 0.0
  %10021 = vmatprep.subr.mxu0 0.0
  %10022 = vmatpush2.msra.mxu0 0.0
  %10023 = vmatprep.subr.mxu0 0.0
  %10024 = vmatpush2.msra.mxu0 0.0
  %10025 = vmatprep.subr.mxu0 0.0
  %10026 = vmatpush2.msra.mxu0 0.0
  %10027 = vmatprep.subr.mxu0 0.0
  %10028 = vmatpush2.msra.mxu0 0.0
  %10029 = vmatprep.mubr.f32.mxu0 0.0
  %10030 = vmatmul.mubr.f32.gmra.mxu0 %v9885
  %v10031 = vpop.f32.mrf.mxu0
  %v10032 = vadd.f32 0.0, %v10031
  %v10033 = vpop.f32.mrf.mxu0
  %10034 = vmatprep.mubr.f32.mxu0 0.0
  %10035 = vmatmul.mubr.f32.gmra.mxu0 %v9886
  %v10036 = vpop.f32.mrf.mxu0
  %v10037 = vadd.f32 0.0, %v10036
  %v10038 = vpop.f32.mrf.mxu0
  %10039 = vmatprep.mubr.f32.mxu0 0.0
  %10040 = vmatmul.mubr.f32.gmra.mxu0 %v9887
  %v10041 = vpop.f32.mrf.mxu0
  %v10042 = vadd.f32 0.0, %v10041
  %v10043 = vpop.f32.mrf.mxu0
  %10044 = vmatprep.mubr.f32.mxu0 0.0
  %10045 = vmatmul.mubr.f32.gmra.mxu0 %v9888
  %v10046 = vpop.f32.mrf.mxu0
  %v10047 = vadd.f32 0.0, %v10046
  %v10048 = vpop.f32.mrf.mxu0
  %10049 = vmatprep.mubr.f32.mxu0 0.0
  %10050 = vmatmul.mubr.f32.gmra.mxu0 %v9889
  %v10051 = vpop.f32.mrf.mxu0
  %v10052 = vadd.f32 0.0, %v10051
  %v10053 = vpop.f32.mrf.mxu0
  %10054 = vmatprep.mubr.f32.mxu0 0.0
  %10055 = vmatmul.mubr.f32.gmra.mxu0 %v9890
  %v10056 = vpop.f32.mrf.mxu0
  %v10057 = vadd.f32 0.0, %v10056
  %v10058 = vpop.f32.mrf.mxu0
  %10059 = vmatprep.mubr.f32.mxu0 0.0
  %10060 = vmatmul.mubr.f32.gmra.mxu0 %v9891
  %v10061 = vpop.f32.mrf.mxu0
  %v10062 = vadd.f32 0.0, %v10061
  %v10063 = vpop.f32.mrf.mxu0
  %10064 = vmatprep.mubr.f32.mxu0 0.0
  %10065 = vmatmul.mubr.f32.gmra.mxu0 %v9892
  %v10066 = vpop.f32.mrf.mxu0
  %v10067 = vadd.f32 0.0, %v10066
  %v10068 = vpop.f32.mrf.mxu0
  %10069 = vmatprep.mubr.f32.mxu0 0.0
  %10070 = vmatmul.mubr.f32.gmra.mxu0 %v9893
  %v10071 = vpop.f32.mrf.mxu0
  %v10072 = vadd.f32 0.0, %v10071
  %v10073 = vpop.f32.mrf.mxu0
  %10074 = vmatprep.mubr.f32.mxu0 0.0
  %10075 = vmatmul.mubr.f32.gmra.mxu0 %v9894
  %v10076 = vpop.f32.mrf.mxu0
  %v10077 = vadd.f32 0.0, %v10076
  %v10078 = vpop.f32.mrf.mxu0
  %10079 = vmatprep.mubr.f32.mxu0 0.0
  %10080 = vmatmul.mubr.f32.gmra.mxu0 %v9895
  %v10081 = vpop.f32.mrf.mxu0
  %v10082 = vadd.f32 0.0, %v10081
  %v10083 = vpop.f32.mrf.mxu0
  %10084 = vmatprep.mubr.f32.mxu0 0.0
  %10085 = vmatmul.mubr.f32.gmra.mxu0 %v9896
  %v10086 = vpop.f32.mrf.mxu0
  %v10087 = vadd.f32 0.0, %v10086
  %v10088 = vpop.f32.mrf.mxu0
  %10089 = vmatprep.mubr.f32.mxu0 0.0
  %10090 = vmatmul.mubr.f32.gmra.mxu0 %v9897
  %v10091 = vpop.f32.mrf.mxu0
  %v10092 = vadd.f32 0.0, %v10091
  %v10093 = vpop.f32.mrf.mxu0
  %10094 = vmatprep.mubr.f32.mxu0 0.0
  %10095 = vmatmul.mubr.f32.gmra.mxu0 %v9898
  %v10096 = vpop.f32.mrf.mxu0
  %v10097 = vadd.f32 0.0, %v10096
  %v10098 = vpop.f32.mrf.mxu0
  %10099 = vmatprep.mubr.f32.mxu0 0.0
  %10100 = vmatmul.mubr.f32.gmra.mxu0 %v9899
  %v10101 = vpop.f32.mrf.mxu0
  %v10102 = vadd.f32 0.0, %v10101
  %v10103 = vpop.f32.mrf.mxu0
  %10104 = vmatprep.mubr.f32.mxu0 0.0
  %10105 = vmatmul.mubr.f32.gmra.mxu0 %v9900
  %v10106 = vpop.f32.mrf.mxu0
  %v10107 = vadd.f32 0.0, %v10106
  %v10108 = vpop.f32.mrf.mxu0
  %10109 = vmatprep.mubr.f32.mxu0 0.0
  %10110 = vmatmul.mubr.f32.gmra.mxu0 %v9901
  %v10111 = vpop.f32.mrf.mxu0
  %v10112 = vadd.f32 0.0, %v10111
  %v10113 = vpop.f32.mrf.mxu0
  %10114 = vmatprep.mubr.f32.mxu0 0.0
  %10115 = vmatmul.mubr.f32.gmra.mxu0 %v9902
  %v10116 = vpop.f32.mrf.mxu0
  %v10117 = vadd.f32 0.0, %v10116
  %v10118 = vpop.f32.mrf.mxu0
  %10119 = vmatprep.mubr.f32.mxu0 0.0
  %10120 = vmatmul.mubr.f32.gmra.mxu0 %v9903
  %v10121 = vpop.f32.mrf.mxu0
  %v10122 = vadd.f32 0.0, %v10121
  %v10123 = vpop.f32.mrf.mxu0
  %10124 = vmatprep.mubr.f32.mxu0 0.0
  %10125 = vmatmul.mubr.f32.gmra.mxu0 %v9904
  %v10126 = vpop.f32.mrf.mxu0
  %v10127 = vadd.f32 0.0, %v10126
  %v10128 = vpop.f32.mrf.mxu0
  %10129 = vmatprep.mubr.f32.mxu0 0.0
  %10130 = vmatmul.mubr.f32.gmra.mxu0 %v9905
  %v10131 = vpop.f32.mrf.mxu0
  %v10132 = vadd.f32 0.0, %v10131
  %v10133 = vpop.f32.mrf.mxu0
  %10134 = vmatprep.mubr.f32.mxu0 0.0
  %10135 = vmatmul.mubr.f32.gmra.mxu0 %v9906
  %v10136 = vpop.f32.mrf.mxu0
  %v10137 = vadd.f32 0.0, %v10136
  %v10138 = vpop.f32.mrf.mxu0
  %10139 = vmatprep.mubr.f32.mxu0 0.0
  %10140 = vmatmul.mubr.f32.gmra.mxu0 %v9907
  %v10141 = vpop.f32.mrf.mxu0
  %v10142 = vadd.f32 0.0, %v10141
  %v10143 = vpop.f32.mrf.mxu0
  %10144 = vmatprep.mubr.f32.mxu0 0.0
  %10145 = vmatmul.mubr.f32.gmra.mxu0 %v9908
  %v10146 = vpop.f32.mrf.mxu0
  %v10147 = vadd.f32 0.0, %v10146
  %v10148 = vpop.f32.mrf.mxu0
  %10149 = vmatprep.mubr.f32.mxu0 0.0
  %10150 = vmatmul.mubr.f32.gmra.mxu0 %v9909
  %v10151 = vpop.f32.mrf.mxu0
  %v10152 = vadd.f32 0.0, %v10151
  %v10153 = vpop.f32.mrf.mxu0
  %10154 = vmatprep.mubr.f32.mxu0 0.0
  %10155 = vmatmul.mubr.f32.gmra.mxu0 %v9910
  %v10156 = vpop.f32.mrf.mxu0
  %v10157 = vadd.f32 0.0, %v10156
  %v10158 = vpop.f32.mrf.mxu0
  %10159 = vmatprep.mubr.f32.mxu0 0.0
  %10160 = vmatmul.mubr.f32.gmra.mxu0 %v9911
  %v10161 = vpop.f32.mrf.mxu0
  %v10162 = vadd.f32 0.0, %v10161
  %v10163 = vpop.f32.mrf.mxu0
  %10164 = vmatprep.mubr.f32.mxu0 0.0
  %10165 = vmatmul.mubr.f32.gmra.mxu0 %v9912
  %v10166 = vpop.f32.mrf.mxu0
  %v10167 = vadd.f32 0.0, %v10166
  %v10168 = vpop.f32.mrf.mxu0
  %10169 = vmatprep.mubr.f32.mxu0 0.0
  %10170 = vmatmul.mubr.f32.gmra.mxu0 %v9913
  %v10171 = vpop.f32.mrf.mxu0
  %v10172 = vadd.f32 0.0, %v10171
  %v10173 = vpop.f32.mrf.mxu0
  %10174 = vmatprep.mubr.f32.mxu0 0.0
  %10175 = vmatmul.mubr.f32.gmra.mxu0 %v9914
  %v10176 = vpop.f32.mrf.mxu0
  %v10177 = vadd.f32 0.0, %v10176
  %v10178 = vpop.f32.mrf.mxu0
  %10179 = vmatprep.mubr.f32.mxu0 0.0
  %10180 = vmatmul.mubr.f32.gmra.mxu0 %v9915
  %v10181 = vpop.f32.mrf.mxu0
  %v10182 = vadd.f32 0.0, %v10181
  %v10183 = vpop.f32.mrf.mxu0
  %10184 = vmatprep.mubr.f32.mxu0 0.0
  %10185 = vmatmul.mubr.f32.gmra.mxu0 %v9916
  %v10186 = vpop.f32.mrf.mxu0
  %v10187 = vadd.f32 0.0, %v10186
  %v10188 = vpop.f32.mrf.mxu0
  %10189 = vmatprep.mubr.f32.mxu0 0.0
  %10190 = vmatmul.mubr.f32.gmra.mxu0 %v9917
  %v10191 = vpop.f32.mrf.mxu0
  %v10192 = vadd.f32 0.0, %v10191
  %v10193 = vpop.f32.mrf.mxu0
  %10194 = vmatprep.mubr.f32.mxu0 0.0
  %10195 = vmatmul.mubr.f32.gmra.mxu0 %v9918
  %v10196 = vpop.f32.mrf.mxu0
  %v10197 = vadd.f32 0.0, %v10196
  %v10198 = vpop.f32.mrf.mxu0
  %10199 = vmatprep.mubr.f32.mxu0 0.0
  %10200 = vmatmul.mubr.f32.gmra.mxu0 %v9919
  %v10201 = vpop.f32.mrf.mxu0
  %v10202 = vadd.f32 0.0, %v10201
  %v10203 = vpop.f32.mrf.mxu0
  %10204 = vmatprep.mubr.f32.mxu0 0.0
  %10205 = vmatmul.mubr.f32.gmra.mxu0 %v9920
  %v10206 = vpop.f32.mrf.mxu0
  %v10207 = vadd.f32 0.0, %v10206
  %v10208 = vpop.f32.mrf.mxu0
  %10209 = vmatprep.mubr.f32.mxu0 0.0
  %10210 = vmatmul.mubr.f32.gmra.mxu0 %v9921
  %v10211 = vpop.f32.mrf.mxu0
  %v10212 = vadd.f32 0.0, %v10211
  %v10213 = vpop.f32.mrf.mxu0
  %10214 = vmatprep.mubr.f32.mxu0 0.0
  %10215 = vmatmul.mubr.f32.gmra.mxu0 %v9922
  %v10216 = vpop.f32.mrf.mxu0
  %v10217 = vadd.f32 0.0, %v10216
  %v10218 = vpop.f32.mrf.mxu0
  %10219 = vmatprep.mubr.f32.mxu0 0.0
  %10220 = vmatmul.mubr.f32.gmra.mxu0 %v9923
  %v10221 = vpop.f32.mrf.mxu0
  %v10222 = vadd.f32 0.0, %v10221
  %v10223 = vpop.f32.mrf.mxu0
  %10224 = vmatprep.mubr.f32.mxu0 0.0
  %10225 = vmatmul.mubr.f32.gmra.mxu0 %v9924
  %v10226 = vpop.f32.mrf.mxu0
  %v10227 = vadd.f32 0.0, %v10226
  %v10228 = vpop.f32.mrf.mxu0
  %10229 = vmatprep.mubr.f32.mxu0 0.0
  %10230 = vmatmul.mubr.f32.gmra.mxu0 %v9925
  %v10231 = vpop.f32.mrf.mxu0
  %v10232 = vadd.f32 0.0, %v10231
  %v10233 = vpop.f32.mrf.mxu0
  %10234 = vmatprep.mubr.f32.mxu0 0.0
  %10235 = vmatmul.mubr.f32.gmra.mxu0 %v9926
  %v10236 = vpop.f32.mrf.mxu0
  %v10237 = vadd.f32 0.0, %v10236
  %v10238 = vpop.f32.mrf.mxu0
  %10239 = vmatprep.mubr.f32.mxu0 0.0
  %10240 = vmatmul.mubr.f32.gmra.mxu0 %v9927
  %v10241 = vpop.f32.mrf.mxu0
  %v10242 = vadd.f32 0.0, %v10241
  %v10243 = vpop.f32.mrf.mxu0
  %10244 = vmatprep.mubr.f32.mxu0 0.0
  %10245 = vmatmul.mubr.f32.gmra.mxu0 %v9928
  %v10246 = vpop.f32.mrf.mxu0
  %v10247 = vadd.f32 0.0, %v10246
  %v10248 = vpop.f32.mrf.mxu0
  %10249 = vmatprep.mubr.f32.mxu0 0.0
  %10250 = vmatmul.mubr.f32.gmra.mxu0 %v9929
  %v10251 = vpop.f32.mrf.mxu0
  %v10252 = vadd.f32 0.0, %v10251
  %v10253 = vpop.f32.mrf.mxu0
  %10254 = vmatprep.mubr.f32.mxu0 0.0
  %10255 = vmatmul.mubr.f32.gmra.mxu0 %v9930
  %v10256 = vpop.f32.mrf.mxu0
  %v10257 = vadd.f32 0.0, %v10256
  %v10258 = vpop.f32.mrf.mxu0
  %10259 = vmatprep.mubr.f32.mxu0 0.0
  %10260 = vmatmul.mubr.f32.gmra.mxu0 %v9931
  %v10261 = vpop.f32.mrf.mxu0
  %v10262 = vadd.f32 0.0, %v10261
  %v10263 = vpop.f32.mrf.mxu0
  %10264 = vmatprep.mubr.f32.mxu0 0.0
  %10265 = vmatmul.mubr.f32.gmra.mxu0 %v9932
  %v10266 = vpop.f32.mrf.mxu0
  %v10267 = vadd.f32 0.0, %v10266
  %v10268 = vpop.f32.mrf.mxu0
  %10269 = vmatprep.mubr.f32.mxu0 0.0
  %10270 = vmatmul.mubr.f32.gmra.mxu0 %v9933
  %v10271 = vpop.f32.mrf.mxu0
  %v10272 = vadd.f32 0.0, %v10271
  %v10273 = vpop.f32.mrf.mxu0
  %10274 = vmatprep.mubr.f32.mxu0 0.0
  %10275 = vmatmul.mubr.f32.gmra.mxu0 %v9934
  %v10276 = vpop.f32.mrf.mxu0
  %v10277 = vadd.f32 0.0, %v10276
  %v10278 = vpop.f32.mrf.mxu0
  %10279 = vmatprep.mubr.f32.mxu0 0.0
  %10280 = vmatmul.mubr.f32.gmra.mxu0 %v9935
  %v10281 = vpop.f32.mrf.mxu0
  %v10282 = vadd.f32 0.0, %v10281
  %v10283 = vpop.f32.mrf.mxu0
  %10284 = vmatprep.mubr.f32.mxu0 0.0
  %10285 = vmatmul.mubr.f32.gmra.mxu0 %v9936
  %v10286 = vpop.f32.mrf.mxu0
  %v10287 = vadd.f32 0.0, %v10286
  %v10288 = vpop.f32.mrf.mxu0
  %10289 = vmatprep.mubr.f32.mxu0 0.0
  %10290 = vmatmul.mubr.f32.gmra.mxu0 %v9937
  %v10291 = vpop.f32.mrf.mxu0
  %v10292 = vadd.f32 0.0, %v10291
  %v10293 = vpop.f32.mrf.mxu0
  %10294 = vmatprep.mubr.f32.mxu0 0.0
  %10295 = vmatmul.mubr.f32.gmra.mxu0 %v9938
  %v10296 = vpop.f32.mrf.mxu0
  %v10297 = vadd.f32 0.0, %v10296
  %v10298 = vpop.f32.mrf.mxu0
  %10299 = vmatprep.mubr.f32.mxu0 0.0
  %10300 = vmatmul.mubr.f32.gmra.mxu0 %v9939
  %v10301 = vpop.f32.mrf.mxu0
  %v10302 = vadd.f32 0.0, %v10301
  %v10303 = vpop.f32.mrf.mxu0
  %10304 = vmatprep.mubr.f32.mxu0 0.0
  %10305 = vmatmul.mubr.f32.gmra.mxu0 %v9940
  %v10306 = vpop.f32.mrf.mxu0
  %v10307 = vadd.f32 0.0, %v10306
  %v10308 = vpop.f32.mrf.mxu0
  %10309 = vmatprep.mubr.f32.mxu0 0.0
  %10310 = vmatmul.mubr.f32.gmra.mxu0 %v9941
  %v10311 = vpop.f32.mrf.mxu0
  %v10312 = vadd.f32 0.0, %v10311
  %v10313 = vpop.f32.mrf.mxu0
  %10314 = vmatprep.mubr.f32.mxu0 0.0
  %10315 = vmatmul.mubr.f32.gmra.mxu0 %v9942
  %v10316 = vpop.f32.mrf.mxu0
  %v10317 = vadd.f32 0.0, %v10316
  %v10318 = vpop.f32.mrf.mxu0
  %10319 = vmatprep.mubr.f32.mxu0 0.0
  %10320 = vmatmul.mubr.f32.gmra.mxu0 %v9943
  %v10321 = vpop.f32.mrf.mxu0
  %v10322 = vadd.f32 0.0, %v10321
  %v10323 = vpop.f32.mrf.mxu0
  %10324 = vmatprep.mubr.f32.mxu0 0.0
  %10325 = vmatmul.mubr.f32.gmra.mxu0 %v9944
  %v10326 = vpop.f32.mrf.mxu0
  %v10327 = vadd.f32 0.0, %v10326
  %v10328 = vpop.f32.mrf.mxu0
  %10329 = vmatprep.mubr.f32.mxu0 0.0
  %10330 = vmatmul.mubr.f32.gmra.mxu0 %v9945
  %v10331 = vpop.f32.mrf.mxu0
  %v10332 = vadd.f32 0.0, %v10331
  %v10333 = vpop.f32.mrf.mxu0
  %10334 = vmatprep.mubr.f32.mxu0 0.0
  %10335 = vmatmul.mubr.f32.gmra.mxu0 %v9946
  %v10336 = vpop.f32.mrf.mxu0
  %v10337 = vadd.f32 0.0, %v10336
  %v10338 = vpop.f32.mrf.mxu0
  %10339 = vmatprep.mubr.f32.mxu0 0.0
  %10340 = vmatmul.mubr.f32.gmra.mxu0 %v9947
  %v10341 = vpop.f32.mrf.mxu0
  %v10342 = vadd.f32 0.0, %v10341
  %v10343 = vpop.f32.mrf.mxu0
  %10344 = vmatprep.mubr.f32.mxu0 0.0
  %10345 = vmatmul.mubr.f32.gmra.mxu0 %v9948
  %v10346 = vpop.f32.mrf.mxu0
  %v10347 = vadd.f32 0.0, %v10346
  %v10348 = vpop.f32.mrf.mxu0
  %10349 = vdwg.mxu0
  %v10350 = vld [vmem:[%s9] sm:$0x1]
  %v10351 = vld [vmem:[%s10] sm:$0x1]
  %v10352 = vadd.f32 %v10032, %v10037
  %v10353 = vadd.f32 %v10352, %v10042
  %v10354 = vadd.f32 %v10353, %v10047
  %v10355 = vadd.f32 %v10354, %v10052
  %v10356 = vadd.f32 %v10355, %v10057
  %v10357 = vadd.f32 %v10356, %v10062
  %v10358 = vadd.f32 %v10357, %v10067
  %v10359 = vadd.f32 %v10358, %v10072
  %v10360 = vadd.f32 %v10359, %v10077
  %v10361 = vadd.f32 %v10360, %v10082
  %v10362 = vadd.f32 %v10361, %v10087
  %v10363 = vadd.f32 %v10362, %v10092
  %v10364 = vadd.f32 %v10363, %v10097
  %v10365 = vadd.f32 %v10364, %v10102
  %v10366 = vadd.f32 %v10365, %v10107
  %v10367 = vadd.f32 %v10366, %v10112
  %v10368 = vadd.f32 %v10367, %v10117
  %v10369 = vadd.f32 %v10368, %v10122
  %v10370 = vadd.f32 %v10369, %v10127
  %v10371 = vadd.f32 %v10370, %v10132
  %v10372 = vadd.f32 %v10371, %v10137
  %v10373 = vadd.f32 %v10372, %v10142
  %v10374 = vadd.f32 %v10373, %v10147
  %v10375 = vadd.f32 %v10374, %v10152
  %v10376 = vadd.f32 %v10375, %v10157
  %v10377 = vadd.f32 %v10376, %v10162
  %v10378 = vadd.f32 %v10377, %v10167
  %v10379 = vadd.f32 %v10378, %v10172
  %v10380 = vadd.f32 %v10379, %v10177
  %v10381 = vadd.f32 %v10380, %v10182
  %v10382 = vadd.f32 %v10381, %v10187
  %v10383 = vadd.f32 %v10382, %v10192
  %v10384 = vadd.f32 %v10383, %v10197
  %v10385 = vadd.f32 %v10384, %v10202
  %v10386 = vadd.f32 %v10385, %v10207
  %v10387 = vadd.f32 %v10386, %v10212
  %v10388 = vadd.f32 %v10387, %v10217
  %v10389 = vadd.f32 %v10388, %v10222
  %v10390 = vadd.f32 %v10389, %v10227
  %v10391 = vadd.f32 %v10390, %v10232
  %v10392 = vadd.f32 %v10391, %v10237
  %v10393 = vadd.f32 %v10392, %v10242
  %v10394 = vadd.f32 %v10393, %v10247
  %v10395 = vadd.f32 %v10394, %v10252
  %v10396 = vadd.f32 %v10395, %v10257
  %v10397 = vadd.f32 %v10396, %v10262
  %v10398 = vadd.f32 %v10397, %v10267
  %v10399 = vadd.f32 %v10398, %v10272
  %v10400 = vadd.f32 %v10399, %v10277
  %v10401 = vadd.f32 %v10400, %v10282
  %v10402 = vadd.f32 %v10401, %v10287
  %v10403 = vadd.f32 %v10402, %v10292
  %v10404 = vadd.f32 %v10403, %v10297
  %v10405 = vadd.f32 %v10404, %v10302
  %v10406 = vadd.f32 %v10405, %v10307
  %v10407 = vadd.f32 %v10406, %v10312
  %v10408 = vadd.f32 %v10407, %v10317
  %v10409 = vadd.f32 %v10408, %v10322
  %v10410 = vadd.f32 %v10409, %v10327
  %v10411 = vadd.f32 %v10410, %v10332
  %v10412 = vadd.f32 %v10411, %v10337
  %v10413 = vadd.f32 %v10412, %v10342
  %v10414 = vadd.f32 %v10413, %v10347
  %v10415 = vrot.slane %v10414, 4
  %v10416 = vadd.f32 %v10414, %v10415
  %v10417 = vrot.slane %v10416, 2
  %v10418 = vadd.f32 %v10416, %v10417
  %v10419 = vrot.slane %v10418, 1
  %v10420 = vadd.f32 %v10418, %v10419
  %v10421 = vmul.f32 %v10420, 0.001953125
  %v10422 = vsub.f32 %v10032, %v10421
  %v10423 = vsub.f32 %v10037, %v10421
  %v10424 = vsub.f32 %v10042, %v10421
  %v10425 = vsub.f32 %v10047, %v10421
  %v10426 = vsub.f32 %v10052, %v10421
  %v10427 = vsub.f32 %v10057, %v10421
  %v10428 = vsub.f32 %v10062, %v10421
  %v10429 = vsub.f32 %v10067, %v10421
  %v10430 = vsub.f32 %v10072, %v10421
  %v10431 = vsub.f32 %v10077, %v10421
  %v10432 = vsub.f32 %v10082, %v10421
  %v10433 = vsub.f32 %v10087, %v10421
  %v10434 = vsub.f32 %v10092, %v10421
  %v10435 = vsub.f32 %v10097, %v10421
  %v10436 = vsub.f32 %v10102, %v10421
  %v10437 = vsub.f32 %v10107, %v10421
  %v10438 = vsub.f32 %v10112, %v10421
  %v10439 = vsub.f32 %v10117, %v10421
  %v10440 = vsub.f32 %v10122, %v10421
  %v10441 = vsub.f32 %v10127, %v10421
  %v10442 = vsub.f32 %v10132, %v10421
  %v10443 = vsub.f32 %v10137, %v10421
  %v10444 = vsub.f32 %v10142, %v10421
  %v10445 = vsub.f32 %v10147, %v10421
  %v10446 = vsub.f32 %v10152, %v10421
  %v10447 = vsub.f32 %v10157, %v10421
  %v10448 = vsub.f32 %v10162, %v10421
  %v10449 = vsub.f32 %v10167, %v10421
  %v10450 = vsub.f32 %v10172, %v10421
  %v10451 = vsub.f32 %v10177, %v10421
  %v10452 = vsub.f32 %v10182, %v10421
  %v10453 = vsub.f32 %v10187, %v10421
  %v10454 = vsub.f32 %v10192, %v10421
  %v10455 = vsub.f32 %v10197, %v10421
  %v10456 = vsub.f32 %v10202, %v10421
  %v10457 = vsub.f32 %v10207, %v10421
  %v10458 = vsub.f32 %v10212, %v10421
  %v10459 = vsub.f32 %v10217, %v10421
  %v10460 = vsub.f32 %v10222, %v10421
  %v10461 = vsub.f32 %v10227, %v10421
  %v10462 = vsub.f32 %v10232, %v10421
  %v10463 = vsub.f32 %v10237, %v10421
  %v10464 = vsub.f32 %v10242, %v10421
  %v10465 = vsub.f32 %v10247, %v10421
  %v10466 = vsub.f32 %v10252, %v10421
  %v10467 = vsub.f32 %v10257, %v10421
  %v10468 = vsub.f32 %v10262, %v10421
  %v10469 = vsub.f32 %v10267, %v10421
  %v10470 = vsub.f32 %v10272, %v10421
  %v10471 = vsub.f32 %v10277, %v10421
  %v10472 = vsub.f32 %v10282, %v10421
  %v10473 = vsub.f32 %v10287, %v10421
  %v10474 = vsub.f32 %v10292, %v10421
  %v10475 = vsub.f32 %v10297, %v10421
  %v10476 = vsub.f32 %v10302, %v10421
  %v10477 = vsub.f32 %v10307, %v10421
  %v10478 = vsub.f32 %v10312, %v10421
  %v10479 = vsub.f32 %v10317, %v10421
  %v10480 = vsub.f32 %v10322, %v10421
  %v10481 = vsub.f32 %v10327, %v10421
  %v10482 = vsub.f32 %v10332, %v10421
  %v10483 = vsub.f32 %v10337, %v10421
  %v10484 = vsub.f32 %v10342, %v10421
  %v10485 = vsub.f32 %v10347, %v10421
  %v10486 = vmul.f32 %v10422, %v10422
  %v10487 = vmul.f32 %v10423, %v10423
  %v10488 = vmul.f32 %v10424, %v10424
  %v10489 = vmul.f32 %v10425, %v10425
  %v10490 = vmul.f32 %v10426, %v10426
  %v10491 = vmul.f32 %v10427, %v10427
  %v10492 = vmul.f32 %v10428, %v10428
  %v10493 = vmul.f32 %v10429, %v10429
  %v10494 = vmul.f32 %v10430, %v10430
  %v10495 = vmul.f32 %v10431, %v10431
  %v10496 = vmul.f32 %v10432, %v10432
  %v10497 = vmul.f32 %v10433, %v10433
  %v10498 = vmul.f32 %v10434, %v10434
  %v10499 = vmul.f32 %v10435, %v10435
  %v10500 = vmul.f32 %v10436, %v10436
  %v10501 = vmul.f32 %v10437, %v10437
  %v10502 = vmul.f32 %v10438, %v10438
  %v10503 = vmul.f32 %v10439, %v10439
  %v10504 = vmul.f32 %v10440, %v10440
  %v10505 = vmul.f32 %v10441, %v10441
  %v10506 = vmul.f32 %v10442, %v10442
  %v10507 = vmul.f32 %v10443, %v10443
  %v10508 = vmul.f32 %v10444, %v10444
  %v10509 = vmul.f32 %v10445, %v10445
  %v10510 = vmul.f32 %v10446, %v10446
  %v10511 = vmul.f32 %v10447, %v10447
  %v10512 = vmul.f32 %v10448, %v10448
  %v10513 = vmul.f32 %v10449, %v10449
  %v10514 = vmul.f32 %v10450, %v10450
  %v10515 = vmul.f32 %v10451, %v10451
  %v10516 = vmul.f32 %v10452, %v10452
  %v10517 = vmul.f32 %v10453, %v10453
  %v10518 = vmul.f32 %v10454, %v10454
  %v10519 = vmul.f32 %v10455, %v10455
  %v10520 = vmul.f32 %v10456, %v10456
  %v10521 = vmul.f32 %v10457, %v10457
  %v10522 = vmul.f32 %v10458, %v10458
  %v10523 = vmul.f32 %v10459, %v10459
  %v10524 = vmul.f32 %v10460, %v10460
  %v10525 = vmul.f32 %v10461, %v10461
  %v10526 = vmul.f32 %v10462, %v10462
  %v10527 = vmul.f32 %v10463, %v10463
  %v10528 = vmul.f32 %v10464, %v10464
  %v10529 = vmul.f32 %v10465, %v10465
  %v10530 = vmul.f32 %v10466, %v10466
  %v10531 = vmul.f32 %v10467, %v10467
  %v10532 = vmul.f32 %v10468, %v10468
  %v10533 = vmul.f32 %v10469, %v10469
  %v10534 = vmul.f32 %v10470, %v10470
  %v10535 = vmul.f32 %v10471, %v10471
  %v10536 = vmul.f32 %v10472, %v10472
  %v10537 = vmul.f32 %v10473, %v10473
  %v10538 = vmul.f32 %v10474, %v10474
  %v10539 = vmul.f32 %v10475, %v10475
  %v10540 = vmul.f32 %v10476, %v10476
  %v10541 = vmul.f32 %v10477, %v10477
  %v10542 = vmul.f32 %v10478, %v10478
  %v10543 = vmul.f32 %v10479, %v10479
  %v10544 = vmul.f32 %v10480, %v10480
  %v10545 = vmul.f32 %v10481, %v10481
  %v10546 = vmul.f32 %v10482, %v10482
  %v10547 = vmul.f32 %v10483, %v10483
  %v10548 = vmul.f32 %v10484, %v10484
  %v10549 = vmul.f32 %v10485, %v10485
  %v10550 = vadd.f32 %v10486, %v10487
  %v10551 = vadd.f32 %v10550, %v10488
  %v10552 = vadd.f32 %v10551, %v10489
  %v10553 = vadd.f32 %v10552, %v10490
  %v10554 = vadd.f32 %v10553, %v10491
  %v10555 = vadd.f32 %v10554, %v10492
  %v10556 = vadd.f32 %v10555, %v10493
  %v10557 = vadd.f32 %v10556, %v10494
  %v10558 = vadd.f32 %v10557, %v10495
  %v10559 = vadd.f32 %v10558, %v10496
  %v10560 = vadd.f32 %v10559, %v10497
  %v10561 = vadd.f32 %v10560, %v10498
  %v10562 = vadd.f32 %v10561, %v10499
  %v10563 = vadd.f32 %v10562, %v10500
  %v10564 = vadd.f32 %v10563, %v10501
  %v10565 = vadd.f32 %v10564, %v10502
  %v10566 = vadd.f32 %v10565, %v10503
  %v10567 = vadd.f32 %v10566, %v10504
  %v10568 = vadd.f32 %v10567, %v10505
  %v10569 = vadd.f32 %v10568, %v10506
  %v10570 = vadd.f32 %v10569, %v10507
  %v10571 = vadd.f32 %v10570, %v10508
  %v10572 = vadd.f32 %v10571, %v10509
  %v10573 = vadd.f32 %v10572, %v10510
  %v10574 = vadd.f32 %v10573, %v10511
  %v10575 = vadd.f32 %v10574, %v10512
  %v10576 = vadd.f32 %v10575, %v10513
  %v10577 = vadd.f32 %v10576, %v10514
  %v10578 = vadd.f32 %v10577, %v10515
  %v10579 = vadd.f32 %v10578, %v10516
  %v10580 = vadd.f32 %v10579, %v10517
  %v10581 = vadd.f32 %v10580, %v10518
  %v10582 = vadd.f32 %v10581, %v10519
  %v10583 = vadd.f32 %v10582, %v10520
  %v10584 = vadd.f32 %v10583, %v10521
  %v10585 = vadd.f32 %v10584, %v10522
  %v10586 = vadd.f32 %v10585, %v10523
  %v10587 = vadd.f32 %v10586, %v10524
  %v10588 = vadd.f32 %v10587, %v10525
  %v10589 = vadd.f32 %v10588, %v10526
  %v10590 = vadd.f32 %v10589, %v10527
  %v10591 = vadd.f32 %v10590, %v10528
  %v10592 = vadd.f32 %v10591, %v10529
  %v10593 = vadd.f32 %v10592, %v10530
  %v10594 = vadd.f32 %v10593, %v10531
  %v10595 = vadd.f32 %v10594, %v10532
  %v10596 = vadd.f32 %v10595, %v10533
  %v10597 = vadd.f32 %v10596, %v10534
  %v10598 = vadd.f32 %v10597, %v10535
  %v10599 = vadd.f32 %v10598, %v10536
  %v10600 = vadd.f32 %v10599, %v10537
  %v10601 = vadd.f32 %v10600, %v10538
  %v10602 = vadd.f32 %v10601, %v10539
  %v10603 = vadd.f32 %v10602, %v10540
  %v10604 = vadd.f32 %v10603, %v10541
  %v10605 = vadd.f32 %v10604, %v10542
  %v10606 = vadd.f32 %v10605, %v10543
  %v10607 = vadd.f32 %v10606, %v10544
  %v10608 = vadd.f32 %v10607, %v10545
  %v10609 = vadd.f32 %v10608, %v10546
  %v10610 = vadd.f32 %v10609, %v10547
  %v10611 = vadd.f32 %v10610, %v10548
  %v10612 = vadd.f32 %v10611, %v10549
  %v10613 = vrot.slane %v10612, 4
  %v10614 = vadd.f32 %v10612, %v10613
  %v10615 = vrot.slane %v10614, 2
  %v10616 = vadd.f32 %v10614, %v10615
  %v10617 = vrot.slane %v10616, 1
  %v10618 = vadd.f32 %v10616, %v10617
  %v10619 = vmul.f32 %v10618, 0.001953125
  %v10620 = vadd.f32 %v10619, 1e-05
  %v10621 = vrsqrt.pop %v10620
  %v10622 = vmul.f32 %v10350, %v10621
  %v10623 = vmul.f32 %v10421, %v10622
  %v10624 = vsub.f32 %v10351, %v10623
  %v10626 = vlaneseq
  %v10627 = vshrl.u32 %v10626, 7
  %v10628 = vsub.s32 0, %v10627
  %v10629 = vrot.slane %v10622, %v10628
  %v10631 = vmul.f32 %v10032, %v10629
  %v10632 = vmul.f32 %v10037, %v10629
  %v10633 = vmul.f32 %v10042, %v10629
  %v10634 = vmul.f32 %v10047, %v10629
  %v10635 = vmul.f32 %v10052, %v10629
  %v10636 = vmul.f32 %v10057, %v10629
  %v10637 = vmul.f32 %v10062, %v10629
  %v10638 = vmul.f32 %v10067, %v10629
  %v10639 = vmul.f32 %v10072, %v10629
  %v10640 = vmul.f32 %v10077, %v10629
  %v10641 = vmul.f32 %v10082, %v10629
  %v10642 = vmul.f32 %v10087, %v10629
  %v10643 = vmul.f32 %v10092, %v10629
  %v10644 = vmul.f32 %v10097, %v10629
  %v10645 = vmul.f32 %v10102, %v10629
  %v10646 = vmul.f32 %v10107, %v10629
  %v10647 = vmul.f32 %v10112, %v10629
  %v10648 = vmul.f32 %v10117, %v10629
  %v10649 = vmul.f32 %v10122, %v10629
  %v10650 = vmul.f32 %v10127, %v10629
  %v10651 = vmul.f32 %v10132, %v10629
  %v10652 = vmul.f32 %v10137, %v10629
  %v10653 = vmul.f32 %v10142, %v10629
  %v10654 = vmul.f32 %v10147, %v10629
  %v10655 = vmul.f32 %v10152, %v10629
  %v10656 = vmul.f32 %v10157, %v10629
  %v10657 = vmul.f32 %v10162, %v10629
  %v10658 = vmul.f32 %v10167, %v10629
  %v10659 = vmul.f32 %v10172, %v10629
  %v10660 = vmul.f32 %v10177, %v10629
  %v10661 = vmul.f32 %v10182, %v10629
  %v10662 = vmul.f32 %v10187, %v10629
  %v10663 = vmul.f32 %v10192, %v10629
  %v10664 = vmul.f32 %v10197, %v10629
  %v10665 = vmul.f32 %v10202, %v10629
  %v10666 = vmul.f32 %v10207, %v10629
  %v10667 = vmul.f32 %v10212, %v10629
  %v10668 = vmul.f32 %v10217, %v10629
  %v10669 = vmul.f32 %v10222, %v10629
  %v10670 = vmul.f32 %v10227, %v10629
  %v10671 = vmul.f32 %v10232, %v10629
  %v10672 = vmul.f32 %v10237, %v10629
  %v10673 = vmul.f32 %v10242, %v10629
  %v10674 = vmul.f32 %v10247, %v10629
  %v10675 = vmul.f32 %v10252, %v10629
  %v10676 = vmul.f32 %v10257, %v10629
  %v10677 = vmul.f32 %v10262, %v10629
  %v10678 = vmul.f32 %v10267, %v10629
  %v10679 = vmul.f32 %v10272, %v10629
  %v10680 = vmul.f32 %v10277, %v10629
  %v10681 = vmul.f32 %v10282, %v10629
  %v10682 = vmul.f32 %v10287, %v10629
  %v10683 = vmul.f32 %v10292, %v10629
  %v10684 = vmul.f32 %v10297, %v10629
  %v10685 = vmul.f32 %v10302, %v10629
  %v10686 = vmul.f32 %v10307, %v10629
  %v10687 = vmul.f32 %v10312, %v10629
  %v10688 = vmul.f32 %v10317, %v10629
  %v10689 = vmul.f32 %v10322, %v10629
  %v10690 = vmul.f32 %v10327, %v10629
  %v10691 = vmul.f32 %v10332, %v10629
  %v10692 = vmul.f32 %v10337, %v10629
  %v10693 = vmul.f32 %v10342, %v10629
  %v10694 = vmul.f32 %v10347, %v10629
  %v10696 = vlaneseq
  %v10697 = vshrl.u32 %v10696, 7
  %v10698 = vsub.s32 0, %v10697
  %v10699 = vrot.slane %v10624, %v10698
  %v10701 = vadd.f32 %v10631, %v10699
  %v10702 = vadd.f32 %v10632, %v10699
  %v10703 = vadd.f32 %v10633, %v10699
  %v10704 = vadd.f32 %v10634, %v10699
  %v10705 = vadd.f32 %v10635, %v10699
  %v10706 = vadd.f32 %v10636, %v10699
  %v10707 = vadd.f32 %v10637, %v10699
  %v10708 = vadd.f32 %v10638, %v10699
  %v10709 = vadd.f32 %v10639, %v10699
  %v10710 = vadd.f32 %v10640, %v10699
  %v10711 = vadd.f32 %v10641, %v10699
  %v10712 = vadd.f32 %v10642, %v10699
  %v10713 = vadd.f32 %v10643, %v10699
  %v10714 = vadd.f32 %v10644, %v10699
  %v10715 = vadd.f32 %v10645, %v10699
  %v10716 = vadd.f32 %v10646, %v10699
  %v10717 = vadd.f32 %v10647, %v10699
  %v10718 = vadd.f32 %v10648, %v10699
  %v10719 = vadd.f32 %v10649, %v10699
  %v10720 = vadd.f32 %v10650, %v10699
  %v10721 = vadd.f32 %v10651, %v10699
  %v10722 = vadd.f32 %v10652, %v10699
  %v10723 = vadd.f32 %v10653, %v10699
  %v10724 = vadd.f32 %v10654, %v10699
  %v10725 = vadd.f32 %v10655, %v10699
  %v10726 = vadd.f32 %v10656, %v10699
  %v10727 = vadd.f32 %v10657, %v10699
  %v10728 = vadd.f32 %v10658, %v10699
  %v10729 = vadd.f32 %v10659, %v10699
  %v10730 = vadd.f32 %v10660, %v10699
  %v10731 = vadd.f32 %v10661, %v10699
  %v10732 = vadd.f32 %v10662, %v10699
  %v10733 = vadd.f32 %v10663, %v10699
  %v10734 = vadd.f32 %v10664, %v10699
  %v10735 = vadd.f32 %v10665, %v10699
  %v10736 = vadd.f32 %v10666, %v10699
  %v10737 = vadd.f32 %v10667, %v10699
  %v10738 = vadd.f32 %v10668, %v10699
  %v10739 = vadd.f32 %v10669, %v10699
  %v10740 = vadd.f32 %v10670, %v10699
  %v10741 = vadd.f32 %v10671, %v10699
  %v10742 = vadd.f32 %v10672, %v10699
  %v10743 = vadd.f32 %v10673, %v10699
  %v10744 = vadd.f32 %v10674, %v10699
  %v10745 = vadd.f32 %v10675, %v10699
  %v10746 = vadd.f32 %v10676, %v10699
  %v10747 = vadd.f32 %v10677, %v10699
  %v10748 = vadd.f32 %v10678, %v10699
  %v10749 = vadd.f32 %v10679, %v10699
  %v10750 = vadd.f32 %v10680, %v10699
  %v10751 = vadd.f32 %v10681, %v10699
  %v10752 = vadd.f32 %v10682, %v10699
  %v10753 = vadd.f32 %v10683, %v10699
  %v10754 = vadd.f32 %v10684, %v10699
  %v10755 = vadd.f32 %v10685, %v10699
  %v10756 = vadd.f32 %v10686, %v10699
  %v10757 = vadd.f32 %v10687, %v10699
  %v10758 = vadd.f32 %v10688, %v10699
  %v10759 = vadd.f32 %v10689, %v10699
  %v10760 = vadd.f32 %v10690, %v10699
  %v10761 = vadd.f32 %v10691, %v10699
  %v10762 = vadd.f32 %v10692, %v10699
  %v10763 = vadd.f32 %v10693, %v10699
  %v10764 = vadd.f32 %v10694, %v10699
  %v10765 = vadd.f32 %v10701, %v1444
  %v10766 = vadd.f32 %v10702, %v1446
  %v10767 = vadd.f32 %v10703, %v1448
  %v10768 = vadd.f32 %v10704, %v1450
  %v10769 = vadd.f32 %v10705, %v1452
  %v10770 = vadd.f32 %v10706, %v1454
  %v10771 = vadd.f32 %v10707, %v1456
  %v10772 = vadd.f32 %v10708, %v1458
  %v10773 = vadd.f32 %v10709, %v1460
  %v10774 = vadd.f32 %v10710, %v1462
  %v10775 = vadd.f32 %v10711, %v1464
  %v10776 = vadd.f32 %v10712, %v1466
  %v10777 = vadd.f32 %v10713, %v1468
  %v10778 = vadd.f32 %v10714, %v1470
  %v10779 = vadd.f32 %v10715, %v1472
  %v10780 = vadd.f32 %v10716, %v1474
  %v10781 = vadd.f32 %v10717, %v1476
  %v10782 = vadd.f32 %v10718, %v1478
  %v10783 = vadd.f32 %v10719, %v1480
  %v10784 = vadd.f32 %v10720, %v1482
  %v10785 = vadd.f32 %v10721, %v1484
  %v10786 = vadd.f32 %v10722, %v1486
  %v10787 = vadd.f32 %v10723, %v1488
  %v10788 = vadd.f32 %v10724, %v1490
  %v10789 = vadd.f32 %v10725, %v1492
  %v10790 = vadd.f32 %v10726, %v1494
  %v10791 = vadd.f32 %v10727, %v1496
  %v10792 = vadd.f32 %v10728, %v1498
  %v10793 = vadd.f32 %v10729, %v1500
  %v10794 = vadd.f32 %v10730, %v1502
  %v10795 = vadd.f32 %v10731, %v1504
  %v10796 = vadd.f32 %v10732, %v1506
  %v10797 = vadd.f32 %v10733, %v1508
  %v10798 = vadd.f32 %v10734, %v1510
  %v10799 = vadd.f32 %v10735, %v1512
  %v10800 = vadd.f32 %v10736, %v1514
  %v10801 = vadd.f32 %v10737, %v1516
  %v10802 = vadd.f32 %v10738, %v1518
  %v10803 = vadd.f32 %v10739, %v1520
  %v10804 = vadd.f32 %v10740, %v1522
  %v10805 = vadd.f32 %v10741, %v1524
  %v10806 = vadd.f32 %v10742, %v1526
  %v10807 = vadd.f32 %v10743, %v1528
  %v10808 = vadd.f32 %v10744, %v1530
  %v10809 = vadd.f32 %v10745, %v1532
  %v10810 = vadd.f32 %v10746, %v1534
  %v10811 = vadd.f32 %v10747, %v1536
  %v10812 = vadd.f32 %v10748, %v1538
  %v10813 = vadd.f32 %v10749, %v1540
  %v10814 = vadd.f32 %v10750, %v1542
  %v10815 = vadd.f32 %v10751, %v1544
  %v10816 = vadd.f32 %v10752, %v1546
  %v10817 = vadd.f32 %v10753, %v1548
  %v10818 = vadd.f32 %v10754, %v1550
  %v10819 = vadd.f32 %v10755, %v1552
  %v10820 = vadd.f32 %v10756, %v1554
  %v10821 = vadd.f32 %v10757, %v1556
  %v10822 = vadd.f32 %v10758, %v1558
  %v10823 = vadd.f32 %v10759, %v1560
  %v10824 = vadd.f32 %v10760, %v1562
  %v10825 = vadd.f32 %v10761, %v1564
  %v10826 = vadd.f32 %v10762, %v1566
  %v10827 = vadd.f32 %v10763, %v1568
  %v10828 = vadd.f32 %v10764, %v1570
  %v10829 = vmax.f32 %v10765, 0.0
  %v10830 = vmax.f32 %v10766, 0.0
  %v10831 = vmax.f32 %v10767, 0.0
  %v10832 = vmax.f32 %v10768, 0.0
  %v10833 = vmax.f32 %v10769, 0.0
  %v10834 = vmax.f32 %v10770, 0.0
  %v10835 = vmax.f32 %v10771, 0.0
  %v10836 = vmax.f32 %v10772, 0.0
  %v10837 = vmax.f32 %v10773, 0.0
  %v10838 = vmax.f32 %v10774, 0.0
  %v10839 = vmax.f32 %v10775, 0.0
  %v10840 = vmax.f32 %v10776, 0.0
  %v10841 = vmax.f32 %v10777, 0.0
  %v10842 = vmax.f32 %v10778, 0.0
  %v10843 = vmax.f32 %v10779, 0.0
  %v10844 = vmax.f32 %v10780, 0.0
  %v10845 = vmax.f32 %v10781, 0.0
  %v10846 = vmax.f32 %v10782, 0.0
  %v10847 = vmax.f32 %v10783, 0.0
  %v10848 = vmax.f32 %v10784, 0.0
  %v10849 = vmax.f32 %v10785, 0.0
  %v10850 = vmax.f32 %v10786, 0.0
  %v10851 = vmax.f32 %v10787, 0.0
  %v10852 = vmax.f32 %v10788, 0.0
  %v10853 = vmax.f32 %v10789, 0.0
  %v10854 = vmax.f32 %v10790, 0.0
  %v10855 = vmax.f32 %v10791, 0.0
  %v10856 = vmax.f32 %v10792, 0.0
  %v10857 = vmax.f32 %v10793, 0.0
  %v10858 = vmax.f32 %v10794, 0.0
  %v10859 = vmax.f32 %v10795, 0.0
  %v10860 = vmax.f32 %v10796, 0.0
  %v10861 = vmax.f32 %v10797, 0.0
  %v10862 = vmax.f32 %v10798, 0.0
  %v10863 = vmax.f32 %v10799, 0.0
  %v10864 = vmax.f32 %v10800, 0.0
  %v10865 = vmax.f32 %v10801, 0.0
  %v10866 = vmax.f32 %v10802, 0.0
  %v10867 = vmax.f32 %v10803, 0.0
  %v10868 = vmax.f32 %v10804, 0.0
  %v10869 = vmax.f32 %v10805, 0.0
  %v10870 = vmax.f32 %v10806, 0.0
  %v10871 = vmax.f32 %v10807, 0.0
  %v10872 = vmax.f32 %v10808, 0.0
  %v10873 = vmax.f32 %v10809, 0.0
  %v10874 = vmax.f32 %v10810, 0.0
  %v10875 = vmax.f32 %v10811, 0.0
  %v10876 = vmax.f32 %v10812, 0.0
  %v10877 = vmax.f32 %v10813, 0.0
  %v10878 = vmax.f32 %v10814, 0.0
  %v10879 = vmax.f32 %v10815, 0.0
  %v10880 = vmax.f32 %v10816, 0.0
  %v10881 = vmax.f32 %v10817, 0.0
  %v10882 = vmax.f32 %v10818, 0.0
  %v10883 = vmax.f32 %v10819, 0.0
  %v10884 = vmax.f32 %v10820, 0.0
  %v10885 = vmax.f32 %v10821, 0.0
  %v10886 = vmax.f32 %v10822, 0.0
  %v10887 = vmax.f32 %v10823, 0.0
  %v10888 = vmax.f32 %v10824, 0.0
  %v10889 = vmax.f32 %v10825, 0.0
  %v10890 = vmax.f32 %v10826, 0.0
  %v10891 = vmax.f32 %v10827, 0.0
  %v10892 = vmax.f32 %v10828, 0.0
  %10893 = vst [vmem:[%s11] sm:$0xff] %v10829
  %10894 = vst [vmem:[%s11 + $0x8] sm:$0xff] %v10830
  %10895 = vst [vmem:[%s11 + $0x10] sm:$0xff] %v10831
  %10896 = vst [vmem:[%s11 + $0x18] sm:$0xff] %v10832
  %10897 = vst [vmem:[%s11 + $0x20] sm:$0xff] %v10833
  %10898 = vst [vmem:[%s11 + $0x28] sm:$0xff] %v10834
  %10899 = vst [vmem:[%s11 + $0x30] sm:$0xff] %v10835
  %10900 = vst [vmem:[%s11 + $0x38] sm:$0xff] %v10836
  %10901 = vst [vmem:[%s11 + $0x40] sm:$0xff] %v10837
  %10902 = vst [vmem:[%s11 + $0x48] sm:$0xff] %v10838
  %10903 = vst [vmem:[%s11 + $0x50] sm:$0xff] %v10839
  %10904 = vst [vmem:[%s11 + $0x58] sm:$0xff] %v10840
  %10905 = vst [vmem:[%s11 + $0x60] sm:$0xff] %v10841
  %10906 = vst [vmem:[%s11 + $0x68] sm:$0xff] %v10842
  %10907 = vst [vmem:[%s11 + $0x70] sm:$0xff] %v10843
  %10908 = vst [vmem:[%s11 + $0x78] sm:$0xff] %v10844
  %10909 = vst [vmem:[%s11 + $0x80] sm:$0xff] %v10845
  %10910 = vst [vmem:[%s11 + $0x88] sm:$0xff] %v10846
  %10911 = vst [vmem:[%s11 + $0x90] sm:$0xff] %v10847
  %10912 = vst [vmem:[%s11 + $0x98] sm:$0xff] %v10848
  %10913 = vst [vmem:[%s11 + $0xa0] sm:$0xff] %v10849
  %10914 = vst [vmem:[%s11 + $0xa8] sm:$0xff] %v10850
  %10915 = vst [vmem:[%s11 + $0xb0] sm:$0xff] %v10851
  %10916 = vst [vmem:[%s11 + $0xb8] sm:$0xff] %v10852
  %10917 = vst [vmem:[%s11 + $0xc0] sm:$0xff] %v10853
  %10918 = vst [vmem:[%s11 + $0xc8] sm:$0xff] %v10854
  %10919 = vst [vmem:[%s11 + $0xd0] sm:$0xff] %v10855
  %10920 = vst [vmem:[%s11 + $0xd8] sm:$0xff] %v10856
  %10921 = vst [vmem:[%s11 + $0xe0] sm:$0xff] %v10857
  %10922 = vst [vmem:[%s11 + $0xe8] sm:$0xff] %v10858
  %10923 = vst [vmem:[%s11 + $0xf0] sm:$0xff] %v10859
  %10924 = vst [vmem:[%s11 + $0xf8] sm:$0xff] %v10860
  %10925 = vst [vmem:[%s11 + $0x100] sm:$0xff] %v10861
  %10926 = vst [vmem:[%s11 + $0x108] sm:$0xff] %v10862
  %10927 = vst [vmem:[%s11 + $0x110] sm:$0xff] %v10863
  %10928 = vst [vmem:[%s11 + $0x118] sm:$0xff] %v10864
  %10929 = vst [vmem:[%s11 + $0x120] sm:$0xff] %v10865
  %10930 = vst [vmem:[%s11 + $0x128] sm:$0xff] %v10866
  %10931 = vst [vmem:[%s11 + $0x130] sm:$0xff] %v10867
  %10932 = vst [vmem:[%s11 + $0x138] sm:$0xff] %v10868
  %10933 = vst [vmem:[%s11 + $0x140] sm:$0xff] %v10869
  %10934 = vst [vmem:[%s11 + $0x148] sm:$0xff] %v10870
  %10935 = vst [vmem:[%s11 + $0x150] sm:$0xff] %v10871
  %10936 = vst [vmem:[%s11 + $0x158] sm:$0xff] %v10872
  %10937 = vst [vmem:[%s11 + $0x160] sm:$0xff] %v10873
  %10938 = vst [vmem:[%s11 + $0x168] sm:$0xff] %v10874
  %10939 = vst [vmem:[%s11 + $0x170] sm:$0xff] %v10875
  %10940 = vst [vmem:[%s11 + $0x178] sm:$0xff] %v10876
  %10941 = vst [vmem:[%s11 + $0x180] sm:$0xff] %v10877
  %10942 = vst [vmem:[%s11 + $0x188] sm:$0xff] %v10878
  %10943 = vst [vmem:[%s11 + $0x190] sm:$0xff] %v10879
  %10944 = vst [vmem:[%s11 + $0x198] sm:$0xff] %v10880
  %10945 = vst [vmem:[%s11 + $0x1a0] sm:$0xff] %v10881
  %10946 = vst [vmem:[%s11 + $0x1a8] sm:$0xff] %v10882
  %10947 = vst [vmem:[%s11 + $0x1b0] sm:$0xff] %v10883
  %10948 = vst [vmem:[%s11 + $0x1b8] sm:$0xff] %v10884
  %10949 = vst [vmem:[%s11 + $0x1c0] sm:$0xff] %v10885
  %10950 = vst [vmem:[%s11 + $0x1c8] sm:$0xff] %v10886
  %10951 = vst [vmem:[%s11 + $0x1d0] sm:$0xff] %v10887
  %10952 = vst [vmem:[%s11 + $0x1d8] sm:$0xff] %v10888
  %10953 = vst [vmem:[%s11 + $0x1e0] sm:$0xff] %v10889
  %10954 = vst [vmem:[%s11 + $0x1e8] sm:$0xff] %v10890
  %10955 = vst [vmem:[%s11 + $0x1f0] sm:$0xff] %v10891
  %10956 = vst [vmem:[%s11 + $0x1f8] sm:$0xff] %v10892
  // Predicated region
  $region46: #{bottleneck_block.1} parent=0 // pred_check
    _
  $region47: #{bottleneck_block.1} parent=0 // pred_check_branch
    %10958 = sbr.rel (0) target = $region49
  $region48: #{bottleneck_block.1} parent=0 // pred_region
    _
  $region49: #{bottleneck_block.1} parent=0 // pred_fallthru
    _
  // Predicated region
  $region50: #{bottleneck_block.1} parent=0 // pred_check
    _
  $region51: #{bottleneck_block.1} parent=0 // pred_check_branch
    %10960 = sbr.rel (0) target = $region53
  $region52: #{bottleneck_block.1} parent=0 // pred_region
    _
  $region53: #{bottleneck_block.1} parent=0 // pred_fallthru
    _

</llo_original>
